<compile_context>
chip_gen: v6e
topology: v6e:2x2x1
jax: 0.10.0
libtpu: 0.0.40
codegen_flags: <defaults>
</compile_context>

<pallas_src>
import jax
import jax.numpy as jnp
from jax.experimental import pallas as pl
from jax.experimental.pallas import tpu as pltpu

LANES = 128
POOL_POS = 4          # 2x2 max-pool window positions
CONV2_COUT = 16       # real conv2 output channels
N_POS2 = 25           # 5x5 pooled spatial positions after conv2
FC1_K = N_POS2 * CONV2_COUT   # 400 real fc1 input features (no zero padding)


def _round_up(x, m):
    return (x + m - 1) // m * m


def _ceil_div(a, b):
    return -(-a // b)


def _conv_grid_splits():
    """>=2 grid steps only on v7x (2 TensorCores/chip); 1 step on v5e/v6e."""
    try:
        kind = jax.devices()[0].device_kind.lower()
    except Exception:
        return 1
    return 2 if ("v7" in kind or "7x" in kind) else 1


# -----------------------------------------------------------------------------
# Pallas kernels
# -----------------------------------------------------------------------------
def conv_relu_pool_kernel(p_ref, w_ref, b_ref, o_ref):
    """Fused conv1 (as im2col matmul) + 2x2 max-pool + bias + ReLU, one M tile.

    p_ref: (4, TM, Kf_pad) bf16   im2col patches, leading axis = pool position
    w_ref: (Kf_pad, 128)   bf16   flattened, zero-padded conv weight
    b_ref: (1, 128)        f32    zero-padded bias
    o_ref: (TM, 128)       bf16   pooled + activated output tile (lane-dense)
    """
    w = w_ref[...]
    acc = jnp.dot(p_ref[0], w, preferred_element_type=jnp.float32)
    for a in range(1, POOL_POS):  # static unroll over 4 pool positions
        acc = jnp.maximum(
            acc, jnp.dot(p_ref[a], w, preferred_element_type=jnp.float32))
    # bias + ReLU once, hoisted out of the pool-max loop
    o_ref[...] = jnp.maximum(acc + b_ref[...], 0.0).astype(o_ref.dtype)


def conv2_mlp_kernel(p_ref, w2_ref, b2_ref, fw1_ref, fb1_ref, fw2_ref, fb2_ref,
                     fw3_ref, fb3_ref, o_ref):
    """Fused conv2 + pool + ReLU + fc1 + ReLU + fc2 + ReLU + fc3 for one batch tile.

    p_ref  : (4, 25, TB, K2_pad) bf16  conv2 im2col patches, spatial-position major
    w2_ref : (K2_pad, 128)       bf16  conv2 weight (16 real output lanes)
    fw1_ref: (400, 128)          bf16  fc1 weight, rows ordered (ij, c) -- no zero K
    fw2_ref, fw3_ref: (128, 128) bf16
    b*_ref : (1, 128)            f32
    o_ref  : (TB, 128)           f32   padded logits (10 real lanes)
    """
    tb = o_ref.shape[0]
    w2 = w2_ref[...]
    b2 = b2_ref[...]

    # conv2 + pool + ReLU per pooled spatial position, with fc1 accumulated on
    # the fly: the (TB, 25, 16) activation never leaves registers/VMEM.
    fc1_acc = jnp.zeros((tb, LANES), jnp.float32)
    for ij in range(N_POS2):  # static unroll over the 5x5 pooled positions
        acc = jnp.dot(p_ref[0, ij], w2, preferred_element_type=jnp.float32)
        for a in range(1, POOL_POS):
            acc = jnp.maximum(
                acc, jnp.dot(p_ref[a, ij], w2, preferred_element_type=jnp.float32))
        acc = jnp.maximum(acc + b2, 0.0)                       # (TB, 128), 16 real
        a16 = acc[:, :CONV2_COUT].astype(fw1_ref.dtype)        # (TB, 16) bf16
        w1_ij = fw1_ref[ij * CONV2_COUT:(ij + 1) * CONV2_COUT, :]  # (16, 128)
        fc1_acc += jnp.dot(a16, w1_ij, preferred_element_type=jnp.float32)

    h = jnp.maximum(fc1_acc + fb1_ref[...], 0.0).astype(fw2_ref.dtype)
    h = jnp.dot(h, fw2_ref[...], preferred_element_type=jnp.float32)
    h = jnp.maximum(h + fb2_ref[...], 0.0).astype(fw3_ref.dtype)
    out = jnp.dot(h, fw3_ref[...], preferred_element_type=jnp.float32)
    o_ref[...] = (out + fb3_ref[...]).astype(o_ref.dtype)


# -----------------------------------------------------------------------------
# pallas_call wrappers
# -----------------------------------------------------------------------------
def conv_relu_pool(patches, w_pad, b_pad, *, splits):
    """patches: (4, M, Kf) bf16 -> (M_pad, 128) bf16 pooled/activated output."""
    _, m, kf = patches.shape
    kf_pad, cout_pad = w_pad.shape
    tm = _round_up(max(1, _ceil_div(m, splits)), 16)   # bf16 tile: multiple of 16
    m_pad = tm * _ceil_div(m, tm)
    p = jnp.pad(patches, ((0, 0), (0, m_pad - m), (0, kf_pad - kf)))

    return pl.pallas_call(
        conv_relu_pool_kernel,
        out_shape=jax.ShapeDtypeStruct((m_pad, cout_pad), jnp.bfloat16),
        grid_spec=pltpu.PrefetchScalarGridSpec(
            num_scalar_prefetch=0,
            grid=(m_pad // tm,),
            in_specs=[
                pl.BlockSpec((POOL_POS, tm, kf_pad), lambda i: (0, i, 0)),
                pl.BlockSpec((kf_pad, cout_pad), lambda i: (0, 0)),
                pl.BlockSpec((1, cout_pad), lambda i: (0, 0)),
            ],
            out_specs=pl.BlockSpec((tm, cout_pad), lambda i: (i, 0)),
        ),
        compiler_params=pltpu.CompilerParams(
            dimension_semantics=("parallel",)),
    )(p, w_pad, b_pad)


def conv2_mlp(patches, params, *, splits):
    """patches: (4, 25, N, Kf) bf16 -> (N_pad, 128) f32 padded logits."""
    _, npos, n, kf = patches.shape
    kf_pad = params["w2m"].shape[0]
    tb = _round_up(max(1, _ceil_div(n, splits)), 16)   # batch tile, multiple of 16
    n_pad = tb * _ceil_div(n, tb)
    p = jnp.pad(patches, ((0, 0), (0, 0), (0, n_pad - n), (0, kf_pad - kf)))

    return pl.pallas_call(
        conv2_mlp_kernel,
        out_shape=jax.ShapeDtypeStruct((n_pad, LANES), jnp.float32),
        grid_spec=pltpu.PrefetchScalarGridSpec(
            num_scalar_prefetch=0,
            grid=(n_pad // tb,),
            in_specs=[
                pl.BlockSpec((POOL_POS, npos, tb, kf_pad), lambda i: (0, 0, i, 0)),
                pl.BlockSpec((kf_pad, LANES), lambda i: (0, 0)),
                pl.BlockSpec((1, LANES), lambda i: (0, 0)),
                pl.BlockSpec((FC1_K, LANES), lambda i: (0, 0)),
                pl.BlockSpec((1, LANES), lambda i: (0, 0)),
                pl.BlockSpec((LANES, LANES), lambda i: (0, 0)),
                pl.BlockSpec((1, LANES), lambda i: (0, 0)),
                pl.BlockSpec((LANES, LANES), lambda i: (0, 0)),
                pl.BlockSpec((1, LANES), lambda i: (0, 0)),
            ],
            out_specs=pl.BlockSpec((tb, LANES), lambda i: (i, 0)),
        ),
        compiler_params=pltpu.CompilerParams(
            dimension_semantics=("parallel",)),
    )(p, params["w2m"], params["b2"], params["fw1"], params["fb1"],
      params["fw2"], params["fb2"], params["fw3"], params["fb3"])


# -----------------------------------------------------------------------------
# JAX glue: patch extraction / weight flattening
# -----------------------------------------------------------------------------
def im2col_pooled(x, k, pool=2, position_major=False):
    """x: (N, H, W, C) NHWC -> pooled im2col patches.

    position_major=False: (pool*pool, N*Ho2*Wo2, k*k*C), rows ordered (n, i, j).
    position_major=True : (pool*pool, Ho2*Wo2, N, k*k*C), spatial position major.
    Features flattened in (kh, kw, cin) order; leading axis = 2x2 pool position.
    """
    n, h, w, c = x.shape
    ho, wo = h - k + 1, w - k + 1
    ho2, wo2 = ho // pool, wo // pool
    cols = [x[:, kh:kh + ho, kw:kw + wo, :] for kh in range(k) for kw in range(k)]
    p = jnp.stack(cols, axis=3)                       # (N, Ho, Wo, k*k, C)
    p = p.reshape(n, ho, wo, k * k * c)               # features: (kh, kw, cin)
    p = p[:, : ho2 * pool, : wo2 * pool, :]
    p = p.reshape(n, ho2, pool, wo2, pool, k * k * c)
    if position_major:
        p = p.transpose(2, 4, 1, 3, 0, 5)             # (pi, pj, Ho2, Wo2, N, Kf)
        return p.reshape(pool * pool, ho2 * wo2, n, k * k * c)
    p = p.transpose(2, 4, 0, 1, 3, 5)                 # (pi, pj, N, Ho2, Wo2, Kf)
    return p.reshape(pool * pool, n * ho2 * wo2, k * k * c)


def conv_weight_to_mat(w):
    """PyTorch conv weight (Cout, Cin, K, K) -> (K*K*Cin, Cout), (kh,kw,cin) order."""
    cout, cin, k, _ = w.shape
    return jnp.transpose(w, (2, 3, 1, 0)).reshape(k * k * cin, cout)


def _pad2(a, rows, cols):
    return jnp.pad(a, ((0, rows - a.shape[0]), (0, cols - a.shape[1])))


# -----------------------------------------------------------------------------
# Full forward pass
# -----------------------------------------------------------------------------
@jax.jit
def net_forward(x_nchw, params):
    n = x_nchw.shape[0]
    splits = _conv_grid_splits()                                  # static (trace time)
    x = jnp.transpose(x_nchw, (0, 2, 3, 1)).astype(jnp.bfloat16)  # NCHW -> NHWC bf16

    # conv1(3->6, k=5) + relu + maxpool(2,2):  32x32 -> 28x28 -> 14x14
    p1 = im2col_pooled(x, k=5)                                    # (4, N*196, 75) bf16
    h1 = conv_relu_pool(p1, params["w1m"], params["b1"], splits=splits)
    h1 = h1[: n * 196, :6].reshape(n, 14, 14, 6)                  # real channels, bf16

    # conv2(6->16, k=5) + relu + maxpool + fc1 + fc2 + fc3: one fused kernel,
    # conv2 activations never written back to HBM.
    p2 = im2col_pooled(h1, k=5, position_major=True)              # (4, 25, N, 150) bf16
    logits = conv2_mlp(p2, params, splits=splits)                 # (N_pad, 128) f32
    return logits[:n, :10]


# -----------------------------------------------------------------------------
# Deterministic parameter init (PyTorch-style uniform(+-1/sqrt(fan_in)))
# with lane padding + bf16 casts baked in (biases stay f32).
# -----------------------------------------------------------------------------
def init_params(key):
    def u(k, shape, fan_in):
        bound = 1.0 / jnp.sqrt(jnp.float32(fan_in))
        return jax.random.uniform(k, shape, jnp.float32, -bound, bound)

    keys = jax.random.split(key, 10)
    conv1_w = u(keys[0], (6, 3, 5, 5), 3 * 5 * 5)
    conv1_b = u(keys[1], (6,), 3 * 5 * 5)
    conv2_w = u(keys[2], (16, 6, 5, 5), 6 * 5 * 5)
    conv2_b = u(keys[3], (16,), 6 * 5 * 5)
    fc1_w = u(keys[4], (400, 120), 400)   # stored as (in, out) = W_pt.T
    fc1_b = u(keys[5], (120,), 400)
    fc2_w = u(keys[6], (120, 84), 120)
    fc2_b = u(keys[7], (84,), 120)
    fc3_w = u(keys[8], (84, 10), 84)
    fc3_b = u(keys[9], (10,), 84)

    # Conv weights: (Kf, Cout) -> zero-pad (K mult-of-128, 128 lanes), bf16.
    w1m = _pad2(conv_weight_to_mat(conv1_w), 128, LANES).astype(jnp.bfloat16)
    b1 = jnp.pad(conv1_b, (0, LANES - 6)).reshape(1, LANES)
    w2m = _pad2(conv_weight_to_mat(conv2_w), 256, LANES).astype(jnp.bfloat16)
    b2 = jnp.pad(conv2_b, (0, LANES - 16)).reshape(1, LANES)

    # fc1: fold PyTorch's (c, i, j) flatten order into (ij, c)-ordered rows so
    # the fused kernel can accumulate fc1 per spatial position. Only the 400
    # real rows are kept (no zero-padded contraction).
    fw1 = fc1_w.reshape(16, 25, 120).transpose(1, 0, 2).reshape(400, 120)
    fw1 = _pad2(fw1, FC1_K, LANES).astype(jnp.bfloat16)           # (400, 128)
    fb1 = jnp.pad(fc1_b, (0, LANES - 120)).reshape(1, LANES)
    fw2 = _pad2(fc2_w, LANES, LANES).astype(jnp.bfloat16)          # (128, 128)
    fb2 = jnp.pad(fc2_b, (0, LANES - 84)).reshape(1, LANES)
    fw3 = _pad2(fc3_w, LANES, LANES).astype(jnp.bfloat16)          # (128, 128)
    fb3 = jnp.pad(fc3_b, (0, LANES - 10)).reshape(1, LANES)

    return {
        "w1m": w1m, "b1": b1,
        "w2m": w2m, "b2": b2,
        "fw1": fw1, "fb1": fb1,
        "fw2": fw2, "fb2": fb2,
        "fw3": fw3, "fb3": fb3,
    }


if __name__ == "__main__":
    key = jax.random.PRNGKey(0)
    pkey, xkey = jax.random.split(key)
    params = init_params(pkey)

    # Architecture requires 32x32 spatial / 3 channels; batch kept small (2).
    x = jax.random.normal(xkey, (2, 3, 32, 32), dtype=jnp.float32)

    out = net_forward(x, params)
    out = jax.block_until_ready(out)

    assert out.shape == (2, 10), out.shape
    assert bool(jnp.all(jnp.isfinite(out)))
    print("KERNEL_OK")
</pallas_src>

<mosaic_0001>
module attributes {stable_mosaic.version = 11 : i64} {
  func.func @conv_relu_pool_kernel(%arg0: i32, %arg1: memref<4x400x128xbf16, #tpu.memory_space<vmem>>, %arg2: memref<128x128xbf16, #tpu.memory_space<vmem>>, %arg3: memref<1x128xf32, #tpu.memory_space<vmem>>, %arg4: memref<400x128xbf16, #tpu.memory_space<vmem>>) attributes {dimension_semantics = [#tpu.dimension_semantics<parallel>], iteration_bounds = array<i64: 1>, scalar_prefetch = 0 : i64, scratch_operands = 0 : i64, tpu.core_type = #tpu.core_type<tc>, window_params = [{transform_indices = @transform_0, window_bounds = array<i64: 4, 400, 128>}, {pipeline_mode = #tpu.pipeline_mode<synchronous>, transform_indices = @transform_1, window_bounds = array<i64: 128, 128>}, {pipeline_mode = #tpu.pipeline_mode<synchronous>, transform_indices = @transform_2, window_bounds = array<i64: 1, 128>}, {transform_indices = @transform_3, window_bounds = array<i64: 400, 128>}]} {
    %c0 = arith.constant 0 : index
    %c0_0 = arith.constant 0 : index
    %0 = vector.load %arg2[%c0, %c0_0] : memref<128x128xbf16, #tpu.memory_space<vmem>>, vector<128x128xbf16>
    %c0_1 = arith.constant 0 : index
    %c0_2 = arith.constant 0 : index
    %c0_3 = arith.constant 0 : index
    %1 = vector.load %arg1[%c0_1, %c0_2, %c0_3] : memref<4x400x128xbf16, #tpu.memory_space<vmem>>, vector<1x400x128xbf16>
    %2 = vector.shape_cast %1 : vector<1x400x128xbf16> to vector<400x128xbf16>
    %cst = arith.constant dense<0.000000e+00> : vector<400x128xf32>
    %3 = tpu.matmul %2, %0, %cst {dimension_numbers = #tpu.dot_dimension_numbers<[1], [0], [0], [1], [0, 0, 1, 1], [], []>} : vector<400x128xbf16>, vector<128x128xbf16>, vector<400x128xf32> -> vector<400x128xf32>
    %c1 = arith.constant 1 : index
    %c0_4 = arith.constant 0 : index
    %c0_5 = arith.constant 0 : index
    %4 = vector.load %arg1[%c1, %c0_4, %c0_5] : memref<4x400x128xbf16, #tpu.memory_space<vmem>>, vector<1x400x128xbf16>
    %5 = vector.shape_cast %4 : vector<1x400x128xbf16> to vector<400x128xbf16>
    %cst_6 = arith.constant dense<0.000000e+00> : vector<400x128xf32>
    %6 = tpu.matmul %5, %0, %cst_6 {dimension_numbers = #tpu.dot_dimension_numbers<[1], [0], [0], [1], [0, 0, 1, 1], [], []>} : vector<400x128xbf16>, vector<128x128xbf16>, vector<400x128xf32> -> vector<400x128xf32>
    %7 = arith.maximumf %3, %6 : vector<400x128xf32>
    %c2 = arith.constant 2 : index
    %c0_7 = arith.constant 0 : index
    %c0_8 = arith.constant 0 : index
    %8 = vector.load %arg1[%c2, %c0_7, %c0_8] : memref<4x400x128xbf16, #tpu.memory_space<vmem>>, vector<1x400x128xbf16>
    %9 = vector.shape_cast %8 : vector<1x400x128xbf16> to vector<400x128xbf16>
    %cst_9 = arith.constant dense<0.000000e+00> : vector<400x128xf32>
    %10 = tpu.matmul %9, %0, %cst_9 {dimension_numbers = #tpu.dot_dimension_numbers<[1], [0], [0], [1], [0, 0, 1, 1], [], []>} : vector<400x128xbf16>, vector<128x128xbf16>, vector<400x128xf32> -> vector<400x128xf32>
    %11 = arith.maximumf %7, %10 : vector<400x128xf32>
    %c3 = arith.constant 3 : index
    %c0_10 = arith.constant 0 : index
    %c0_11 = arith.constant 0 : index
    %12 = vector.load %arg1[%c3, %c0_10, %c0_11] : memref<4x400x128xbf16, #tpu.memory_space<vmem>>, vector<1x400x128xbf16>
    %13 = vector.shape_cast %12 : vector<1x400x128xbf16> to vector<400x128xbf16>
    %cst_12 = arith.constant dense<0.000000e+00> : vector<400x128xf32>
    %14 = tpu.matmul %13, %0, %cst_12 {dimension_numbers = #tpu.dot_dimension_numbers<[1], [0], [0], [1], [0, 0, 1, 1], [], []>} : vector<400x128xbf16>, vector<128x128xbf16>, vector<400x128xf32> -> vector<400x128xf32>
    %15 = arith.maximumf %11, %14 : vector<400x128xf32>
    %c0_13 = arith.constant 0 : index
    %c0_14 = arith.constant 0 : index
    %16 = vector.load %arg3[%c0_13, %c0_14] : memref<1x128xf32, #tpu.memory_space<vmem>>, vector<1x128xf32>
    %17 = vector.broadcast %16 : vector<1x128xf32> to vector<400x128xf32>
    %18 = arith.addf %15, %17 : vector<400x128xf32>
    %cst_15 = arith.constant 0.000000e+00 : f32
    %19 = vector.broadcast %cst_15 : f32 to vector<400x128xf32>
    %20 = arith.maximumf %18, %19 : vector<400x128xf32>
    %21 = arith.truncf %20 : vector<400x128xf32> to vector<400x128xbf16>
    %c0_16 = arith.constant 0 : index
    %c0_17 = arith.constant 0 : index
    %22 = vector.load %arg4[%c0_16, %c0_17] : memref<400x128xbf16, #tpu.memory_space<vmem>>, vector<400x128xbf16>
    tpu.vector_store %arg4[%c0_16, %c0_17], %21 {strides = array<i32>} : memref<400x128xbf16, #tpu.memory_space<vmem>>, vector<400x128xbf16>,
    return
  }
  func.func @transform_0(%arg0: i32) -> (i32, i32, i32) {
    %c0_i32 = arith.constant 0 : i32
    %c0_i32_0 = arith.constant 0 : i32
    %c0_i32_1 = arith.constant 0 : i32
    return %c0_i32, %arg0, %c0_i32_0 : i32, i32, i32
  }
  func.func @transform_1(%arg0: i32) -> (i32, i32) {
    %c0_i32 = arith.constant 0 : i32
    %c0_i32_0 = arith.constant 0 : i32
    %c0_i32_1 = arith.constant 0 : i32
    return %c0_i32, %c0_i32_0 : i32, i32
  }
  func.func @transform_2(%arg0: i32) -> (i32, i32) {
    %c0_i32 = arith.constant 0 : i32
    %c0_i32_0 = arith.constant 0 : i32
    %c0_i32_1 = arith.constant 0 : i32
    return %c0_i32, %c0_i32_0 : i32, i32
  }
  func.func @transform_3(%arg0: i32) -> (i32, i32) {
    %c0_i32 = arith.constant 0 : i32
    %c0_i32_0 = arith.constant 0 : i32
    return %arg0, %c0_i32 : i32, i32
  }
}

module attributes {stable_mosaic.version = 11 : i64} {
  func.func @conv2_mlp_kernel(%arg0: i32, %arg1: memref<4x25x16x256xbf16, #tpu.memory_space<vmem>>, %arg2: memref<256x128xbf16, #tpu.memory_space<vmem>>, %arg3: memref<1x128xf32, #tpu.memory_space<vmem>>, %arg4: memref<400x128xbf16, #tpu.memory_space<vmem>>, %arg5: memref<1x128xf32, #tpu.memory_space<vmem>>, %arg6: memref<128x128xbf16, #tpu.memory_space<vmem>>, %arg7: memref<1x128xf32, #tpu.memory_space<vmem>>, %arg8: memref<128x128xbf16, #tpu.memory_space<vmem>>, %arg9: memref<1x128xf32, #tpu.memory_space<vmem>>, %arg10: memref<16x128xf32, #tpu.memory_space<vmem>>) attributes {dimension_semantics = [#tpu.dimension_semantics<parallel>], iteration_bounds = array<i64: 1>, scalar_prefetch = 0 : i64, scratch_operands = 0 : i64, tpu.core_type = #tpu.core_type<tc>, window_params = [{transform_indices = @transform_0, window_bounds = array<i64: 4, 25, 16, 256>}, {pipeline_mode = #tpu.pipeline_mode<synchronous>, transform_indices = @transform_1, window_bounds = array<i64: 256, 128>}, {pipeline_mode = #tpu.pipeline_mode<synchronous>, transform_indices = @transform_2, window_bounds = array<i64: 1, 128>}, {pipeline_mode = #tpu.pipeline_mode<synchronous>, transform_indices = @transform_3, window_bounds = array<i64: 400, 128>}, {pipeline_mode = #tpu.pipeline_mode<synchronous>, transform_indices = @transform_4, window_bounds = array<i64: 1, 128>}, {pipeline_mode = #tpu.pipeline_mode<synchronous>, transform_indices = @transform_5, window_bounds = array<i64: 128, 128>}, {pipeline_mode = #tpu.pipeline_mode<synchronous>, transform_indices = @transform_6, window_bounds = array<i64: 1, 128>}, {pipeline_mode = #tpu.pipeline_mode<synchronous>, transform_indices = @transform_7, window_bounds = array<i64: 128, 128>}, {pipeline_mode = #tpu.pipeline_mode<synchronous>, transform_indices = @transform_8, window_bounds = array<i64: 1, 128>}, {transform_indices = @transform_9, window_bounds = array<i64: 16, 128>}]} {
    %c0 = arith.constant 0 : index
    %c0_0 = arith.constant 0 : index
    %0 = vector.load %arg2[%c0, %c0_0] : memref<256x128xbf16, #tpu.memory_space<vmem>>, vector<256x128xbf16>
    %c0_1 = arith.constant 0 : index
    %c0_2 = arith.constant 0 : index
    %1 = vector.load %arg3[%c0_1, %c0_2] : memref<1x128xf32, #tpu.memory_space<vmem>>, vector<1x128xf32>
    %cst = arith.constant 0.000000e+00 : f32
    %2 = vector.broadcast %cst : f32 to vector<16x128xf32>
    %c0_3 = arith.constant 0 : index
    %c0_4 = arith.constant 0 : index
    %c0_5 = arith.constant 0 : index
    %c0_6 = arith.constant 0 : index
    %3 = vector.load %arg1[%c0_3, %c0_4, %c0_5, %c0_6] : memref<4x25x16x256xbf16, #tpu.memory_space<vmem>>, vector<1x1x16x256xbf16>
    %4 = vector.shape_cast %3 : vector<1x1x16x256xbf16> to vector<16x256xbf16>
    %cst_7 = arith.constant dense<0.000000e+00> : vector<16x128xf32>
    %5 = tpu.matmul %4, %0, %cst_7 {dimension_numbers = #tpu.dot_dimension_numbers<[1], [0], [0], [1], [0, 0, 1, 1], [], []>} : vector<16x256xbf16>, vector<256x128xbf16>, vector<16x128xf32> -> vector<16x128xf32>
    %c1 = arith.constant 1 : index
    %c0_8 = arith.constant 0 : index
    %c0_9 = arith.constant 0 : index
    %c0_10 = arith.constant 0 : index
    %6 = vector.load %arg1[%c1, %c0_8, %c0_9, %c0_10] : memref<4x25x16x256xbf16, #tpu.memory_space<vmem>>, vector<1x1x16x256xbf16>
    %7 = vector.shape_cast %6 : vector<1x1x16x256xbf16> to vector<16x256xbf16>
    %cst_11 = arith.constant dense<0.000000e+00> : vector<16x128xf32>
    %8 = tpu.matmul %7, %0, %cst_11 {dimension_numbers = #tpu.dot_dimension_numbers<[1], [0], [0], [1], [0, 0, 1, 1], [], []>} : vector<16x256xbf16>, vector<256x128xbf16>, vector<16x128xf32> -> vector<16x128xf32>
    %9 = arith.maximumf %5, %8 : vector<16x128xf32>
    %c2 = arith.constant 2 : index
    %c0_12 = arith.constant 0 : index
    %c0_13 = arith.constant 0 : index
    %c0_14 = arith.constant 0 : index
    %10 = vector.load %arg1[%c2, %c0_12, %c0_13, %c0_14] : memref<4x25x16x256xbf16, #tpu.memory_space<vmem>>, vector<1x1x16x256xbf16>
    %11 = vector.shape_cast %10 : vector<1x1x16x256xbf16> to vector<16x256xbf16>
    %cst_15 = arith.constant dense<0.000000e+00> : vector<16x128xf32>
    %12 = tpu.matmul %11, %0, %cst_15 {dimension_numbers = #tpu.dot_dimension_numbers<[1], [0], [0], [1], [0, 0, 1, 1], [], []>} : vector<16x256xbf16>, vector<256x128xbf16>, vector<16x128xf32> -> vector<16x128xf32>
    %13 = arith.maximumf %9, %12 : vector<16x128xf32>
    %c3 = arith.constant 3 : index
    %c0_16 = arith.constant 0 : index
    %c0_17 = arith.constant 0 : index
    %c0_18 = arith.constant 0 : index
    %14 = vector.load %arg1[%c3, %c0_16, %c0_17, %c0_18] : memref<4x25x16x256xbf16, #tpu.memory_space<vmem>>, vector<1x1x16x256xbf16>
    %15 = vector.shape_cast %14 : vector<1x1x16x256xbf16> to vector<16x256xbf16>
    %cst_19 = arith.constant dense<0.000000e+00> : vector<16x128xf32>
    %16 = tpu.matmul %15, %0, %cst_19 {dimension_numbers = #tpu.dot_dimension_numbers<[1], [0], [0], [1], [0, 0, 1, 1], [], []>} : vector<16x256xbf16>, vector<256x128xbf16>, vector<16x128xf32> -> vector<16x128xf32>
    %17 = arith.maximumf %13, %16 : vector<16x128xf32>
    %18 = vector.broadcast %1 : vector<1x128xf32> to vector<16x128xf32>
    %19 = arith.addf %17, %18 : vector<16x128xf32>
    %cst_20 = arith.constant 0.000000e+00 : f32
    %20 = vector.broadcast %cst_20 : f32 to vector<16x128xf32>
    %21 = arith.maximumf %19, %20 : vector<16x128xf32>
    %22 = vector.extract_strided_slice %21 {offsets = [0, 0], sizes = [16, 16], strides = [1, 1]} : vector<16x128xf32> to vector<16x16xf32>
    %23 = arith.truncf %22 : vector<16x16xf32> to vector<16x16xbf16>
    %c0_21 = arith.constant 0 : index
    %c0_22 = arith.constant 0 : index
    %24 = vector.load %arg4[%c0_21, %c0_22] : memref<400x128xbf16, #tpu.memory_space<vmem>>, vector<16x128xbf16>
    %cst_23 = arith.constant dense<0.000000e+00> : vector<16x128xf32>
    %25 = tpu.matmul %23, %24, %cst_23 {dimension_numbers = #tpu.dot_dimension_numbers<[1], [0], [0], [1], [0, 0, 1, 1], [], []>} : vector<16x16xbf16>, vector<16x128xbf16>, vector<16x128xf32> -> vector<16x128xf32>
    %26 = arith.addf %2, %25 : vector<16x128xf32>
    %c0_24 = arith.constant 0 : index
    %c1_25 = arith.constant 1 : index
    %c0_26 = arith.constant 0 : index
    %c0_27 = arith.constant 0 : index
    %27 = vector.load %arg1[%c0_24, %c1_25, %c0_26, %c0_27] : memref<4x25x16x256xbf16, #tpu.memory_space<vmem>>, vector<1x1x16x256xbf16>
    %28 = vector.shape_cast %27 : vector<1x1x16x256xbf16> to vector<16x256xbf16>
    %cst_28 = arith.constant dense<0.000000e+00> : vector<16x128xf32>
    %29 = tpu.matmul %28, %0, %cst_28 {dimension_numbers = #tpu.dot_dimension_numbers<[1], [0], [0], [1], [0, 0, 1, 1], [], []>} : vector<16x256xbf16>, vector<256x128xbf16>, vector<16x128xf32> -> vector<16x128xf32>
    %c1_29 = arith.constant 1 : index
    %c1_30 = arith.constant 1 : index
    %c0_31 = arith.constant 0 : index
    %c0_32 = arith.constant 0 : index
    %30 = vector.load %arg1[%c1_29, %c1_30, %c0_31, %c0_32] : memref<4x25x16x256xbf16, #tpu.memory_space<vmem>>, vector<1x1x16x256xbf16>
    %31 = vector.shape_cast %30 : vector<1x1x16x256xbf16> to vector<16x256xbf16>
    %cst_33 = arith.constant dense<0.000000e+00> : vector<16x128xf32>
    %32 = tpu.matmul %31, %0, %cst_33 {dimension_numbers = #tpu.dot_dimension_numbers<[1], [0], [0], [1], [0, 0, 1, 1], [], []>} : vector<16x256xbf16>, vector<256x128xbf16>, vector<16x128xf32> -> vector<16x128xf32>
    %33 = arith.maximumf %29, %32 : vector<16x128xf32>
    %c2_34 = arith.constant 2 : index
    %c1_35 = arith.constant 1 : index
    %c0_36 = arith.constant 0 : index
    %c0_37 = arith.constant 0 : index
    %34 = vector.load %arg1[%c2_34, %c1_35, %c0_36, %c0_37] : memref<4x25x16x256xbf16, #tpu.memory_space<vmem>>, vector<1x1x16x256xbf16>
    %35 = vector.shape_cast %34 : vector<1x1x16x256xbf16> to vector<16x256xbf16>
    %cst_38 = arith.constant dense<0.000000e+00> : vector<16x128xf32>
    %36 = tpu.matmul %35, %0, %cst_38 {dimension_numbers = #tpu.dot_dimension_numbers<[1], [0], [0], [1], [0, 0, 1, 1], [], []>} : vector<16x256xbf16>, vector<256x128xbf16>, vector<16x128xf32> -> vector<16x128xf32>
    %37 = arith.maximumf %33, %36 : vector<16x128xf32>
    %c3_39 = arith.constant 3 : index
    %c1_40 = arith.constant 1 : index
    %c0_41 = arith.constant 0 : index
    %c0_42 = arith.constant 0 : index
    %38 = vector.load %arg1[%c3_39, %c1_40, %c0_41, %c0_42] : memref<4x25x16x256xbf16, #tpu.memory_space<vmem>>, vector<1x1x16x256xbf16>
    %39 = vector.shape_cast %38 : vector<1x1x16x256xbf16> to vector<16x256xbf16>
    %cst_43 = arith.constant dense<0.000000e+00> : vector<16x128xf32>
    %40 = tpu.matmul %39, %0, %cst_43 {dimension_numbers = #tpu.dot_dimension_numbers<[1], [0], [0], [1], [0, 0, 1, 1], [], []>} : vector<16x256xbf16>, vector<256x128xbf16>, vector<16x128xf32> -> vector<16x128xf32>
    %41 = arith.maximumf %37, %40 : vector<16x128xf32>
    %42 = vector.broadcast %1 : vector<1x128xf32> to vector<16x128xf32>
    %43 = arith.addf %41, %42 : vector<16x128xf32>
    %cst_44 = arith.constant 0.000000e+00 : f32
    %44 = vector.broadcast %cst_44 : f32 to vector<16x128xf32>
    %45 = arith.maximumf %43, %44 : vector<16x128xf32>
    %46 = vector.extract_strided_slice %45 {offsets = [0, 0], sizes = [16, 16], strides = [1, 1]} : vector<16x128xf32> to vector<16x16xf32>
    %47 = arith.truncf %46 : vector<16x16xf32> to vector<16x16xbf16>
    %c16 = arith.constant 16 : index
    %c0_45 = arith.constant 0 : index
    %48 = vector.load %arg4[%c16, %c0_45] : memref<400x128xbf16, #tpu.memory_space<vmem>>, vector<16x128xbf16>
    %cst_46 = arith.constant dense<0.000000e+00> : vector<16x128xf32>
    %49 = tpu.matmul %47, %48, %cst_46 {dimension_numbers = #tpu.dot_dimension_numbers<[1], [0], [0], [1], [0, 0, 1, 1], [], []>} : vector<16x16xbf16>, vector<16x128xbf16>, vector<16x128xf32> -> vector<16x128xf32>
    %50 = arith.addf %26, %49 : vector<16x128xf32>
    %c0_47 = arith.constant 0 : index
    %c2_48 = arith.constant 2 : index
    %c0_49 = arith.constant 0 : index
    %c0_50 = arith.constant 0 : index
    %51 = vector.load %arg1[%c0_47, %c2_48, %c0_49, %c0_50] : memref<4x25x16x256xbf16, #tpu.memory_space<vmem>>, vector<1x1x16x256xbf16>
    %52 = vector.shape_cast %51 : vector<1x1x16x256xbf16> to vector<16x256xbf16>
    %cst_51 = arith.constant dense<0.000000e+00> : vector<16x128xf32>
    %53 = tpu.matmul %52, %0, %cst_51 {dimension_numbers = #tpu.dot_dimension_numbers<[1], [0], [0], [1], [0, 0, 1, 1], [], []>} : vector<16x256xbf16>, vector<256x128xbf16>, vector<16x128xf32> -> vector<16x128xf32>
    %c1_52 = arith.constant 1 : index
    %c2_53 = arith.constant 2 : index
    %c0_54 = arith.constant 0 : index
    %c0_55 = arith.constant 0 : index
    %54 = vector.load %arg1[%c1_52, %c2_53, %c0_54, %c0_55] : memref<4x25x16x256xbf16, #tpu.memory_space<vmem>>, vector<1x1x16x256xbf16>
    %55 = vector.shape_cast %54 : vector<1x1x16x256xbf16> to vector<16x256xbf16>
    %cst_56 = arith.constant dense<0.000000e+00> : vector<16x128xf32>
    %56 = tpu.matmul %55, %0, %cst_56 {dimension_numbers = #tpu.dot_dimension_numbers<[1], [0], [0], [1], [0, 0, 1, 1], [], []>} : vector<16x256xbf16>, vector<256x128xbf16>, vector<16x128xf32> -> vector<16x128xf32>
    %57 = arith.maximumf %53, %56 : vector<16x128xf32>
    %c2_57 = arith.constant 2 : index
    %c2_58 = arith.constant 2 : index
    %c0_59 = arith.constant 0 : index
    %c0_60 = arith.constant 0 : index
    %58 = vector.load %arg1[%c2_57, %c2_58, %c0_59, %c0_60] : memref<4x25x16x256xbf16, #tpu.memory_space<vmem>>, vector<1x1x16x256xbf16>
    %59 = vector.shape_cast %58 : vector<1x1x16x256xbf16> to vector<16x256xbf16>
    %cst_61 = arith.constant dense<0.000000e+00> : vector<16x128xf32>
    %60 = tpu.matmul %59, %0, %cst_61 {dimension_numbers = #tpu.dot_dimension_numbers<[1], [0], [0], [1], [0, 0, 1, 1], [], []>} : vector<16x256xbf16>, vector<256x128xbf16>, vector<16x128xf32> -> vector<16x128xf32>
    %61 = arith.maximumf %57, %60 : vector<16x128xf32>
    %c3_62 = arith.constant 3 : index
    %c2_63 = arith.constant 2 : index
    %c0_64 = arith.constant 0 : index
    %c0_65 = arith.constant 0 : index
    %62 = vector.load %arg1[%c3_62, %c2_63, %c0_64, %c0_65] : memref<4x25x16x256xbf16, #tpu.memory_space<vmem>>, vector<1x1x16x256xbf16>
    %63 = vector.shape_cast %62 : vector<1x1x16x256xbf16> to vector<16x256xbf16>
    %cst_66 = arith.constant dense<0.000000e+00> : vector<16x128xf32>
    %64 = tpu.matmul %63, %0, %cst_66 {dimension_numbers = #tpu.dot_dimension_numbers<[1], [0], [0], [1], [0, 0, 1, 1], [], []>} : vector<16x256xbf16>, vector<256x128xbf16>, vector<16x128xf32> -> vector<16x128xf32>
    %65 = arith.maximumf %61, %64 : vector<16x128xf32>
    %66 = vector.broadcast %1 : vector<1x128xf32> to vector<16x128xf32>
    %67 = arith.addf %65, %66 : vector<16x128xf32>
    %cst_67 = arith.constant 0.000000e+00 : f32
    %68 = vector.broadcast %cst_67 : f32 to vector<16x128xf32>
    %69 = arith.maximumf %67, %68 : vector<16x128xf32>
    %70 = vector.extract_strided_slice %69 {offsets = [0, 0], sizes = [16, 16], strides = [1, 1]} : vector<16x128xf32> to vector<16x16xf32>
    %71 = arith.truncf %70 : vector<16x16xf32> to vector<16x16xbf16>
    %c32 = arith.constant 32 : index
    %c0_68 = arith.constant 0 : index
    %72 = vector.load %arg4[%c32, %c0_68] : memref<400x128xbf16, #tpu.memory_space<vmem>>, vector<16x128xbf16>
    %cst_69 = arith.constant dense<0.000000e+00> : vector<16x128xf32>
    %73 = tpu.matmul %71, %72, %cst_69 {dimension_numbers = #tpu.dot_dimension_numbers<[1], [0], [0], [1], [0, 0, 1, 1], [], []>} : vector<16x16xbf16>, vector<16x128xbf16>, vector<16x128xf32> -> vector<16x128xf32>
    %74 = arith.addf %50, %73 : vector<16x128xf32>
    %c0_70 = arith.constant 0 : index
    %c3_71 = arith.constant 3 : index
    %c0_72 = arith.constant 0 : index
    %c0_73 = arith.constant 0 : index
    %75 = vector.load %arg1[%c0_70, %c3_71, %c0_72, %c0_73] : memref<4x25x16x256xbf16, #tpu.memory_space<vmem>>, vector<1x1x16x256xbf16>
    %76 = vector.shape_cast %75 : vector<1x1x16x256xbf16> to vector<16x256xbf16>
    %cst_74 = arith.constant dense<0.000000e+00> : vector<16x128xf32>
    %77 = tpu.matmul %76, %0, %cst_74 {dimension_numbers = #tpu.dot_dimension_numbers<[1], [0], [0], [1], [0, 0, 1, 1], [], []>} : vector<16x256xbf16>, vector<256x128xbf16>, vector<16x128xf32> -> vector<16x128xf32>
    %c1_75 = arith.constant 1 : index
    %c3_76 = arith.constant 3 : index
    %c0_77 = arith.constant 0 : index
    %c0_78 = arith.constant 0 : index
    %78 = vector.load %arg1[%c1_75, %c3_76, %c0_77, %c0_78] : memref<4x25x16x256xbf16, #tpu.memory_space<vmem>>, vector<1x1x16x256xbf16>
    %79 = vector.shape_cast %78 : vector<1x1x16x256xbf16> to vector<16x256xbf16>
    %cst_79 = arith.constant dense<0.000000e+00> : vector<16x128xf32>
    %80 = tpu.matmul %79, %0, %cst_79 {dimension_numbers = #tpu.dot_dimension_numbers<[1], [0], [0], [1], [0, 0, 1, 1], [], []>} : vector<16x256xbf16>, vector<256x128xbf16>, vector<16x128xf32> -> vector<16x128xf32>
    %81 = arith.maximumf %77, %80 : vector<16x128xf32>
    %c2_80 = arith.constant 2 : index
    %c3_81 = arith.constant 3 : index
    %c0_82 = arith.constant 0 : index
    %c0_83 = arith.constant 0 : index
    %82 = vector.load %arg1[%c2_80, %c3_81, %c0_82, %c0_83] : memref<4x25x16x256xbf16, #tpu.memory_space<vmem>>, vector<1x1x16x256xbf16>
    %83 = vector.shape_cast %82 : vector<1x1x16x256xbf16> to vector<16x256xbf16>
    %cst_84 = arith.constant dense<0.000000e+00> : vector<16x128xf32>
    %84 = tpu.matmul %83, %0, %cst_84 {dimension_numbers = #tpu.dot_dimension_numbers<[1], [0], [0], [1], [0, 0, 1, 1], [], []>} : vector<16x256xbf16>, vector<256x128xbf16>, vector<16x128xf32> -> vector<16x128xf32>
    %85 = arith.maximumf %81, %84 : vector<16x128xf32>
    %c3_85 = arith.constant 3 : index
    %c3_86 = arith.constant 3 : index
    %c0_87 = arith.constant 0 : index
    %c0_88 = arith.constant 0 : index
    %86 = vector.load %arg1[%c3_85, %c3_86, %c0_87, %c0_88] : memref<4x25x16x256xbf16, #tpu.memory_space<vmem>>, vector<1x1x16x256xbf16>
    %87 = vector.shape_cast %86 : vector<1x1x16x256xbf16> to vector<16x256xbf16>
    %cst_89 = arith.constant dense<0.000000e+00> : vector<16x128xf32>
    %88 = tpu.matmul %87, %0, %cst_89 {dimension_numbers = #tpu.dot_dimension_numbers<[1], [0], [0], [1], [0, 0, 1, 1], [], []>} : vector<16x256xbf16>, vector<256x128xbf16>, vector<16x128xf32> -> vector<16x128xf32>
    %89 = arith.maximumf %85, %88 : vector<16x128xf32>
    %90 = vector.broadcast %1 : vector<1x128xf32> to vector<16x128xf32>
    %91 = arith.addf %89, %90 : vector<16x128xf32>
    %cst_90 = arith.constant 0.000000e+00 : f32
    %92 = vector.broadcast %cst_90 : f32 to vector<16x128xf32>
    %93 = arith.maximumf %91, %92 : vector<16x128xf32>
    %94 = vector.extract_strided_slice %93 {offsets = [0, 0], sizes = [16, 16], strides = [1, 1]} : vector<16x128xf32> to vector<16x16xf32>
    %95 = arith.truncf %94 : vector<16x16xf32> to vector<16x16xbf16>
    %c48 = arith.constant 48 : index
    %c0_91 = arith.constant 0 : index
    %96 = vector.load %arg4[%c48, %c0_91] : memref<400x128xbf16, #tpu.memory_space<vmem>>, vector<16x128xbf16>
    %cst_92 = arith.constant dense<0.000000e+00> : vector<16x128xf32>
    %97 = tpu.matmul %95, %96, %cst_92 {dimension_numbers = #tpu.dot_dimension_numbers<[1], [0], [0], [1], [0, 0, 1, 1], [], []>} : vector<16x16xbf16>, vector<16x128xbf16>, vector<16x128xf32> -> vector<16x128xf32>
    %98 = arith.addf %74, %97 : vector<16x128xf32>
    %c0_93 = arith.constant 0 : index
    %c4 = arith.constant 4 : index
    %c0_94 = arith.constant 0 : index
    %c0_95 = arith.constant 0 : index
    %99 = vector.load %arg1[%c0_93, %c4, %c0_94, %c0_95] : memref<4x25x16x256xbf16, #tpu.memory_space<vmem>>, vector<1x1x16x256xbf16>
    %100 = vector.shape_cast %99 : vector<1x1x16x256xbf16> to vector<16x256xbf16>
    %cst_96 = arith.constant dense<0.000000e+00> : vector<16x128xf32>
    %101 = tpu.matmul %100, %0, %cst_96 {dimension_numbers = #tpu.dot_dimension_numbers<[1], [0], [0], [1], [0, 0, 1, 1], [], []>} : vector<16x256xbf16>, vector<256x128xbf16>, vector<16x128xf32> -> vector<16x128xf32>
    %c1_97 = arith.constant 1 : index
    %c4_98 = arith.constant 4 : index
    %c0_99 = arith.constant 0 : index
    %c0_100 = arith.constant 0 : index
    %102 = vector.load %arg1[%c1_97, %c4_98, %c0_99, %c0_100] : memref<4x25x16x256xbf16, #tpu.memory_space<vmem>>, vector<1x1x16x256xbf16>
    %103 = vector.shape_cast %102 : vector<1x1x16x256xbf16> to vector<16x256xbf16>
    %cst_101 = arith.constant dense<0.000000e+00> : vector<16x128xf32>
    %104 = tpu.matmul %103, %0, %cst_101 {dimension_numbers = #tpu.dot_dimension_numbers<[1], [0], [0], [1], [0, 0, 1, 1], [], []>} : vector<16x256xbf16>, vector<256x128xbf16>, vector<16x128xf32> -> vector<16x128xf32>
    %105 = arith.maximumf %101, %104 : vector<16x128xf32>
    %c2_102 = arith.constant 2 : index
    %c4_103 = arith.constant 4 : index
    %c0_104 = arith.constant 0 : index
    %c0_105 = arith.constant 0 : index
    %106 = vector.load %arg1[%c2_102, %c4_103, %c0_104, %c0_105] : memref<4x25x16x256xbf16, #tpu.memory_space<vmem>>, vector<1x1x16x256xbf16>
    %107 = vector.shape_cast %106 : vector<1x1x16x256xbf16> to vector<16x256xbf16>
    %cst_106 = arith.constant dense<0.000000e+00> : vector<16x128xf32>
    %108 = tpu.matmul %107, %0, %cst_106 {dimension_numbers = #tpu.dot_dimension_numbers<[1], [0], [0], [1], [0, 0, 1, 1], [], []>} : vector<16x256xbf16>, vector<256x128xbf16>, vector<16x128xf32> -> vector<16x128xf32>
    %109 = arith.maximumf %105, %108 : vector<16x128xf32>
    %c3_107 = arith.constant 3 : index
    %c4_108 = arith.constant 4 : index
    %c0_109 = arith.constant 0 : index
    %c0_110 = arith.constant 0 : index
    %110 = vector.load %arg1[%c3_107, %c4_108, %c0_109, %c0_110] : memref<4x25x16x256xbf16, #tpu.memory_space<vmem>>, vector<1x1x16x256xbf16>
    %111 = vector.shape_cast %110 : vector<1x1x16x256xbf16> to vector<16x256xbf16>
    %cst_111 = arith.constant dense<0.000000e+00> : vector<16x128xf32>
    %112 = tpu.matmul %111, %0, %cst_111 {dimension_numbers = #tpu.dot_dimension_numbers<[1], [0], [0], [1], [0, 0, 1, 1], [], []>} : vector<16x256xbf16>, vector<256x128xbf16>, vector<16x128xf32> -> vector<16x128xf32>
    %113 = arith.maximumf %109, %112 : vector<16x128xf32>
    %114 = vector.broadcast %1 : vector<1x128xf32> to vector<16x128xf32>
    %115 = arith.addf %113, %114 : vector<16x128xf32>
    %cst_112 = arith.constant 0.000000e+00 : f32
    %116 = vector.broadcast %cst_112 : f32 to vector<16x128xf32>
    %117 = arith.maximumf %115, %116 : vector<16x128xf32>
    %118 = vector.extract_strided_slice %117 {offsets = [0, 0], sizes = [16, 16], strides = [1, 1]} : vector<16x128xf32> to vector<16x16xf32>
    %119 = arith.truncf %118 : vector<16x16xf32> to vector<16x16xbf16>
    %c64 = arith.constant 64 : index
    %c0_113 = arith.constant 0 : index
    %120 = vector.load %arg4[%c64, %c0_113] : memref<400x128xbf16, #tpu.memory_space<vmem>>, vector<16x128xbf16>
    %cst_114 = arith.constant dense<0.000000e+00> : vector<16x128xf32>
    %121 = tpu.matmul %119, %120, %cst_114 {dimension_numbers = #tpu.dot_dimension_numbers<[1], [0], [0], [1], [0, 0, 1, 1], [], []>} : vector<16x16xbf16>, vector<16x128xbf16>, vector<16x128xf32> -> vector<16x128xf32>
    %122 = arith.addf %98, %121 : vector<16x128xf32>
    %c0_115 = arith.constant 0 : index
    %c5 = arith.constant 5 : index
    %c0_116 = arith.constant 0 : index
    %c0_117 = arith.constant 0 : index
    %123 = vector.load %arg1[%c0_115, %c5, %c0_116, %c0_117] : memref<4x25x16x256xbf16, #tpu.memory_space<vmem>>, vector<1x1x16x256xbf16>
    %124 = vector.shape_cast %123 : vector<1x1x16x256xbf16> to vector<16x256xbf16>
    %cst_118 = arith.constant dense<0.000000e+00> : vector<16x128xf32>
    %125 = tpu.matmul %124, %0, %cst_118 {dimension_numbers = #tpu.dot_dimension_numbers<[1], [0], [0], [1], [0, 0, 1, 1], [], []>} : vector<16x256xbf16>, vector<256x128xbf16>, vector<16x128xf32> -> vector<16x128xf32>
    %c1_119 = arith.constant 1 : index
    %c5_120 = arith.constant 5 : index
    %c0_121 = arith.constant 0 : index
    %c0_122 = arith.constant 0 : index
    %126 = vector.load %arg1[%c1_119, %c5_120, %c0_121, %c0_122] : memref<4x25x16x256xbf16, #tpu.memory_space<vmem>>, vector<1x1x16x256xbf16>
    %127 = vector.shape_cast %126 : vector<1x1x16x256xbf16> to vector<16x256xbf16>
    %cst_123 = arith.constant dense<0.000000e+00> : vector<16x128xf32>
    %128 = tpu.matmul %127, %0, %cst_123 {dimension_numbers = #tpu.dot_dimension_numbers<[1], [0], [0], [1], [0, 0, 1, 1], [], []>} : vector<16x256xbf16>, vector<256x128xbf16>, vector<16x128xf32> -> vector<16x128xf32>
    %129 = arith.maximumf %125, %128 : vector<16x128xf32>
    %c2_124 = arith.constant 2 : index
    %c5_125 = arith.constant 5 : index
    %c0_126 = arith.constant 0 : index
    %c0_127 = arith.constant 0 : index
    %130 = vector.load %arg1[%c2_124, %c5_125, %c0_126, %c0_127] : memref<4x25x16x256xbf16, #tpu.memory_space<vmem>>, vector<1x1x16x256xbf16>
    %131 = vector.shape_cast %130 : vector<1x1x16x256xbf16> to vector<16x256xbf16>
    %cst_128 = arith.constant dense<0.000000e+00> : vector<16x128xf32>
    %132 = tpu.matmul %131, %0, %cst_128 {dimension_numbers = #tpu.dot_dimension_numbers<[1], [0], [0], [1], [0, 0, 1, 1], [], []>} : vector<16x256xbf16>, vector<256x128xbf16>, vector<16x128xf32> -> vector<16x128xf32>
    %133 = arith.maximumf %129, %132 : vector<16x128xf32>
    %c3_129 = arith.constant 3 : index
    %c5_130 = arith.constant 5 : index
    %c0_131 = arith.constant 0 : index
    %c0_132 = arith.constant 0 : index
    %134 = vector.load %arg1[%c3_129, %c5_130, %c0_131, %c0_132] : memref<4x25x16x256xbf16, #tpu.memory_space<vmem>>, vector<1x1x16x256xbf16>
    %135 = vector.shape_cast %134 : vector<1x1x16x256xbf16> to vector<16x256xbf16>
    %cst_133 = arith.constant dense<0.000000e+00> : vector<16x128xf32>
    %136 = tpu.matmul %135, %0, %cst_133 {dimension_numbers = #tpu.dot_dimension_numbers<[1], [0], [0], [1], [0, 0, 1, 1], [], []>} : vector<16x256xbf16>, vector<256x128xbf16>, vector<16x128xf32> -> vector<16x128xf32>
    %137 = arith.maximumf %133, %136 : vector<16x128xf32>
    %138 = vector.broadcast %1 : vector<1x128xf32> to vector<16x128xf32>
    %139 = arith.addf %137, %138 : vector<16x128xf32>
    %cst_134 = arith.constant 0.000000e+00 : f32
    %140 = vector.broadcast %cst_134 : f32 to vector<16x128xf32>
    %141 = arith.maximumf %139, %140 : vector<16x128xf32>
    %142 = vector.extract_strided_slice %141 {offsets = [0, 0], sizes = [16, 16], strides = [1, 1]} : vector<16x128xf32> to vector<16x16xf32>
    %143 = arith.truncf %142 : vector<16x16xf32> to vector<16x16xbf16>
    %c80 = arith.constant 80 : index
    %c0_135 = arith.constant 0 : index
    %144 = vector.load %arg4[%c80, %c0_135] : memref<400x128xbf16, #tpu.memory_space<vmem>>, vector<16x128xbf16>
    %cst_136 = arith.constant dense<0.000000e+00> : vector<16x128xf32>
    %145 = tpu.matmul %143, %144, %cst_136 {dimension_numbers = #tpu.dot_dimension_numbers<[1], [0], [0], [1], [0, 0, 1, 1], [], []>} : vector<16x16xbf16>, vector<16x128xbf16>, vector<16x128xf32> -> vector<16x128xf32>
    %146 = arith.addf %122, %145 : vector<16x128xf32>
    %c0_137 = arith.constant 0 : index
    %c6 = arith.constant 6 : index
    %c0_138 = arith.constant 0 : index
    %c0_139 = arith.constant 0 : index
    %147 = vector.load %arg1[%c0_137, %c6, %c0_138, %c0_139] : memref<4x25x16x256xbf16, #tpu.memory_space<vmem>>, vector<1x1x16x256xbf16>
    %148 = vector.shape_cast %147 : vector<1x1x16x256xbf16> to vector<16x256xbf16>
    %cst_140 = arith.constant dense<0.000000e+00> : vector<16x128xf32>
    %149 = tpu.matmul %148, %0, %cst_140 {dimension_numbers = #tpu.dot_dimension_numbers<[1], [0], [0], [1], [0, 0, 1, 1], [], []>} : vector<16x256xbf16>, vector<256x128xbf16>, vector<16x128xf32> -> vector<16x128xf32>
    %c1_141 = arith.constant 1 : index
    %c6_142 = arith.constant 6 : index
    %c0_143 = arith.constant 0 : index
    %c0_144 = arith.constant 0 : index
    %150 = vector.load %arg1[%c1_141, %c6_142, %c0_143, %c0_144] : memref<4x25x16x256xbf16, #tpu.memory_space<vmem>>, vector<1x1x16x256xbf16>
    %151 = vector.shape_cast %150 : vector<1x1x16x256xbf16> to vector<16x256xbf16>
    %cst_145 = arith.constant dense<0.000000e+00> : vector<16x128xf32>
    %152 = tpu.matmul %151, %0, %cst_145 {dimension_numbers = #tpu.dot_dimension_numbers<[1], [0], [0], [1], [0, 0, 1, 1], [], []>} : vector<16x256xbf16>, vector<256x128xbf16>, vector<16x128xf32> -> vector<16x128xf32>
    %153 = arith.maximumf %149, %152 : vector<16x128xf32>
    %c2_146 = arith.constant 2 : index
    %c6_147 = arith.constant 6 : index
    %c0_148 = arith.constant 0 : index
    %c0_149 = arith.constant 0 : index
    %154 = vector.load %arg1[%c2_146, %c6_147, %c0_148, %c0_149] : memref<4x25x16x256xbf16, #tpu.memory_space<vmem>>, vector<1x1x16x256xbf16>
    %155 = vector.shape_cast %154 : vector<1x1x16x256xbf16> to vector<16x256xbf16>
    %cst_150 = arith.constant dense<0.000000e+00> : vector<16x128xf32>
    %156 = tpu.matmul %155, %0, %cst_150 {dimension_numbers = #tpu.dot_dimension_numbers<[1], [0], [0], [1], [0, 0, 1, 1], [], []>} : vector<16x256xbf16>, vector<256x128xbf16>, vector<16x128xf32> -> vector<16x128xf32>
    %157 = arith.maximumf %153, %156 : vector<16x128xf32>
    %c3_151 = arith.constant 3 : index
    %c6_152 = arith.constant 6 : index
    %c0_153 = arith.constant 0 : index
    %c0_154 = arith.constant 0 : index
    %158 = vector.load %arg1[%c3_151, %c6_152, %c0_153, %c0_154] : memref<4x25x16x256xbf16, #tpu.memory_space<vmem>>, vector<1x1x16x256xbf16>
    %159 = vector.shape_cast %158 : vector<1x1x16x256xbf16> to vector<16x256xbf16>
    %cst_155 = arith.constant dense<0.000000e+00> : vector<16x128xf32>
    %160 = tpu.matmul %159, %0, %cst_155 {dimension_numbers = #tpu.dot_dimension_numbers<[1], [0], [0], [1], [0, 0, 1, 1], [], []>} : vector<16x256xbf16>, vector<256x128xbf16>, vector<16x128xf32> -> vector<16x128xf32>
    %161 = arith.maximumf %157, %160 : vector<16x128xf32>
    %162 = vector.broadcast %1 : vector<1x128xf32> to vector<16x128xf32>
    %163 = arith.addf %161, %162 : vector<16x128xf32>
    %cst_156 = arith.constant 0.000000e+00 : f32
    %164 = vector.broadcast %cst_156 : f32 to vector<16x128xf32>
    %165 = arith.maximumf %163, %164 : vector<16x128xf32>
    %166 = vector.extract_strided_slice %165 {offsets = [0, 0], sizes = [16, 16], strides = [1, 1]} : vector<16x128xf32> to vector<16x16xf32>
    %167 = arith.truncf %166 : vector<16x16xf32> to vector<16x16xbf16>
    %c96 = arith.constant 96 : index
    %c0_157 = arith.constant 0 : index
    %168 = vector.load %arg4[%c96, %c0_157] : memref<400x128xbf16, #tpu.memory_space<vmem>>, vector<16x128xbf16>
    %cst_158 = arith.constant dense<0.000000e+00> : vector<16x128xf32>
    %169 = tpu.matmul %167, %168, %cst_158 {dimension_numbers = #tpu.dot_dimension_numbers<[1], [0], [0], [1], [0, 0, 1, 1], [], []>} : vector<16x16xbf16>, vector<16x128xbf16>, vector<16x128xf32> -> vector<16x128xf32>
    %170 = arith.addf %146, %169 : vector<16x128xf32>
    %c0_159 = arith.constant 0 : index
    %c7 = arith.constant 7 : index
    %c0_160 = arith.constant 0 : index
    %c0_161 = arith.constant 0 : index
    %171 = vector.load %arg1[%c0_159, %c7, %c0_160, %c0_161] : memref<4x25x16x256xbf16, #tpu.memory_space<vmem>>, vector<1x1x16x256xbf16>
    %172 = vector.shape_cast %171 : vector<1x1x16x256xbf16> to vector<16x256xbf16>
    %cst_162 = arith.constant dense<0.000000e+00> : vector<16x128xf32>
    %173 = tpu.matmul %172, %0, %cst_162 {dimension_numbers = #tpu.dot_dimension_numbers<[1], [0], [0], [1], [0, 0, 1, 1], [], []>} : vector<16x256xbf16>, vector<256x128xbf16>, vector<16x128xf32> -> vector<16x128xf32>
    %c1_163 = arith.constant 1 : index
    %c7_164 = arith.constant 7 : index
    %c0_165 = arith.constant 0 : index
    %c0_166 = arith.constant 0 : index
    %174 = vector.load %arg1[%c1_163, %c7_164, %c0_165, %c0_166] : memref<4x25x16x256xbf16, #tpu.memory_space<vmem>>, vector<1x1x16x256xbf16>
    %175 = vector.shape_cast %174 : vector<1x1x16x256xbf16> to vector<16x256xbf16>
    %cst_167 = arith.constant dense<0.000000e+00> : vector<16x128xf32>
    %176 = tpu.matmul %175, %0, %cst_167 {dimension_numbers = #tpu.dot_dimension_numbers<[1], [0], [0], [1], [0, 0, 1, 1], [], []>} : vector<16x256xbf16>, vector<256x128xbf16>, vector<16x128xf32> -> vector<16x128xf32>
    %177 = arith.maximumf %173, %176 : vector<16x128xf32>
    %c2_168 = arith.constant 2 : index
    %c7_169 = arith.constant 7 : index
    %c0_170 = arith.constant 0 : index
    %c0_171 = arith.constant 0 : index
    %178 = vector.load %arg1[%c2_168, %c7_169, %c0_170, %c0_171] : memref<4x25x16x256xbf16, #tpu.memory_space<vmem>>, vector<1x1x16x256xbf16>
    %179 = vector.shape_cast %178 : vector<1x1x16x256xbf16> to vector<16x256xbf16>
    %cst_172 = arith.constant dense<0.000000e+00> : vector<16x128xf32>
    %180 = tpu.matmul %179, %0, %cst_172 {dimension_numbers = #tpu.dot_dimension_numbers<[1], [0], [0], [1], [0, 0, 1, 1], [], []>} : vector<16x256xbf16>, vector<256x128xbf16>, vector<16x128xf32> -> vector<16x128xf32>
    %181 = arith.maximumf %177, %180 : vector<16x128xf32>
    %c3_173 = arith.constant 3 : index
    %c7_174 = arith.constant 7 : index
    %c0_175 = arith.constant 0 : index
    %c0_176 = arith.constant 0 : index
    %182 = vector.load %arg1[%c3_173, %c7_174, %c0_175, %c0_176] : memref<4x25x16x256xbf16, #tpu.memory_space<vmem>>, vector<1x1x16x256xbf16>
    %183 = vector.shape_cast %182 : vector<1x1x16x256xbf16> to vector<16x256xbf16>
    %cst_177 = arith.constant dense<0.000000e+00> : vector<16x128xf32>
    %184 = tpu.matmul %183, %0, %cst_177 {dimension_numbers = #tpu.dot_dimension_numbers<[1], [0], [0], [1], [0, 0, 1, 1], [], []>} : vector<16x256xbf16>, vector<256x128xbf16>, vector<16x128xf32> -> vector<16x128xf32>
    %185 = arith.maximumf %181, %184 : vector<16x128xf32>
    %186 = vector.broadcast %1 : vector<1x128xf32> to vector<16x128xf32>
    %187 = arith.addf %185, %186 : vector<16x128xf32>
    %cst_178 = arith.constant 0.000000e+00 : f32
    %188 = vector.broadcast %cst_178 : f32 to vector<16x128xf32>
    %189 = arith.maximumf %187, %188 : vector<16x128xf32>
    %190 = vector.extract_strided_slice %189 {offsets = [0, 0], sizes = [16, 16], strides = [1, 1]} : vector<16x128xf32> to vector<16x16xf32>
    %191 = arith.truncf %190 : vector<16x16xf32> to vector<16x16xbf16>
    %c112 = arith.constant 112 : index
    %c0_179 = arith.constant 0 : index
    %192 = vector.load %arg4[%c112, %c0_179] : memref<400x128xbf16, #tpu.memory_space<vmem>>, vector<16x128xbf16>
    %cst_180 = arith.constant dense<0.000000e+00> : vector<16x128xf32>
    %193 = tpu.matmul %191, %192, %cst_180 {dimension_numbers = #tpu.dot_dimension_numbers<[1], [0], [0], [1], [0, 0, 1, 1], [], []>} : vector<16x16xbf16>, vector<16x128xbf16>, vector<16x128xf32> -> vector<16x128xf32>
    %194 = arith.addf %170, %193 : vector<16x128xf32>
    %c0_181 = arith.constant 0 : index
    %c8 = arith.constant 8 : index
    %c0_182 = arith.constant 0 : index
    %c0_183 = arith.constant 0 : index
    %195 = vector.load %arg1[%c0_181, %c8, %c0_182, %c0_183] : memref<4x25x16x256xbf16, #tpu.memory_space<vmem>>, vector<1x1x16x256xbf16>
    %196 = vector.shape_cast %195 : vector<1x1x16x256xbf16> to vector<16x256xbf16>
    %cst_184 = arith.constant dense<0.000000e+00> : vector<16x128xf32>
    %197 = tpu.matmul %196, %0, %cst_184 {dimension_numbers = #tpu.dot_dimension_numbers<[1], [0], [0], [1], [0, 0, 1, 1], [], []>} : vector<16x256xbf16>, vector<256x128xbf16>, vector<16x128xf32> -> vector<16x128xf32>
    %c1_185 = arith.constant 1 : index
    %c8_186 = arith.constant 8 : index
    %c0_187 = arith.constant 0 : index
    %c0_188 = arith.constant 0 : index
    %198 = vector.load %arg1[%c1_185, %c8_186, %c0_187, %c0_188] : memref<4x25x16x256xbf16, #tpu.memory_space<vmem>>, vector<1x1x16x256xbf16>
    %199 = vector.shape_cast %198 : vector<1x1x16x256xbf16> to vector<16x256xbf16>
    %cst_189 = arith.constant dense<0.000000e+00> : vector<16x128xf32>
    %200 = tpu.matmul %199, %0, %cst_189 {dimension_numbers = #tpu.dot_dimension_numbers<[1], [0], [0], [1], [0, 0, 1, 1], [], []>} : vector<16x256xbf16>, vector<256x128xbf16>, vector<16x128xf32> -> vector<16x128xf32>
    %201 = arith.maximumf %197, %200 : vector<16x128xf32>
    %c2_190 = arith.constant 2 : index
    %c8_191 = arith.constant 8 : index
    %c0_192 = arith.constant 0 : index
    %c0_193 = arith.constant 0 : index
    %202 = vector.load %arg1[%c2_190, %c8_191, %c0_192, %c0_193] : memref<4x25x16x256xbf16, #tpu.memory_space<vmem>>, vector<1x1x16x256xbf16>
    %203 = vector.shape_cast %202 : vector<1x1x16x256xbf16> to vector<16x256xbf16>
    %cst_194 = arith.constant dense<0.000000e+00> : vector<16x128xf32>
    %204 = tpu.matmul %203, %0, %cst_194 {dimension_numbers = #tpu.dot_dimension_numbers<[1], [0], [0], [1], [0, 0, 1, 1], [], []>} : vector<16x256xbf16>, vector<256x128xbf16>, vector<16x128xf32> -> vector<16x128xf32>
    %205 = arith.maximumf %201, %204 : vector<16x128xf32>
    %c3_195 = arith.constant 3 : index
    %c8_196 = arith.constant 8 : index
    %c0_197 = arith.constant 0 : index
    %c0_198 = arith.constant 0 : index
    %206 = vector.load %arg1[%c3_195, %c8_196, %c0_197, %c0_198] : memref<4x25x16x256xbf16, #tpu.memory_space<vmem>>, vector<1x1x16x256xbf16>
    %207 = vector.shape_cast %206 : vector<1x1x16x256xbf16> to vector<16x256xbf16>
    %cst_199 = arith.constant dense<0.000000e+00> : vector<16x128xf32>
    %208 = tpu.matmul %207, %0, %cst_199 {dimension_numbers = #tpu.dot_dimension_numbers<[1], [0], [0], [1], [0, 0, 1, 1], [], []>} : vector<16x256xbf16>, vector<256x128xbf16>, vector<16x128xf32> -> vector<16x128xf32>
    %209 = arith.maximumf %205, %208 : vector<16x128xf32>
    %210 = vector.broadcast %1 : vector<1x128xf32> to vector<16x128xf32>
    %211 = arith.addf %209, %210 : vector<16x128xf32>
    %cst_200 = arith.constant 0.000000e+00 : f32
    %212 = vector.broadcast %cst_200 : f32 to vector<16x128xf32>
    %213 = arith.maximumf %211, %212 : vector<16x128xf32>
    %214 = vector.extract_strided_slice %213 {offsets = [0, 0], sizes = [16, 16], strides = [1, 1]} : vector<16x128xf32> to vector<16x16xf32>
    %215 = arith.truncf %214 : vector<16x16xf32> to vector<16x16xbf16>
    %c128 = arith.constant 128 : index
    %c0_201 = arith.constant 0 : index
    %216 = vector.load %arg4[%c128, %c0_201] : memref<400x128xbf16, #tpu.memory_space<vmem>>, vector<16x128xbf16>
    %cst_202 = arith.constant dense<0.000000e+00> : vector<16x128xf32>
    %217 = tpu.matmul %215, %216, %cst_202 {dimension_numbers = #tpu.dot_dimension_numbers<[1], [0], [0], [1], [0, 0, 1, 1], [], []>} : vector<16x16xbf16>, vector<16x128xbf16>, vector<16x128xf32> -> vector<16x128xf32>
    %218 = arith.addf %194, %217 : vector<16x128xf32>
    %c0_203 = arith.constant 0 : index
    %c9 = arith.constant 9 : index
    %c0_204 = arith.constant 0 : index
    %c0_205 = arith.constant 0 : index
    %219 = vector.load %arg1[%c0_203, %c9, %c0_204, %c0_205] : memref<4x25x16x256xbf16, #tpu.memory_space<vmem>>, vector<1x1x16x256xbf16>
    %220 = vector.shape_cast %219 : vector<1x1x16x256xbf16> to vector<16x256xbf16>
    %cst_206 = arith.constant dense<0.000000e+00> : vector<16x128xf32>
    %221 = tpu.matmul %220, %0, %cst_206 {dimension_numbers = #tpu.dot_dimension_numbers<[1], [0], [0], [1], [0, 0, 1, 1], [], []>} : vector<16x256xbf16>, vector<256x128xbf16>, vector<16x128xf32> -> vector<16x128xf32>
    %c1_207 = arith.constant 1 : index
    %c9_208 = arith.constant 9 : index
    %c0_209 = arith.constant 0 : index
    %c0_210 = arith.constant 0 : index
    %222 = vector.load %arg1[%c1_207, %c9_208, %c0_209, %c0_210] : memref<4x25x16x256xbf16, #tpu.memory_space<vmem>>, vector<1x1x16x256xbf16>
    %223 = vector.shape_cast %222 : vector<1x1x16x256xbf16> to vector<16x256xbf16>
    %cst_211 = arith.constant dense<0.000000e+00> : vector<16x128xf32>
    %224 = tpu.matmul %223, %0, %cst_211 {dimension_numbers = #tpu.dot_dimension_numbers<[1], [0], [0], [1], [0, 0, 1, 1], [], []>} : vector<16x256xbf16>, vector<256x128xbf16>, vector<16x128xf32> -> vector<16x128xf32>
    %225 = arith.maximumf %221, %224 : vector<16x128xf32>
    %c2_212 = arith.constant 2 : index
    %c9_213 = arith.constant 9 : index
    %c0_214 = arith.constant 0 : index
    %c0_215 = arith.constant 0 : index
    %226 = vector.load %arg1[%c2_212, %c9_213, %c0_214, %c0_215] : memref<4x25x16x256xbf16, #tpu.memory_space<vmem>>, vector<1x1x16x256xbf16>
    %227 = vector.shape_cast %226 : vector<1x1x16x256xbf16> to vector<16x256xbf16>
    %cst_216 = arith.constant dense<0.000000e+00> : vector<16x128xf32>
    %228 = tpu.matmul %227, %0, %cst_216 {dimension_numbers = #tpu.dot_dimension_numbers<[1], [0], [0], [1], [0, 0, 1, 1], [], []>} : vector<16x256xbf16>, vector<256x128xbf16>, vector<16x128xf32> -> vector<16x128xf32>
    %229 = arith.maximumf %225, %228 : vector<16x128xf32>
    %c3_217 = arith.constant 3 : index
    %c9_218 = arith.constant 9 : index
    %c0_219 = arith.constant 0 : index
    %c0_220 = arith.constant 0 : index
    %230 = vector.load %arg1[%c3_217, %c9_218, %c0_219, %c0_220] : memref<4x25x16x256xbf16, #tpu.memory_space<vmem>>, vector<1x1x16x256xbf16>
    %231 = vector.shape_cast %230 : vector<1x1x16x256xbf16> to vector<16x256xbf16>
    %cst_221 = arith.constant dense<0.000000e+00> : vector<16x128xf32>
    %232 = tpu.matmul %231, %0, %cst_221 {dimension_numbers = #tpu.dot_dimension_numbers<[1], [0], [0], [1], [0, 0, 1, 1], [], []>} : vector<16x256xbf16>, vector<256x128xbf16>, vector<16x128xf32> -> vector<16x128xf32>
    %233 = arith.maximumf %229, %232 : vector<16x128xf32>
    %234 = vector.broadcast %1 : vector<1x128xf32> to vector<16x128xf32>
    %235 = arith.addf %233, %234 : vector<16x128xf32>
    %cst_222 = arith.constant 0.000000e+00 : f32
    %236 = vector.broadcast %cst_222 : f32 to vector<16x128xf32>
    %237 = arith.maximumf %235, %236 : vector<16x128xf32>
    %238 = vector.extract_strided_slice %237 {offsets = [0, 0], sizes = [16, 16], strides = [1, 1]} : vector<16x128xf32> to vector<16x16xf32>
    %239 = arith.truncf %238 : vector<16x16xf32> to vector<16x16xbf16>
    %c144 = arith.constant 144 : index
    %c0_223 = arith.constant 0 : index
    %240 = vector.load %arg4[%c144, %c0_223] : memref<400x128xbf16, #tpu.memory_space<vmem>>, vector<16x128xbf16>
    %cst_224 = arith.constant dense<0.000000e+00> : vector<16x128xf32>
    %241 = tpu.matmul %239, %240, %cst_224 {dimension_numbers = #tpu.dot_dimension_numbers<[1], [0], [0], [1], [0, 0, 1, 1], [], []>} : vector<16x16xbf16>, vector<16x128xbf16>, vector<16x128xf32> -> vector<16x128xf32>
    %242 = arith.addf %218, %241 : vector<16x128xf32>
    %c0_225 = arith.constant 0 : index
    %c10 = arith.constant 10 : index
    %c0_226 = arith.constant 0 : index
    %c0_227 = arith.constant 0 : index
    %243 = vector.load %arg1[%c0_225, %c10, %c0_226, %c0_227] : memref<4x25x16x256xbf16, #tpu.memory_space<vmem>>, vector<1x1x16x256xbf16>
    %244 = vector.shape_cast %243 : vector<1x1x16x256xbf16> to vector<16x256xbf16>
    %cst_228 = arith.constant dense<0.000000e+00> : vector<16x128xf32>
    %245 = tpu.matmul %244, %0, %cst_228 {dimension_numbers = #tpu.dot_dimension_numbers<[1], [0], [0], [1], [0, 0, 1, 1], [], []>} : vector<16x256xbf16>, vector<256x128xbf16>, vector<16x128xf32> -> vector<16x128xf32>
    %c1_229 = arith.constant 1 : index
    %c10_230 = arith.constant 10 : index
    %c0_231 = arith.constant 0 : index
    %c0_232 = arith.constant 0 : index
    %246 = vector.load %arg1[%c1_229, %c10_230, %c0_231, %c0_232] : memref<4x25x16x256xbf16, #tpu.memory_space<vmem>>, vector<1x1x16x256xbf16>
    %247 = vector.shape_cast %246 : vector<1x1x16x256xbf16> to vector<16x256xbf16>
    %cst_233 = arith.constant dense<0.000000e+00> : vector<16x128xf32>
    %248 = tpu.matmul %247, %0, %cst_233 {dimension_numbers = #tpu.dot_dimension_numbers<[1], [0], [0], [1], [0, 0, 1, 1], [], []>} : vector<16x256xbf16>, vector<256x128xbf16>, vector<16x128xf32> -> vector<16x128xf32>
    %249 = arith.maximumf %245, %248 : vector<16x128xf32>
    %c2_234 = arith.constant 2 : index
    %c10_235 = arith.constant 10 : index
    %c0_236 = arith.constant 0 : index
    %c0_237 = arith.constant 0 : index
    %250 = vector.load %arg1[%c2_234, %c10_235, %c0_236, %c0_237] : memref<4x25x16x256xbf16, #tpu.memory_space<vmem>>, vector<1x1x16x256xbf16>
    %251 = vector.shape_cast %250 : vector<1x1x16x256xbf16> to vector<16x256xbf16>
    %cst_238 = arith.constant dense<0.000000e+00> : vector<16x128xf32>
    %252 = tpu.matmul %251, %0, %cst_238 {dimension_numbers = #tpu.dot_dimension_numbers<[1], [0], [0], [1], [0, 0, 1, 1], [], []>} : vector<16x256xbf16>, vector<256x128xbf16>, vector<16x128xf32> -> vector<16x128xf32>
    %253 = arith.maximumf %249, %252 : vector<16x128xf32>
    %c3_239 = arith.constant 3 : index
    %c10_240 = arith.constant 10 : index
    %c0_241 = arith.constant 0 : index
    %c0_242 = arith.constant 0 : index
    %254 = vector.load %arg1[%c3_239, %c10_240, %c0_241, %c0_242] : memref<4x25x16x256xbf16, #tpu.memory_space<vmem>>, vector<1x1x16x256xbf16>
    %255 = vector.shape_cast %254 : vector<1x1x16x256xbf16> to vector<16x256xbf16>
    %cst_243 = arith.constant dense<0.000000e+00> : vector<16x128xf32>
    %256 = tpu.matmul %255, %0, %cst_243 {dimension_numbers = #tpu.dot_dimension_numbers<[1], [0], [0], [1], [0, 0, 1, 1], [], []>} : vector<16x256xbf16>, vector<256x128xbf16>, vector<16x128xf32> -> vector<16x128xf32>
    %257 = arith.maximumf %253, %256 : vector<16x128xf32>
    %258 = vector.broadcast %1 : vector<1x128xf32> to vector<16x128xf32>
    %259 = arith.addf %257, %258 : vector<16x128xf32>
    %cst_244 = arith.constant 0.000000e+00 : f32
    %260 = vector.broadcast %cst_244 : f32 to vector<16x128xf32>
    %261 = arith.maximumf %259, %260 : vector<16x128xf32>
    %262 = vector.extract_strided_slice %261 {offsets = [0, 0], sizes = [16, 16], strides = [1, 1]} : vector<16x128xf32> to vector<16x16xf32>
    %263 = arith.truncf %262 : vector<16x16xf32> to vector<16x16xbf16>
    %c160 = arith.constant 160 : index
    %c0_245 = arith.constant 0 : index
    %264 = vector.load %arg4[%c160, %c0_245] : memref<400x128xbf16, #tpu.memory_space<vmem>>, vector<16x128xbf16>
    %cst_246 = arith.constant dense<0.000000e+00> : vector<16x128xf32>
    %265 = tpu.matmul %263, %264, %cst_246 {dimension_numbers = #tpu.dot_dimension_numbers<[1], [0], [0], [1], [0, 0, 1, 1], [], []>} : vector<16x16xbf16>, vector<16x128xbf16>, vector<16x128xf32> -> vector<16x128xf32>
    %266 = arith.addf %242, %265 : vector<16x128xf32>
    %c0_247 = arith.constant 0 : index
    %c11 = arith.constant 11 : index
    %c0_248 = arith.constant 0 : index
    %c0_249 = arith.constant 0 : index
    %267 = vector.load %arg1[%c0_247, %c11, %c0_248, %c0_249] : memref<4x25x16x256xbf16, #tpu.memory_space<vmem>>, vector<1x1x16x256xbf16>
    %268 = vector.shape_cast %267 : vector<1x1x16x256xbf16> to vector<16x256xbf16>
    %cst_250 = arith.constant dense<0.000000e+00> : vector<16x128xf32>
    %269 = tpu.matmul %268, %0, %cst_250 {dimension_numbers = #tpu.dot_dimension_numbers<[1], [0], [0], [1], [0, 0, 1, 1], [], []>} : vector<16x256xbf16>, vector<256x128xbf16>, vector<16x128xf32> -> vector<16x128xf32>
    %c1_251 = arith.constant 1 : index
    %c11_252 = arith.constant 11 : index
    %c0_253 = arith.constant 0 : index
    %c0_254 = arith.constant 0 : index
    %270 = vector.load %arg1[%c1_251, %c11_252, %c0_253, %c0_254] : memref<4x25x16x256xbf16, #tpu.memory_space<vmem>>, vector<1x1x16x256xbf16>
    %271 = vector.shape_cast %270 : vector<1x1x16x256xbf16> to vector<16x256xbf16>
    %cst_255 = arith.constant dense<0.000000e+00> : vector<16x128xf32>
    %272 = tpu.matmul %271, %0, %cst_255 {dimension_numbers = #tpu.dot_dimension_numbers<[1], [0], [0], [1], [0, 0, 1, 1], [], []>} : vector<16x256xbf16>, vector<256x128xbf16>, vector<16x128xf32> -> vector<16x128xf32>
    %273 = arith.maximumf %269, %272 : vector<16x128xf32>
    %c2_256 = arith.constant 2 : index
    %c11_257 = arith.constant 11 : index
    %c0_258 = arith.constant 0 : index
    %c0_259 = arith.constant 0 : index
    %274 = vector.load %arg1[%c2_256, %c11_257, %c0_258, %c0_259] : memref<4x25x16x256xbf16, #tpu.memory_space<vmem>>, vector<1x1x16x256xbf16>
    %275 = vector.shape_cast %274 : vector<1x1x16x256xbf16> to vector<16x256xbf16>
    %cst_260 = arith.constant dense<0.000000e+00> : vector<16x128xf32>
    %276 = tpu.matmul %275, %0, %cst_260 {dimension_numbers = #tpu.dot_dimension_numbers<[1], [0], [0], [1], [0, 0, 1, 1], [], []>} : vector<16x256xbf16>, vector<256x128xbf16>, vector<16x128xf32> -> vector<16x128xf32>
    %277 = arith.maximumf %273, %276 : vector<16x128xf32>
    %c3_261 = arith.constant 3 : index
    %c11_262 = arith.constant 11 : index
    %c0_263 = arith.constant 0 : index
    %c0_264 = arith.constant 0 : index
    %278 = vector.load %arg1[%c3_261, %c11_262, %c0_263, %c0_264] : memref<4x25x16x256xbf16, #tpu.memory_space<vmem>>, vector<1x1x16x256xbf16>
    %279 = vector.shape_cast %278 : vector<1x1x16x256xbf16> to vector<16x256xbf16>
    %cst_265 = arith.constant dense<0.000000e+00> : vector<16x128xf32>
    %280 = tpu.matmul %279, %0, %cst_265 {dimension_numbers = #tpu.dot_dimension_numbers<[1], [0], [0], [1], [0, 0, 1, 1], [], []>} : vector<16x256xbf16>, vector<256x128xbf16>, vector<16x128xf32> -> vector<16x128xf32>
    %281 = arith.maximumf %277, %280 : vector<16x128xf32>
    %282 = vector.broadcast %1 : vector<1x128xf32> to vector<16x128xf32>
    %283 = arith.addf %281, %282 : vector<16x128xf32>
    %cst_266 = arith.constant 0.000000e+00 : f32
    %284 = vector.broadcast %cst_266 : f32 to vector<16x128xf32>
    %285 = arith.maximumf %283, %284 : vector<16x128xf32>
    %286 = vector.extract_strided_slice %285 {offsets = [0, 0], sizes = [16, 16], strides = [1, 1]} : vector<16x128xf32> to vector<16x16xf32>
    %287 = arith.truncf %286 : vector<16x16xf32> to vector<16x16xbf16>
    %c176 = arith.constant 176 : index
    %c0_267 = arith.constant 0 : index
    %288 = vector.load %arg4[%c176, %c0_267] : memref<400x128xbf16, #tpu.memory_space<vmem>>, vector<16x128xbf16>
    %cst_268 = arith.constant dense<0.000000e+00> : vector<16x128xf32>
    %289 = tpu.matmul %287, %288, %cst_268 {dimension_numbers = #tpu.dot_dimension_numbers<[1], [0], [0], [1], [0, 0, 1, 1], [], []>} : vector<16x16xbf16>, vector<16x128xbf16>, vector<16x128xf32> -> vector<16x128xf32>
    %290 = arith.addf %266, %289 : vector<16x128xf32>
    %c0_269 = arith.constant 0 : index
    %c12 = arith.constant 12 : index
    %c0_270 = arith.constant 0 : index
    %c0_271 = arith.constant 0 : index
    %291 = vector.load %arg1[%c0_269, %c12, %c0_270, %c0_271] : memref<4x25x16x256xbf16, #tpu.memory_space<vmem>>, vector<1x1x16x256xbf16>
    %292 = vector.shape_cast %291 : vector<1x1x16x256xbf16> to vector<16x256xbf16>
    %cst_272 = arith.constant dense<0.000000e+00> : vector<16x128xf32>
    %293 = tpu.matmul %292, %0, %cst_272 {dimension_numbers = #tpu.dot_dimension_numbers<[1], [0], [0], [1], [0, 0, 1, 1], [], []>} : vector<16x256xbf16>, vector<256x128xbf16>, vector<16x128xf32> -> vector<16x128xf32>
    %c1_273 = arith.constant 1 : index
    %c12_274 = arith.constant 12 : index
    %c0_275 = arith.constant 0 : index
    %c0_276 = arith.constant 0 : index
    %294 = vector.load %arg1[%c1_273, %c12_274, %c0_275, %c0_276] : memref<4x25x16x256xbf16, #tpu.memory_space<vmem>>, vector<1x1x16x256xbf16>
    %295 = vector.shape_cast %294 : vector<1x1x16x256xbf16> to vector<16x256xbf16>
    %cst_277 = arith.constant dense<0.000000e+00> : vector<16x128xf32>
    %296 = tpu.matmul %295, %0, %cst_277 {dimension_numbers = #tpu.dot_dimension_numbers<[1], [0], [0], [1], [0, 0, 1, 1], [], []>} : vector<16x256xbf16>, vector<256x128xbf16>, vector<16x128xf32> -> vector<16x128xf32>
    %297 = arith.maximumf %293, %296 : vector<16x128xf32>
    %c2_278 = arith.constant 2 : index
    %c12_279 = arith.constant 12 : index
    %c0_280 = arith.constant 0 : index
    %c0_281 = arith.constant 0 : index
    %298 = vector.load %arg1[%c2_278, %c12_279, %c0_280, %c0_281] : memref<4x25x16x256xbf16, #tpu.memory_space<vmem>>, vector<1x1x16x256xbf16>
    %299 = vector.shape_cast %298 : vector<1x1x16x256xbf16> to vector<16x256xbf16>
    %cst_282 = arith.constant dense<0.000000e+00> : vector<16x128xf32>
    %300 = tpu.matmul %299, %0, %cst_282 {dimension_numbers = #tpu.dot_dimension_numbers<[1], [0], [0], [1], [0, 0, 1, 1], [], []>} : vector<16x256xbf16>, vector<256x128xbf16>, vector<16x128xf32> -> vector<16x128xf32>
    %301 = arith.maximumf %297, %300 : vector<16x128xf32>
    %c3_283 = arith.constant 3 : index
    %c12_284 = arith.constant 12 : index
    %c0_285 = arith.constant 0 : index
    %c0_286 = arith.constant 0 : index
    %302 = vector.load %arg1[%c3_283, %c12_284, %c0_285, %c0_286] : memref<4x25x16x256xbf16, #tpu.memory_space<vmem>>, vector<1x1x16x256xbf16>
    %303 = vector.shape_cast %302 : vector<1x1x16x256xbf16> to vector<16x256xbf16>
    %cst_287 = arith.constant dense<0.000000e+00> : vector<16x128xf32>
    %304 = tpu.matmul %303, %0, %cst_287 {dimension_numbers = #tpu.dot_dimension_numbers<[1], [0], [0], [1], [0, 0, 1, 1], [], []>} : vector<16x256xbf16>, vector<256x128xbf16>, vector<16x128xf32> -> vector<16x128xf32>
    %305 = arith.maximumf %301, %304 : vector<16x128xf32>
    %306 = vector.broadcast %1 : vector<1x128xf32> to vector<16x128xf32>
    %307 = arith.addf %305, %306 : vector<16x128xf32>
    %cst_288 = arith.constant 0.000000e+00 : f32
    %308 = vector.broadcast %cst_288 : f32 to vector<16x128xf32>
    %309 = arith.maximumf %307, %308 : vector<16x128xf32>
    %310 = vector.extract_strided_slice %309 {offsets = [0, 0], sizes = [16, 16], strides = [1, 1]} : vector<16x128xf32> to vector<16x16xf32>
    %311 = arith.truncf %310 : vector<16x16xf32> to vector<16x16xbf16>
    %c192 = arith.constant 192 : index
    %c0_289 = arith.constant 0 : index
    %312 = vector.load %arg4[%c192, %c0_289] : memref<400x128xbf16, #tpu.memory_space<vmem>>, vector<16x128xbf16>
    %cst_290 = arith.constant dense<0.000000e+00> : vector<16x128xf32>
    %313 = tpu.matmul %311, %312, %cst_290 {dimension_numbers = #tpu.dot_dimension_numbers<[1], [0], [0], [1], [0, 0, 1, 1], [], []>} : vector<16x16xbf16>, vector<16x128xbf16>, vector<16x128xf32> -> vector<16x128xf32>
    %314 = arith.addf %290, %313 : vector<16x128xf32>
    %c0_291 = arith.constant 0 : index
    %c13 = arith.constant 13 : index
    %c0_292 = arith.constant 0 : index
    %c0_293 = arith.constant 0 : index
    %315 = vector.load %arg1[%c0_291, %c13, %c0_292, %c0_293] : memref<4x25x16x256xbf16, #tpu.memory_space<vmem>>, vector<1x1x16x256xbf16>
    %316 = vector.shape_cast %315 : vector<1x1x16x256xbf16> to vector<16x256xbf16>
    %cst_294 = arith.constant dense<0.000000e+00> : vector<16x128xf32>
    %317 = tpu.matmul %316, %0, %cst_294 {dimension_numbers = #tpu.dot_dimension_numbers<[1], [0], [0], [1], [0, 0, 1, 1], [], []>} : vector<16x256xbf16>, vector<256x128xbf16>, vector<16x128xf32> -> vector<16x128xf32>
    %c1_295 = arith.constant 1 : index
    %c13_296 = arith.constant 13 : index
    %c0_297 = arith.constant 0 : index
    %c0_298 = arith.constant 0 : index
    %318 = vector.load %arg1[%c1_295, %c13_296, %c0_297, %c0_298] : memref<4x25x16x256xbf16, #tpu.memory_space<vmem>>, vector<1x1x16x256xbf16>
    %319 = vector.shape_cast %318 : vector<1x1x16x256xbf16> to vector<16x256xbf16>
    %cst_299 = arith.constant dense<0.000000e+00> : vector<16x128xf32>
    %320 = tpu.matmul %319, %0, %cst_299 {dimension_numbers = #tpu.dot_dimension_numbers<[1], [0], [0], [1], [0, 0, 1, 1], [], []>} : vector<16x256xbf16>, vector<256x128xbf16>, vector<16x128xf32> -> vector<16x128xf32>
    %321 = arith.maximumf %317, %320 : vector<16x128xf32>
    %c2_300 = arith.constant 2 : index
    %c13_301 = arith.constant 13 : index
    %c0_302 = arith.constant 0 : index
    %c0_303 = arith.constant 0 : index
    %322 = vector.load %arg1[%c2_300, %c13_301, %c0_302, %c0_303] : memref<4x25x16x256xbf16, #tpu.memory_space<vmem>>, vector<1x1x16x256xbf16>
    %323 = vector.shape_cast %322 : vector<1x1x16x256xbf16> to vector<16x256xbf16>
    %cst_304 = arith.constant dense<0.000000e+00> : vector<16x128xf32>
    %324 = tpu.matmul %323, %0, %cst_304 {dimension_numbers = #tpu.dot_dimension_numbers<[1], [0], [0], [1], [0, 0, 1, 1], [], []>} : vector<16x256xbf16>, vector<256x128xbf16>, vector<16x128xf32> -> vector<16x128xf32>
    %325 = arith.maximumf %321, %324 : vector<16x128xf32>
    %c3_305 = arith.constant 3 : index
    %c13_306 = arith.constant 13 : index
    %c0_307 = arith.constant 0 : index
    %c0_308 = arith.constant 0 : index
    %326 = vector.load %arg1[%c3_305, %c13_306, %c0_307, %c0_308] : memref<4x25x16x256xbf16, #tpu.memory_space<vmem>>, vector<1x1x16x256xbf16>
    %327 = vector.shape_cast %326 : vector<1x1x16x256xbf16> to vector<16x256xbf16>
    %cst_309 = arith.constant dense<0.000000e+00> : vector<16x128xf32>
    %328 = tpu.matmul %327, %0, %cst_309 {dimension_numbers = #tpu.dot_dimension_numbers<[1], [0], [0], [1], [0, 0, 1, 1], [], []>} : vector<16x256xbf16>, vector<256x128xbf16>, vector<16x128xf32> -> vector<16x128xf32>
    %329 = arith.maximumf %325, %328 : vector<16x128xf32>
    %330 = vector.broadcast %1 : vector<1x128xf32> to vector<16x128xf32>
    %331 = arith.addf %329, %330 : vector<16x128xf32>
    %cst_310 = arith.constant 0.000000e+00 : f32
    %332 = vector.broadcast %cst_310 : f32 to vector<16x128xf32>
    %333 = arith.maximumf %331, %332 : vector<16x128xf32>
    %334 = vector.extract_strided_slice %333 {offsets = [0, 0], sizes = [16, 16], strides = [1, 1]} : vector<16x128xf32> to vector<16x16xf32>
    %335 = arith.truncf %334 : vector<16x16xf32> to vector<16x16xbf16>
    %c208 = arith.constant 208 : index
    %c0_311 = arith.constant 0 : index
    %336 = vector.load %arg4[%c208, %c0_311] : memref<400x128xbf16, #tpu.memory_space<vmem>>, vector<16x128xbf16>
    %cst_312 = arith.constant dense<0.000000e+00> : vector<16x128xf32>
    %337 = tpu.matmul %335, %336, %cst_312 {dimension_numbers = #tpu.dot_dimension_numbers<[1], [0], [0], [1], [0, 0, 1, 1], [], []>} : vector<16x16xbf16>, vector<16x128xbf16>, vector<16x128xf32> -> vector<16x128xf32>
    %338 = arith.addf %314, %337 : vector<16x128xf32>
    %c0_313 = arith.constant 0 : index
    %c14 = arith.constant 14 : index
    %c0_314 = arith.constant 0 : index
    %c0_315 = arith.constant 0 : index
    %339 = vector.load %arg1[%c0_313, %c14, %c0_314, %c0_315] : memref<4x25x16x256xbf16, #tpu.memory_space<vmem>>, vector<1x1x16x256xbf16>
    %340 = vector.shape_cast %339 : vector<1x1x16x256xbf16> to vector<16x256xbf16>
    %cst_316 = arith.constant dense<0.000000e+00> : vector<16x128xf32>
    %341 = tpu.matmul %340, %0, %cst_316 {dimension_numbers = #tpu.dot_dimension_numbers<[1], [0], [0], [1], [0, 0, 1, 1], [], []>} : vector<16x256xbf16>, vector<256x128xbf16>, vector<16x128xf32> -> vector<16x128xf32>
    %c1_317 = arith.constant 1 : index
    %c14_318 = arith.constant 14 : index
    %c0_319 = arith.constant 0 : index
    %c0_320 = arith.constant 0 : index
    %342 = vector.load %arg1[%c1_317, %c14_318, %c0_319, %c0_320] : memref<4x25x16x256xbf16, #tpu.memory_space<vmem>>, vector<1x1x16x256xbf16>
    %343 = vector.shape_cast %342 : vector<1x1x16x256xbf16> to vector<16x256xbf16>
    %cst_321 = arith.constant dense<0.000000e+00> : vector<16x128xf32>
    %344 = tpu.matmul %343, %0, %cst_321 {dimension_numbers = #tpu.dot_dimension_numbers<[1], [0], [0], [1], [0, 0, 1, 1], [], []>} : vector<16x256xbf16>, vector<256x128xbf16>, vector<16x128xf32> -> vector<16x128xf32>
    %345 = arith.maximumf %341, %344 : vector<16x128xf32>
    %c2_322 = arith.constant 2 : index
    %c14_323 = arith.constant 14 : index
    %c0_324 = arith.constant 0 : index
    %c0_325 = arith.constant 0 : index
    %346 = vector.load %arg1[%c2_322, %c14_323, %c0_324, %c0_325] : memref<4x25x16x256xbf16, #tpu.memory_space<vmem>>, vector<1x1x16x256xbf16>
    %347 = vector.shape_cast %346 : vector<1x1x16x256xbf16> to vector<16x256xbf16>
    %cst_326 = arith.constant dense<0.000000e+00> : vector<16x128xf32>
    %348 = tpu.matmul %347, %0, %cst_326 {dimension_numbers = #tpu.dot_dimension_numbers<[1], [0], [0], [1], [0, 0, 1, 1], [], []>} : vector<16x256xbf16>, vector<256x128xbf16>, vector<16x128xf32> -> vector<16x128xf32>
    %349 = arith.maximumf %345, %348 : vector<16x128xf32>
    %c3_327 = arith.constant 3 : index
    %c14_328 = arith.constant 14 : index
    %c0_329 = arith.constant 0 : index
    %c0_330 = arith.constant 0 : index
    %350 = vector.load %arg1[%c3_327, %c14_328, %c0_329, %c0_330] : memref<4x25x16x256xbf16, #tpu.memory_space<vmem>>, vector<1x1x16x256xbf16>
    %351 = vector.shape_cast %350 : vector<1x1x16x256xbf16> to vector<16x256xbf16>
    %cst_331 = arith.constant dense<0.000000e+00> : vector<16x128xf32>
    %352 = tpu.matmul %351, %0, %cst_331 {dimension_numbers = #tpu.dot_dimension_numbers<[1], [0], [0], [1], [0, 0, 1, 1], [], []>} : vector<16x256xbf16>, vector<256x128xbf16>, vector<16x128xf32> -> vector<16x128xf32>
    %353 = arith.maximumf %349, %352 : vector<16x128xf32>
    %354 = vector.broadcast %1 : vector<1x128xf32> to vector<16x128xf32>
    %355 = arith.addf %353, %354 : vector<16x128xf32>
    %cst_332 = arith.constant 0.000000e+00 : f32
    %356 = vector.broadcast %cst_332 : f32 to vector<16x128xf32>
    %357 = arith.maximumf %355, %356 : vector<16x128xf32>
    %358 = vector.extract_strided_slice %357 {offsets = [0, 0], sizes = [16, 16], strides = [1, 1]} : vector<16x128xf32> to vector<16x16xf32>
    %359 = arith.truncf %358 : vector<16x16xf32> to vector<16x16xbf16>
    %c224 = arith.constant 224 : index
    %c0_333 = arith.constant 0 : index
    %360 = vector.load %arg4[%c224, %c0_333] : memref<400x128xbf16, #tpu.memory_space<vmem>>, vector<16x128xbf16>
    %cst_334 = arith.constant dense<0.000000e+00> : vector<16x128xf32>
    %361 = tpu.matmul %359, %360, %cst_334 {dimension_numbers = #tpu.dot_dimension_numbers<[1], [0], [0], [1], [0, 0, 1, 1], [], []>} : vector<16x16xbf16>, vector<16x128xbf16>, vector<16x128xf32> -> vector<16x128xf32>
    %362 = arith.addf %338, %361 : vector<16x128xf32>
    %c0_335 = arith.constant 0 : index
    %c15 = arith.constant 15 : index
    %c0_336 = arith.constant 0 : index
    %c0_337 = arith.constant 0 : index
    %363 = vector.load %arg1[%c0_335, %c15, %c0_336, %c0_337] : memref<4x25x16x256xbf16, #tpu.memory_space<vmem>>, vector<1x1x16x256xbf16>
    %364 = vector.shape_cast %363 : vector<1x1x16x256xbf16> to vector<16x256xbf16>
    %cst_338 = arith.constant dense<0.000000e+00> : vector<16x128xf32>
    %365 = tpu.matmul %364, %0, %cst_338 {dimension_numbers = #tpu.dot_dimension_numbers<[1], [0], [0], [1], [0, 0, 1, 1], [], []>} : vector<16x256xbf16>, vector<256x128xbf16>, vector<16x128xf32> -> vector<16x128xf32>
    %c1_339 = arith.constant 1 : index
    %c15_340 = arith.constant 15 : index
    %c0_341 = arith.constant 0 : index
    %c0_342 = arith.constant 0 : index
    %366 = vector.load %arg1[%c1_339, %c15_340, %c0_341, %c0_342] : memref<4x25x16x256xbf16, #tpu.memory_space<vmem>>, vector<1x1x16x256xbf16>
    %367 = vector.shape_cast %366 : vector<1x1x16x256xbf16> to vector<16x256xbf16>
    %cst_343 = arith.constant dense<0.000000e+00> : vector<16x128xf32>
    %368 = tpu.matmul %367, %0, %cst_343 {dimension_numbers = #tpu.dot_dimension_numbers<[1], [0], [0], [1], [0, 0, 1, 1], [], []>} : vector<16x256xbf16>, vector<256x128xbf16>, vector<16x128xf32> -> vector<16x128xf32>
    %369 = arith.maximumf %365, %368 : vector<16x128xf32>
    %c2_344 = arith.constant 2 : index
    %c15_345 = arith.constant 15 : index
    %c0_346 = arith.constant 0 : index
    %c0_347 = arith.constant 0 : index
    %370 = vector.load %arg1[%c2_344, %c15_345, %c0_346, %c0_347] : memref<4x25x16x256xbf16, #tpu.memory_space<vmem>>, vector<1x1x16x256xbf16>
    %371 = vector.shape_cast %370 : vector<1x1x16x256xbf16> to vector<16x256xbf16>
    %cst_348 = arith.constant dense<0.000000e+00> : vector<16x128xf32>
    %372 = tpu.matmul %371, %0, %cst_348 {dimension_numbers = #tpu.dot_dimension_numbers<[1], [0], [0], [1], [0, 0, 1, 1], [], []>} : vector<16x256xbf16>, vector<256x128xbf16>, vector<16x128xf32> -> vector<16x128xf32>
    %373 = arith.maximumf %369, %372 : vector<16x128xf32>
    %c3_349 = arith.constant 3 : index
    %c15_350 = arith.constant 15 : index
    %c0_351 = arith.constant 0 : index
    %c0_352 = arith.constant 0 : index
    %374 = vector.load %arg1[%c3_349, %c15_350, %c0_351, %c0_352] : memref<4x25x16x256xbf16, #tpu.memory_space<vmem>>, vector<1x1x16x256xbf16>
    %375 = vector.shape_cast %374 : vector<1x1x16x256xbf16> to vector<16x256xbf16>
    %cst_353 = arith.constant dense<0.000000e+00> : vector<16x128xf32>
    %376 = tpu.matmul %375, %0, %cst_353 {dimension_numbers = #tpu.dot_dimension_numbers<[1], [0], [0], [1], [0, 0, 1, 1], [], []>} : vector<16x256xbf16>, vector<256x128xbf16>, vector<16x128xf32> -> vector<16x128xf32>
    %377 = arith.maximumf %373, %376 : vector<16x128xf32>
    %378 = vector.broadcast %1 : vector<1x128xf32> to vector<16x128xf32>
    %379 = arith.addf %377, %378 : vector<16x128xf32>
    %cst_354 = arith.constant 0.000000e+00 : f32
    %380 = vector.broadcast %cst_354 : f32 to vector<16x128xf32>
    %381 = arith.maximumf %379, %380 : vector<16x128xf32>
    %382 = vector.extract_strided_slice %381 {offsets = [0, 0], sizes = [16, 16], strides = [1, 1]} : vector<16x128xf32> to vector<16x16xf32>
    %383 = arith.truncf %382 : vector<16x16xf32> to vector<16x16xbf16>
    %c240 = arith.constant 240 : index
    %c0_355 = arith.constant 0 : index
    %384 = vector.load %arg4[%c240, %c0_355] : memref<400x128xbf16, #tpu.memory_space<vmem>>, vector<16x128xbf16>
    %cst_356 = arith.constant dense<0.000000e+00> : vector<16x128xf32>
    %385 = tpu.matmul %383, %384, %cst_356 {dimension_numbers = #tpu.dot_dimension_numbers<[1], [0], [0], [1], [0, 0, 1, 1], [], []>} : vector<16x16xbf16>, vector<16x128xbf16>, vector<16x128xf32> -> vector<16x128xf32>
    %386 = arith.addf %362, %385 : vector<16x128xf32>
    %c0_357 = arith.constant 0 : index
    %c16_358 = arith.constant 16 : index
    %c0_359 = arith.constant 0 : index
    %c0_360 = arith.constant 0 : index
    %387 = vector.load %arg1[%c0_357, %c16_358, %c0_359, %c0_360] : memref<4x25x16x256xbf16, #tpu.memory_space<vmem>>, vector<1x1x16x256xbf16>
    %388 = vector.shape_cast %387 : vector<1x1x16x256xbf16> to vector<16x256xbf16>
    %cst_361 = arith.constant dense<0.000000e+00> : vector<16x128xf32>
    %389 = tpu.matmul %388, %0, %cst_361 {dimension_numbers = #tpu.dot_dimension_numbers<[1], [0], [0], [1], [0, 0, 1, 1], [], []>} : vector<16x256xbf16>, vector<256x128xbf16>, vector<16x128xf32> -> vector<16x128xf32>
    %c1_362 = arith.constant 1 : index
    %c16_363 = arith.constant 16 : index
    %c0_364 = arith.constant 0 : index
    %c0_365 = arith.constant 0 : index
    %390 = vector.load %arg1[%c1_362, %c16_363, %c0_364, %c0_365] : memref<4x25x16x256xbf16, #tpu.memory_space<vmem>>, vector<1x1x16x256xbf16>
    %391 = vector.shape_cast %390 : vector<1x1x16x256xbf16> to vector<16x256xbf16>
    %cst_366 = arith.constant dense<0.000000e+00> : vector<16x128xf32>
    %392 = tpu.matmul %391, %0, %cst_366 {dimension_numbers = #tpu.dot_dimension_numbers<[1], [0], [0], [1], [0, 0, 1, 1], [], []>} : vector<16x256xbf16>, vector<256x128xbf16>, vector<16x128xf32> -> vector<16x128xf32>
    %393 = arith.maximumf %389, %392 : vector<16x128xf32>
    %c2_367 = arith.constant 2 : index
    %c16_368 = arith.constant 16 : index
    %c0_369 = arith.constant 0 : index
    %c0_370 = arith.constant 0 : index
    %394 = vector.load %arg1[%c2_367, %c16_368, %c0_369, %c0_370] : memref<4x25x16x256xbf16, #tpu.memory_space<vmem>>, vector<1x1x16x256xbf16>
    %395 = vector.shape_cast %394 : vector<1x1x16x256xbf16> to vector<16x256xbf16>
    %cst_371 = arith.constant dense<0.000000e+00> : vector<16x128xf32>
    %396 = tpu.matmul %395, %0, %cst_371 {dimension_numbers = #tpu.dot_dimension_numbers<[1], [0], [0], [1], [0, 0, 1, 1], [], []>} : vector<16x256xbf16>, vector<256x128xbf16>, vector<16x128xf32> -> vector<16x128xf32>
    %397 = arith.maximumf %393, %396 : vector<16x128xf32>
    %c3_372 = arith.constant 3 : index
    %c16_373 = arith.constant 16 : index
    %c0_374 = arith.constant 0 : index
    %c0_375 = arith.constant 0 : index
    %398 = vector.load %arg1[%c3_372, %c16_373, %c0_374, %c0_375] : memref<4x25x16x256xbf16, #tpu.memory_space<vmem>>, vector<1x1x16x256xbf16>
    %399 = vector.shape_cast %398 : vector<1x1x16x256xbf16> to vector<16x256xbf16>
    %cst_376 = arith.constant dense<0.000000e+00> : vector<16x128xf32>
    %400 = tpu.matmul %399, %0, %cst_376 {dimension_numbers = #tpu.dot_dimension_numbers<[1], [0], [0], [1], [0, 0, 1, 1], [], []>} : vector<16x256xbf16>, vector<256x128xbf16>, vector<16x128xf32> -> vector<16x128xf32>
    %401 = arith.maximumf %397, %400 : vector<16x128xf32>
    %402 = vector.broadcast %1 : vector<1x128xf32> to vector<16x128xf32>
    %403 = arith.addf %401, %402 : vector<16x128xf32>
    %cst_377 = arith.constant 0.000000e+00 : f32
    %404 = vector.broadcast %cst_377 : f32 to vector<16x128xf32>
    %405 = arith.maximumf %403, %404 : vector<16x128xf32>
    %406 = vector.extract_strided_slice %405 {offsets = [0, 0], sizes = [16, 16], strides = [1, 1]} : vector<16x128xf32> to vector<16x16xf32>
    %407 = arith.truncf %406 : vector<16x16xf32> to vector<16x16xbf16>
    %c256 = arith.constant 256 : index
    %c0_378 = arith.constant 0 : index
    %408 = vector.load %arg4[%c256, %c0_378] : memref<400x128xbf16, #tpu.memory_space<vmem>>, vector<16x128xbf16>
    %cst_379 = arith.constant dense<0.000000e+00> : vector<16x128xf32>
    %409 = tpu.matmul %407, %408, %cst_379 {dimension_numbers = #tpu.dot_dimension_numbers<[1], [0], [0], [1], [0, 0, 1, 1], [], []>} : vector<16x16xbf16>, vector<16x128xbf16>, vector<16x128xf32> -> vector<16x128xf32>
    %410 = arith.addf %386, %409 : vector<16x128xf32>
    %c0_380 = arith.constant 0 : index
    %c17 = arith.constant 17 : index
    %c0_381 = arith.constant 0 : index
    %c0_382 = arith.constant 0 : index
    %411 = vector.load %arg1[%c0_380, %c17, %c0_381, %c0_382] : memref<4x25x16x256xbf16, #tpu.memory_space<vmem>>, vector<1x1x16x256xbf16>
    %412 = vector.shape_cast %411 : vector<1x1x16x256xbf16> to vector<16x256xbf16>
    %cst_383 = arith.constant dense<0.000000e+00> : vector<16x128xf32>
    %413 = tpu.matmul %412, %0, %cst_383 {dimension_numbers = #tpu.dot_dimension_numbers<[1], [0], [0], [1], [0, 0, 1, 1], [], []>} : vector<16x256xbf16>, vector<256x128xbf16>, vector<16x128xf32> -> vector<16x128xf32>
    %c1_384 = arith.constant 1 : index
    %c17_385 = arith.constant 17 : index
    %c0_386 = arith.constant 0 : index
    %c0_387 = arith.constant 0 : index
    %414 = vector.load %arg1[%c1_384, %c17_385, %c0_386, %c0_387] : memref<4x25x16x256xbf16, #tpu.memory_space<vmem>>, vector<1x1x16x256xbf16>
    %415 = vector.shape_cast %414 : vector<1x1x16x256xbf16> to vector<16x256xbf16>
    %cst_388 = arith.constant dense<0.000000e+00> : vector<16x128xf32>
    %416 = tpu.matmul %415, %0, %cst_388 {dimension_numbers = #tpu.dot_dimension_numbers<[1], [0], [0], [1], [0, 0, 1, 1], [], []>} : vector<16x256xbf16>, vector<256x128xbf16>, vector<16x128xf32> -> vector<16x128xf32>
    %417 = arith.maximumf %413, %416 : vector<16x128xf32>
    %c2_389 = arith.constant 2 : index
    %c17_390 = arith.constant 17 : index
    %c0_391 = arith.constant 0 : index
    %c0_392 = arith.constant 0 : index
    %418 = vector.load %arg1[%c2_389, %c17_390, %c0_391, %c0_392] : memref<4x25x16x256xbf16, #tpu.memory_space<vmem>>, vector<1x1x16x256xbf16>
    %419 = vector.shape_cast %418 : vector<1x1x16x256xbf16> to vector<16x256xbf16>
    %cst_393 = arith.constant dense<0.000000e+00> : vector<16x128xf32>
    %420 = tpu.matmul %419, %0, %cst_393 {dimension_numbers = #tpu.dot_dimension_numbers<[1], [0], [0], [1], [0, 0, 1, 1], [], []>} : vector<16x256xbf16>, vector<256x128xbf16>, vector<16x128xf32> -> vector<16x128xf32>
    %421 = arith.maximumf %417, %420 : vector<16x128xf32>
    %c3_394 = arith.constant 3 : index
    %c17_395 = arith.constant 17 : index
    %c0_396 = arith.constant 0 : index
    %c0_397 = arith.constant 0 : index
    %422 = vector.load %arg1[%c3_394, %c17_395, %c0_396, %c0_397] : memref<4x25x16x256xbf16, #tpu.memory_space<vmem>>, vector<1x1x16x256xbf16>
    %423 = vector.shape_cast %422 : vector<1x1x16x256xbf16> to vector<16x256xbf16>
    %cst_398 = arith.constant dense<0.000000e+00> : vector<16x128xf32>
    %424 = tpu.matmul %423, %0, %cst_398 {dimension_numbers = #tpu.dot_dimension_numbers<[1], [0], [0], [1], [0, 0, 1, 1], [], []>} : vector<16x256xbf16>, vector<256x128xbf16>, vector<16x128xf32> -> vector<16x128xf32>
    %425 = arith.maximumf %421, %424 : vector<16x128xf32>
    %426 = vector.broadcast %1 : vector<1x128xf32> to vector<16x128xf32>
    %427 = arith.addf %425, %426 : vector<16x128xf32>
    %cst_399 = arith.constant 0.000000e+00 : f32
    %428 = vector.broadcast %cst_399 : f32 to vector<16x128xf32>
    %429 = arith.maximumf %427, %428 : vector<16x128xf32>
    %430 = vector.extract_strided_slice %429 {offsets = [0, 0], sizes = [16, 16], strides = [1, 1]} : vector<16x128xf32> to vector<16x16xf32>
    %431 = arith.truncf %430 : vector<16x16xf32> to vector<16x16xbf16>
    %c272 = arith.constant 272 : index
    %c0_400 = arith.constant 0 : index
    %432 = vector.load %arg4[%c272, %c0_400] : memref<400x128xbf16, #tpu.memory_space<vmem>>, vector<16x128xbf16>
    %cst_401 = arith.constant dense<0.000000e+00> : vector<16x128xf32>
    %433 = tpu.matmul %431, %432, %cst_401 {dimension_numbers = #tpu.dot_dimension_numbers<[1], [0], [0], [1], [0, 0, 1, 1], [], []>} : vector<16x16xbf16>, vector<16x128xbf16>, vector<16x128xf32> -> vector<16x128xf32>
    %434 = arith.addf %410, %433 : vector<16x128xf32>
    %c0_402 = arith.constant 0 : index
    %c18 = arith.constant 18 : index
    %c0_403 = arith.constant 0 : index
    %c0_404 = arith.constant 0 : index
    %435 = vector.load %arg1[%c0_402, %c18, %c0_403, %c0_404] : memref<4x25x16x256xbf16, #tpu.memory_space<vmem>>, vector<1x1x16x256xbf16>
    %436 = vector.shape_cast %435 : vector<1x1x16x256xbf16> to vector<16x256xbf16>
    %cst_405 = arith.constant dense<0.000000e+00> : vector<16x128xf32>
    %437 = tpu.matmul %436, %0, %cst_405 {dimension_numbers = #tpu.dot_dimension_numbers<[1], [0], [0], [1], [0, 0, 1, 1], [], []>} : vector<16x256xbf16>, vector<256x128xbf16>, vector<16x128xf32> -> vector<16x128xf32>
    %c1_406 = arith.constant 1 : index
    %c18_407 = arith.constant 18 : index
    %c0_408 = arith.constant 0 : index
    %c0_409 = arith.constant 0 : index
    %438 = vector.load %arg1[%c1_406, %c18_407, %c0_408, %c0_409] : memref<4x25x16x256xbf16, #tpu.memory_space<vmem>>, vector<1x1x16x256xbf16>
    %439 = vector.shape_cast %438 : vector<1x1x16x256xbf16> to vector<16x256xbf16>
    %cst_410 = arith.constant dense<0.000000e+00> : vector<16x128xf32>
    %440 = tpu.matmul %439, %0, %cst_410 {dimension_numbers = #tpu.dot_dimension_numbers<[1], [0], [0], [1], [0, 0, 1, 1], [], []>} : vector<16x256xbf16>, vector<256x128xbf16>, vector<16x128xf32> -> vector<16x128xf32>
    %441 = arith.maximumf %437, %440 : vector<16x128xf32>
    %c2_411 = arith.constant 2 : index
    %c18_412 = arith.constant 18 : index
    %c0_413 = arith.constant 0 : index
    %c0_414 = arith.constant 0 : index
    %442 = vector.load %arg1[%c2_411, %c18_412, %c0_413, %c0_414] : memref<4x25x16x256xbf16, #tpu.memory_space<vmem>>, vector<1x1x16x256xbf16>
    %443 = vector.shape_cast %442 : vector<1x1x16x256xbf16> to vector<16x256xbf16>
    %cst_415 = arith.constant dense<0.000000e+00> : vector<16x128xf32>
    %444 = tpu.matmul %443, %0, %cst_415 {dimension_numbers = #tpu.dot_dimension_numbers<[1], [0], [0], [1], [0, 0, 1, 1], [], []>} : vector<16x256xbf16>, vector<256x128xbf16>, vector<16x128xf32> -> vector<16x128xf32>
    %445 = arith.maximumf %441, %444 : vector<16x128xf32>
    %c3_416 = arith.constant 3 : index
    %c18_417 = arith.constant 18 : index
    %c0_418 = arith.constant 0 : index
    %c0_419 = arith.constant 0 : index
    %446 = vector.load %arg1[%c3_416, %c18_417, %c0_418, %c0_419] : memref<4x25x16x256xbf16, #tpu.memory_space<vmem>>, vector<1x1x16x256xbf16>
    %447 = vector.shape_cast %446 : vector<1x1x16x256xbf16> to vector<16x256xbf16>
    %cst_420 = arith.constant dense<0.000000e+00> : vector<16x128xf32>
    %448 = tpu.matmul %447, %0, %cst_420 {dimension_numbers = #tpu.dot_dimension_numbers<[1], [0], [0], [1], [0, 0, 1, 1], [], []>} : vector<16x256xbf16>, vector<256x128xbf16>, vector<16x128xf32> -> vector<16x128xf32>
    %449 = arith.maximumf %445, %448 : vector<16x128xf32>
    %450 = vector.broadcast %1 : vector<1x128xf32> to vector<16x128xf32>
    %451 = arith.addf %449, %450 : vector<16x128xf32>
    %cst_421 = arith.constant 0.000000e+00 : f32
    %452 = vector.broadcast %cst_421 : f32 to vector<16x128xf32>
    %453 = arith.maximumf %451, %452 : vector<16x128xf32>
    %454 = vector.extract_strided_slice %453 {offsets = [0, 0], sizes = [16, 16], strides = [1, 1]} : vector<16x128xf32> to vector<16x16xf32>
    %455 = arith.truncf %454 : vector<16x16xf32> to vector<16x16xbf16>
    %c288 = arith.constant 288 : index
    %c0_422 = arith.constant 0 : index
    %456 = vector.load %arg4[%c288, %c0_422] : memref<400x128xbf16, #tpu.memory_space<vmem>>, vector<16x128xbf16>
    %cst_423 = arith.constant dense<0.000000e+00> : vector<16x128xf32>
    %457 = tpu.matmul %455, %456, %cst_423 {dimension_numbers = #tpu.dot_dimension_numbers<[1], [0], [0], [1], [0, 0, 1, 1], [], []>} : vector<16x16xbf16>, vector<16x128xbf16>, vector<16x128xf32> -> vector<16x128xf32>
    %458 = arith.addf %434, %457 : vector<16x128xf32>
    %c0_424 = arith.constant 0 : index
    %c19 = arith.constant 19 : index
    %c0_425 = arith.constant 0 : index
    %c0_426 = arith.constant 0 : index
    %459 = vector.load %arg1[%c0_424, %c19, %c0_425, %c0_426] : memref<4x25x16x256xbf16, #tpu.memory_space<vmem>>, vector<1x1x16x256xbf16>
    %460 = vector.shape_cast %459 : vector<1x1x16x256xbf16> to vector<16x256xbf16>
    %cst_427 = arith.constant dense<0.000000e+00> : vector<16x128xf32>
    %461 = tpu.matmul %460, %0, %cst_427 {dimension_numbers = #tpu.dot_dimension_numbers<[1], [0], [0], [1], [0, 0, 1, 1], [], []>} : vector<16x256xbf16>, vector<256x128xbf16>, vector<16x128xf32> -> vector<16x128xf32>
    %c1_428 = arith.constant 1 : index
    %c19_429 = arith.constant 19 : index
    %c0_430 = arith.constant 0 : index
    %c0_431 = arith.constant 0 : index
    %462 = vector.load %arg1[%c1_428, %c19_429, %c0_430, %c0_431] : memref<4x25x16x256xbf16, #tpu.memory_space<vmem>>, vector<1x1x16x256xbf16>
    %463 = vector.shape_cast %462 : vector<1x1x16x256xbf16> to vector<16x256xbf16>
    %cst_432 = arith.constant dense<0.000000e+00> : vector<16x128xf32>
    %464 = tpu.matmul %463, %0, %cst_432 {dimension_numbers = #tpu.dot_dimension_numbers<[1], [0], [0], [1], [0, 0, 1, 1], [], []>} : vector<16x256xbf16>, vector<256x128xbf16>, vector<16x128xf32> -> vector<16x128xf32>
    %465 = arith.maximumf %461, %464 : vector<16x128xf32>
    %c2_433 = arith.constant 2 : index
    %c19_434 = arith.constant 19 : index
    %c0_435 = arith.constant 0 : index
    %c0_436 = arith.constant 0 : index
    %466 = vector.load %arg1[%c2_433, %c19_434, %c0_435, %c0_436] : memref<4x25x16x256xbf16, #tpu.memory_space<vmem>>, vector<1x1x16x256xbf16>
    %467 = vector.shape_cast %466 : vector<1x1x16x256xbf16> to vector<16x256xbf16>
    %cst_437 = arith.constant dense<0.000000e+00> : vector<16x128xf32>
    %468 = tpu.matmul %467, %0, %cst_437 {dimension_numbers = #tpu.dot_dimension_numbers<[1], [0], [0], [1], [0, 0, 1, 1], [], []>} : vector<16x256xbf16>, vector<256x128xbf16>, vector<16x128xf32> -> vector<16x128xf32>
    %469 = arith.maximumf %465, %468 : vector<16x128xf32>
    %c3_438 = arith.constant 3 : index
    %c19_439 = arith.constant 19 : index
    %c0_440 = arith.constant 0 : index
    %c0_441 = arith.constant 0 : index
    %470 = vector.load %arg1[%c3_438, %c19_439, %c0_440, %c0_441] : memref<4x25x16x256xbf16, #tpu.memory_space<vmem>>, vector<1x1x16x256xbf16>
    %471 = vector.shape_cast %470 : vector<1x1x16x256xbf16> to vector<16x256xbf16>
    %cst_442 = arith.constant dense<0.000000e+00> : vector<16x128xf32>
    %472 = tpu.matmul %471, %0, %cst_442 {dimension_numbers = #tpu.dot_dimension_numbers<[1], [0], [0], [1], [0, 0, 1, 1], [], []>} : vector<16x256xbf16>, vector<256x128xbf16>, vector<16x128xf32> -> vector<16x128xf32>
    %473 = arith.maximumf %469, %472 : vector<16x128xf32>
    %474 = vector.broadcast %1 : vector<1x128xf32> to vector<16x128xf32>
    %475 = arith.addf %473, %474 : vector<16x128xf32>
    %cst_443 = arith.constant 0.000000e+00 : f32
    %476 = vector.broadcast %cst_443 : f32 to vector<16x128xf32>
    %477 = arith.maximumf %475, %476 : vector<16x128xf32>
    %478 = vector.extract_strided_slice %477 {offsets = [0, 0], sizes = [16, 16], strides = [1, 1]} : vector<16x128xf32> to vector<16x16xf32>
    %479 = arith.truncf %478 : vector<16x16xf32> to vector<16x16xbf16>
    %c304 = arith.constant 304 : index
    %c0_444 = arith.constant 0 : index
    %480 = vector.load %arg4[%c304, %c0_444] : memref<400x128xbf16, #tpu.memory_space<vmem>>, vector<16x128xbf16>
    %cst_445 = arith.constant dense<0.000000e+00> : vector<16x128xf32>
    %481 = tpu.matmul %479, %480, %cst_445 {dimension_numbers = #tpu.dot_dimension_numbers<[1], [0], [0], [1], [0, 0, 1, 1], [], []>} : vector<16x16xbf16>, vector<16x128xbf16>, vector<16x128xf32> -> vector<16x128xf32>
    %482 = arith.addf %458, %481 : vector<16x128xf32>
    %c0_446 = arith.constant 0 : index
    %c20 = arith.constant 20 : index
    %c0_447 = arith.constant 0 : index
    %c0_448 = arith.constant 0 : index
    %483 = vector.load %arg1[%c0_446, %c20, %c0_447, %c0_448] : memref<4x25x16x256xbf16, #tpu.memory_space<vmem>>, vector<1x1x16x256xbf16>
    %484 = vector.shape_cast %483 : vector<1x1x16x256xbf16> to vector<16x256xbf16>
    %cst_449 = arith.constant dense<0.000000e+00> : vector<16x128xf32>
    %485 = tpu.matmul %484, %0, %cst_449 {dimension_numbers = #tpu.dot_dimension_numbers<[1], [0], [0], [1], [0, 0, 1, 1], [], []>} : vector<16x256xbf16>, vector<256x128xbf16>, vector<16x128xf32> -> vector<16x128xf32>
    %c1_450 = arith.constant 1 : index
    %c20_451 = arith.constant 20 : index
    %c0_452 = arith.constant 0 : index
    %c0_453 = arith.constant 0 : index
    %486 = vector.load %arg1[%c1_450, %c20_451, %c0_452, %c0_453] : memref<4x25x16x256xbf16, #tpu.memory_space<vmem>>, vector<1x1x16x256xbf16>
    %487 = vector.shape_cast %486 : vector<1x1x16x256xbf16> to vector<16x256xbf16>
    %cst_454 = arith.constant dense<0.000000e+00> : vector<16x128xf32>
    %488 = tpu.matmul %487, %0, %cst_454 {dimension_numbers = #tpu.dot_dimension_numbers<[1], [0], [0], [1], [0, 0, 1, 1], [], []>} : vector<16x256xbf16>, vector<256x128xbf16>, vector<16x128xf32> -> vector<16x128xf32>
    %489 = arith.maximumf %485, %488 : vector<16x128xf32>
    %c2_455 = arith.constant 2 : index
    %c20_456 = arith.constant 20 : index
    %c0_457 = arith.constant 0 : index
    %c0_458 = arith.constant 0 : index
    %490 = vector.load %arg1[%c2_455, %c20_456, %c0_457, %c0_458] : memref<4x25x16x256xbf16, #tpu.memory_space<vmem>>, vector<1x1x16x256xbf16>
    %491 = vector.shape_cast %490 : vector<1x1x16x256xbf16> to vector<16x256xbf16>
    %cst_459 = arith.constant dense<0.000000e+00> : vector<16x128xf32>
    %492 = tpu.matmul %491, %0, %cst_459 {dimension_numbers = #tpu.dot_dimension_numbers<[1], [0], [0], [1], [0, 0, 1, 1], [], []>} : vector<16x256xbf16>, vector<256x128xbf16>, vector<16x128xf32> -> vector<16x128xf32>
    %493 = arith.maximumf %489, %492 : vector<16x128xf32>
    %c3_460 = arith.constant 3 : index
    %c20_461 = arith.constant 20 : index
    %c0_462 = arith.constant 0 : index
    %c0_463 = arith.constant 0 : index
    %494 = vector.load %arg1[%c3_460, %c20_461, %c0_462, %c0_463] : memref<4x25x16x256xbf16, #tpu.memory_space<vmem>>, vector<1x1x16x256xbf16>
    %495 = vector.shape_cast %494 : vector<1x1x16x256xbf16> to vector<16x256xbf16>
    %cst_464 = arith.constant dense<0.000000e+00> : vector<16x128xf32>
    %496 = tpu.matmul %495, %0, %cst_464 {dimension_numbers = #tpu.dot_dimension_numbers<[1], [0], [0], [1], [0, 0, 1, 1], [], []>} : vector<16x256xbf16>, vector<256x128xbf16>, vector<16x128xf32> -> vector<16x128xf32>
    %497 = arith.maximumf %493, %496 : vector<16x128xf32>
    %498 = vector.broadcast %1 : vector<1x128xf32> to vector<16x128xf32>
    %499 = arith.addf %497, %498 : vector<16x128xf32>
    %cst_465 = arith.constant 0.000000e+00 : f32
    %500 = vector.broadcast %cst_465 : f32 to vector<16x128xf32>
    %501 = arith.maximumf %499, %500 : vector<16x128xf32>
    %502 = vector.extract_strided_slice %501 {offsets = [0, 0], sizes = [16, 16], strides = [1, 1]} : vector<16x128xf32> to vector<16x16xf32>
    %503 = arith.truncf %502 : vector<16x16xf32> to vector<16x16xbf16>
    %c320 = arith.constant 320 : index
    %c0_466 = arith.constant 0 : index
    %504 = vector.load %arg4[%c320, %c0_466] : memref<400x128xbf16, #tpu.memory_space<vmem>>, vector<16x128xbf16>
    %cst_467 = arith.constant dense<0.000000e+00> : vector<16x128xf32>
    %505 = tpu.matmul %503, %504, %cst_467 {dimension_numbers = #tpu.dot_dimension_numbers<[1], [0], [0], [1], [0, 0, 1, 1], [], []>} : vector<16x16xbf16>, vector<16x128xbf16>, vector<16x128xf32> -> vector<16x128xf32>
    %506 = arith.addf %482, %505 : vector<16x128xf32>
    %c0_468 = arith.constant 0 : index
    %c21 = arith.constant 21 : index
    %c0_469 = arith.constant 0 : index
    %c0_470 = arith.constant 0 : index
    %507 = vector.load %arg1[%c0_468, %c21, %c0_469, %c0_470] : memref<4x25x16x256xbf16, #tpu.memory_space<vmem>>, vector<1x1x16x256xbf16>
    %508 = vector.shape_cast %507 : vector<1x1x16x256xbf16> to vector<16x256xbf16>
    %cst_471 = arith.constant dense<0.000000e+00> : vector<16x128xf32>
    %509 = tpu.matmul %508, %0, %cst_471 {dimension_numbers = #tpu.dot_dimension_numbers<[1], [0], [0], [1], [0, 0, 1, 1], [], []>} : vector<16x256xbf16>, vector<256x128xbf16>, vector<16x128xf32> -> vector<16x128xf32>
    %c1_472 = arith.constant 1 : index
    %c21_473 = arith.constant 21 : index
    %c0_474 = arith.constant 0 : index
    %c0_475 = arith.constant 0 : index
    %510 = vector.load %arg1[%c1_472, %c21_473, %c0_474, %c0_475] : memref<4x25x16x256xbf16, #tpu.memory_space<vmem>>, vector<1x1x16x256xbf16>
    %511 = vector.shape_cast %510 : vector<1x1x16x256xbf16> to vector<16x256xbf16>
    %cst_476 = arith.constant dense<0.000000e+00> : vector<16x128xf32>
    %512 = tpu.matmul %511, %0, %cst_476 {dimension_numbers = #tpu.dot_dimension_numbers<[1], [0], [0], [1], [0, 0, 1, 1], [], []>} : vector<16x256xbf16>, vector<256x128xbf16>, vector<16x128xf32> -> vector<16x128xf32>
    %513 = arith.maximumf %509, %512 : vector<16x128xf32>
    %c2_477 = arith.constant 2 : index
    %c21_478 = arith.constant 21 : index
    %c0_479 = arith.constant 0 : index
    %c0_480 = arith.constant 0 : index
    %514 = vector.load %arg1[%c2_477, %c21_478, %c0_479, %c0_480] : memref<4x25x16x256xbf16, #tpu.memory_space<vmem>>, vector<1x1x16x256xbf16>
    %515 = vector.shape_cast %514 : vector<1x1x16x256xbf16> to vector<16x256xbf16>
    %cst_481 = arith.constant dense<0.000000e+00> : vector<16x128xf32>
    %516 = tpu.matmul %515, %0, %cst_481 {dimension_numbers = #tpu.dot_dimension_numbers<[1], [0], [0], [1], [0, 0, 1, 1], [], []>} : vector<16x256xbf16>, vector<256x128xbf16>, vector<16x128xf32> -> vector<16x128xf32>
    %517 = arith.maximumf %513, %516 : vector<16x128xf32>
    %c3_482 = arith.constant 3 : index
    %c21_483 = arith.constant 21 : index
    %c0_484 = arith.constant 0 : index
    %c0_485 = arith.constant 0 : index
    %518 = vector.load %arg1[%c3_482, %c21_483, %c0_484, %c0_485] : memref<4x25x16x256xbf16, #tpu.memory_space<vmem>>, vector<1x1x16x256xbf16>
    %519 = vector.shape_cast %518 : vector<1x1x16x256xbf16> to vector<16x256xbf16>
    %cst_486 = arith.constant dense<0.000000e+00> : vector<16x128xf32>
    %520 = tpu.matmul %519, %0, %cst_486 {dimension_numbers = #tpu.dot_dimension_numbers<[1], [0], [0], [1], [0, 0, 1, 1], [], []>} : vector<16x256xbf16>, vector<256x128xbf16>, vector<16x128xf32> -> vector<16x128xf32>
    %521 = arith.maximumf %517, %520 : vector<16x128xf32>
    %522 = vector.broadcast %1 : vector<1x128xf32> to vector<16x128xf32>
    %523 = arith.addf %521, %522 : vector<16x128xf32>
    %cst_487 = arith.constant 0.000000e+00 : f32
    %524 = vector.broadcast %cst_487 : f32 to vector<16x128xf32>
    %525 = arith.maximumf %523, %524 : vector<16x128xf32>
    %526 = vector.extract_strided_slice %525 {offsets = [0, 0], sizes = [16, 16], strides = [1, 1]} : vector<16x128xf32> to vector<16x16xf32>
    %527 = arith.truncf %526 : vector<16x16xf32> to vector<16x16xbf16>
    %c336 = arith.constant 336 : index
    %c0_488 = arith.constant 0 : index
    %528 = vector.load %arg4[%c336, %c0_488] : memref<400x128xbf16, #tpu.memory_space<vmem>>, vector<16x128xbf16>
    %cst_489 = arith.constant dense<0.000000e+00> : vector<16x128xf32>
    %529 = tpu.matmul %527, %528, %cst_489 {dimension_numbers = #tpu.dot_dimension_numbers<[1], [0], [0], [1], [0, 0, 1, 1], [], []>} : vector<16x16xbf16>, vector<16x128xbf16>, vector<16x128xf32> -> vector<16x128xf32>
    %530 = arith.addf %506, %529 : vector<16x128xf32>
    %c0_490 = arith.constant 0 : index
    %c22 = arith.constant 22 : index
    %c0_491 = arith.constant 0 : index
    %c0_492 = arith.constant 0 : index
    %531 = vector.load %arg1[%c0_490, %c22, %c0_491, %c0_492] : memref<4x25x16x256xbf16, #tpu.memory_space<vmem>>, vector<1x1x16x256xbf16>
    %532 = vector.shape_cast %531 : vector<1x1x16x256xbf16> to vector<16x256xbf16>
    %cst_493 = arith.constant dense<0.000000e+00> : vector<16x128xf32>
    %533 = tpu.matmul %532, %0, %cst_493 {dimension_numbers = #tpu.dot_dimension_numbers<[1], [0], [0], [1], [0, 0, 1, 1], [], []>} : vector<16x256xbf16>, vector<256x128xbf16>, vector<16x128xf32> -> vector<16x128xf32>
    %c1_494 = arith.constant 1 : index
    %c22_495 = arith.constant 22 : index
    %c0_496 = arith.constant 0 : index
    %c0_497 = arith.constant 0 : index
    %534 = vector.load %arg1[%c1_494, %c22_495, %c0_496, %c0_497] : memref<4x25x16x256xbf16, #tpu.memory_space<vmem>>, vector<1x1x16x256xbf16>
    %535 = vector.shape_cast %534 : vector<1x1x16x256xbf16> to vector<16x256xbf16>
    %cst_498 = arith.constant dense<0.000000e+00> : vector<16x128xf32>
    %536 = tpu.matmul %535, %0, %cst_498 {dimension_numbers = #tpu.dot_dimension_numbers<[1], [0], [0], [1], [0, 0, 1, 1], [], []>} : vector<16x256xbf16>, vector<256x128xbf16>, vector<16x128xf32> -> vector<16x128xf32>
    %537 = arith.maximumf %533, %536 : vector<16x128xf32>
    %c2_499 = arith.constant 2 : index
    %c22_500 = arith.constant 22 : index
    %c0_501 = arith.constant 0 : index
    %c0_502 = arith.constant 0 : index
    %538 = vector.load %arg1[%c2_499, %c22_500, %c0_501, %c0_502] : memref<4x25x16x256xbf16, #tpu.memory_space<vmem>>, vector<1x1x16x256xbf16>
    %539 = vector.shape_cast %538 : vector<1x1x16x256xbf16> to vector<16x256xbf16>
    %cst_503 = arith.constant dense<0.000000e+00> : vector<16x128xf32>
    %540 = tpu.matmul %539, %0, %cst_503 {dimension_numbers = #tpu.dot_dimension_numbers<[1], [0], [0], [1], [0, 0, 1, 1], [], []>} : vector<16x256xbf16>, vector<256x128xbf16>, vector<16x128xf32> -> vector<16x128xf32>
    %541 = arith.maximumf %537, %540 : vector<16x128xf32>
    %c3_504 = arith.constant 3 : index
    %c22_505 = arith.constant 22 : index
    %c0_506 = arith.constant 0 : index
    %c0_507 = arith.constant 0 : index
    %542 = vector.load %arg1[%c3_504, %c22_505, %c0_506, %c0_507] : memref<4x25x16x256xbf16, #tpu.memory_space<vmem>>, vector<1x1x16x256xbf16>
    %543 = vector.shape_cast %542 : vector<1x1x16x256xbf16> to vector<16x256xbf16>
    %cst_508 = arith.constant dense<0.000000e+00> : vector<16x128xf32>
    %544 = tpu.matmul %543, %0, %cst_508 {dimension_numbers = #tpu.dot_dimension_numbers<[1], [0], [0], [1], [0, 0, 1, 1], [], []>} : vector<16x256xbf16>, vector<256x128xbf16>, vector<16x128xf32> -> vector<16x128xf32>
    %545 = arith.maximumf %541, %544 : vector<16x128xf32>
    %546 = vector.broadcast %1 : vector<1x128xf32> to vector<16x128xf32>
    %547 = arith.addf %545, %546 : vector<16x128xf32>
    %cst_509 = arith.constant 0.000000e+00 : f32
    %548 = vector.broadcast %cst_509 : f32 to vector<16x128xf32>
    %549 = arith.maximumf %547, %548 : vector<16x128xf32>
    %550 = vector.extract_strided_slice %549 {offsets = [0, 0], sizes = [16, 16], strides = [1, 1]} : vector<16x128xf32> to vector<16x16xf32>
    %551 = arith.truncf %550 : vector<16x16xf32> to vector<16x16xbf16>
    %c352 = arith.constant 352 : index
    %c0_510 = arith.constant 0 : index
    %552 = vector.load %arg4[%c352, %c0_510] : memref<400x128xbf16, #tpu.memory_space<vmem>>, vector<16x128xbf16>
    %cst_511 = arith.constant dense<0.000000e+00> : vector<16x128xf32>
    %553 = tpu.matmul %551, %552, %cst_511 {dimension_numbers = #tpu.dot_dimension_numbers<[1], [0], [0], [1], [0, 0, 1, 1], [], []>} : vector<16x16xbf16>, vector<16x128xbf16>, vector<16x128xf32> -> vector<16x128xf32>
    %554 = arith.addf %530, %553 : vector<16x128xf32>
    %c0_512 = arith.constant 0 : index
    %c23 = arith.constant 23 : index
    %c0_513 = arith.constant 0 : index
    %c0_514 = arith.constant 0 : index
    %555 = vector.load %arg1[%c0_512, %c23, %c0_513, %c0_514] : memref<4x25x16x256xbf16, #tpu.memory_space<vmem>>, vector<1x1x16x256xbf16>
    %556 = vector.shape_cast %555 : vector<1x1x16x256xbf16> to vector<16x256xbf16>
    %cst_515 = arith.constant dense<0.000000e+00> : vector<16x128xf32>
    %557 = tpu.matmul %556, %0, %cst_515 {dimension_numbers = #tpu.dot_dimension_numbers<[1], [0], [0], [1], [0, 0, 1, 1], [], []>} : vector<16x256xbf16>, vector<256x128xbf16>, vector<16x128xf32> -> vector<16x128xf32>
    %c1_516 = arith.constant 1 : index
    %c23_517 = arith.constant 23 : index
    %c0_518 = arith.constant 0 : index
    %c0_519 = arith.constant 0 : index
    %558 = vector.load %arg1[%c1_516, %c23_517, %c0_518, %c0_519] : memref<4x25x16x256xbf16, #tpu.memory_space<vmem>>, vector<1x1x16x256xbf16>
    %559 = vector.shape_cast %558 : vector<1x1x16x256xbf16> to vector<16x256xbf16>
    %cst_520 = arith.constant dense<0.000000e+00> : vector<16x128xf32>
    %560 = tpu.matmul %559, %0, %cst_520 {dimension_numbers = #tpu.dot_dimension_numbers<[1], [0], [0], [1], [0, 0, 1, 1], [], []>} : vector<16x256xbf16>, vector<256x128xbf16>, vector<16x128xf32> -> vector<16x128xf32>
    %561 = arith.maximumf %557, %560 : vector<16x128xf32>
    %c2_521 = arith.constant 2 : index
    %c23_522 = arith.constant 23 : index
    %c0_523 = arith.constant 0 : index
    %c0_524 = arith.constant 0 : index
    %562 = vector.load %arg1[%c2_521, %c23_522, %c0_523, %c0_524] : memref<4x25x16x256xbf16, #tpu.memory_space<vmem>>, vector<1x1x16x256xbf16>
    %563 = vector.shape_cast %562 : vector<1x1x16x256xbf16> to vector<16x256xbf16>
    %cst_525 = arith.constant dense<0.000000e+00> : vector<16x128xf32>
    %564 = tpu.matmul %563, %0, %cst_525 {dimension_numbers = #tpu.dot_dimension_numbers<[1], [0], [0], [1], [0, 0, 1, 1], [], []>} : vector<16x256xbf16>, vector<256x128xbf16>, vector<16x128xf32> -> vector<16x128xf32>
    %565 = arith.maximumf %561, %564 : vector<16x128xf32>
    %c3_526 = arith.constant 3 : index
    %c23_527 = arith.constant 23 : index
    %c0_528 = arith.constant 0 : index
    %c0_529 = arith.constant 0 : index
    %566 = vector.load %arg1[%c3_526, %c23_527, %c0_528, %c0_529] : memref<4x25x16x256xbf16, #tpu.memory_space<vmem>>, vector<1x1x16x256xbf16>
    %567 = vector.shape_cast %566 : vector<1x1x16x256xbf16> to vector<16x256xbf16>
    %cst_530 = arith.constant dense<0.000000e+00> : vector<16x128xf32>
    %568 = tpu.matmul %567, %0, %cst_530 {dimension_numbers = #tpu.dot_dimension_numbers<[1], [0], [0], [1], [0, 0, 1, 1], [], []>} : vector<16x256xbf16>, vector<256x128xbf16>, vector<16x128xf32> -> vector<16x128xf32>
    %569 = arith.maximumf %565, %568 : vector<16x128xf32>
    %570 = vector.broadcast %1 : vector<1x128xf32> to vector<16x128xf32>
    %571 = arith.addf %569, %570 : vector<16x128xf32>
    %cst_531 = arith.constant 0.000000e+00 : f32
    %572 = vector.broadcast %cst_531 : f32 to vector<16x128xf32>
    %573 = arith.maximumf %571, %572 : vector<16x128xf32>
    %574 = vector.extract_strided_slice %573 {offsets = [0, 0], sizes = [16, 16], strides = [1, 1]} : vector<16x128xf32> to vector<16x16xf32>
    %575 = arith.truncf %574 : vector<16x16xf32> to vector<16x16xbf16>
    %c368 = arith.constant 368 : index
    %c0_532 = arith.constant 0 : index
    %576 = vector.load %arg4[%c368, %c0_532] : memref<400x128xbf16, #tpu.memory_space<vmem>>, vector<16x128xbf16>
    %cst_533 = arith.constant dense<0.000000e+00> : vector<16x128xf32>
    %577 = tpu.matmul %575, %576, %cst_533 {dimension_numbers = #tpu.dot_dimension_numbers<[1], [0], [0], [1], [0, 0, 1, 1], [], []>} : vector<16x16xbf16>, vector<16x128xbf16>, vector<16x128xf32> -> vector<16x128xf32>
    %578 = arith.addf %554, %577 : vector<16x128xf32>
    %c0_534 = arith.constant 0 : index
    %c24 = arith.constant 24 : index
    %c0_535 = arith.constant 0 : index
    %c0_536 = arith.constant 0 : index
    %579 = vector.load %arg1[%c0_534, %c24, %c0_535, %c0_536] : memref<4x25x16x256xbf16, #tpu.memory_space<vmem>>, vector<1x1x16x256xbf16>
    %580 = vector.shape_cast %579 : vector<1x1x16x256xbf16> to vector<16x256xbf16>
    %cst_537 = arith.constant dense<0.000000e+00> : vector<16x128xf32>
    %581 = tpu.matmul %580, %0, %cst_537 {dimension_numbers = #tpu.dot_dimension_numbers<[1], [0], [0], [1], [0, 0, 1, 1], [], []>} : vector<16x256xbf16>, vector<256x128xbf16>, vector<16x128xf32> -> vector<16x128xf32>
    %c1_538 = arith.constant 1 : index
    %c24_539 = arith.constant 24 : index
    %c0_540 = arith.constant 0 : index
    %c0_541 = arith.constant 0 : index
    %582 = vector.load %arg1[%c1_538, %c24_539, %c0_540, %c0_541] : memref<4x25x16x256xbf16, #tpu.memory_space<vmem>>, vector<1x1x16x256xbf16>
    %583 = vector.shape_cast %582 : vector<1x1x16x256xbf16> to vector<16x256xbf16>
    %cst_542 = arith.constant dense<0.000000e+00> : vector<16x128xf32>
    %584 = tpu.matmul %583, %0, %cst_542 {dimension_numbers = #tpu.dot_dimension_numbers<[1], [0], [0], [1], [0, 0, 1, 1], [], []>} : vector<16x256xbf16>, vector<256x128xbf16>, vector<16x128xf32> -> vector<16x128xf32>
    %585 = arith.maximumf %581, %584 : vector<16x128xf32>
    %c2_543 = arith.constant 2 : index
    %c24_544 = arith.constant 24 : index
    %c0_545 = arith.constant 0 : index
    %c0_546 = arith.constant 0 : index
    %586 = vector.load %arg1[%c2_543, %c24_544, %c0_545, %c0_546] : memref<4x25x16x256xbf16, #tpu.memory_space<vmem>>, vector<1x1x16x256xbf16>
    %587 = vector.shape_cast %586 : vector<1x1x16x256xbf16> to vector<16x256xbf16>
    %cst_547 = arith.constant dense<0.000000e+00> : vector<16x128xf32>
    %588 = tpu.matmul %587, %0, %cst_547 {dimension_numbers = #tpu.dot_dimension_numbers<[1], [0], [0], [1], [0, 0, 1, 1], [], []>} : vector<16x256xbf16>, vector<256x128xbf16>, vector<16x128xf32> -> vector<16x128xf32>
    %589 = arith.maximumf %585, %588 : vector<16x128xf32>
    %c3_548 = arith.constant 3 : index
    %c24_549 = arith.constant 24 : index
    %c0_550 = arith.constant 0 : index
    %c0_551 = arith.constant 0 : index
    %590 = vector.load %arg1[%c3_548, %c24_549, %c0_550, %c0_551] : memref<4x25x16x256xbf16, #tpu.memory_space<vmem>>, vector<1x1x16x256xbf16>
    %591 = vector.shape_cast %590 : vector<1x1x16x256xbf16> to vector<16x256xbf16>
    %cst_552 = arith.constant dense<0.000000e+00> : vector<16x128xf32>
    %592 = tpu.matmul %591, %0, %cst_552 {dimension_numbers = #tpu.dot_dimension_numbers<[1], [0], [0], [1], [0, 0, 1, 1], [], []>} : vector<16x256xbf16>, vector<256x128xbf16>, vector<16x128xf32> -> vector<16x128xf32>
    %593 = arith.maximumf %589, %592 : vector<16x128xf32>
    %594 = vector.broadcast %1 : vector<1x128xf32> to vector<16x128xf32>
    %595 = arith.addf %593, %594 : vector<16x128xf32>
    %cst_553 = arith.constant 0.000000e+00 : f32
    %596 = vector.broadcast %cst_553 : f32 to vector<16x128xf32>
    %597 = arith.maximumf %595, %596 : vector<16x128xf32>
    %598 = vector.extract_strided_slice %597 {offsets = [0, 0], sizes = [16, 16], strides = [1, 1]} : vector<16x128xf32> to vector<16x16xf32>
    %599 = arith.truncf %598 : vector<16x16xf32> to vector<16x16xbf16>
    %c384 = arith.constant 384 : index
    %c0_554 = arith.constant 0 : index
    %600 = vector.load %arg4[%c384, %c0_554] : memref<400x128xbf16, #tpu.memory_space<vmem>>, vector<16x128xbf16>
    %cst_555 = arith.constant dense<0.000000e+00> : vector<16x128xf32>
    %601 = tpu.matmul %599, %600, %cst_555 {dimension_numbers = #tpu.dot_dimension_numbers<[1], [0], [0], [1], [0, 0, 1, 1], [], []>} : vector<16x16xbf16>, vector<16x128xbf16>, vector<16x128xf32> -> vector<16x128xf32>
    %602 = arith.addf %578, %601 : vector<16x128xf32>
    %c0_556 = arith.constant 0 : index
    %c0_557 = arith.constant 0 : index
    %603 = vector.load %arg5[%c0_556, %c0_557] : memref<1x128xf32, #tpu.memory_space<vmem>>, vector<1x128xf32>
    %604 = vector.broadcast %603 : vector<1x128xf32> to vector<16x128xf32>
    %605 = arith.addf %602, %604 : vector<16x128xf32>
    %cst_558 = arith.constant 0.000000e+00 : f32
    %606 = vector.broadcast %cst_558 : f32 to vector<16x128xf32>
    %607 = arith.maximumf %605, %606 : vector<16x128xf32>
    %608 = arith.truncf %607 : vector<16x128xf32> to vector<16x128xbf16>
    %c0_559 = arith.constant 0 : index
    %c0_560 = arith.constant 0 : index
    %609 = vector.load %arg6[%c0_559, %c0_560] : memref<128x128xbf16, #tpu.memory_space<vmem>>, vector<128x128xbf16>
    %cst_561 = arith.constant dense<0.000000e+00> : vector<16x128xf32>
    %610 = tpu.matmul %608, %609, %cst_561 {dimension_numbers = #tpu.dot_dimension_numbers<[1], [0], [0], [1], [0, 0, 1, 1], [], []>} : vector<16x128xbf16>, vector<128x128xbf16>, vector<16x128xf32> -> vector<16x128xf32>
    %c0_562 = arith.constant 0 : index
    %c0_563 = arith.constant 0 : index
    %611 = vector.load %arg7[%c0_562, %c0_563] : memref<1x128xf32, #tpu.memory_space<vmem>>, vector<1x128xf32>
    %612 = vector.broadcast %611 : vector<1x128xf32> to vector<16x128xf32>
    %613 = arith.addf %610, %612 : vector<16x128xf32>
    %cst_564 = arith.constant 0.000000e+00 : f32
    %614 = vector.broadcast %cst_564 : f32 to vector<16x128xf32>
    %615 = arith.maximumf %613, %614 : vector<16x128xf32>
    %616 = arith.truncf %615 : vector<16x128xf32> to vector<16x128xbf16>
    %c0_565 = arith.constant 0 : index
    %c0_566 = arith.constant 0 : index
    %617 = vector.load %arg8[%c0_565, %c0_566] : memref<128x128xbf16, #tpu.memory_space<vmem>>, vector<128x128xbf16>
    %cst_567 = arith.constant dense<0.000000e+00> : vector<16x128xf32>
    %618 = tpu.matmul %616, %617, %cst_567 {dimension_numbers = #tpu.dot_dimension_numbers<[1], [0], [0], [1], [0, 0, 1, 1], [], []>} : vector<16x128xbf16>, vector<128x128xbf16>, vector<16x128xf32> -> vector<16x128xf32>
    %c0_568 = arith.constant 0 : index
    %c0_569 = arith.constant 0 : index
    %619 = vector.load %arg9[%c0_568, %c0_569] : memref<1x128xf32, #tpu.memory_space<vmem>>, vector<1x128xf32>
    %620 = vector.broadcast %619 : vector<1x128xf32> to vector<16x128xf32>
    %621 = arith.addf %618, %620 : vector<16x128xf32>
    %c0_570 = arith.constant 0 : index
    %c0_571 = arith.constant 0 : index
    %622 = vector.load %arg10[%c0_570, %c0_571] : memref<16x128xf32, #tpu.memory_space<vmem>>, vector<16x128xf32>
    tpu.vector_store %arg10[%c0_570, %c0_571], %621 {strides = array<i32>} : memref<16x128xf32, #tpu.memory_space<vmem>>, vector<16x128xf32>,
    return
  }
  func.func @transform_0(%arg0: i32) -> (i32, i32, i32, i32) {
    %c0_i32 = arith.constant 0 : i32
    %c0_i32_0 = arith.constant 0 : i32
    %c0_i32_1 = arith.constant 0 : i32
    %c0_i32_2 = arith.constant 0 : i32
    return %c0_i32, %c0_i32_0, %arg0, %c0_i32_1 : i32, i32, i32, i32
  }
  func.func @transform_1(%arg0: i32) -> (i32, i32) {
    %c0_i32 = arith.constant 0 : i32
    %c0_i32_0 = arith.constant 0 : i32
    %c0_i32_1 = arith.constant 0 : i32
    return %c0_i32, %c0_i32_0 : i32, i32
  }
  func.func @transform_2(%arg0: i32) -> (i32, i32) {
    %c0_i32 = arith.constant 0 : i32
    %c0_i32_0 = arith.constant 0 : i32
    %c0_i32_1 = arith.constant 0 : i32
    return %c0_i32, %c0_i32_0 : i32, i32
  }
  func.func @transform_3(%arg0: i32) -> (i32, i32) {
    %c0_i32 = arith.constant 0 : i32
    %c0_i32_0 = arith.constant 0 : i32
    %c0_i32_1 = arith.constant 0 : i32
    return %c0_i32, %c0_i32_0 : i32, i32
  }
  func.func @transform_4(%arg0: i32) -> (i32, i32) {
    %c0_i32 = arith.constant 0 : i32
    %c0_i32_0 = arith.constant 0 : i32
    %c0_i32_1 = arith.constant 0 : i32
    return %c0_i32, %c0_i32_0 : i32, i32
  }
  func.func @transform_5(%arg0: i32) -> (i32, i32) {
    %c0_i32 = arith.constant 0 : i32
    %c0_i32_0 = arith.constant 0 : i32
    %c0_i32_1 = arith.constant 0 : i32
    return %c0_i32, %c0_i32_0 : i32, i32
  }
  func.func @transform_6(%arg0: i32) -> (i32, i32) {
    %c0_i32 = arith.constant 0 : i32
    %c0_i32_0 = arith.constant 0 : i32
    %c0_i32_1 = arith.constant 0 : i32
    return %c0_i32, %c0_i32_0 : i32, i32
  }
  func.func @transform_7(%arg0: i32) -> (i32, i32) {
    %c0_i32 = arith.constant 0 : i32
    %c0_i32_0 = arith.constant 0 : i32
    %c0_i32_1 = arith.constant 0 : i32
    return %c0_i32, %c0_i32_0 : i32, i32
  }
  func.func @transform_8(%arg0: i32) -> (i32, i32) {
    %c0_i32 = arith.constant 0 : i32
    %c0_i32_0 = arith.constant 0 : i32
    %c0_i32_1 = arith.constant 0 : i32
    return %c0_i32, %c0_i32_0 : i32, i32
  }
  func.func @transform_9(%arg0: i32) -> (i32, i32) {
    %c0_i32 = arith.constant 0 : i32
    %c0_i32_0 = arith.constant 0 : i32
    return %arg0, %c0_i32 : i32, i32
  }
}

</mosaic_0001>

<llo_original>
// kernel: net_forward.2
$region0: #{net_forward.2}
  #allocation0 [shape = 'u32[]', space=smem, size = 0x4, offset = 0x4, fixed_abs, tag = 'smem constant byte address 0x4 - core index']
  #allocation1 [shape = 'u32[144,128]{1,0:T(1,128)}', space=vmem, size = 0x12000, scoped, tag = 'internal scratch']
  %s0 = inlined_call_operand.vmem [shape: bf16[4,400,128], index: 0, kind: input, shape index: {}]
  %s1 = inlined_call_operand.vmem [shape: bf16[128,128], index: 1, kind: input, shape index: {}]
  %s2 = inlined_call_operand.vmem [shape: f32[1,128], index: 2, kind: input, shape index: {}]
  %s3 = inlined_call_operand.vmem [shape: bf16[400,128], index: 3, kind: output, shape index: {}]
  %s4 = sld [smem:[#allocation0]]
  $region22: #{net_forward.2} parent=0
    _
  %s6 = ssub.s32 1, %s4
  %s7 = scalar_select 0, %s6, %s4
  // Predicated region
  $region2: #{net_forward.2} parent=0 // pred_check
    _
  $region3: #{net_forward.2} parent=0 // pred_check_branch
    %9 = sbr.rel (0) target = $region5
  $region4: #{net_forward.2} parent=0 // pred_region
    _
  $region5: #{net_forward.2} parent=0 // pred_fallthru
    _
  // Predicated region
  $region6: #{net_forward.2} parent=0 // pred_check
    _
  $region7: #{net_forward.2} parent=0 // pred_check_branch
    %11 = sbr.rel (0) target = $region9
  $region8: #{net_forward.2} parent=0 // pred_region
    _
  $region9: #{net_forward.2} parent=0 // pred_fallthru
    _
  // Predicated region
  $region10: #{net_forward.2} parent=0 // pred_check
    _
  $region11: #{net_forward.2} parent=0 // pred_check_branch
    %13 = sbr.rel (0) target = $region13
  $region12: #{net_forward.2} parent=0 // pred_region
    _
  $region13: #{net_forward.2} parent=0 // pred_fallthru
    _
  %v15 = vld [vmem:[%s1] sm:$0xf]
  %v16 = vld [vmem:[%s1 + $0x4] sm:$0xf]
  %v17 = vld [vmem:[%s1 + $0x8] sm:$0xf]
  %v18 = vld [vmem:[%s1 + $0xc] sm:$0xf]
  %v19 = vld [vmem:[%s1 + $0x10] sm:$0xf]
  %v20 = vld [vmem:[%s1 + $0x14] sm:$0xf]
  %v21 = vld [vmem:[%s1 + $0x18] sm:$0xf]
  %v22 = vld [vmem:[%s1 + $0x1c] sm:$0xf]
  %v23 = vld [vmem:[%s1 + $0x20] sm:$0xf]
  %v24 = vld [vmem:[%s1 + $0x24] sm:$0xf]
  %v25 = vld [vmem:[%s1 + $0x28] sm:$0xf]
  %v26 = vld [vmem:[%s1 + $0x2c] sm:$0xf]
  %v27 = vld [vmem:[%s1 + $0x30] sm:$0xf]
  %v28 = vld [vmem:[%s1 + $0x34] sm:$0xf]
  %v29 = vld [vmem:[%s1 + $0x38] sm:$0xf]
  %v30 = vld [vmem:[%s1 + $0x3c] sm:$0xf]
  %v31 = vld [vmem:[%s0] sm:$0xf]
  %v32 = vld [vmem:[%s0 + $0x4] sm:$0xf]
  %v33 = vld [vmem:[%s0 + $0x8] sm:$0xf]
  %v34 = vld [vmem:[%s0 + $0xc] sm:$0xf]
  %v35 = vld [vmem:[%s0 + $0x10] sm:$0xf]
  %v36 = vld [vmem:[%s0 + $0x14] sm:$0xf]
  %v37 = vld [vmem:[%s0 + $0x18] sm:$0xf]
  %v38 = vld [vmem:[%s0 + $0x1c] sm:$0xf]
  %v39 = vld [vmem:[%s0 + $0x20] sm:$0xf]
  %v40 = vld [vmem:[%s0 + $0x24] sm:$0xf]
  %v41 = vld [vmem:[%s0 + $0x28] sm:$0xf]
  %v42 = vld [vmem:[%s0 + $0x2c] sm:$0xf]
  %v43 = vld [vmem:[%s0 + $0x30] sm:$0xf]
  %v44 = vld [vmem:[%s0 + $0x34] sm:$0xf]
  %v45 = vld [vmem:[%s0 + $0x38] sm:$0xf]
  %v46 = vld [vmem:[%s0 + $0x3c] sm:$0xf]
  %v47 = vld [vmem:[%s0 + $0x40] sm:$0xf]
  %v48 = vld [vmem:[%s0 + $0x44] sm:$0xf]
  %v49 = vld [vmem:[%s0 + $0x48] sm:$0xf]
  %v50 = vld [vmem:[%s0 + $0x4c] sm:$0xf]
  %v51 = vld [vmem:[%s0 + $0x50] sm:$0xf]
  %v52 = vld [vmem:[%s0 + $0x54] sm:$0xf]
  %v53 = vld [vmem:[%s0 + $0x58] sm:$0xf]
  %v54 = vld [vmem:[%s0 + $0x5c] sm:$0xf]
  %v55 = vld [vmem:[%s0 + $0x60] sm:$0xf]
  %v56 = vld [vmem:[%s0 + $0x64] sm:$0xf]
  %v57 = vld [vmem:[%s0 + $0x68] sm:$0xf]
  %v58 = vld [vmem:[%s0 + $0x6c] sm:$0xf]
  %v59 = vld [vmem:[%s0 + $0x70] sm:$0xf]
  %v60 = vld [vmem:[%s0 + $0x74] sm:$0xf]
  %v61 = vld [vmem:[%s0 + $0x78] sm:$0xf]
  %v62 = vld [vmem:[%s0 + $0x7c] sm:$0xf]
  %v63 = vld [vmem:[%s0 + $0x80] sm:$0xf]
  %v64 = vld [vmem:[%s0 + $0x84] sm:$0xf]
  %v65 = vld [vmem:[%s0 + $0x88] sm:$0xf]
  %v66 = vld [vmem:[%s0 + $0x8c] sm:$0xf]
  %v67 = vld [vmem:[%s0 + $0x90] sm:$0xf]
  %v68 = vld [vmem:[%s0 + $0x94] sm:$0xf]
  %v69 = vld [vmem:[%s0 + $0x98] sm:$0xf]
  %v70 = vld [vmem:[%s0 + $0x9c] sm:$0xf]
  %v71 = vld [vmem:[%s0 + $0xa0] sm:$0xf]
  %v72 = vld [vmem:[%s0 + $0xa4] sm:$0xf]
  %v73 = vld [vmem:[%s0 + $0xa8] sm:$0xf]
  %v74 = vld [vmem:[%s0 + $0xac] sm:$0xf]
  %v75 = vld [vmem:[%s0 + $0xb0] sm:$0xf]
  %v76 = vld [vmem:[%s0 + $0xb4] sm:$0xf]
  %v77 = vld [vmem:[%s0 + $0xb8] sm:$0xf]
  %v78 = vld [vmem:[%s0 + $0xbc] sm:$0xf]
  %v79 = vld [vmem:[%s0 + $0xc0] sm:$0xf]
  %v80 = vld [vmem:[%s0 + $0xc4] sm:$0xf]
  %v131 = vunpack.c.l.b16 %v31
  %v132 = vunpack.c.l.b16 %v32
  %v133 = vunpack.c.l.b16 %v33
  %v134 = vunpack.c.l.b16 %v34
  %v135 = vunpack.c.l.b16 %v35
  %v136 = vunpack.c.l.b16 %v36
  %v137 = vunpack.c.l.b16 %v37
  %v138 = vunpack.c.l.b16 %v38
  %v139 = vunpack.c.l.b16 %v39
  %v140 = vunpack.c.l.b16 %v40
  %v141 = vunpack.c.l.b16 %v41
  %v142 = vunpack.c.l.b16 %v42
  %v143 = vunpack.c.l.b16 %v43
  %v144 = vunpack.c.l.b16 %v44
  %v145 = vunpack.c.l.b16 %v45
  %v146 = vunpack.c.l.b16 %v46
  %v147 = vunpack.c.l.b16 %v47
  %v148 = vunpack.c.l.b16 %v48
  %v149 = vunpack.c.l.b16 %v49
  %v150 = vunpack.c.l.b16 %v50
  %v151 = vunpack.c.l.b16 %v51
  %v152 = vunpack.c.l.b16 %v52
  %v153 = vunpack.c.l.b16 %v53
  %v154 = vunpack.c.l.b16 %v54
  %v155 = vunpack.c.l.b16 %v55
  %v156 = vunpack.c.l.b16 %v56
  %v157 = vunpack.c.l.b16 %v57
  %v158 = vunpack.c.l.b16 %v58
  %v159 = vunpack.c.l.b16 %v59
  %v160 = vunpack.c.l.b16 %v60
  %v161 = vunpack.c.l.b16 %v61
  %v162 = vunpack.c.l.b16 %v62
  %v163 = vunpack.c.l.b16 %v63
  %v164 = vunpack.c.l.b16 %v64
  %v165 = vunpack.c.l.b16 %v65
  %v166 = vunpack.c.l.b16 %v66
  %v167 = vunpack.c.l.b16 %v67
  %v168 = vunpack.c.l.b16 %v68
  %v169 = vunpack.c.l.b16 %v69
  %v170 = vunpack.c.l.b16 %v70
  %v171 = vunpack.c.l.b16 %v71
  %v172 = vunpack.c.l.b16 %v72
  %v173 = vunpack.c.l.b16 %v73
  %v174 = vunpack.c.l.b16 %v74
  %v175 = vunpack.c.l.b16 %v75
  %v176 = vunpack.c.l.b16 %v76
  %v177 = vunpack.c.l.b16 %v77
  %v178 = vunpack.c.l.b16 %v78
  %v179 = vunpack.c.l.b16 %v79
  %v180 = vunpack.c.l.b16 %v80
  %v181 = vpack.c.b16 %v132, %v131
  %v182 = vpack.c.b16 %v134, %v133
  %v183 = vpack.c.b16 %v136, %v135
  %v184 = vpack.c.b16 %v138, %v137
  %v185 = vpack.c.b16 %v140, %v139
  %v186 = vpack.c.b16 %v142, %v141
  %v187 = vpack.c.b16 %v144, %v143
  %v188 = vpack.c.b16 %v146, %v145
  %v189 = vpack.c.b16 %v148, %v147
  %v190 = vpack.c.b16 %v150, %v149
  %v191 = vpack.c.b16 %v152, %v151
  %v192 = vpack.c.b16 %v154, %v153
  %v193 = vpack.c.b16 %v156, %v155
  %v194 = vpack.c.b16 %v158, %v157
  %v195 = vpack.c.b16 %v160, %v159
  %v196 = vpack.c.b16 %v162, %v161
  %v197 = vpack.c.b16 %v164, %v163
  %v198 = vpack.c.b16 %v166, %v165
  %v199 = vpack.c.b16 %v168, %v167
  %v200 = vpack.c.b16 %v170, %v169
  %v201 = vpack.c.b16 %v172, %v171
  %v202 = vpack.c.b16 %v174, %v173
  %v203 = vpack.c.b16 %v176, %v175
  %v204 = vpack.c.b16 %v178, %v177
  %v205 = vpack.c.b16 %v180, %v179
  %v247 = vunpack.c.l.b16 %v15
  %v248 = vunpack.c.l.b16 %v16
  %v249 = vunpack.c.l.b16 %v17
  %v250 = vunpack.c.l.b16 %v18
  %v251 = vunpack.c.l.b16 %v19
  %v252 = vunpack.c.l.b16 %v20
  %v253 = vunpack.c.l.b16 %v21
  %v254 = vunpack.c.l.b16 %v22
  %v255 = vunpack.c.l.b16 %v23
  %v256 = vunpack.c.l.b16 %v24
  %v257 = vunpack.c.l.b16 %v25
  %v258 = vunpack.c.l.b16 %v26
  %v259 = vunpack.c.l.b16 %v27
  %v260 = vunpack.c.l.b16 %v28
  %v261 = vunpack.c.l.b16 %v29
  %v262 = vunpack.c.l.b16 %v30
  %v263 = vpack.c.b16 %v248, %v247
  %v264 = vpack.c.b16 %v250, %v249
  %v265 = vpack.c.b16 %v252, %v251
  %v266 = vpack.c.b16 %v254, %v253
  %v267 = vpack.c.b16 %v256, %v255
  %v268 = vpack.c.b16 %v258, %v257
  %v269 = vpack.c.b16 %v260, %v259
  %v270 = vpack.c.b16 %v262, %v261
  %279 = vmatprep.subr.bf16.mxu0 0
  %280 = vmatpush1.bf16.msra.mxu0 %v270
  %281 = vmatprep.subr.bf16.mxu0 0
  %282 = vmatpush1.bf16.msra.mxu0 %v269
  %283 = vmatprep.subr.bf16.mxu0 0
  %284 = vmatpush1.bf16.msra.mxu0 %v268
  %285 = vmatprep.subr.bf16.mxu0 0
  %286 = vmatpush1.bf16.msra.mxu0 %v267
  %287 = vmatprep.subr.bf16.mxu0 0
  %288 = vmatpush1.bf16.msra.mxu0 %v266
  %289 = vmatprep.subr.bf16.mxu0 0
  %290 = vmatpush1.bf16.msra.mxu0 %v265
  %291 = vmatprep.subr.bf16.mxu0 0
  %292 = vmatpush1.bf16.msra.mxu0 %v264
  %293 = vmatprep.subr.bf16.mxu0 0
  %294 = vmatpush1.bf16.msra.mxu0 %v263
  %295 = vmatprep.subr.bf16.mxu0 0
  %296 = vmatpush2.bf16.msra.mxu0 0
  %297 = vmatprep.subr.bf16.mxu0 0
  %298 = vmatpush2.bf16.msra.mxu0 0
  %299 = vmatprep.subr.bf16.mxu0 0
  %300 = vmatpush2.bf16.msra.mxu0 0
  %301 = vmatprep.subr.bf16.mxu0 0
  %302 = vmatpush2.bf16.msra.mxu0 0
  %303 = vmatprep.subr.bf16.mxu0 0
  %304 = vmatpush2.bf16.msra.mxu0 0
  %305 = vmatprep.subr.bf16.mxu0 0
  %306 = vmatpush2.bf16.msra.mxu0 0
  %307 = vmatprep.subr.bf16.mxu0 0
  %308 = vmatpush2.bf16.msra.mxu0 0
  %309 = vmatprep.subr.bf16.mxu0 0
  %310 = vmatpush2.bf16.msra.mxu0 0
  %311 = vmatprep.mubr.bf16.mxu0 0
  %312 = vmatmul.mubr.bf16.gmra.mxu0 %v181
  %v313 = vpop.f32.mrf.mxu0
  %v314 = vadd.f32 0.0, %v313
  %v315 = vpop.f32.mrf.mxu0
  %v316 = vpop.f32.mrf.mxu0
  %v317 = vadd.f32 0.0, %v316
  %v318 = vpop.f32.mrf.mxu0
  %319 = vmatprep.mubr.bf16.mxu0 0
  %320 = vmatmul.mubr.bf16.gmra.mxu0 %v182
  %v321 = vpop.f32.mrf.mxu0
  %v322 = vadd.f32 0.0, %v321
  %v323 = vpop.f32.mrf.mxu0
  %v324 = vpop.f32.mrf.mxu0
  %v325 = vadd.f32 0.0, %v324
  %v326 = vpop.f32.mrf.mxu0
  %327 = vmatprep.mubr.bf16.mxu0 0
  %328 = vmatmul.mubr.bf16.gmra.mxu0 %v183
  %v329 = vpop.f32.mrf.mxu0
  %v330 = vadd.f32 0.0, %v329
  %v331 = vpop.f32.mrf.mxu0
  %v332 = vpop.f32.mrf.mxu0
  %v333 = vadd.f32 0.0, %v332
  %v334 = vpop.f32.mrf.mxu0
  %335 = vmatprep.mubr.bf16.mxu0 0
  %336 = vmatmul.mubr.bf16.gmra.mxu0 %v184
  %v337 = vpop.f32.mrf.mxu0
  %v338 = vadd.f32 0.0, %v337
  %v339 = vpop.f32.mrf.mxu0
  %v340 = vpop.f32.mrf.mxu0
  %v341 = vadd.f32 0.0, %v340
  %v342 = vpop.f32.mrf.mxu0
  %343 = vmatprep.mubr.bf16.mxu0 0
  %344 = vmatmul.mubr.bf16.gmra.mxu0 %v185
  %v345 = vpop.f32.mrf.mxu0
  %v346 = vadd.f32 0.0, %v345
  %v347 = vpop.f32.mrf.mxu0
  %v348 = vpop.f32.mrf.mxu0
  %v349 = vadd.f32 0.0, %v348
  %v350 = vpop.f32.mrf.mxu0
  %351 = vmatprep.mubr.bf16.mxu0 0
  %352 = vmatmul.mubr.bf16.gmra.mxu0 %v186
  %v353 = vpop.f32.mrf.mxu0
  %v354 = vadd.f32 0.0, %v353
  %v355 = vpop.f32.mrf.mxu0
  %v356 = vpop.f32.mrf.mxu0
  %v357 = vadd.f32 0.0, %v356
  %v358 = vpop.f32.mrf.mxu0
  %359 = vmatprep.mubr.bf16.mxu0 0
  %360 = vmatmul.mubr.bf16.gmra.mxu0 %v187
  %v361 = vpop.f32.mrf.mxu0
  %v362 = vadd.f32 0.0, %v361
  %v363 = vpop.f32.mrf.mxu0
  %v364 = vpop.f32.mrf.mxu0
  %v365 = vadd.f32 0.0, %v364
  %v366 = vpop.f32.mrf.mxu0
  %367 = vmatprep.mubr.bf16.mxu0 0
  %368 = vmatmul.mubr.bf16.gmra.mxu0 %v188
  %v369 = vpop.f32.mrf.mxu0
  %v370 = vadd.f32 0.0, %v369
  %v371 = vpop.f32.mrf.mxu0
  %v372 = vpop.f32.mrf.mxu0
  %v373 = vadd.f32 0.0, %v372
  %v374 = vpop.f32.mrf.mxu0
  %375 = vmatprep.mubr.bf16.mxu0 0
  %376 = vmatmul.mubr.bf16.gmra.mxu0 %v189
  %v377 = vpop.f32.mrf.mxu0
  %v378 = vadd.f32 0.0, %v377
  %v379 = vpop.f32.mrf.mxu0
  %v380 = vpop.f32.mrf.mxu0
  %v381 = vadd.f32 0.0, %v380
  %v382 = vpop.f32.mrf.mxu0
  %383 = vmatprep.mubr.bf16.mxu0 0
  %384 = vmatmul.mubr.bf16.gmra.mxu0 %v190
  %v385 = vpop.f32.mrf.mxu0
  %v386 = vadd.f32 0.0, %v385
  %v387 = vpop.f32.mrf.mxu0
  %v388 = vpop.f32.mrf.mxu0
  %v389 = vadd.f32 0.0, %v388
  %v390 = vpop.f32.mrf.mxu0
  %391 = vmatprep.mubr.bf16.mxu0 0
  %392 = vmatmul.mubr.bf16.gmra.mxu0 %v191
  %v393 = vpop.f32.mrf.mxu0
  %v394 = vadd.f32 0.0, %v393
  %v395 = vpop.f32.mrf.mxu0
  %v396 = vpop.f32.mrf.mxu0
  %v397 = vadd.f32 0.0, %v396
  %v398 = vpop.f32.mrf.mxu0
  %399 = vmatprep.mubr.bf16.mxu0 0
  %400 = vmatmul.mubr.bf16.gmra.mxu0 %v192
  %v401 = vpop.f32.mrf.mxu0
  %v402 = vadd.f32 0.0, %v401
  %v403 = vpop.f32.mrf.mxu0
  %v404 = vpop.f32.mrf.mxu0
  %v405 = vadd.f32 0.0, %v404
  %v406 = vpop.f32.mrf.mxu0
  %407 = vmatprep.mubr.bf16.mxu0 0
  %408 = vmatmul.mubr.bf16.gmra.mxu0 %v193
  %v409 = vpop.f32.mrf.mxu0
  %v410 = vadd.f32 0.0, %v409
  %v411 = vpop.f32.mrf.mxu0
  %v412 = vpop.f32.mrf.mxu0
  %v413 = vadd.f32 0.0, %v412
  %v414 = vpop.f32.mrf.mxu0
  %415 = vmatprep.mubr.bf16.mxu0 0
  %416 = vmatmul.mubr.bf16.gmra.mxu0 %v194
  %v417 = vpop.f32.mrf.mxu0
  %v418 = vadd.f32 0.0, %v417
  %v419 = vpop.f32.mrf.mxu0
  %v420 = vpop.f32.mrf.mxu0
  %v421 = vadd.f32 0.0, %v420
  %v422 = vpop.f32.mrf.mxu0
  %423 = vmatprep.mubr.bf16.mxu0 0
  %424 = vmatmul.mubr.bf16.gmra.mxu0 %v195
  %v425 = vpop.f32.mrf.mxu0
  %v426 = vadd.f32 0.0, %v425
  %v427 = vpop.f32.mrf.mxu0
  %v428 = vpop.f32.mrf.mxu0
  %v429 = vadd.f32 0.0, %v428
  %v430 = vpop.f32.mrf.mxu0
  %431 = vmatprep.mubr.bf16.mxu0 0
  %432 = vmatmul.mubr.bf16.gmra.mxu0 %v196
  %v433 = vpop.f32.mrf.mxu0
  %v434 = vadd.f32 0.0, %v433
  %v435 = vpop.f32.mrf.mxu0
  %v436 = vpop.f32.mrf.mxu0
  %v437 = vadd.f32 0.0, %v436
  %v438 = vpop.f32.mrf.mxu0
  %439 = vmatprep.mubr.bf16.mxu0 0
  %440 = vmatmul.mubr.bf16.gmra.mxu0 %v197
  %v441 = vpop.f32.mrf.mxu0
  %v442 = vadd.f32 0.0, %v441
  %v443 = vpop.f32.mrf.mxu0
  %v444 = vpop.f32.mrf.mxu0
  %v445 = vadd.f32 0.0, %v444
  %v446 = vpop.f32.mrf.mxu0
  %447 = vmatprep.mubr.bf16.mxu0 0
  %448 = vmatmul.mubr.bf16.gmra.mxu0 %v198
  %v449 = vpop.f32.mrf.mxu0
  %v450 = vadd.f32 0.0, %v449
  %v451 = vpop.f32.mrf.mxu0
  %v452 = vpop.f32.mrf.mxu0
  %v453 = vadd.f32 0.0, %v452
  %v454 = vpop.f32.mrf.mxu0
  %455 = vmatprep.mubr.bf16.mxu0 0
  %456 = vmatmul.mubr.bf16.gmra.mxu0 %v199
  %v457 = vpop.f32.mrf.mxu0
  %v458 = vadd.f32 0.0, %v457
  %v459 = vpop.f32.mrf.mxu0
  %v460 = vpop.f32.mrf.mxu0
  %v461 = vadd.f32 0.0, %v460
  %v462 = vpop.f32.mrf.mxu0
  %463 = vmatprep.mubr.bf16.mxu0 0
  %464 = vmatmul.mubr.bf16.gmra.mxu0 %v200
  %v465 = vpop.f32.mrf.mxu0
  %v466 = vadd.f32 0.0, %v465
  %v467 = vpop.f32.mrf.mxu0
  %v468 = vpop.f32.mrf.mxu0
  %v469 = vadd.f32 0.0, %v468
  %v470 = vpop.f32.mrf.mxu0
  %471 = vmatprep.mubr.bf16.mxu0 0
  %472 = vmatmul.mubr.bf16.gmra.mxu0 %v201
  %v473 = vpop.f32.mrf.mxu0
  %v474 = vadd.f32 0.0, %v473
  %v475 = vpop.f32.mrf.mxu0
  %v476 = vpop.f32.mrf.mxu0
  %v477 = vadd.f32 0.0, %v476
  %v478 = vpop.f32.mrf.mxu0
  %479 = vmatprep.mubr.bf16.mxu0 0
  %480 = vmatmul.mubr.bf16.gmra.mxu0 %v202
  %v481 = vpop.f32.mrf.mxu0
  %v482 = vadd.f32 0.0, %v481
  %v483 = vpop.f32.mrf.mxu0
  %v484 = vpop.f32.mrf.mxu0
  %v485 = vadd.f32 0.0, %v484
  %v486 = vpop.f32.mrf.mxu0
  %487 = vmatprep.mubr.bf16.mxu0 0
  %488 = vmatmul.mubr.bf16.gmra.mxu0 %v203
  %v489 = vpop.f32.mrf.mxu0
  %v490 = vadd.f32 0.0, %v489
  %v491 = vpop.f32.mrf.mxu0
  %v492 = vpop.f32.mrf.mxu0
  %v493 = vadd.f32 0.0, %v492
  %v494 = vpop.f32.mrf.mxu0
  %495 = vmatprep.mubr.bf16.mxu0 0
  %496 = vmatmul.mubr.bf16.gmra.mxu0 %v204
  %v497 = vpop.f32.mrf.mxu0
  %v498 = vadd.f32 0.0, %v497
  %v499 = vpop.f32.mrf.mxu0
  %v500 = vpop.f32.mrf.mxu0
  %v501 = vadd.f32 0.0, %v500
  %v502 = vpop.f32.mrf.mxu0
  %503 = vmatprep.mubr.bf16.mxu0 0
  %504 = vmatmul.mubr.bf16.gmra.mxu0 %v205
  %v505 = vpop.f32.mrf.mxu0
  %v506 = vadd.f32 0.0, %v505
  %v507 = vpop.f32.mrf.mxu0
  %v508 = vpop.f32.mrf.mxu0
  %v509 = vadd.f32 0.0, %v508
  %v510 = vpop.f32.mrf.mxu0
  %511 = vdwg.mxu0
  %s512 = scalar_lea.vmem %s0, 200
  %v513 = vld [vmem:[%s512] sm:$0xf]
  %v514 = vld [vmem:[%s512 + $0x4] sm:$0xf]
  %v515 = vld [vmem:[%s512 + $0x8] sm:$0xf]
  %v516 = vld [vmem:[%s512 + $0xc] sm:$0xf]
  %v517 = vld [vmem:[%s512 + $0x10] sm:$0xf]
  %v518 = vld [vmem:[%s512 + $0x14] sm:$0xf]
  %v519 = vld [vmem:[%s512 + $0x18] sm:$0xf]
  %v520 = vld [vmem:[%s512 + $0x1c] sm:$0xf]
  %v521 = vld [vmem:[%s512 + $0x20] sm:$0xf]
  %v522 = vld [vmem:[%s512 + $0x24] sm:$0xf]
  %v523 = vld [vmem:[%s512 + $0x28] sm:$0xf]
  %v524 = vld [vmem:[%s512 + $0x2c] sm:$0xf]
  %v525 = vld [vmem:[%s512 + $0x30] sm:$0xf]
  %v526 = vld [vmem:[%s512 + $0x34] sm:$0xf]
  %v527 = vld [vmem:[%s512 + $0x38] sm:$0xf]
  %v528 = vld [vmem:[%s512 + $0x3c] sm:$0xf]
  %v529 = vld [vmem:[%s512 + $0x40] sm:$0xf]
  %v530 = vld [vmem:[%s512 + $0x44] sm:$0xf]
  %v531 = vld [vmem:[%s512 + $0x48] sm:$0xf]
  %v532 = vld [vmem:[%s512 + $0x4c] sm:$0xf]
  %v533 = vld [vmem:[%s512 + $0x50] sm:$0xf]
  %v534 = vld [vmem:[%s512 + $0x54] sm:$0xf]
  %v535 = vld [vmem:[%s512 + $0x58] sm:$0xf]
  %v536 = vld [vmem:[%s512 + $0x5c] sm:$0xf]
  %v537 = vld [vmem:[%s512 + $0x60] sm:$0xf]
  %v538 = vld [vmem:[%s512 + $0x64] sm:$0xf]
  %v539 = vld [vmem:[%s512 + $0x68] sm:$0xf]
  %v540 = vld [vmem:[%s512 + $0x6c] sm:$0xf]
  %v541 = vld [vmem:[%s512 + $0x70] sm:$0xf]
  %v542 = vld [vmem:[%s512 + $0x74] sm:$0xf]
  %v543 = vld [vmem:[%s512 + $0x78] sm:$0xf]
  %v544 = vld [vmem:[%s512 + $0x7c] sm:$0xf]
  %v545 = vld [vmem:[%s512 + $0x80] sm:$0xf]
  %v546 = vld [vmem:[%s512 + $0x84] sm:$0xf]
  %v547 = vld [vmem:[%s512 + $0x88] sm:$0xf]
  %v548 = vld [vmem:[%s512 + $0x8c] sm:$0xf]
  %v549 = vld [vmem:[%s512 + $0x90] sm:$0xf]
  %v550 = vld [vmem:[%s512 + $0x94] sm:$0xf]
  %v551 = vld [vmem:[%s512 + $0x98] sm:$0xf]
  %v552 = vld [vmem:[%s512 + $0x9c] sm:$0xf]
  %v553 = vld [vmem:[%s512 + $0xa0] sm:$0xf]
  %v554 = vld [vmem:[%s512 + $0xa4] sm:$0xf]
  %v555 = vld [vmem:[%s512 + $0xa8] sm:$0xf]
  %v556 = vld [vmem:[%s512 + $0xac] sm:$0xf]
  %v557 = vld [vmem:[%s512 + $0xb0] sm:$0xf]
  %v558 = vld [vmem:[%s512 + $0xb4] sm:$0xf]
  %v559 = vld [vmem:[%s512 + $0xb8] sm:$0xf]
  %v560 = vld [vmem:[%s512 + $0xbc] sm:$0xf]
  %v561 = vld [vmem:[%s512 + $0xc0] sm:$0xf]
  %v562 = vld [vmem:[%s512 + $0xc4] sm:$0xf]
  %v613 = vunpack.c.l.b16 %v513
  %v614 = vunpack.c.l.b16 %v514
  %v615 = vunpack.c.l.b16 %v515
  %v616 = vunpack.c.l.b16 %v516
  %v617 = vunpack.c.l.b16 %v517
  %v618 = vunpack.c.l.b16 %v518
  %v619 = vunpack.c.l.b16 %v519
  %v620 = vunpack.c.l.b16 %v520
  %v621 = vunpack.c.l.b16 %v521
  %v622 = vunpack.c.l.b16 %v522
  %v623 = vunpack.c.l.b16 %v523
  %v624 = vunpack.c.l.b16 %v524
  %v625 = vunpack.c.l.b16 %v525
  %v626 = vunpack.c.l.b16 %v526
  %v627 = vunpack.c.l.b16 %v527
  %v628 = vunpack.c.l.b16 %v528
  %v629 = vunpack.c.l.b16 %v529
  %v630 = vunpack.c.l.b16 %v530
  %v631 = vunpack.c.l.b16 %v531
  %v632 = vunpack.c.l.b16 %v532
  %v633 = vunpack.c.l.b16 %v533
  %v634 = vunpack.c.l.b16 %v534
  %v635 = vunpack.c.l.b16 %v535
  %v636 = vunpack.c.l.b16 %v536
  %v637 = vunpack.c.l.b16 %v537
  %v638 = vunpack.c.l.b16 %v538
  %v639 = vunpack.c.l.b16 %v539
  %v640 = vunpack.c.l.b16 %v540
  %v641 = vunpack.c.l.b16 %v541
  %v642 = vunpack.c.l.b16 %v542
  %v643 = vunpack.c.l.b16 %v543
  %v644 = vunpack.c.l.b16 %v544
  %v645 = vunpack.c.l.b16 %v545
  %v646 = vunpack.c.l.b16 %v546
  %v647 = vunpack.c.l.b16 %v547
  %v648 = vunpack.c.l.b16 %v548
  %v649 = vunpack.c.l.b16 %v549
  %v650 = vunpack.c.l.b16 %v550
  %v651 = vunpack.c.l.b16 %v551
  %v652 = vunpack.c.l.b16 %v552
  %v653 = vunpack.c.l.b16 %v553
  %v654 = vunpack.c.l.b16 %v554
  %v655 = vunpack.c.l.b16 %v555
  %v656 = vunpack.c.l.b16 %v556
  %v657 = vunpack.c.l.b16 %v557
  %v658 = vunpack.c.l.b16 %v558
  %v659 = vunpack.c.l.b16 %v559
  %v660 = vunpack.c.l.b16 %v560
  %v661 = vunpack.c.l.b16 %v561
  %v662 = vunpack.c.l.b16 %v562
  %v663 = vpack.c.b16 %v614, %v613
  %v664 = vpack.c.b16 %v616, %v615
  %v665 = vpack.c.b16 %v618, %v617
  %v666 = vpack.c.b16 %v620, %v619
  %v667 = vpack.c.b16 %v622, %v621
  %v668 = vpack.c.b16 %v624, %v623
  %v669 = vpack.c.b16 %v626, %v625
  %v670 = vpack.c.b16 %v628, %v627
  %v671 = vpack.c.b16 %v630, %v629
  %v672 = vpack.c.b16 %v632, %v631
  %v673 = vpack.c.b16 %v634, %v633
  %v674 = vpack.c.b16 %v636, %v635
  %v675 = vpack.c.b16 %v638, %v637
  %v676 = vpack.c.b16 %v640, %v639
  %v677 = vpack.c.b16 %v642, %v641
  %v678 = vpack.c.b16 %v644, %v643
  %v679 = vpack.c.b16 %v646, %v645
  %v680 = vpack.c.b16 %v648, %v647
  %v681 = vpack.c.b16 %v650, %v649
  %v682 = vpack.c.b16 %v652, %v651
  %v683 = vpack.c.b16 %v654, %v653
  %v684 = vpack.c.b16 %v656, %v655
  %v685 = vpack.c.b16 %v658, %v657
  %v686 = vpack.c.b16 %v660, %v659
  %v687 = vpack.c.b16 %v662, %v661
  %713 = vmatprep.subr.bf16.mxu0 0
  %714 = vmatpush1.bf16.msra.mxu0 %v270
  %715 = vmatprep.subr.bf16.mxu0 0
  %716 = vmatpush1.bf16.msra.mxu0 %v269
  %717 = vmatprep.subr.bf16.mxu0 0
  %718 = vmatpush1.bf16.msra.mxu0 %v268
  %719 = vmatprep.subr.bf16.mxu0 0
  %720 = vmatpush1.bf16.msra.mxu0 %v267
  %721 = vmatprep.subr.bf16.mxu0 0
  %722 = vmatpush1.bf16.msra.mxu0 %v266
  %723 = vmatprep.subr.bf16.mxu0 0
  %724 = vmatpush1.bf16.msra.mxu0 %v265
  %725 = vmatprep.subr.bf16.mxu0 0
  %726 = vmatpush1.bf16.msra.mxu0 %v264
  %727 = vmatprep.subr.bf16.mxu0 0
  %728 = vmatpush1.bf16.msra.mxu0 %v263
  %729 = vmatprep.subr.bf16.mxu0 0
  %730 = vmatpush2.bf16.msra.mxu0 0
  %731 = vmatprep.subr.bf16.mxu0 0
  %732 = vmatpush2.bf16.msra.mxu0 0
  %733 = vmatprep.subr.bf16.mxu0 0
  %734 = vmatpush2.bf16.msra.mxu0 0
  %735 = vmatprep.subr.bf16.mxu0 0
  %736 = vmatpush2.bf16.msra.mxu0 0
  %737 = vmatprep.subr.bf16.mxu0 0
  %738 = vmatpush2.bf16.msra.mxu0 0
  %739 = vmatprep.subr.bf16.mxu0 0
  %740 = vmatpush2.bf16.msra.mxu0 0
  %741 = vmatprep.subr.bf16.mxu0 0
  %742 = vmatpush2.bf16.msra.mxu0 0
  %743 = vmatprep.subr.bf16.mxu0 0
  %744 = vmatpush2.bf16.msra.mxu0 0
  %745 = vmatprep.mubr.bf16.mxu0 0
  %746 = vmatmul.mubr.bf16.gmra.mxu0 %v663
  %v747 = vpop.f32.mrf.mxu0
  %v748 = vadd.f32 0.0, %v747
  %v749 = vpop.f32.mrf.mxu0
  %v750 = vpop.f32.mrf.mxu0
  %v751 = vadd.f32 0.0, %v750
  %v752 = vpop.f32.mrf.mxu0
  %753 = vmatprep.mubr.bf16.mxu0 0
  %754 = vmatmul.mubr.bf16.gmra.mxu0 %v664
  %v755 = vpop.f32.mrf.mxu0
  %v756 = vadd.f32 0.0, %v755
  %v757 = vpop.f32.mrf.mxu0
  %v758 = vpop.f32.mrf.mxu0
  %v759 = vadd.f32 0.0, %v758
  %v760 = vpop.f32.mrf.mxu0
  %761 = vmatprep.mubr.bf16.mxu0 0
  %762 = vmatmul.mubr.bf16.gmra.mxu0 %v665
  %v763 = vpop.f32.mrf.mxu0
  %v764 = vadd.f32 0.0, %v763
  %v765 = vpop.f32.mrf.mxu0
  %v766 = vpop.f32.mrf.mxu0
  %v767 = vadd.f32 0.0, %v766
  %v768 = vpop.f32.mrf.mxu0
  %769 = vmatprep.mubr.bf16.mxu0 0
  %770 = vmatmul.mubr.bf16.gmra.mxu0 %v666
  %v771 = vpop.f32.mrf.mxu0
  %v772 = vadd.f32 0.0, %v771
  %v773 = vpop.f32.mrf.mxu0
  %v774 = vpop.f32.mrf.mxu0
  %v775 = vadd.f32 0.0, %v774
  %v776 = vpop.f32.mrf.mxu0
  %777 = vmatprep.mubr.bf16.mxu0 0
  %778 = vmatmul.mubr.bf16.gmra.mxu0 %v667
  %v779 = vpop.f32.mrf.mxu0
  %v780 = vadd.f32 0.0, %v779
  %v781 = vpop.f32.mrf.mxu0
  %v782 = vpop.f32.mrf.mxu0
  %v783 = vadd.f32 0.0, %v782
  %v784 = vpop.f32.mrf.mxu0
  %785 = vmatprep.mubr.bf16.mxu0 0
  %786 = vmatmul.mubr.bf16.gmra.mxu0 %v668
  %v787 = vpop.f32.mrf.mxu0
  %v788 = vadd.f32 0.0, %v787
  %v789 = vpop.f32.mrf.mxu0
  %v790 = vpop.f32.mrf.mxu0
  %v791 = vadd.f32 0.0, %v790
  %v792 = vpop.f32.mrf.mxu0
  %793 = vmatprep.mubr.bf16.mxu0 0
  %794 = vmatmul.mubr.bf16.gmra.mxu0 %v669
  %v795 = vpop.f32.mrf.mxu0
  %v796 = vadd.f32 0.0, %v795
  %v797 = vpop.f32.mrf.mxu0
  %v798 = vpop.f32.mrf.mxu0
  %v799 = vadd.f32 0.0, %v798
  %v800 = vpop.f32.mrf.mxu0
  %801 = vmatprep.mubr.bf16.mxu0 0
  %802 = vmatmul.mubr.bf16.gmra.mxu0 %v670
  %v803 = vpop.f32.mrf.mxu0
  %v804 = vadd.f32 0.0, %v803
  %v805 = vpop.f32.mrf.mxu0
  %v806 = vpop.f32.mrf.mxu0
  %v807 = vadd.f32 0.0, %v806
  %v808 = vpop.f32.mrf.mxu0
  %809 = vmatprep.mubr.bf16.mxu0 0
  %810 = vmatmul.mubr.bf16.gmra.mxu0 %v671
  %v811 = vpop.f32.mrf.mxu0
  %v812 = vadd.f32 0.0, %v811
  %v813 = vpop.f32.mrf.mxu0
  %v814 = vpop.f32.mrf.mxu0
  %v815 = vadd.f32 0.0, %v814
  %v816 = vpop.f32.mrf.mxu0
  %817 = vmatprep.mubr.bf16.mxu0 0
  %818 = vmatmul.mubr.bf16.gmra.mxu0 %v672
  %v819 = vpop.f32.mrf.mxu0
  %v820 = vadd.f32 0.0, %v819
  %v821 = vpop.f32.mrf.mxu0
  %v822 = vpop.f32.mrf.mxu0
  %v823 = vadd.f32 0.0, %v822
  %v824 = vpop.f32.mrf.mxu0
  %825 = vmatprep.mubr.bf16.mxu0 0
  %826 = vmatmul.mubr.bf16.gmra.mxu0 %v673
  %v827 = vpop.f32.mrf.mxu0
  %v828 = vadd.f32 0.0, %v827
  %v829 = vpop.f32.mrf.mxu0
  %v830 = vpop.f32.mrf.mxu0
  %v831 = vadd.f32 0.0, %v830
  %v832 = vpop.f32.mrf.mxu0
  %833 = vmatprep.mubr.bf16.mxu0 0
  %834 = vmatmul.mubr.bf16.gmra.mxu0 %v674
  %v835 = vpop.f32.mrf.mxu0
  %v836 = vadd.f32 0.0, %v835
  %v837 = vpop.f32.mrf.mxu0
  %v838 = vpop.f32.mrf.mxu0
  %v839 = vadd.f32 0.0, %v838
  %v840 = vpop.f32.mrf.mxu0
  %841 = vmatprep.mubr.bf16.mxu0 0
  %842 = vmatmul.mubr.bf16.gmra.mxu0 %v675
  %v843 = vpop.f32.mrf.mxu0
  %v844 = vadd.f32 0.0, %v843
  %v845 = vpop.f32.mrf.mxu0
  %v846 = vpop.f32.mrf.mxu0
  %v847 = vadd.f32 0.0, %v846
  %v848 = vpop.f32.mrf.mxu0
  %849 = vmatprep.mubr.bf16.mxu0 0
  %850 = vmatmul.mubr.bf16.gmra.mxu0 %v676
  %v851 = vpop.f32.mrf.mxu0
  %v852 = vadd.f32 0.0, %v851
  %v853 = vpop.f32.mrf.mxu0
  %v854 = vpop.f32.mrf.mxu0
  %v855 = vadd.f32 0.0, %v854
  %v856 = vpop.f32.mrf.mxu0
  %857 = vmatprep.mubr.bf16.mxu0 0
  %858 = vmatmul.mubr.bf16.gmra.mxu0 %v677
  %v859 = vpop.f32.mrf.mxu0
  %v860 = vadd.f32 0.0, %v859
  %v861 = vpop.f32.mrf.mxu0
  %v862 = vpop.f32.mrf.mxu0
  %v863 = vadd.f32 0.0, %v862
  %v864 = vpop.f32.mrf.mxu0
  %865 = vmatprep.mubr.bf16.mxu0 0
  %866 = vmatmul.mubr.bf16.gmra.mxu0 %v678
  %v867 = vpop.f32.mrf.mxu0
  %v868 = vadd.f32 0.0, %v867
  %v869 = vpop.f32.mrf.mxu0
  %v870 = vpop.f32.mrf.mxu0
  %v871 = vadd.f32 0.0, %v870
  %v872 = vpop.f32.mrf.mxu0
  %873 = vmatprep.mubr.bf16.mxu0 0
  %874 = vmatmul.mubr.bf16.gmra.mxu0 %v679
  %v875 = vpop.f32.mrf.mxu0
  %v876 = vadd.f32 0.0, %v875
  %v877 = vpop.f32.mrf.mxu0
  %v878 = vpop.f32.mrf.mxu0
  %v879 = vadd.f32 0.0, %v878
  %v880 = vpop.f32.mrf.mxu0
  %881 = vmatprep.mubr.bf16.mxu0 0
  %882 = vmatmul.mubr.bf16.gmra.mxu0 %v680
  %v883 = vpop.f32.mrf.mxu0
  %v884 = vadd.f32 0.0, %v883
  %v885 = vpop.f32.mrf.mxu0
  %v886 = vpop.f32.mrf.mxu0
  %v887 = vadd.f32 0.0, %v886
  %v888 = vpop.f32.mrf.mxu0
  %889 = vmatprep.mubr.bf16.mxu0 0
  %890 = vmatmul.mubr.bf16.gmra.mxu0 %v681
  %v891 = vpop.f32.mrf.mxu0
  %v892 = vadd.f32 0.0, %v891
  %v893 = vpop.f32.mrf.mxu0
  %v894 = vpop.f32.mrf.mxu0
  %v895 = vadd.f32 0.0, %v894
  %v896 = vpop.f32.mrf.mxu0
  %897 = vmatprep.mubr.bf16.mxu0 0
  %898 = vmatmul.mubr.bf16.gmra.mxu0 %v682
  %v899 = vpop.f32.mrf.mxu0
  %v900 = vadd.f32 0.0, %v899
  %v901 = vpop.f32.mrf.mxu0
  %v902 = vpop.f32.mrf.mxu0
  %v903 = vadd.f32 0.0, %v902
  %v904 = vpop.f32.mrf.mxu0
  %905 = vmatprep.mubr.bf16.mxu0 0
  %906 = vmatmul.mubr.bf16.gmra.mxu0 %v683
  %v907 = vpop.f32.mrf.mxu0
  %v908 = vadd.f32 0.0, %v907
  %v909 = vpop.f32.mrf.mxu0
  %v910 = vpop.f32.mrf.mxu0
  %v911 = vadd.f32 0.0, %v910
  %v912 = vpop.f32.mrf.mxu0
  %913 = vmatprep.mubr.bf16.mxu0 0
  %914 = vmatmul.mubr.bf16.gmra.mxu0 %v684
  %v915 = vpop.f32.mrf.mxu0
  %v916 = vadd.f32 0.0, %v915
  %v917 = vpop.f32.mrf.mxu0
  %v918 = vpop.f32.mrf.mxu0
  %v919 = vadd.f32 0.0, %v918
  %v920 = vpop.f32.mrf.mxu0
  %921 = vmatprep.mubr.bf16.mxu0 0
  %922 = vmatmul.mubr.bf16.gmra.mxu0 %v685
  %v923 = vpop.f32.mrf.mxu0
  %v924 = vadd.f32 0.0, %v923
  %v925 = vpop.f32.mrf.mxu0
  %v926 = vpop.f32.mrf.mxu0
  %v927 = vadd.f32 0.0, %v926
  %v928 = vpop.f32.mrf.mxu0
  %929 = vmatprep.mubr.bf16.mxu0 0
  %930 = vmatmul.mubr.bf16.gmra.mxu0 %v686
  %v931 = vpop.f32.mrf.mxu0
  %v932 = vadd.f32 0.0, %v931
  %v933 = vpop.f32.mrf.mxu0
  %v934 = vpop.f32.mrf.mxu0
  %v935 = vadd.f32 0.0, %v934
  %v936 = vpop.f32.mrf.mxu0
  %937 = vmatprep.mubr.bf16.mxu0 0
  %938 = vmatmul.mubr.bf16.gmra.mxu0 %v687
  %v939 = vpop.f32.mrf.mxu0
  %v940 = vadd.f32 0.0, %v939
  %v941 = vpop.f32.mrf.mxu0
  %v942 = vpop.f32.mrf.mxu0
  %v943 = vadd.f32 0.0, %v942
  %v944 = vpop.f32.mrf.mxu0
  %945 = vdwg.mxu0
  %v946 = vmax.f32 %v314, %v748
  %v947 = vmax.f32 %v317, %v751
  %v948 = vmax.f32 %v322, %v756
  %v949 = vmax.f32 %v325, %v759
  %v950 = vmax.f32 %v330, %v764
  %v951 = vmax.f32 %v333, %v767
  %v952 = vmax.f32 %v338, %v772
  %v953 = vmax.f32 %v341, %v775
  %v954 = vmax.f32 %v346, %v780
  %v955 = vmax.f32 %v349, %v783
  %v956 = vmax.f32 %v354, %v788
  %v957 = vmax.f32 %v357, %v791
  %v958 = vmax.f32 %v362, %v796
  %v959 = vmax.f32 %v365, %v799
  %v960 = vmax.f32 %v370, %v804
  %v961 = vmax.f32 %v373, %v807
  %v962 = vmax.f32 %v378, %v812
  %v963 = vmax.f32 %v381, %v815
  %v964 = vmax.f32 %v386, %v820
  %v965 = vmax.f32 %v389, %v823
  %v966 = vmax.f32 %v394, %v828
  %v967 = vmax.f32 %v397, %v831
  %v968 = vmax.f32 %v402, %v836
  %v969 = vmax.f32 %v405, %v839
  %v970 = vmax.f32 %v410, %v844
  %v971 = vmax.f32 %v413, %v847
  %v972 = vmax.f32 %v418, %v852
  %v973 = vmax.f32 %v421, %v855
  %v974 = vmax.f32 %v426, %v860
  %v975 = vmax.f32 %v429, %v863
  %v976 = vmax.f32 %v434, %v868
  %v977 = vmax.f32 %v437, %v871
  %v978 = vmax.f32 %v442, %v876
  %v979 = vmax.f32 %v445, %v879
  %v980 = vmax.f32 %v450, %v884
  %v981 = vmax.f32 %v453, %v887
  %v982 = vmax.f32 %v458, %v892
  %v983 = vmax.f32 %v461, %v895
  %v984 = vmax.f32 %v466, %v900
  %v985 = vmax.f32 %v469, %v903
  %v986 = vmax.f32 %v474, %v908
  %v987 = vmax.f32 %v477, %v911
  %v988 = vmax.f32 %v482, %v916
  %v989 = vmax.f32 %v485, %v919
  %v990 = vmax.f32 %v490, %v924
  %v991 = vmax.f32 %v493, %v927
  %v992 = vmax.f32 %v498, %v932
  %v993 = vmax.f32 %v501, %v935
  %v994 = vmax.f32 %v506, %v940
  %v995 = vmax.f32 %v509, %v943
  %s996 = scalar_lea.vmem %s0, 400
  %v997 = vld [vmem:[%s996] sm:$0xf]
  %v998 = vld [vmem:[%s996 + $0x4] sm:$0xf]
  %v999 = vld [vmem:[%s996 + $0x8] sm:$0xf]
  %v1000 = vld [vmem:[%s996 + $0xc] sm:$0xf]
  %v1001 = vld [vmem:[%s996 + $0x10] sm:$0xf]
  %v1002 = vld [vmem:[%s996 + $0x14] sm:$0xf]
  %v1003 = vld [vmem:[%s996 + $0x18] sm:$0xf]
  %v1004 = vld [vmem:[%s996 + $0x1c] sm:$0xf]
  %v1005 = vld [vmem:[%s996 + $0x20] sm:$0xf]
  %v1006 = vld [vmem:[%s996 + $0x24] sm:$0xf]
  %v1007 = vld [vmem:[%s996 + $0x28] sm:$0xf]
  %v1008 = vld [vmem:[%s996 + $0x2c] sm:$0xf]
  %v1009 = vld [vmem:[%s996 + $0x30] sm:$0xf]
  %v1010 = vld [vmem:[%s996 + $0x34] sm:$0xf]
  %v1011 = vld [vmem:[%s996 + $0x38] sm:$0xf]
  %v1012 = vld [vmem:[%s996 + $0x3c] sm:$0xf]
  %v1013 = vld [vmem:[%s996 + $0x40] sm:$0xf]
  %v1014 = vld [vmem:[%s996 + $0x44] sm:$0xf]
  %v1015 = vld [vmem:[%s996 + $0x48] sm:$0xf]
  %v1016 = vld [vmem:[%s996 + $0x4c] sm:$0xf]
  %v1017 = vld [vmem:[%s996 + $0x50] sm:$0xf]
  %v1018 = vld [vmem:[%s996 + $0x54] sm:$0xf]
  %v1019 = vld [vmem:[%s996 + $0x58] sm:$0xf]
  %v1020 = vld [vmem:[%s996 + $0x5c] sm:$0xf]
  %v1021 = vld [vmem:[%s996 + $0x60] sm:$0xf]
  %v1022 = vld [vmem:[%s996 + $0x64] sm:$0xf]
  %v1023 = vld [vmem:[%s996 + $0x68] sm:$0xf]
  %v1024 = vld [vmem:[%s996 + $0x6c] sm:$0xf]
  %v1025 = vld [vmem:[%s996 + $0x70] sm:$0xf]
  %v1026 = vld [vmem:[%s996 + $0x74] sm:$0xf]
  %v1027 = vld [vmem:[%s996 + $0x78] sm:$0xf]
  %v1028 = vld [vmem:[%s996 + $0x7c] sm:$0xf]
  %v1029 = vld [vmem:[%s996 + $0x80] sm:$0xf]
  %v1030 = vld [vmem:[%s996 + $0x84] sm:$0xf]
  %v1031 = vld [vmem:[%s996 + $0x88] sm:$0xf]
  %v1032 = vld [vmem:[%s996 + $0x8c] sm:$0xf]
  %v1033 = vld [vmem:[%s996 + $0x90] sm:$0xf]
  %v1034 = vld [vmem:[%s996 + $0x94] sm:$0xf]
  %v1035 = vld [vmem:[%s996 + $0x98] sm:$0xf]
  %v1036 = vld [vmem:[%s996 + $0x9c] sm:$0xf]
  %v1037 = vld [vmem:[%s996 + $0xa0] sm:$0xf]
  %v1038 = vld [vmem:[%s996 + $0xa4] sm:$0xf]
  %v1039 = vld [vmem:[%s996 + $0xa8] sm:$0xf]
  %v1040 = vld [vmem:[%s996 + $0xac] sm:$0xf]
  %v1041 = vld [vmem:[%s996 + $0xb0] sm:$0xf]
  %v1042 = vld [vmem:[%s996 + $0xb4] sm:$0xf]
  %v1043 = vld [vmem:[%s996 + $0xb8] sm:$0xf]
  %v1044 = vld [vmem:[%s996 + $0xbc] sm:$0xf]
  %v1045 = vld [vmem:[%s996 + $0xc0] sm:$0xf]
  %v1046 = vld [vmem:[%s996 + $0xc4] sm:$0xf]
  %v1097 = vunpack.c.l.b16 %v997
  %v1098 = vunpack.c.l.b16 %v998
  %v1099 = vunpack.c.l.b16 %v999
  %v1100 = vunpack.c.l.b16 %v1000
  %v1101 = vunpack.c.l.b16 %v1001
  %v1102 = vunpack.c.l.b16 %v1002
  %v1103 = vunpack.c.l.b16 %v1003
  %v1104 = vunpack.c.l.b16 %v1004
  %v1105 = vunpack.c.l.b16 %v1005
  %v1106 = vunpack.c.l.b16 %v1006
  %v1107 = vunpack.c.l.b16 %v1007
  %v1108 = vunpack.c.l.b16 %v1008
  %v1109 = vunpack.c.l.b16 %v1009
  %v1110 = vunpack.c.l.b16 %v1010
  %v1111 = vunpack.c.l.b16 %v1011
  %v1112 = vunpack.c.l.b16 %v1012
  %v1113 = vunpack.c.l.b16 %v1013
  %v1114 = vunpack.c.l.b16 %v1014
  %v1115 = vunpack.c.l.b16 %v1015
  %v1116 = vunpack.c.l.b16 %v1016
  %v1117 = vunpack.c.l.b16 %v1017
  %v1118 = vunpack.c.l.b16 %v1018
  %v1119 = vunpack.c.l.b16 %v1019
  %v1120 = vunpack.c.l.b16 %v1020
  %v1121 = vunpack.c.l.b16 %v1021
  %v1122 = vunpack.c.l.b16 %v1022
  %v1123 = vunpack.c.l.b16 %v1023
  %v1124 = vunpack.c.l.b16 %v1024
  %v1125 = vunpack.c.l.b16 %v1025
  %v1126 = vunpack.c.l.b16 %v1026
  %v1127 = vunpack.c.l.b16 %v1027
  %v1128 = vunpack.c.l.b16 %v1028
  %v1129 = vunpack.c.l.b16 %v1029
  %v1130 = vunpack.c.l.b16 %v1030
  %v1131 = vunpack.c.l.b16 %v1031
  %v1132 = vunpack.c.l.b16 %v1032
  %v1133 = vunpack.c.l.b16 %v1033
  %v1134 = vunpack.c.l.b16 %v1034
  %v1135 = vunpack.c.l.b16 %v1035
  %v1136 = vunpack.c.l.b16 %v1036
  %v1137 = vunpack.c.l.b16 %v1037
  %v1138 = vunpack.c.l.b16 %v1038
  %v1139 = vunpack.c.l.b16 %v1039
  %v1140 = vunpack.c.l.b16 %v1040
  %v1141 = vunpack.c.l.b16 %v1041
  %v1142 = vunpack.c.l.b16 %v1042
  %v1143 = vunpack.c.l.b16 %v1043
  %v1144 = vunpack.c.l.b16 %v1044
  %v1145 = vunpack.c.l.b16 %v1045
  %v1146 = vunpack.c.l.b16 %v1046
  %v1147 = vpack.c.b16 %v1098, %v1097
  %v1148 = vpack.c.b16 %v1100, %v1099
  %v1149 = vpack.c.b16 %v1102, %v1101
  %v1150 = vpack.c.b16 %v1104, %v1103
  %v1151 = vpack.c.b16 %v1106, %v1105
  %v1152 = vpack.c.b16 %v1108, %v1107
  %v1153 = vpack.c.b16 %v1110, %v1109
  %v1154 = vpack.c.b16 %v1112, %v1111
  %v1155 = vpack.c.b16 %v1114, %v1113
  %v1156 = vpack.c.b16 %v1116, %v1115
  %v1157 = vpack.c.b16 %v1118, %v1117
  %v1158 = vpack.c.b16 %v1120, %v1119
  %v1159 = vpack.c.b16 %v1122, %v1121
  %v1160 = vpack.c.b16 %v1124, %v1123
  %v1161 = vpack.c.b16 %v1126, %v1125
  %v1162 = vpack.c.b16 %v1128, %v1127
  %v1163 = vpack.c.b16 %v1130, %v1129
  %v1164 = vpack.c.b16 %v1132, %v1131
  %v1165 = vpack.c.b16 %v1134, %v1133
  %v1166 = vpack.c.b16 %v1136, %v1135
  %v1167 = vpack.c.b16 %v1138, %v1137
  %v1168 = vpack.c.b16 %v1140, %v1139
  %v1169 = vpack.c.b16 %v1142, %v1141
  %v1170 = vpack.c.b16 %v1144, %v1143
  %v1171 = vpack.c.b16 %v1146, %v1145
  %1197 = vmatprep.subr.bf16.mxu0 0
  %1198 = vmatpush1.bf16.msra.mxu0 %v270
  %1199 = vmatprep.subr.bf16.mxu0 0
  %1200 = vmatpush1.bf16.msra.mxu0 %v269
  %1201 = vmatprep.subr.bf16.mxu0 0
  %1202 = vmatpush1.bf16.msra.mxu0 %v268
  %1203 = vmatprep.subr.bf16.mxu0 0
  %1204 = vmatpush1.bf16.msra.mxu0 %v267
  %1205 = vmatprep.subr.bf16.mxu0 0
  %1206 = vmatpush1.bf16.msra.mxu0 %v266
  %1207 = vmatprep.subr.bf16.mxu0 0
  %1208 = vmatpush1.bf16.msra.mxu0 %v265
  %1209 = vmatprep.subr.bf16.mxu0 0
  %1210 = vmatpush1.bf16.msra.mxu0 %v264
  %1211 = vmatprep.subr.bf16.mxu0 0
  %1212 = vmatpush1.bf16.msra.mxu0 %v263
  %1213 = vmatprep.subr.bf16.mxu0 0
  %1214 = vmatpush2.bf16.msra.mxu0 0
  %1215 = vmatprep.subr.bf16.mxu0 0
  %1216 = vmatpush2.bf16.msra.mxu0 0
  %1217 = vmatprep.subr.bf16.mxu0 0
  %1218 = vmatpush2.bf16.msra.mxu0 0
  %1219 = vmatprep.subr.bf16.mxu0 0
  %1220 = vmatpush2.bf16.msra.mxu0 0
  %1221 = vmatprep.subr.bf16.mxu0 0
  %1222 = vmatpush2.bf16.msra.mxu0 0
  %1223 = vmatprep.subr.bf16.mxu0 0
  %1224 = vmatpush2.bf16.msra.mxu0 0
  %1225 = vmatprep.subr.bf16.mxu0 0
  %1226 = vmatpush2.bf16.msra.mxu0 0
  %1227 = vmatprep.subr.bf16.mxu0 0
  %1228 = vmatpush2.bf16.msra.mxu0 0
  %1229 = vmatprep.mubr.bf16.mxu0 0
  %1230 = vmatmul.mubr.bf16.gmra.mxu0 %v1147
  %v1231 = vpop.f32.mrf.mxu0
  %v1232 = vadd.f32 0.0, %v1231
  %v1233 = vpop.f32.mrf.mxu0
  %v1234 = vpop.f32.mrf.mxu0
  %v1235 = vadd.f32 0.0, %v1234
  %v1236 = vpop.f32.mrf.mxu0
  %1237 = vmatprep.mubr.bf16.mxu0 0
  %1238 = vmatmul.mubr.bf16.gmra.mxu0 %v1148
  %v1239 = vpop.f32.mrf.mxu0
  %v1240 = vadd.f32 0.0, %v1239
  %v1241 = vpop.f32.mrf.mxu0
  %v1242 = vpop.f32.mrf.mxu0
  %v1243 = vadd.f32 0.0, %v1242
  %v1244 = vpop.f32.mrf.mxu0
  %1245 = vmatprep.mubr.bf16.mxu0 0
  %1246 = vmatmul.mubr.bf16.gmra.mxu0 %v1149
  %v1247 = vpop.f32.mrf.mxu0
  %v1248 = vadd.f32 0.0, %v1247
  %v1249 = vpop.f32.mrf.mxu0
  %v1250 = vpop.f32.mrf.mxu0
  %v1251 = vadd.f32 0.0, %v1250
  %v1252 = vpop.f32.mrf.mxu0
  %1253 = vmatprep.mubr.bf16.mxu0 0
  %1254 = vmatmul.mubr.bf16.gmra.mxu0 %v1150
  %v1255 = vpop.f32.mrf.mxu0
  %v1256 = vadd.f32 0.0, %v1255
  %v1257 = vpop.f32.mrf.mxu0
  %v1258 = vpop.f32.mrf.mxu0
  %v1259 = vadd.f32 0.0, %v1258
  %v1260 = vpop.f32.mrf.mxu0
  %1261 = vmatprep.mubr.bf16.mxu0 0
  %1262 = vmatmul.mubr.bf16.gmra.mxu0 %v1151
  %v1263 = vpop.f32.mrf.mxu0
  %v1264 = vadd.f32 0.0, %v1263
  %v1265 = vpop.f32.mrf.mxu0
  %v1266 = vpop.f32.mrf.mxu0
  %v1267 = vadd.f32 0.0, %v1266
  %v1268 = vpop.f32.mrf.mxu0
  %1269 = vmatprep.mubr.bf16.mxu0 0
  %1270 = vmatmul.mubr.bf16.gmra.mxu0 %v1152
  %v1271 = vpop.f32.mrf.mxu0
  %v1272 = vadd.f32 0.0, %v1271
  %v1273 = vpop.f32.mrf.mxu0
  %v1274 = vpop.f32.mrf.mxu0
  %v1275 = vadd.f32 0.0, %v1274
  %v1276 = vpop.f32.mrf.mxu0
  %1277 = vmatprep.mubr.bf16.mxu0 0
  %1278 = vmatmul.mubr.bf16.gmra.mxu0 %v1153
  %v1279 = vpop.f32.mrf.mxu0
  %v1280 = vadd.f32 0.0, %v1279
  %v1281 = vpop.f32.mrf.mxu0
  %v1282 = vpop.f32.mrf.mxu0
  %v1283 = vadd.f32 0.0, %v1282
  %v1284 = vpop.f32.mrf.mxu0
  %1285 = vmatprep.mubr.bf16.mxu0 0
  %1286 = vmatmul.mubr.bf16.gmra.mxu0 %v1154
  %v1287 = vpop.f32.mrf.mxu0
  %v1288 = vadd.f32 0.0, %v1287
  %v1289 = vpop.f32.mrf.mxu0
  %v1290 = vpop.f32.mrf.mxu0
  %v1291 = vadd.f32 0.0, %v1290
  %v1292 = vpop.f32.mrf.mxu0
  %1293 = vmatprep.mubr.bf16.mxu0 0
  %1294 = vmatmul.mubr.bf16.gmra.mxu0 %v1155
  %v1295 = vpop.f32.mrf.mxu0
  %v1296 = vadd.f32 0.0, %v1295
  %v1297 = vpop.f32.mrf.mxu0
  %v1298 = vpop.f32.mrf.mxu0
  %v1299 = vadd.f32 0.0, %v1298
  %v1300 = vpop.f32.mrf.mxu0
  %1301 = vmatprep.mubr.bf16.mxu0 0
  %1302 = vmatmul.mubr.bf16.gmra.mxu0 %v1156
  %v1303 = vpop.f32.mrf.mxu0
  %v1304 = vadd.f32 0.0, %v1303
  %v1305 = vpop.f32.mrf.mxu0
  %v1306 = vpop.f32.mrf.mxu0
  %v1307 = vadd.f32 0.0, %v1306
  %v1308 = vpop.f32.mrf.mxu0
  %1309 = vmatprep.mubr.bf16.mxu0 0
  %1310 = vmatmul.mubr.bf16.gmra.mxu0 %v1157
  %v1311 = vpop.f32.mrf.mxu0
  %v1312 = vadd.f32 0.0, %v1311
  %v1313 = vpop.f32.mrf.mxu0
  %v1314 = vpop.f32.mrf.mxu0
  %v1315 = vadd.f32 0.0, %v1314
  %v1316 = vpop.f32.mrf.mxu0
  %1317 = vmatprep.mubr.bf16.mxu0 0
  %1318 = vmatmul.mubr.bf16.gmra.mxu0 %v1158
  %v1319 = vpop.f32.mrf.mxu0
  %v1320 = vadd.f32 0.0, %v1319
  %v1321 = vpop.f32.mrf.mxu0
  %v1322 = vpop.f32.mrf.mxu0
  %v1323 = vadd.f32 0.0, %v1322
  %v1324 = vpop.f32.mrf.mxu0
  %1325 = vmatprep.mubr.bf16.mxu0 0
  %1326 = vmatmul.mubr.bf16.gmra.mxu0 %v1159
  %v1327 = vpop.f32.mrf.mxu0
  %v1328 = vadd.f32 0.0, %v1327
  %v1329 = vpop.f32.mrf.mxu0
  %v1330 = vpop.f32.mrf.mxu0
  %v1331 = vadd.f32 0.0, %v1330
  %v1332 = vpop.f32.mrf.mxu0
  %1333 = vmatprep.mubr.bf16.mxu0 0
  %1334 = vmatmul.mubr.bf16.gmra.mxu0 %v1160
  %v1335 = vpop.f32.mrf.mxu0
  %v1336 = vadd.f32 0.0, %v1335
  %v1337 = vpop.f32.mrf.mxu0
  %v1338 = vpop.f32.mrf.mxu0
  %v1339 = vadd.f32 0.0, %v1338
  %v1340 = vpop.f32.mrf.mxu0
  %1341 = vmatprep.mubr.bf16.mxu0 0
  %1342 = vmatmul.mubr.bf16.gmra.mxu0 %v1161
  %v1343 = vpop.f32.mrf.mxu0
  %v1344 = vadd.f32 0.0, %v1343
  %v1345 = vpop.f32.mrf.mxu0
  %v1346 = vpop.f32.mrf.mxu0
  %v1347 = vadd.f32 0.0, %v1346
  %v1348 = vpop.f32.mrf.mxu0
  %1349 = vmatprep.mubr.bf16.mxu0 0
  %1350 = vmatmul.mubr.bf16.gmra.mxu0 %v1162
  %v1351 = vpop.f32.mrf.mxu0
  %v1352 = vadd.f32 0.0, %v1351
  %v1353 = vpop.f32.mrf.mxu0
  %v1354 = vpop.f32.mrf.mxu0
  %v1355 = vadd.f32 0.0, %v1354
  %v1356 = vpop.f32.mrf.mxu0
  %1357 = vmatprep.mubr.bf16.mxu0 0
  %1358 = vmatmul.mubr.bf16.gmra.mxu0 %v1163
  %v1359 = vpop.f32.mrf.mxu0
  %v1360 = vadd.f32 0.0, %v1359
  %v1361 = vpop.f32.mrf.mxu0
  %v1362 = vpop.f32.mrf.mxu0
  %v1363 = vadd.f32 0.0, %v1362
  %v1364 = vpop.f32.mrf.mxu0
  %1365 = vmatprep.mubr.bf16.mxu0 0
  %1366 = vmatmul.mubr.bf16.gmra.mxu0 %v1164
  %v1367 = vpop.f32.mrf.mxu0
  %v1368 = vadd.f32 0.0, %v1367
  %v1369 = vpop.f32.mrf.mxu0
  %v1370 = vpop.f32.mrf.mxu0
  %v1371 = vadd.f32 0.0, %v1370
  %v1372 = vpop.f32.mrf.mxu0
  %1373 = vmatprep.mubr.bf16.mxu0 0
  %1374 = vmatmul.mubr.bf16.gmra.mxu0 %v1165
  %v1375 = vpop.f32.mrf.mxu0
  %v1376 = vadd.f32 0.0, %v1375
  %v1377 = vpop.f32.mrf.mxu0
  %v1378 = vpop.f32.mrf.mxu0
  %v1379 = vadd.f32 0.0, %v1378
  %v1380 = vpop.f32.mrf.mxu0
  %1381 = vmatprep.mubr.bf16.mxu0 0
  %1382 = vmatmul.mubr.bf16.gmra.mxu0 %v1166
  %v1383 = vpop.f32.mrf.mxu0
  %v1384 = vadd.f32 0.0, %v1383
  %v1385 = vpop.f32.mrf.mxu0
  %v1386 = vpop.f32.mrf.mxu0
  %v1387 = vadd.f32 0.0, %v1386
  %v1388 = vpop.f32.mrf.mxu0
  %1389 = vmatprep.mubr.bf16.mxu0 0
  %1390 = vmatmul.mubr.bf16.gmra.mxu0 %v1167
  %v1391 = vpop.f32.mrf.mxu0
  %v1392 = vadd.f32 0.0, %v1391
  %v1393 = vpop.f32.mrf.mxu0
  %v1394 = vpop.f32.mrf.mxu0
  %v1395 = vadd.f32 0.0, %v1394
  %v1396 = vpop.f32.mrf.mxu0
  %1397 = vmatprep.mubr.bf16.mxu0 0
  %1398 = vmatmul.mubr.bf16.gmra.mxu0 %v1168
  %v1399 = vpop.f32.mrf.mxu0
  %v1400 = vadd.f32 0.0, %v1399
  %v1401 = vpop.f32.mrf.mxu0
  %v1402 = vpop.f32.mrf.mxu0
  %v1403 = vadd.f32 0.0, %v1402
  %v1404 = vpop.f32.mrf.mxu0
  %1405 = vmatprep.mubr.bf16.mxu0 0
  %1406 = vmatmul.mubr.bf16.gmra.mxu0 %v1169
  %v1407 = vpop.f32.mrf.mxu0
  %v1408 = vadd.f32 0.0, %v1407
  %v1409 = vpop.f32.mrf.mxu0
  %v1410 = vpop.f32.mrf.mxu0
  %v1411 = vadd.f32 0.0, %v1410
  %v1412 = vpop.f32.mrf.mxu0
  %1413 = vmatprep.mubr.bf16.mxu0 0
  %1414 = vmatmul.mubr.bf16.gmra.mxu0 %v1170
  %v1415 = vpop.f32.mrf.mxu0
  %v1416 = vadd.f32 0.0, %v1415
  %v1417 = vpop.f32.mrf.mxu0
  %v1418 = vpop.f32.mrf.mxu0
  %v1419 = vadd.f32 0.0, %v1418
  %v1420 = vpop.f32.mrf.mxu0
  %1421 = vmatprep.mubr.bf16.mxu0 0
  %1422 = vmatmul.mubr.bf16.gmra.mxu0 %v1171
  %v1423 = vpop.f32.mrf.mxu0
  %v1424 = vadd.f32 0.0, %v1423
  %v1425 = vpop.f32.mrf.mxu0
  %v1426 = vpop.f32.mrf.mxu0
  %v1427 = vadd.f32 0.0, %v1426
  %v1428 = vpop.f32.mrf.mxu0
  %1429 = vdwg.mxu0
  %v1430 = vmax.f32 %v946, %v1232
  %v1431 = vmax.f32 %v947, %v1235
  %v1432 = vmax.f32 %v948, %v1240
  %v1433 = vmax.f32 %v949, %v1243
  %v1434 = vmax.f32 %v950, %v1248
  %v1435 = vmax.f32 %v951, %v1251
  %v1436 = vmax.f32 %v952, %v1256
  %v1437 = vmax.f32 %v953, %v1259
  %v1438 = vmax.f32 %v954, %v1264
  %v1439 = vmax.f32 %v955, %v1267
  %v1440 = vmax.f32 %v956, %v1272
  %v1441 = vmax.f32 %v957, %v1275
  %v1442 = vmax.f32 %v958, %v1280
  %v1443 = vmax.f32 %v959, %v1283
  %v1444 = vmax.f32 %v960, %v1288
  %v1445 = vmax.f32 %v961, %v1291
  %v1446 = vmax.f32 %v962, %v1296
  %v1447 = vmax.f32 %v963, %v1299
  %v1448 = vmax.f32 %v964, %v1304
  %v1449 = vmax.f32 %v965, %v1307
  %v1450 = vmax.f32 %v966, %v1312
  %v1451 = vmax.f32 %v967, %v1315
  %v1452 = vmax.f32 %v968, %v1320
  %v1453 = vmax.f32 %v969, %v1323
  %v1454 = vmax.f32 %v970, %v1328
  %v1455 = vmax.f32 %v971, %v1331
  %v1456 = vmax.f32 %v972, %v1336
  %v1457 = vmax.f32 %v973, %v1339
  %v1458 = vmax.f32 %v974, %v1344
  %v1459 = vmax.f32 %v975, %v1347
  %v1460 = vmax.f32 %v976, %v1352
  %v1461 = vmax.f32 %v977, %v1355
  %v1462 = vmax.f32 %v978, %v1360
  %v1463 = vmax.f32 %v979, %v1363
  %v1464 = vmax.f32 %v980, %v1368
  %v1465 = vmax.f32 %v981, %v1371
  %v1466 = vmax.f32 %v982, %v1376
  %v1467 = vmax.f32 %v983, %v1379
  %v1468 = vmax.f32 %v984, %v1384
  %v1469 = vmax.f32 %v985, %v1387
  %v1470 = vmax.f32 %v986, %v1392
  %v1471 = vmax.f32 %v987, %v1395
  %v1472 = vmax.f32 %v988, %v1400
  %v1473 = vmax.f32 %v989, %v1403
  %v1474 = vmax.f32 %v990, %v1408
  %v1475 = vmax.f32 %v991, %v1411
  %v1476 = vmax.f32 %v992, %v1416
  %v1477 = vmax.f32 %v993, %v1419
  %v1478 = vmax.f32 %v994, %v1424
  %v1479 = vmax.f32 %v995, %v1427
  %s1480 = scalar_lea.vmem %s0, 600
  %v1481 = vld [vmem:[%s1480] sm:$0xf]
  %v1482 = vld [vmem:[%s1480 + $0x4] sm:$0xf]
  %v1483 = vld [vmem:[%s1480 + $0x8] sm:$0xf]
  %v1484 = vld [vmem:[%s1480 + $0xc] sm:$0xf]
  %v1485 = vld [vmem:[%s1480 + $0x10] sm:$0xf]
  %v1486 = vld [vmem:[%s1480 + $0x14] sm:$0xf]
  %v1487 = vld [vmem:[%s1480 + $0x18] sm:$0xf]
  %v1488 = vld [vmem:[%s1480 + $0x1c] sm:$0xf]
  %v1489 = vld [vmem:[%s1480 + $0x20] sm:$0xf]
  %v1490 = vld [vmem:[%s1480 + $0x24] sm:$0xf]
  %v1491 = vld [vmem:[%s1480 + $0x28] sm:$0xf]
  %v1492 = vld [vmem:[%s1480 + $0x2c] sm:$0xf]
  %v1493 = vld [vmem:[%s1480 + $0x30] sm:$0xf]
  %v1494 = vld [vmem:[%s1480 + $0x34] sm:$0xf]
  %v1495 = vld [vmem:[%s1480 + $0x38] sm:$0xf]
  %v1496 = vld [vmem:[%s1480 + $0x3c] sm:$0xf]
  %v1497 = vld [vmem:[%s1480 + $0x40] sm:$0xf]
  %v1498 = vld [vmem:[%s1480 + $0x44] sm:$0xf]
  %v1499 = vld [vmem:[%s1480 + $0x48] sm:$0xf]
  %v1500 = vld [vmem:[%s1480 + $0x4c] sm:$0xf]
  %v1501 = vld [vmem:[%s1480 + $0x50] sm:$0xf]
  %v1502 = vld [vmem:[%s1480 + $0x54] sm:$0xf]
  %v1503 = vld [vmem:[%s1480 + $0x58] sm:$0xf]
  %v1504 = vld [vmem:[%s1480 + $0x5c] sm:$0xf]
  %v1505 = vld [vmem:[%s1480 + $0x60] sm:$0xf]
  %v1506 = vld [vmem:[%s1480 + $0x64] sm:$0xf]
  %v1507 = vld [vmem:[%s1480 + $0x68] sm:$0xf]
  %v1508 = vld [vmem:[%s1480 + $0x6c] sm:$0xf]
  %v1509 = vld [vmem:[%s1480 + $0x70] sm:$0xf]
  %v1510 = vld [vmem:[%s1480 + $0x74] sm:$0xf]
  %v1511 = vld [vmem:[%s1480 + $0x78] sm:$0xf]
  %v1512 = vld [vmem:[%s1480 + $0x7c] sm:$0xf]
  %v1513 = vld [vmem:[%s1480 + $0x80] sm:$0xf]
  %v1514 = vld [vmem:[%s1480 + $0x84] sm:$0xf]
  %v1515 = vld [vmem:[%s1480 + $0x88] sm:$0xf]
  %v1516 = vld [vmem:[%s1480 + $0x8c] sm:$0xf]
  %v1517 = vld [vmem:[%s1480 + $0x90] sm:$0xf]
  %v1518 = vld [vmem:[%s1480 + $0x94] sm:$0xf]
  %v1519 = vld [vmem:[%s1480 + $0x98] sm:$0xf]
  %v1520 = vld [vmem:[%s1480 + $0x9c] sm:$0xf]
  %v1521 = vld [vmem:[%s1480 + $0xa0] sm:$0xf]
  %v1522 = vld [vmem:[%s1480 + $0xa4] sm:$0xf]
  %v1523 = vld [vmem:[%s1480 + $0xa8] sm:$0xf]
  %v1524 = vld [vmem:[%s1480 + $0xac] sm:$0xf]
  %v1525 = vld [vmem:[%s1480 + $0xb0] sm:$0xf]
  %v1526 = vld [vmem:[%s1480 + $0xb4] sm:$0xf]
  %v1527 = vld [vmem:[%s1480 + $0xb8] sm:$0xf]
  %v1528 = vld [vmem:[%s1480 + $0xbc] sm:$0xf]
  %v1529 = vld [vmem:[%s1480 + $0xc0] sm:$0xf]
  %v1530 = vld [vmem:[%s1480 + $0xc4] sm:$0xf]
  %v1581 = vunpack.c.l.b16 %v1481
  %v1582 = vunpack.c.l.b16 %v1482
  %v1583 = vunpack.c.l.b16 %v1483
  %v1584 = vunpack.c.l.b16 %v1484
  %v1585 = vunpack.c.l.b16 %v1485
  %v1586 = vunpack.c.l.b16 %v1486
  %v1587 = vunpack.c.l.b16 %v1487
  %v1588 = vunpack.c.l.b16 %v1488
  %v1589 = vunpack.c.l.b16 %v1489
  %v1590 = vunpack.c.l.b16 %v1490
  %v1591 = vunpack.c.l.b16 %v1491
  %v1592 = vunpack.c.l.b16 %v1492
  %v1593 = vunpack.c.l.b16 %v1493
  %v1594 = vunpack.c.l.b16 %v1494
  %v1595 = vunpack.c.l.b16 %v1495
  %v1596 = vunpack.c.l.b16 %v1496
  %v1597 = vunpack.c.l.b16 %v1497
  %v1598 = vunpack.c.l.b16 %v1498
  %v1599 = vunpack.c.l.b16 %v1499
  %v1600 = vunpack.c.l.b16 %v1500
  %v1601 = vunpack.c.l.b16 %v1501
  %v1602 = vunpack.c.l.b16 %v1502
  %v1603 = vunpack.c.l.b16 %v1503
  %v1604 = vunpack.c.l.b16 %v1504
  %v1605 = vunpack.c.l.b16 %v1505
  %v1606 = vunpack.c.l.b16 %v1506
  %v1607 = vunpack.c.l.b16 %v1507
  %v1608 = vunpack.c.l.b16 %v1508
  %v1609 = vunpack.c.l.b16 %v1509
  %v1610 = vunpack.c.l.b16 %v1510
  %v1611 = vunpack.c.l.b16 %v1511
  %v1612 = vunpack.c.l.b16 %v1512
  %v1613 = vunpack.c.l.b16 %v1513
  %v1614 = vunpack.c.l.b16 %v1514
  %v1615 = vunpack.c.l.b16 %v1515
  %v1616 = vunpack.c.l.b16 %v1516
  %v1617 = vunpack.c.l.b16 %v1517
  %v1618 = vunpack.c.l.b16 %v1518
  %v1619 = vunpack.c.l.b16 %v1519
  %v1620 = vunpack.c.l.b16 %v1520
  %v1621 = vunpack.c.l.b16 %v1521
  %v1622 = vunpack.c.l.b16 %v1522
  %v1623 = vunpack.c.l.b16 %v1523
  %v1624 = vunpack.c.l.b16 %v1524
  %v1625 = vunpack.c.l.b16 %v1525
  %v1626 = vunpack.c.l.b16 %v1526
  %v1627 = vunpack.c.l.b16 %v1527
  %v1628 = vunpack.c.l.b16 %v1528
  %v1629 = vunpack.c.l.b16 %v1529
  %v1630 = vunpack.c.l.b16 %v1530
  %v1631 = vpack.c.b16 %v1582, %v1581
  %v1632 = vpack.c.b16 %v1584, %v1583
  %v1633 = vpack.c.b16 %v1586, %v1585
  %v1634 = vpack.c.b16 %v1588, %v1587
  %v1635 = vpack.c.b16 %v1590, %v1589
  %v1636 = vpack.c.b16 %v1592, %v1591
  %v1637 = vpack.c.b16 %v1594, %v1593
  %v1638 = vpack.c.b16 %v1596, %v1595
  %v1639 = vpack.c.b16 %v1598, %v1597
  %v1640 = vpack.c.b16 %v1600, %v1599
  %v1641 = vpack.c.b16 %v1602, %v1601
  %v1642 = vpack.c.b16 %v1604, %v1603
  %v1643 = vpack.c.b16 %v1606, %v1605
  %v1644 = vpack.c.b16 %v1608, %v1607
  %v1645 = vpack.c.b16 %v1610, %v1609
  %v1646 = vpack.c.b16 %v1612, %v1611
  %v1647 = vpack.c.b16 %v1614, %v1613
  %v1648 = vpack.c.b16 %v1616, %v1615
  %v1649 = vpack.c.b16 %v1618, %v1617
  %v1650 = vpack.c.b16 %v1620, %v1619
  %v1651 = vpack.c.b16 %v1622, %v1621
  %v1652 = vpack.c.b16 %v1624, %v1623
  %v1653 = vpack.c.b16 %v1626, %v1625
  %v1654 = vpack.c.b16 %v1628, %v1627
  %v1655 = vpack.c.b16 %v1630, %v1629
  %1681 = vmatprep.subr.bf16.mxu0 0
  %1682 = vmatpush1.bf16.msra.mxu0 %v270
  %1683 = vmatprep.subr.bf16.mxu0 0
  %1684 = vmatpush1.bf16.msra.mxu0 %v269
  %1685 = vmatprep.subr.bf16.mxu0 0
  %1686 = vmatpush1.bf16.msra.mxu0 %v268
  %1687 = vmatprep.subr.bf16.mxu0 0
  %1688 = vmatpush1.bf16.msra.mxu0 %v267
  %1689 = vmatprep.subr.bf16.mxu0 0
  %1690 = vmatpush1.bf16.msra.mxu0 %v266
  %1691 = vmatprep.subr.bf16.mxu0 0
  %1692 = vmatpush1.bf16.msra.mxu0 %v265
  %1693 = vmatprep.subr.bf16.mxu0 0
  %1694 = vmatpush1.bf16.msra.mxu0 %v264
  %1695 = vmatprep.subr.bf16.mxu0 0
  %1696 = vmatpush1.bf16.msra.mxu0 %v263
  %1697 = vmatprep.subr.bf16.mxu0 0
  %1698 = vmatpush2.bf16.msra.mxu0 0
  %1699 = vmatprep.subr.bf16.mxu0 0
  %1700 = vmatpush2.bf16.msra.mxu0 0
  %1701 = vmatprep.subr.bf16.mxu0 0
  %1702 = vmatpush2.bf16.msra.mxu0 0
  %1703 = vmatprep.subr.bf16.mxu0 0
  %1704 = vmatpush2.bf16.msra.mxu0 0
  %1705 = vmatprep.subr.bf16.mxu0 0
  %1706 = vmatpush2.bf16.msra.mxu0 0
  %1707 = vmatprep.subr.bf16.mxu0 0
  %1708 = vmatpush2.bf16.msra.mxu0 0
  %1709 = vmatprep.subr.bf16.mxu0 0
  %1710 = vmatpush2.bf16.msra.mxu0 0
  %1711 = vmatprep.subr.bf16.mxu0 0
  %1712 = vmatpush2.bf16.msra.mxu0 0
  %1713 = vmatprep.mubr.bf16.mxu0 0
  %1714 = vmatmul.mubr.bf16.gmra.mxu0 %v1631
  %v1715 = vpop.f32.mrf.mxu0
  %v1716 = vadd.f32 0.0, %v1715
  %v1717 = vpop.f32.mrf.mxu0
  %v1718 = vpop.f32.mrf.mxu0
  %v1719 = vadd.f32 0.0, %v1718
  %v1720 = vpop.f32.mrf.mxu0
  %1721 = vmatprep.mubr.bf16.mxu0 0
  %1722 = vmatmul.mubr.bf16.gmra.mxu0 %v1632
  %v1723 = vpop.f32.mrf.mxu0
  %v1724 = vadd.f32 0.0, %v1723
  %v1725 = vpop.f32.mrf.mxu0
  %v1726 = vpop.f32.mrf.mxu0
  %v1727 = vadd.f32 0.0, %v1726
  %v1728 = vpop.f32.mrf.mxu0
  %1729 = vmatprep.mubr.bf16.mxu0 0
  %1730 = vmatmul.mubr.bf16.gmra.mxu0 %v1633
  %v1731 = vpop.f32.mrf.mxu0
  %v1732 = vadd.f32 0.0, %v1731
  %v1733 = vpop.f32.mrf.mxu0
  %v1734 = vpop.f32.mrf.mxu0
  %v1735 = vadd.f32 0.0, %v1734
  %v1736 = vpop.f32.mrf.mxu0
  %1737 = vmatprep.mubr.bf16.mxu0 0
  %1738 = vmatmul.mubr.bf16.gmra.mxu0 %v1634
  %v1739 = vpop.f32.mrf.mxu0
  %v1740 = vadd.f32 0.0, %v1739
  %v1741 = vpop.f32.mrf.mxu0
  %v1742 = vpop.f32.mrf.mxu0
  %v1743 = vadd.f32 0.0, %v1742
  %v1744 = vpop.f32.mrf.mxu0
  %1745 = vmatprep.mubr.bf16.mxu0 0
  %1746 = vmatmul.mubr.bf16.gmra.mxu0 %v1635
  %v1747 = vpop.f32.mrf.mxu0
  %v1748 = vadd.f32 0.0, %v1747
  %v1749 = vpop.f32.mrf.mxu0
  %v1750 = vpop.f32.mrf.mxu0
  %v1751 = vadd.f32 0.0, %v1750
  %v1752 = vpop.f32.mrf.mxu0
  %1753 = vmatprep.mubr.bf16.mxu0 0
  %1754 = vmatmul.mubr.bf16.gmra.mxu0 %v1636
  %v1755 = vpop.f32.mrf.mxu0
  %v1756 = vadd.f32 0.0, %v1755
  %v1757 = vpop.f32.mrf.mxu0
  %v1758 = vpop.f32.mrf.mxu0
  %v1759 = vadd.f32 0.0, %v1758
  %v1760 = vpop.f32.mrf.mxu0
  %1761 = vmatprep.mubr.bf16.mxu0 0
  %1762 = vmatmul.mubr.bf16.gmra.mxu0 %v1637
  %v1763 = vpop.f32.mrf.mxu0
  %v1764 = vadd.f32 0.0, %v1763
  %v1765 = vpop.f32.mrf.mxu0
  %v1766 = vpop.f32.mrf.mxu0
  %v1767 = vadd.f32 0.0, %v1766
  %v1768 = vpop.f32.mrf.mxu0
  %1769 = vmatprep.mubr.bf16.mxu0 0
  %1770 = vmatmul.mubr.bf16.gmra.mxu0 %v1638
  %v1771 = vpop.f32.mrf.mxu0
  %v1772 = vadd.f32 0.0, %v1771
  %v1773 = vpop.f32.mrf.mxu0
  %v1774 = vpop.f32.mrf.mxu0
  %v1775 = vadd.f32 0.0, %v1774
  %v1776 = vpop.f32.mrf.mxu0
  %1777 = vmatprep.mubr.bf16.mxu0 0
  %1778 = vmatmul.mubr.bf16.gmra.mxu0 %v1639
  %v1779 = vpop.f32.mrf.mxu0
  %v1780 = vadd.f32 0.0, %v1779
  %v1781 = vpop.f32.mrf.mxu0
  %v1782 = vpop.f32.mrf.mxu0
  %v1783 = vadd.f32 0.0, %v1782
  %v1784 = vpop.f32.mrf.mxu0
  %1785 = vmatprep.mubr.bf16.mxu0 0
  %1786 = vmatmul.mubr.bf16.gmra.mxu0 %v1640
  %v1787 = vpop.f32.mrf.mxu0
  %v1788 = vadd.f32 0.0, %v1787
  %v1789 = vpop.f32.mrf.mxu0
  %v1790 = vpop.f32.mrf.mxu0
  %v1791 = vadd.f32 0.0, %v1790
  %v1792 = vpop.f32.mrf.mxu0
  %1793 = vmatprep.mubr.bf16.mxu0 0
  %1794 = vmatmul.mubr.bf16.gmra.mxu0 %v1641
  %v1795 = vpop.f32.mrf.mxu0
  %v1796 = vadd.f32 0.0, %v1795
  %v1797 = vpop.f32.mrf.mxu0
  %v1798 = vpop.f32.mrf.mxu0
  %v1799 = vadd.f32 0.0, %v1798
  %v1800 = vpop.f32.mrf.mxu0
  %1801 = vmatprep.mubr.bf16.mxu0 0
  %1802 = vmatmul.mubr.bf16.gmra.mxu0 %v1642
  %v1803 = vpop.f32.mrf.mxu0
  %v1804 = vadd.f32 0.0, %v1803
  %v1805 = vpop.f32.mrf.mxu0
  %v1806 = vpop.f32.mrf.mxu0
  %v1807 = vadd.f32 0.0, %v1806
  %v1808 = vpop.f32.mrf.mxu0
  %1809 = vmatprep.mubr.bf16.mxu0 0
  %1810 = vmatmul.mubr.bf16.gmra.mxu0 %v1643
  %v1811 = vpop.f32.mrf.mxu0
  %v1812 = vadd.f32 0.0, %v1811
  %v1813 = vpop.f32.mrf.mxu0
  %v1814 = vpop.f32.mrf.mxu0
  %v1815 = vadd.f32 0.0, %v1814
  %v1816 = vpop.f32.mrf.mxu0
  %1817 = vmatprep.mubr.bf16.mxu0 0
  %1818 = vmatmul.mubr.bf16.gmra.mxu0 %v1644
  %v1819 = vpop.f32.mrf.mxu0
  %v1820 = vadd.f32 0.0, %v1819
  %v1821 = vpop.f32.mrf.mxu0
  %v1822 = vpop.f32.mrf.mxu0
  %v1823 = vadd.f32 0.0, %v1822
  %v1824 = vpop.f32.mrf.mxu0
  %1825 = vmatprep.mubr.bf16.mxu0 0
  %1826 = vmatmul.mubr.bf16.gmra.mxu0 %v1645
  %v1827 = vpop.f32.mrf.mxu0
  %v1828 = vadd.f32 0.0, %v1827
  %v1829 = vpop.f32.mrf.mxu0
  %v1830 = vpop.f32.mrf.mxu0
  %v1831 = vadd.f32 0.0, %v1830
  %v1832 = vpop.f32.mrf.mxu0
  %1833 = vmatprep.mubr.bf16.mxu0 0
  %1834 = vmatmul.mubr.bf16.gmra.mxu0 %v1646
  %v1835 = vpop.f32.mrf.mxu0
  %v1836 = vadd.f32 0.0, %v1835
  %v1837 = vpop.f32.mrf.mxu0
  %v1838 = vpop.f32.mrf.mxu0
  %v1839 = vadd.f32 0.0, %v1838
  %v1840 = vpop.f32.mrf.mxu0
  %1841 = vmatprep.mubr.bf16.mxu0 0
  %1842 = vmatmul.mubr.bf16.gmra.mxu0 %v1647
  %v1843 = vpop.f32.mrf.mxu0
  %v1844 = vadd.f32 0.0, %v1843
  %v1845 = vpop.f32.mrf.mxu0
  %v1846 = vpop.f32.mrf.mxu0
  %v1847 = vadd.f32 0.0, %v1846
  %v1848 = vpop.f32.mrf.mxu0
  %1849 = vmatprep.mubr.bf16.mxu0 0
  %1850 = vmatmul.mubr.bf16.gmra.mxu0 %v1648
  %v1851 = vpop.f32.mrf.mxu0
  %v1852 = vadd.f32 0.0, %v1851
  %v1853 = vpop.f32.mrf.mxu0
  %v1854 = vpop.f32.mrf.mxu0
  %v1855 = vadd.f32 0.0, %v1854
  %v1856 = vpop.f32.mrf.mxu0
  %1857 = vmatprep.mubr.bf16.mxu0 0
  %1858 = vmatmul.mubr.bf16.gmra.mxu0 %v1649
  %v1859 = vpop.f32.mrf.mxu0
  %v1860 = vadd.f32 0.0, %v1859
  %v1861 = vpop.f32.mrf.mxu0
  %v1862 = vpop.f32.mrf.mxu0
  %v1863 = vadd.f32 0.0, %v1862
  %v1864 = vpop.f32.mrf.mxu0
  %1865 = vmatprep.mubr.bf16.mxu0 0
  %1866 = vmatmul.mubr.bf16.gmra.mxu0 %v1650
  %v1867 = vpop.f32.mrf.mxu0
  %v1868 = vadd.f32 0.0, %v1867
  %v1869 = vpop.f32.mrf.mxu0
  %v1870 = vpop.f32.mrf.mxu0
  %v1871 = vadd.f32 0.0, %v1870
  %v1872 = vpop.f32.mrf.mxu0
  %1873 = vmatprep.mubr.bf16.mxu0 0
  %1874 = vmatmul.mubr.bf16.gmra.mxu0 %v1651
  %v1875 = vpop.f32.mrf.mxu0
  %v1876 = vadd.f32 0.0, %v1875
  %v1877 = vpop.f32.mrf.mxu0
  %v1878 = vpop.f32.mrf.mxu0
  %v1879 = vadd.f32 0.0, %v1878
  %v1880 = vpop.f32.mrf.mxu0
  %1881 = vmatprep.mubr.bf16.mxu0 0
  %1882 = vmatmul.mubr.bf16.gmra.mxu0 %v1652
  %v1883 = vpop.f32.mrf.mxu0
  %v1884 = vadd.f32 0.0, %v1883
  %v1885 = vpop.f32.mrf.mxu0
  %v1886 = vpop.f32.mrf.mxu0
  %v1887 = vadd.f32 0.0, %v1886
  %v1888 = vpop.f32.mrf.mxu0
  %1889 = vmatprep.mubr.bf16.mxu0 0
  %1890 = vmatmul.mubr.bf16.gmra.mxu0 %v1653
  %v1891 = vpop.f32.mrf.mxu0
  %v1892 = vadd.f32 0.0, %v1891
  %v1893 = vpop.f32.mrf.mxu0
  %v1894 = vpop.f32.mrf.mxu0
  %v1895 = vadd.f32 0.0, %v1894
  %v1896 = vpop.f32.mrf.mxu0
  %1897 = vmatprep.mubr.bf16.mxu0 0
  %1898 = vmatmul.mubr.bf16.gmra.mxu0 %v1654
  %v1899 = vpop.f32.mrf.mxu0
  %v1900 = vadd.f32 0.0, %v1899
  %v1901 = vpop.f32.mrf.mxu0
  %v1902 = vpop.f32.mrf.mxu0
  %v1903 = vadd.f32 0.0, %v1902
  %v1904 = vpop.f32.mrf.mxu0
  %1905 = vmatprep.mubr.bf16.mxu0 0
  %1906 = vmatmul.mubr.bf16.gmra.mxu0 %v1655
  %v1907 = vpop.f32.mrf.mxu0
  %v1908 = vadd.f32 0.0, %v1907
  %v1909 = vpop.f32.mrf.mxu0
  %v1910 = vpop.f32.mrf.mxu0
  %v1911 = vadd.f32 0.0, %v1910
  %v1912 = vpop.f32.mrf.mxu0
  %1913 = vdwg.mxu0
  %v1914 = vmax.f32 %v1430, %v1716
  %v1915 = vmax.f32 %v1431, %v1719
  %v1916 = vmax.f32 %v1432, %v1724
  %v1917 = vmax.f32 %v1433, %v1727
  %v1918 = vmax.f32 %v1434, %v1732
  %v1919 = vmax.f32 %v1435, %v1735
  %v1920 = vmax.f32 %v1436, %v1740
  %v1921 = vmax.f32 %v1437, %v1743
  %v1922 = vmax.f32 %v1438, %v1748
  %v1923 = vmax.f32 %v1439, %v1751
  %v1924 = vmax.f32 %v1440, %v1756
  %v1925 = vmax.f32 %v1441, %v1759
  %v1926 = vmax.f32 %v1442, %v1764
  %v1927 = vmax.f32 %v1443, %v1767
  %v1928 = vmax.f32 %v1444, %v1772
  %v1929 = vmax.f32 %v1445, %v1775
  %v1930 = vmax.f32 %v1446, %v1780
  %v1931 = vmax.f32 %v1447, %v1783
  %v1932 = vmax.f32 %v1448, %v1788
  %v1933 = vmax.f32 %v1449, %v1791
  %v1934 = vmax.f32 %v1450, %v1796
  %v1935 = vmax.f32 %v1451, %v1799
  %v1936 = vmax.f32 %v1452, %v1804
  %v1937 = vmax.f32 %v1453, %v1807
  %v1938 = vmax.f32 %v1454, %v1812
  %v1939 = vmax.f32 %v1455, %v1815
  %v1940 = vmax.f32 %v1456, %v1820
  %v1941 = vmax.f32 %v1457, %v1823
  %v1942 = vmax.f32 %v1458, %v1828
  %v1943 = vmax.f32 %v1459, %v1831
  %v1944 = vmax.f32 %v1460, %v1836
  %v1945 = vmax.f32 %v1461, %v1839
  %v1946 = vmax.f32 %v1462, %v1844
  %v1947 = vmax.f32 %v1463, %v1847
  %v1948 = vmax.f32 %v1464, %v1852
  %v1949 = vmax.f32 %v1465, %v1855
  %v1950 = vmax.f32 %v1466, %v1860
  %v1951 = vmax.f32 %v1467, %v1863
  %v1952 = vmax.f32 %v1468, %v1868
  %v1953 = vmax.f32 %v1469, %v1871
  %v1954 = vmax.f32 %v1470, %v1876
  %v1955 = vmax.f32 %v1471, %v1879
  %v1956 = vmax.f32 %v1472, %v1884
  %v1957 = vmax.f32 %v1473, %v1887
  %v1958 = vmax.f32 %v1474, %v1892
  %v1959 = vmax.f32 %v1475, %v1895
  %v1960 = vmax.f32 %v1476, %v1900
  %v1961 = vmax.f32 %v1477, %v1903
  %v1962 = vmax.f32 %v1478, %v1908
  %v1963 = vmax.f32 %v1479, %v1911
  %v1964 = vld [vmem:[%s2] sm:$0x1]
  %v1966 = vlaneseq
  %v1967 = vshrl.u32 %v1966, 7
  %v1968 = vsub.s32 0, %v1967
  %v1969 = vrot.slane %v1964, %v1968
  %v1971 = vadd.f32 %v1914, %v1969
  %v1972 = vadd.f32 %v1915, %v1969
  %v1973 = vadd.f32 %v1916, %v1969
  %v1974 = vadd.f32 %v1917, %v1969
  %v1975 = vadd.f32 %v1918, %v1969
  %v1976 = vadd.f32 %v1919, %v1969
  %v1977 = vadd.f32 %v1920, %v1969
  %v1978 = vadd.f32 %v1921, %v1969
  %v1979 = vadd.f32 %v1922, %v1969
  %v1980 = vadd.f32 %v1923, %v1969
  %v1981 = vadd.f32 %v1924, %v1969
  %v1982 = vadd.f32 %v1925, %v1969
  %v1983 = vadd.f32 %v1926, %v1969
  %v1984 = vadd.f32 %v1927, %v1969
  %v1985 = vadd.f32 %v1928, %v1969
  %v1986 = vadd.f32 %v1929, %v1969
  %v1987 = vadd.f32 %v1930, %v1969
  %v1988 = vadd.f32 %v1931, %v1969
  %v1989 = vadd.f32 %v1932, %v1969
  %v1990 = vadd.f32 %v1933, %v1969
  %v1991 = vadd.f32 %v1934, %v1969
  %v1992 = vadd.f32 %v1935, %v1969
  %v1993 = vadd.f32 %v1936, %v1969
  %v1994 = vadd.f32 %v1937, %v1969
  %v1995 = vadd.f32 %v1938, %v1969
  %v1996 = vadd.f32 %v1939, %v1969
  %v1997 = vadd.f32 %v1940, %v1969
  %v1998 = vadd.f32 %v1941, %v1969
  %v1999 = vadd.f32 %v1942, %v1969
  %v2000 = vadd.f32 %v1943, %v1969
  %v2001 = vadd.f32 %v1944, %v1969
  %v2002 = vadd.f32 %v1945, %v1969
  %v2003 = vadd.f32 %v1946, %v1969
  %v2004 = vadd.f32 %v1947, %v1969
  %v2005 = vadd.f32 %v1948, %v1969
  %v2006 = vadd.f32 %v1949, %v1969
  %v2007 = vadd.f32 %v1950, %v1969
  %v2008 = vadd.f32 %v1951, %v1969
  %v2009 = vadd.f32 %v1952, %v1969
  %v2010 = vadd.f32 %v1953, %v1969
  %v2011 = vadd.f32 %v1954, %v1969
  %v2012 = vadd.f32 %v1955, %v1969
  %v2013 = vadd.f32 %v1956, %v1969
  %v2014 = vadd.f32 %v1957, %v1969
  %v2015 = vadd.f32 %v1958, %v1969
  %v2016 = vadd.f32 %v1959, %v1969
  %v2017 = vadd.f32 %v1960, %v1969
  %v2018 = vadd.f32 %v1961, %v1969
  %v2019 = vadd.f32 %v1962, %v1969
  %v2020 = vadd.f32 %v1963, %v1969
  %v2021 = vmax.f32 %v1971, 0.0
  %v2022 = vmax.f32 %v1972, 0.0
  %v2023 = vmax.f32 %v1973, 0.0
  %v2024 = vmax.f32 %v1974, 0.0
  %v2025 = vmax.f32 %v1975, 0.0
  %v2026 = vmax.f32 %v1976, 0.0
  %v2027 = vmax.f32 %v1977, 0.0
  %v2028 = vmax.f32 %v1978, 0.0
  %v2029 = vmax.f32 %v1979, 0.0
  %v2030 = vmax.f32 %v1980, 0.0
  %v2031 = vmax.f32 %v1981, 0.0
  %v2032 = vmax.f32 %v1982, 0.0
  %v2033 = vmax.f32 %v1983, 0.0
  %v2034 = vmax.f32 %v1984, 0.0
  %v2035 = vmax.f32 %v1985, 0.0
  %v2036 = vmax.f32 %v1986, 0.0
  %v2037 = vmax.f32 %v1987, 0.0
  %v2038 = vmax.f32 %v1988, 0.0
  %v2039 = vmax.f32 %v1989, 0.0
  %v2040 = vmax.f32 %v1990, 0.0
  %v2041 = vmax.f32 %v1991, 0.0
  %v2042 = vmax.f32 %v1992, 0.0
  %v2043 = vmax.f32 %v1993, 0.0
  %v2044 = vmax.f32 %v1994, 0.0
  %v2045 = vmax.f32 %v1995, 0.0
  %v2046 = vmax.f32 %v1996, 0.0
  %v2047 = vmax.f32 %v1997, 0.0
  %v2048 = vmax.f32 %v1998, 0.0
  %v2049 = vmax.f32 %v1999, 0.0
  %v2050 = vmax.f32 %v2000, 0.0
  %v2051 = vmax.f32 %v2001, 0.0
  %v2052 = vmax.f32 %v2002, 0.0
  %v2053 = vmax.f32 %v2003, 0.0
  %v2054 = vmax.f32 %v2004, 0.0
  %v2055 = vmax.f32 %v2005, 0.0
  %v2056 = vmax.f32 %v2006, 0.0
  %v2057 = vmax.f32 %v2007, 0.0
  %v2058 = vmax.f32 %v2008, 0.0
  %v2059 = vmax.f32 %v2009, 0.0
  %v2060 = vmax.f32 %v2010, 0.0
  %v2061 = vmax.f32 %v2011, 0.0
  %v2062 = vmax.f32 %v2012, 0.0
  %v2063 = vmax.f32 %v2013, 0.0
  %v2064 = vmax.f32 %v2014, 0.0
  %v2065 = vmax.f32 %v2015, 0.0
  %v2066 = vmax.f32 %v2016, 0.0
  %v2067 = vmax.f32 %v2017, 0.0
  %v2068 = vmax.f32 %v2018, 0.0
  %v2069 = vmax.f32 %v2019, 0.0
  %v2070 = vmax.f32 %v2020, 0.0
  %v2071 = vpack.c.bf16 %v2022, %v2021
  %v2072 = vpack.c.bf16 %v2024, %v2023
  %v2073 = vpack.c.bf16 %v2026, %v2025
  %v2074 = vpack.c.bf16 %v2028, %v2027
  %v2075 = vpack.c.bf16 %v2030, %v2029
  %v2076 = vpack.c.bf16 %v2032, %v2031
  %v2077 = vpack.c.bf16 %v2034, %v2033
  %v2078 = vpack.c.bf16 %v2036, %v2035
  %v2079 = vpack.c.bf16 %v2038, %v2037
  %v2080 = vpack.c.bf16 %v2040, %v2039
  %v2081 = vpack.c.bf16 %v2042, %v2041
  %v2082 = vpack.c.bf16 %v2044, %v2043
  %v2083 = vpack.c.bf16 %v2046, %v2045
  %v2084 = vpack.c.bf16 %v2048, %v2047
  %v2085 = vpack.c.bf16 %v2050, %v2049
  %v2086 = vpack.c.bf16 %v2052, %v2051
  %v2087 = vpack.c.bf16 %v2054, %v2053
  %v2088 = vpack.c.bf16 %v2056, %v2055
  %v2089 = vpack.c.bf16 %v2058, %v2057
  %v2090 = vpack.c.bf16 %v2060, %v2059
  %v2091 = vpack.c.bf16 %v2062, %v2061
  %v2092 = vpack.c.bf16 %v2064, %v2063
  %v2093 = vpack.c.bf16 %v2066, %v2065
  %v2094 = vpack.c.bf16 %v2068, %v2067
  %v2095 = vpack.c.bf16 %v2070, %v2069
  %v2121 = vunpack.c.l.b16 %v2071
  %v2122 = vunpack.c.h.b16 %v2071
  %v2123 = vunpack.c.l.b16 %v2072
  %v2124 = vunpack.c.h.b16 %v2072
  %v2125 = vunpack.c.l.b16 %v2073
  %v2126 = vunpack.c.h.b16 %v2073
  %v2127 = vunpack.c.l.b16 %v2074
  %v2128 = vunpack.c.h.b16 %v2074
  %v2129 = vunpack.c.l.b16 %v2075
  %v2130 = vunpack.c.h.b16 %v2075
  %v2131 = vunpack.c.l.b16 %v2076
  %v2132 = vunpack.c.h.b16 %v2076
  %v2133 = vunpack.c.l.b16 %v2077
  %v2134 = vunpack.c.h.b16 %v2077
  %v2135 = vunpack.c.l.b16 %v2078
  %v2136 = vunpack.c.h.b16 %v2078
  %v2137 = vunpack.c.l.b16 %v2079
  %v2138 = vunpack.c.h.b16 %v2079
  %v2139 = vunpack.c.l.b16 %v2080
  %v2140 = vunpack.c.h.b16 %v2080
  %v2141 = vunpack.c.l.b16 %v2081
  %v2142 = vunpack.c.h.b16 %v2081
  %v2143 = vunpack.c.l.b16 %v2082
  %v2144 = vunpack.c.h.b16 %v2082
  %v2145 = vunpack.c.l.b16 %v2083
  %v2146 = vunpack.c.h.b16 %v2083
  %v2147 = vunpack.c.l.b16 %v2084
  %v2148 = vunpack.c.h.b16 %v2084
  %v2149 = vunpack.c.l.b16 %v2085
  %v2150 = vunpack.c.h.b16 %v2085
  %v2151 = vunpack.c.l.b16 %v2086
  %v2152 = vunpack.c.h.b16 %v2086
  %v2153 = vunpack.c.l.b16 %v2087
  %v2154 = vunpack.c.h.b16 %v2087
  %v2155 = vunpack.c.l.b16 %v2088
  %v2156 = vunpack.c.h.b16 %v2088
  %v2157 = vunpack.c.l.b16 %v2089
  %v2158 = vunpack.c.h.b16 %v2089
  %v2159 = vunpack.c.l.b16 %v2090
  %v2160 = vunpack.c.h.b16 %v2090
  %v2161 = vunpack.c.l.b16 %v2091
  %v2162 = vunpack.c.h.b16 %v2091
  %v2163 = vunpack.c.l.b16 %v2092
  %v2164 = vunpack.c.h.b16 %v2092
  %v2165 = vunpack.c.l.b16 %v2093
  %v2166 = vunpack.c.h.b16 %v2093
  %v2167 = vunpack.c.l.b16 %v2094
  %v2168 = vunpack.c.h.b16 %v2094
  %v2169 = vunpack.c.l.b16 %v2095
  %v2170 = vunpack.c.h.b16 %v2095
  %v2171 = vpack.c.b16 %v2121, %v2121
  %v2172 = vpack.c.b16 %v2122, %v2122
  %v2173 = vpack.c.b16 %v2123, %v2123
  %v2174 = vpack.c.b16 %v2124, %v2124
  %v2175 = vpack.c.b16 %v2125, %v2125
  %v2176 = vpack.c.b16 %v2126, %v2126
  %v2177 = vpack.c.b16 %v2127, %v2127
  %v2178 = vpack.c.b16 %v2128, %v2128
  %v2179 = vpack.c.b16 %v2129, %v2129
  %v2180 = vpack.c.b16 %v2130, %v2130
  %v2181 = vpack.c.b16 %v2131, %v2131
  %v2182 = vpack.c.b16 %v2132, %v2132
  %v2183 = vpack.c.b16 %v2133, %v2133
  %v2184 = vpack.c.b16 %v2134, %v2134
  %v2185 = vpack.c.b16 %v2135, %v2135
  %v2186 = vpack.c.b16 %v2136, %v2136
  %v2187 = vpack.c.b16 %v2137, %v2137
  %v2188 = vpack.c.b16 %v2138, %v2138
  %v2189 = vpack.c.b16 %v2139, %v2139
  %v2190 = vpack.c.b16 %v2140, %v2140
  %v2191 = vpack.c.b16 %v2141, %v2141
  %v2192 = vpack.c.b16 %v2142, %v2142
  %v2193 = vpack.c.b16 %v2143, %v2143
  %v2194 = vpack.c.b16 %v2144, %v2144
  %v2195 = vpack.c.b16 %v2145, %v2145
  %v2196 = vpack.c.b16 %v2146, %v2146
  %v2197 = vpack.c.b16 %v2147, %v2147
  %v2198 = vpack.c.b16 %v2148, %v2148
  %v2199 = vpack.c.b16 %v2149, %v2149
  %v2200 = vpack.c.b16 %v2150, %v2150
  %v2201 = vpack.c.b16 %v2151, %v2151
  %v2202 = vpack.c.b16 %v2152, %v2152
  %v2203 = vpack.c.b16 %v2153, %v2153
  %v2204 = vpack.c.b16 %v2154, %v2154
  %v2205 = vpack.c.b16 %v2155, %v2155
  %v2206 = vpack.c.b16 %v2156, %v2156
  %v2207 = vpack.c.b16 %v2157, %v2157
  %v2208 = vpack.c.b16 %v2158, %v2158
  %v2209 = vpack.c.b16 %v2159, %v2159
  %v2210 = vpack.c.b16 %v2160, %v2160
  %v2211 = vpack.c.b16 %v2161, %v2161
  %v2212 = vpack.c.b16 %v2162, %v2162
  %v2213 = vpack.c.b16 %v2163, %v2163
  %v2214 = vpack.c.b16 %v2164, %v2164
  %v2215 = vpack.c.b16 %v2165, %v2165
  %v2216 = vpack.c.b16 %v2166, %v2166
  %v2217 = vpack.c.b16 %v2167, %v2167
  %v2218 = vpack.c.b16 %v2168, %v2168
  %v2219 = vpack.c.b16 %v2169, %v2169
  %v2220 = vpack.c.b16 %v2170, %v2170
  %2271 = vst [vmem:[%s3] sm:$0xf] %v2171
  %2272 = vst [vmem:[%s3 + $0x4] sm:$0xf] %v2172
  %2273 = vst [vmem:[%s3 + $0x8] sm:$0xf] %v2173
  %2274 = vst [vmem:[%s3 + $0xc] sm:$0xf] %v2174
  %2275 = vst [vmem:[%s3 + $0x10] sm:$0xf] %v2175
  %2276 = vst [vmem:[%s3 + $0x14] sm:$0xf] %v2176
  %2277 = vst [vmem:[%s3 + $0x18] sm:$0xf] %v2177
  %2278 = vst [vmem:[%s3 + $0x1c] sm:$0xf] %v2178
  %2279 = vst [vmem:[%s3 + $0x20] sm:$0xf] %v2179
  %2280 = vst [vmem:[%s3 + $0x24] sm:$0xf] %v2180
  %2281 = vst [vmem:[%s3 + $0x28] sm:$0xf] %v2181
  %2282 = vst [vmem:[%s3 + $0x2c] sm:$0xf] %v2182
  %2283 = vst [vmem:[%s3 + $0x30] sm:$0xf] %v2183
  %2284 = vst [vmem:[%s3 + $0x34] sm:$0xf] %v2184
  %2285 = vst [vmem:[%s3 + $0x38] sm:$0xf] %v2185
  %2286 = vst [vmem:[%s3 + $0x3c] sm:$0xf] %v2186
  %2287 = vst [vmem:[%s3 + $0x40] sm:$0xf] %v2187
  %2288 = vst [vmem:[%s3 + $0x44] sm:$0xf] %v2188
  %2289 = vst [vmem:[%s3 + $0x48] sm:$0xf] %v2189
  %2290 = vst [vmem:[%s3 + $0x4c] sm:$0xf] %v2190
  %2291 = vst [vmem:[%s3 + $0x50] sm:$0xf] %v2191
  %2292 = vst [vmem:[%s3 + $0x54] sm:$0xf] %v2192
  %2293 = vst [vmem:[%s3 + $0x58] sm:$0xf] %v2193
  %2294 = vst [vmem:[%s3 + $0x5c] sm:$0xf] %v2194
  %2295 = vst [vmem:[%s3 + $0x60] sm:$0xf] %v2195
  %2296 = vst [vmem:[%s3 + $0x64] sm:$0xf] %v2196
  %2297 = vst [vmem:[%s3 + $0x68] sm:$0xf] %v2197
  %2298 = vst [vmem:[%s3 + $0x6c] sm:$0xf] %v2198
  %2299 = vst [vmem:[%s3 + $0x70] sm:$0xf] %v2199
  %2300 = vst [vmem:[%s3 + $0x74] sm:$0xf] %v2200
  %2301 = vst [vmem:[%s3 + $0x78] sm:$0xf] %v2201
  %2302 = vst [vmem:[%s3 + $0x7c] sm:$0xf] %v2202
  %2303 = vst [vmem:[%s3 + $0x80] sm:$0xf] %v2203
  %2304 = vst [vmem:[%s3 + $0x84] sm:$0xf] %v2204
  %2305 = vst [vmem:[%s3 + $0x88] sm:$0xf] %v2205
  %2306 = vst [vmem:[%s3 + $0x8c] sm:$0xf] %v2206
  %2307 = vst [vmem:[%s3 + $0x90] sm:$0xf] %v2207
  %2308 = vst [vmem:[%s3 + $0x94] sm:$0xf] %v2208
  %2309 = vst [vmem:[%s3 + $0x98] sm:$0xf] %v2209
  %2310 = vst [vmem:[%s3 + $0x9c] sm:$0xf] %v2210
  %2311 = vst [vmem:[%s3 + $0xa0] sm:$0xf] %v2211
  %2312 = vst [vmem:[%s3 + $0xa4] sm:$0xf] %v2212
  %2313 = vst [vmem:[%s3 + $0xa8] sm:$0xf] %v2213
  %2314 = vst [vmem:[%s3 + $0xac] sm:$0xf] %v2214
  %2315 = vst [vmem:[%s3 + $0xb0] sm:$0xf] %v2215
  %2316 = vst [vmem:[%s3 + $0xb4] sm:$0xf] %v2216
  %2317 = vst [vmem:[%s3 + $0xb8] sm:$0xf] %v2217
  %2318 = vst [vmem:[%s3 + $0xbc] sm:$0xf] %v2218
  %2319 = vst [vmem:[%s3 + $0xc0] sm:$0xf] %v2219
  %2320 = vst [vmem:[%s3 + $0xc4] sm:$0xf] %v2220
  // Predicated region
  $region14: #{net_forward.2} parent=0 // pred_check
    _
  $region15: #{net_forward.2} parent=0 // pred_check_branch
    %2322 = sbr.rel (0) target = $region17
  $region16: #{net_forward.2} parent=0 // pred_region
    _
  $region17: #{net_forward.2} parent=0 // pred_fallthru
    _
  // Predicated region
  $region18: #{net_forward.2} parent=0 // pred_check
    _
  $region19: #{net_forward.2} parent=0 // pred_check_branch
    %2324 = sbr.rel (0) target = $region21
  $region20: #{net_forward.2} parent=0 // pred_region
    _
  $region21: #{net_forward.2} parent=0 // pred_fallthru
    _

// kernel: net_forward.3
$region0: #{net_forward.3}
  #allocation0 [shape = 'u32[]', space=smem, size = 0x4, offset = 0x4, fixed_abs, tag = 'smem constant byte address 0x4 - core index']
  #allocation1 [shape = 'u32[144,128]{1,0:T(1,128)}', space=vmem, size = 0x12000, scoped, tag = 'internal scratch']
  %s0 = inlined_call_operand.vmem [shape: bf16[4,25,16,256], index: 0, kind: input, shape index: {}]
  %s1 = inlined_call_operand.vmem [shape: bf16[256,128], index: 1, kind: input, shape index: {}]
  %s2 = inlined_call_operand.vmem [shape: f32[1,128], index: 2, kind: input, shape index: {}]
  %s3 = inlined_call_operand.vmem [shape: bf16[400,128], index: 3, kind: input, shape index: {}]
  %s4 = inlined_call_operand.vmem [shape: f32[1,128], index: 4, kind: input, shape index: {}]
  %s5 = inlined_call_operand.vmem [shape: bf16[128,128], index: 5, kind: input, shape index: {}]
  %s6 = inlined_call_operand.vmem [shape: f32[1,128], index: 6, kind: input, shape index: {}]
  %s7 = inlined_call_operand.vmem [shape: bf16[128,128], index: 7, kind: input, shape index: {}]
  %s8 = inlined_call_operand.vmem [shape: f32[1,128], index: 8, kind: input, shape index: {}]
  %s9 = inlined_call_operand.vmem [shape: f32[16,128], index: 9, kind: output, shape index: {}]
  %s10 = sld [smem:[#allocation0]]
  $region46: #{net_forward.3} parent=0
    _
  %s12 = ssub.s32 1, %s10
  %s13 = scalar_select 0, %s12, %s10
  // Predicated region
  $region2: #{net_forward.3} parent=0 // pred_check
    _
  $region3: #{net_forward.3} parent=0 // pred_check_branch
    %15 = sbr.rel (0) target = $region5
  $region4: #{net_forward.3} parent=0 // pred_region
    _
  $region5: #{net_forward.3} parent=0 // pred_fallthru
    _
  // Predicated region
  $region6: #{net_forward.3} parent=0 // pred_check
    _
  $region7: #{net_forward.3} parent=0 // pred_check_branch
    %17 = sbr.rel (0) target = $region9
  $region8: #{net_forward.3} parent=0 // pred_region
    _
  $region9: #{net_forward.3} parent=0 // pred_fallthru
    _
  // Predicated region
  $region10: #{net_forward.3} parent=0 // pred_check
    _
  $region11: #{net_forward.3} parent=0 // pred_check_branch
    %19 = sbr.rel (0) target = $region13
  $region12: #{net_forward.3} parent=0 // pred_region
    _
  $region13: #{net_forward.3} parent=0 // pred_fallthru
    _
  // Predicated region
  $region14: #{net_forward.3} parent=0 // pred_check
    _
  $region15: #{net_forward.3} parent=0 // pred_check_branch
    %21 = sbr.rel (0) target = $region17
  $region16: #{net_forward.3} parent=0 // pred_region
    _
  $region17: #{net_forward.3} parent=0 // pred_fallthru
    _
  // Predicated region
  $region18: #{net_forward.3} parent=0 // pred_check
    _
  $region19: #{net_forward.3} parent=0 // pred_check_branch
    %23 = sbr.rel (0) target = $region21
  $region20: #{net_forward.3} parent=0 // pred_region
    _
  $region21: #{net_forward.3} parent=0 // pred_fallthru
    _
  // Predicated region
  $region22: #{net_forward.3} parent=0 // pred_check
    _
  $region23: #{net_forward.3} parent=0 // pred_check_branch
    %25 = sbr.rel (0) target = $region25
  $region24: #{net_forward.3} parent=0 // pred_region
    _
  $region25: #{net_forward.3} parent=0 // pred_fallthru
    _
  // Predicated region
  $region26: #{net_forward.3} parent=0 // pred_check
    _
  $region27: #{net_forward.3} parent=0 // pred_check_branch
    %27 = sbr.rel (0) target = $region29
  $region28: #{net_forward.3} parent=0 // pred_region
    _
  $region29: #{net_forward.3} parent=0 // pred_fallthru
    _
  // Predicated region
  $region30: #{net_forward.3} parent=0 // pred_check
    _
  $region31: #{net_forward.3} parent=0 // pred_check_branch
    %29 = sbr.rel (0) target = $region33
  $region32: #{net_forward.3} parent=0 // pred_region
    _
  $region33: #{net_forward.3} parent=0 // pred_fallthru
    _
  // Predicated region
  $region34: #{net_forward.3} parent=0 // pred_check
    _
  $region35: #{net_forward.3} parent=0 // pred_check_branch
    %31 = sbr.rel (0) target = $region37
  $region36: #{net_forward.3} parent=0 // pred_region
    _
  $region37: #{net_forward.3} parent=0 // pred_fallthru
    _
  %v33 = vld [vmem:[%s1] sm:$0xf]
  %v34 = vld [vmem:[%s1 + $0x4] sm:$0xf]
  %v35 = vld [vmem:[%s1 + $0x8] sm:$0xf]
  %v36 = vld [vmem:[%s1 + $0xc] sm:$0xf]
  %v37 = vld [vmem:[%s1 + $0x10] sm:$0xf]
  %v38 = vld [vmem:[%s1 + $0x14] sm:$0xf]
  %v39 = vld [vmem:[%s1 + $0x18] sm:$0xf]
  %v40 = vld [vmem:[%s1 + $0x1c] sm:$0xf]
  %v41 = vld [vmem:[%s1 + $0x20] sm:$0xf]
  %v42 = vld [vmem:[%s1 + $0x24] sm:$0xf]
  %v43 = vld [vmem:[%s1 + $0x28] sm:$0xf]
  %v44 = vld [vmem:[%s1 + $0x2c] sm:$0xf]
  %v45 = vld [vmem:[%s1 + $0x30] sm:$0xf]
  %v46 = vld [vmem:[%s1 + $0x34] sm:$0xf]
  %v47 = vld [vmem:[%s1 + $0x38] sm:$0xf]
  %v48 = vld [vmem:[%s1 + $0x3c] sm:$0xf]
  %v49 = vld [vmem:[%s1 + $0x40] sm:$0xf]
  %v50 = vld [vmem:[%s1 + $0x44] sm:$0xf]
  %v51 = vld [vmem:[%s1 + $0x48] sm:$0xf]
  %v52 = vld [vmem:[%s1 + $0x4c] sm:$0xf]
  %v53 = vld [vmem:[%s1 + $0x50] sm:$0xf]
  %v54 = vld [vmem:[%s1 + $0x54] sm:$0xf]
  %v55 = vld [vmem:[%s1 + $0x58] sm:$0xf]
  %v56 = vld [vmem:[%s1 + $0x5c] sm:$0xf]
  %v57 = vld [vmem:[%s1 + $0x60] sm:$0xf]
  %v58 = vld [vmem:[%s1 + $0x64] sm:$0xf]
  %v59 = vld [vmem:[%s1 + $0x68] sm:$0xf]
  %v60 = vld [vmem:[%s1 + $0x6c] sm:$0xf]
  %v61 = vld [vmem:[%s1 + $0x70] sm:$0xf]
  %v62 = vld [vmem:[%s1 + $0x74] sm:$0xf]
  %v63 = vld [vmem:[%s1 + $0x78] sm:$0xf]
  %v64 = vld [vmem:[%s1 + $0x7c] sm:$0xf]
  %v65 = vld [vmem:[%s2] sm:$0x1]
  %v66 = vld [vmem:[%s0] sm:$0xff]
  %v67 = vld [vmem:[%s0 + $0x8] sm:$0xff]
  %v70 = vunpack.c.l.b16 %v66
  %v71 = vunpack.c.h.b16 %v66
  %v72 = vunpack.c.l.b16 %v67
  %v73 = vunpack.c.h.b16 %v67
  %v74 = vpack.c.b16 %v72, %v70
  %v75 = vpack.c.b16 %v73, %v71
  %v110 = vunpack.c.l.b16 %v33
  %v111 = vunpack.c.l.b16 %v34
  %v112 = vunpack.c.l.b16 %v35
  %v113 = vunpack.c.l.b16 %v36
  %v114 = vunpack.c.l.b16 %v37
  %v115 = vunpack.c.l.b16 %v38
  %v116 = vunpack.c.l.b16 %v39
  %v117 = vunpack.c.l.b16 %v40
  %v118 = vunpack.c.l.b16 %v41
  %v119 = vunpack.c.l.b16 %v42
  %v120 = vunpack.c.l.b16 %v43
  %v121 = vunpack.c.l.b16 %v44
  %v122 = vunpack.c.l.b16 %v45
  %v123 = vunpack.c.l.b16 %v46
  %v124 = vunpack.c.l.b16 %v47
  %v125 = vunpack.c.l.b16 %v48
  %v126 = vunpack.c.l.b16 %v49
  %v127 = vunpack.c.l.b16 %v50
  %v128 = vunpack.c.l.b16 %v51
  %v129 = vunpack.c.l.b16 %v52
  %v130 = vunpack.c.l.b16 %v53
  %v131 = vunpack.c.l.b16 %v54
  %v132 = vunpack.c.l.b16 %v55
  %v133 = vunpack.c.l.b16 %v56
  %v134 = vunpack.c.l.b16 %v57
  %v135 = vunpack.c.l.b16 %v58
  %v136 = vunpack.c.l.b16 %v59
  %v137 = vunpack.c.l.b16 %v60
  %v138 = vunpack.c.l.b16 %v61
  %v139 = vunpack.c.l.b16 %v62
  %v140 = vunpack.c.l.b16 %v63
  %v141 = vunpack.c.l.b16 %v64
  %v142 = vpack.c.b16 %v111, %v110
  %v143 = vpack.c.b16 %v113, %v112
  %v144 = vpack.c.b16 %v115, %v114
  %v145 = vpack.c.b16 %v117, %v116
  %v146 = vpack.c.b16 %v119, %v118
  %v147 = vpack.c.b16 %v121, %v120
  %v148 = vpack.c.b16 %v123, %v122
  %v149 = vpack.c.b16 %v125, %v124
  %v150 = vpack.c.b16 %v127, %v126
  %v151 = vpack.c.b16 %v129, %v128
  %v152 = vpack.c.b16 %v131, %v130
  %v153 = vpack.c.b16 %v133, %v132
  %v154 = vpack.c.b16 %v135, %v134
  %v155 = vpack.c.b16 %v137, %v136
  %v156 = vpack.c.b16 %v139, %v138
  %v157 = vpack.c.b16 %v141, %v140
  %174 = vmatprep.subr.bf16.mxu0 0
  %175 = vmatpush1.bf16.msra.mxu0 %v149
  %176 = vmatprep.subr.bf16.mxu0 0
  %177 = vmatpush1.bf16.msra.mxu0 %v148
  %178 = vmatprep.subr.bf16.mxu0 0
  %179 = vmatpush1.bf16.msra.mxu0 %v147
  %180 = vmatprep.subr.bf16.mxu0 0
  %181 = vmatpush1.bf16.msra.mxu0 %v146
  %182 = vmatprep.subr.bf16.mxu0 0
  %183 = vmatpush1.bf16.msra.mxu0 %v145
  %184 = vmatprep.subr.bf16.mxu0 0
  %185 = vmatpush1.bf16.msra.mxu0 %v144
  %186 = vmatprep.subr.bf16.mxu0 0
  %187 = vmatpush1.bf16.msra.mxu0 %v143
  %188 = vmatprep.subr.bf16.mxu0 0
  %189 = vmatpush1.bf16.msra.mxu0 %v142
  %190 = vmatprep.subr.bf16.mxu0 0
  %191 = vmatpush2.bf16.msra.mxu0 %v157
  %192 = vmatprep.subr.bf16.mxu0 0
  %193 = vmatpush2.bf16.msra.mxu0 %v156
  %194 = vmatprep.subr.bf16.mxu0 0
  %195 = vmatpush2.bf16.msra.mxu0 %v155
  %196 = vmatprep.subr.bf16.mxu0 0
  %197 = vmatpush2.bf16.msra.mxu0 %v154
  %198 = vmatprep.subr.bf16.mxu0 0
  %199 = vmatpush2.bf16.msra.mxu0 %v153
  %200 = vmatprep.subr.bf16.mxu0 0
  %201 = vmatpush2.bf16.msra.mxu0 %v152
  %202 = vmatprep.subr.bf16.mxu0 0
  %203 = vmatpush2.bf16.msra.mxu0 %v151
  %204 = vmatprep.subr.bf16.mxu0 0
  %205 = vmatpush2.bf16.msra.mxu0 %v150
  %206 = vmatprep.mubr.bf16.mxu0 %v75
  %207 = vmatmul.mubr.bf16.gmra.mxu0 %v74
  %v208 = vpop.f32.mrf.mxu0
  %v209 = vadd.f32 0.0, %v208
  %v210 = vpop.f32.mrf.mxu0
  %v211 = vpop.f32.mrf.mxu0
  %v212 = vadd.f32 0.0, %v211
  %v213 = vpop.f32.mrf.mxu0
  %214 = vdwg.mxu0
  %s215 = scalar_lea.vmem %s0, 400
  %v216 = vld [vmem:[%s215] sm:$0xff]
  %v217 = vld [vmem:[%s215 + $0x8] sm:$0xff]
  %v220 = vunpack.c.l.b16 %v216
  %v221 = vunpack.c.h.b16 %v216
  %v222 = vunpack.c.l.b16 %v217
  %v223 = vunpack.c.h.b16 %v217
  %v224 = vpack.c.b16 %v222, %v220
  %v225 = vpack.c.b16 %v223, %v221
  %228 = vmatprep.subr.bf16.mxu0 0
  %229 = vmatpush1.bf16.msra.mxu0 %v149
  %230 = vmatprep.subr.bf16.mxu0 0
  %231 = vmatpush1.bf16.msra.mxu0 %v148
  %232 = vmatprep.subr.bf16.mxu0 0
  %233 = vmatpush1.bf16.msra.mxu0 %v147
  %234 = vmatprep.subr.bf16.mxu0 0
  %235 = vmatpush1.bf16.msra.mxu0 %v146
  %236 = vmatprep.subr.bf16.mxu0 0
  %237 = vmatpush1.bf16.msra.mxu0 %v145
  %238 = vmatprep.subr.bf16.mxu0 0
  %239 = vmatpush1.bf16.msra.mxu0 %v144
  %240 = vmatprep.subr.bf16.mxu0 0
  %241 = vmatpush1.bf16.msra.mxu0 %v143
  %242 = vmatprep.subr.bf16.mxu0 0
  %243 = vmatpush1.bf16.msra.mxu0 %v142
  %244 = vmatprep.subr.bf16.mxu0 0
  %245 = vmatpush2.bf16.msra.mxu0 %v157
  %246 = vmatprep.subr.bf16.mxu0 0
  %247 = vmatpush2.bf16.msra.mxu0 %v156
  %248 = vmatprep.subr.bf16.mxu0 0
  %249 = vmatpush2.bf16.msra.mxu0 %v155
  %250 = vmatprep.subr.bf16.mxu0 0
  %251 = vmatpush2.bf16.msra.mxu0 %v154
  %252 = vmatprep.subr.bf16.mxu0 0
  %253 = vmatpush2.bf16.msra.mxu0 %v153
  %254 = vmatprep.subr.bf16.mxu0 0
  %255 = vmatpush2.bf16.msra.mxu0 %v152
  %256 = vmatprep.subr.bf16.mxu0 0
  %257 = vmatpush2.bf16.msra.mxu0 %v151
  %258 = vmatprep.subr.bf16.mxu0 0
  %259 = vmatpush2.bf16.msra.mxu0 %v150
  %260 = vmatprep.mubr.bf16.mxu0 %v225
  %261 = vmatmul.mubr.bf16.gmra.mxu0 %v224
  %v262 = vpop.f32.mrf.mxu0
  %v263 = vadd.f32 0.0, %v262
  %v264 = vpop.f32.mrf.mxu0
  %v265 = vpop.f32.mrf.mxu0
  %v266 = vadd.f32 0.0, %v265
  %v267 = vpop.f32.mrf.mxu0
  %268 = vdwg.mxu0
  %v269 = vmax.f32 %v209, %v263
  %v270 = vmax.f32 %v212, %v266
  %s271 = scalar_lea.vmem %s0, 800
  %v272 = vld [vmem:[%s271] sm:$0xff]
  %v273 = vld [vmem:[%s271 + $0x8] sm:$0xff]
  %v276 = vunpack.c.l.b16 %v272
  %v277 = vunpack.c.h.b16 %v272
  %v278 = vunpack.c.l.b16 %v273
  %v279 = vunpack.c.h.b16 %v273
  %v280 = vpack.c.b16 %v278, %v276
  %v281 = vpack.c.b16 %v279, %v277
  %284 = vmatprep.subr.bf16.mxu0 0
  %285 = vmatpush1.bf16.msra.mxu0 %v149
  %286 = vmatprep.subr.bf16.mxu0 0
  %287 = vmatpush1.bf16.msra.mxu0 %v148
  %288 = vmatprep.subr.bf16.mxu0 0
  %289 = vmatpush1.bf16.msra.mxu0 %v147
  %290 = vmatprep.subr.bf16.mxu0 0
  %291 = vmatpush1.bf16.msra.mxu0 %v146
  %292 = vmatprep.subr.bf16.mxu0 0
  %293 = vmatpush1.bf16.msra.mxu0 %v145
  %294 = vmatprep.subr.bf16.mxu0 0
  %295 = vmatpush1.bf16.msra.mxu0 %v144
  %296 = vmatprep.subr.bf16.mxu0 0
  %297 = vmatpush1.bf16.msra.mxu0 %v143
  %298 = vmatprep.subr.bf16.mxu0 0
  %299 = vmatpush1.bf16.msra.mxu0 %v142
  %300 = vmatprep.subr.bf16.mxu0 0
  %301 = vmatpush2.bf16.msra.mxu0 %v157
  %302 = vmatprep.subr.bf16.mxu0 0
  %303 = vmatpush2.bf16.msra.mxu0 %v156
  %304 = vmatprep.subr.bf16.mxu0 0
  %305 = vmatpush2.bf16.msra.mxu0 %v155
  %306 = vmatprep.subr.bf16.mxu0 0
  %307 = vmatpush2.bf16.msra.mxu0 %v154
  %308 = vmatprep.subr.bf16.mxu0 0
  %309 = vmatpush2.bf16.msra.mxu0 %v153
  %310 = vmatprep.subr.bf16.mxu0 0
  %311 = vmatpush2.bf16.msra.mxu0 %v152
  %312 = vmatprep.subr.bf16.mxu0 0
  %313 = vmatpush2.bf16.msra.mxu0 %v151
  %314 = vmatprep.subr.bf16.mxu0 0
  %315 = vmatpush2.bf16.msra.mxu0 %v150
  %316 = vmatprep.mubr.bf16.mxu0 %v281
  %317 = vmatmul.mubr.bf16.gmra.mxu0 %v280
  %v318 = vpop.f32.mrf.mxu0
  %v319 = vadd.f32 0.0, %v318
  %v320 = vpop.f32.mrf.mxu0
  %v321 = vpop.f32.mrf.mxu0
  %v322 = vadd.f32 0.0, %v321
  %v323 = vpop.f32.mrf.mxu0
  %324 = vdwg.mxu0
  %v325 = vmax.f32 %v269, %v319
  %v326 = vmax.f32 %v270, %v322
  %s327 = scalar_lea.vmem %s0, 1200
  %v328 = vld [vmem:[%s327] sm:$0xff]
  %v329 = vld [vmem:[%s327 + $0x8] sm:$0xff]
  %v332 = vunpack.c.l.b16 %v328
  %v333 = vunpack.c.h.b16 %v328
  %v334 = vunpack.c.l.b16 %v329
  %v335 = vunpack.c.h.b16 %v329
  %v336 = vpack.c.b16 %v334, %v332
  %v337 = vpack.c.b16 %v335, %v333
  %340 = vmatprep.subr.bf16.mxu0 0
  %341 = vmatpush1.bf16.msra.mxu0 %v149
  %342 = vmatprep.subr.bf16.mxu0 0
  %343 = vmatpush1.bf16.msra.mxu0 %v148
  %344 = vmatprep.subr.bf16.mxu0 0
  %345 = vmatpush1.bf16.msra.mxu0 %v147
  %346 = vmatprep.subr.bf16.mxu0 0
  %347 = vmatpush1.bf16.msra.mxu0 %v146
  %348 = vmatprep.subr.bf16.mxu0 0
  %349 = vmatpush1.bf16.msra.mxu0 %v145
  %350 = vmatprep.subr.bf16.mxu0 0
  %351 = vmatpush1.bf16.msra.mxu0 %v144
  %352 = vmatprep.subr.bf16.mxu0 0
  %353 = vmatpush1.bf16.msra.mxu0 %v143
  %354 = vmatprep.subr.bf16.mxu0 0
  %355 = vmatpush1.bf16.msra.mxu0 %v142
  %356 = vmatprep.subr.bf16.mxu0 0
  %357 = vmatpush2.bf16.msra.mxu0 %v157
  %358 = vmatprep.subr.bf16.mxu0 0
  %359 = vmatpush2.bf16.msra.mxu0 %v156
  %360 = vmatprep.subr.bf16.mxu0 0
  %361 = vmatpush2.bf16.msra.mxu0 %v155
  %362 = vmatprep.subr.bf16.mxu0 0
  %363 = vmatpush2.bf16.msra.mxu0 %v154
  %364 = vmatprep.subr.bf16.mxu0 0
  %365 = vmatpush2.bf16.msra.mxu0 %v153
  %366 = vmatprep.subr.bf16.mxu0 0
  %367 = vmatpush2.bf16.msra.mxu0 %v152
  %368 = vmatprep.subr.bf16.mxu0 0
  %369 = vmatpush2.bf16.msra.mxu0 %v151
  %370 = vmatprep.subr.bf16.mxu0 0
  %371 = vmatpush2.bf16.msra.mxu0 %v150
  %372 = vmatprep.mubr.bf16.mxu0 %v337
  %373 = vmatmul.mubr.bf16.gmra.mxu0 %v336
  %v374 = vpop.f32.mrf.mxu0
  %v375 = vadd.f32 0.0, %v374
  %v376 = vpop.f32.mrf.mxu0
  %v377 = vpop.f32.mrf.mxu0
  %v378 = vadd.f32 0.0, %v377
  %v379 = vpop.f32.mrf.mxu0
  %380 = vdwg.mxu0
  %v381 = vmax.f32 %v325, %v375
  %v382 = vmax.f32 %v326, %v378
  %v384 = vlaneseq
  %v385 = vshrl.u32 %v384, 7
  %v386 = vsub.s32 0, %v385
  %v387 = vrot.slane %v65, %v386
  %v389 = vadd.f32 %v381, %v387
  %v390 = vadd.f32 %v382, %v387
  %v391 = vmax.f32 %v389, 0.0
  %v392 = vmax.f32 %v390, 0.0
  %v393 = vpack.c.bf16 %v392, %v391
  %v394 = vld [vmem:[%s3] sm:$0xf]
  %v395 = vld [vmem:[%s3 + $0x4] sm:$0xf]
  %s396 = scalar_lea.vmem %s0, 16
  %v397 = vld [vmem:[%s396] sm:$0xff]
  %v398 = vld [vmem:[%s396 + $0x8] sm:$0xff]
  %v401 = vunpack.c.l.b16 %v397
  %v402 = vunpack.c.h.b16 %v397
  %v403 = vunpack.c.l.b16 %v398
  %v404 = vunpack.c.h.b16 %v398
  %v405 = vpack.c.b16 %v403, %v401
  %v406 = vpack.c.b16 %v404, %v402
  %409 = vmatprep.subr.bf16.mxu0 0
  %410 = vmatpush1.bf16.msra.mxu0 %v149
  %411 = vmatprep.subr.bf16.mxu0 0
  %412 = vmatpush1.bf16.msra.mxu0 %v148
  %413 = vmatprep.subr.bf16.mxu0 0
  %414 = vmatpush1.bf16.msra.mxu0 %v147
  %415 = vmatprep.subr.bf16.mxu0 0
  %416 = vmatpush1.bf16.msra.mxu0 %v146
  %417 = vmatprep.subr.bf16.mxu0 0
  %418 = vmatpush1.bf16.msra.mxu0 %v145
  %419 = vmatprep.subr.bf16.mxu0 0
  %420 = vmatpush1.bf16.msra.mxu0 %v144
  %421 = vmatprep.subr.bf16.mxu0 0
  %422 = vmatpush1.bf16.msra.mxu0 %v143
  %423 = vmatprep.subr.bf16.mxu0 0
  %424 = vmatpush1.bf16.msra.mxu0 %v142
  %425 = vmatprep.subr.bf16.mxu0 0
  %426 = vmatpush2.bf16.msra.mxu0 %v157
  %427 = vmatprep.subr.bf16.mxu0 0
  %428 = vmatpush2.bf16.msra.mxu0 %v156
  %429 = vmatprep.subr.bf16.mxu0 0
  %430 = vmatpush2.bf16.msra.mxu0 %v155
  %431 = vmatprep.subr.bf16.mxu0 0
  %432 = vmatpush2.bf16.msra.mxu0 %v154
  %433 = vmatprep.subr.bf16.mxu0 0
  %434 = vmatpush2.bf16.msra.mxu0 %v153
  %435 = vmatprep.subr.bf16.mxu0 0
  %436 = vmatpush2.bf16.msra.mxu0 %v152
  %437 = vmatprep.subr.bf16.mxu0 0
  %438 = vmatpush2.bf16.msra.mxu0 %v151
  %439 = vmatprep.subr.bf16.mxu0 0
  %440 = vmatpush2.bf16.msra.mxu0 %v150
  %441 = vmatprep.mubr.bf16.mxu0 %v406
  %442 = vmatmul.mubr.bf16.gmra.mxu0 %v405
  %v443 = vpop.f32.mrf.mxu0
  %v444 = vadd.f32 0.0, %v443
  %v445 = vpop.f32.mrf.mxu0
  %v446 = vpop.f32.mrf.mxu0
  %v447 = vadd.f32 0.0, %v446
  %v448 = vpop.f32.mrf.mxu0
  %449 = vdwg.mxu0
  %s450 = scalar_lea.vmem %s0, 416
  %v451 = vld [vmem:[%s450] sm:$0xff]
  %v452 = vld [vmem:[%s450 + $0x8] sm:$0xff]
  %v455 = vunpack.c.l.b16 %v451
  %v456 = vunpack.c.h.b16 %v451
  %v457 = vunpack.c.l.b16 %v452
  %v458 = vunpack.c.h.b16 %v452
  %v459 = vpack.c.b16 %v457, %v455
  %v460 = vpack.c.b16 %v458, %v456
  %463 = vmatprep.subr.bf16.mxu0 0
  %464 = vmatpush1.bf16.msra.mxu0 %v149
  %465 = vmatprep.subr.bf16.mxu0 0
  %466 = vmatpush1.bf16.msra.mxu0 %v148
  %467 = vmatprep.subr.bf16.mxu0 0
  %468 = vmatpush1.bf16.msra.mxu0 %v147
  %469 = vmatprep.subr.bf16.mxu0 0
  %470 = vmatpush1.bf16.msra.mxu0 %v146
  %471 = vmatprep.subr.bf16.mxu0 0
  %472 = vmatpush1.bf16.msra.mxu0 %v145
  %473 = vmatprep.subr.bf16.mxu0 0
  %474 = vmatpush1.bf16.msra.mxu0 %v144
  %475 = vmatprep.subr.bf16.mxu0 0
  %476 = vmatpush1.bf16.msra.mxu0 %v143
  %477 = vmatprep.subr.bf16.mxu0 0
  %478 = vmatpush1.bf16.msra.mxu0 %v142
  %479 = vmatprep.subr.bf16.mxu0 0
  %480 = vmatpush2.bf16.msra.mxu0 %v157
  %481 = vmatprep.subr.bf16.mxu0 0
  %482 = vmatpush2.bf16.msra.mxu0 %v156
  %483 = vmatprep.subr.bf16.mxu0 0
  %484 = vmatpush2.bf16.msra.mxu0 %v155
  %485 = vmatprep.subr.bf16.mxu0 0
  %486 = vmatpush2.bf16.msra.mxu0 %v154
  %487 = vmatprep.subr.bf16.mxu0 0
  %488 = vmatpush2.bf16.msra.mxu0 %v153
  %489 = vmatprep.subr.bf16.mxu0 0
  %490 = vmatpush2.bf16.msra.mxu0 %v152
  %491 = vmatprep.subr.bf16.mxu0 0
  %492 = vmatpush2.bf16.msra.mxu0 %v151
  %493 = vmatprep.subr.bf16.mxu0 0
  %494 = vmatpush2.bf16.msra.mxu0 %v150
  %495 = vmatprep.mubr.bf16.mxu0 %v460
  %496 = vmatmul.mubr.bf16.gmra.mxu0 %v459
  %v497 = vpop.f32.mrf.mxu0
  %v498 = vadd.f32 0.0, %v497
  %v499 = vpop.f32.mrf.mxu0
  %v500 = vpop.f32.mrf.mxu0
  %v501 = vadd.f32 0.0, %v500
  %v502 = vpop.f32.mrf.mxu0
  %503 = vdwg.mxu0
  %v504 = vmax.f32 %v444, %v498
  %v505 = vmax.f32 %v447, %v501
  %s506 = scalar_lea.vmem %s0, 816
  %v507 = vld [vmem:[%s506] sm:$0xff]
  %v508 = vld [vmem:[%s506 + $0x8] sm:$0xff]
  %v511 = vunpack.c.l.b16 %v507
  %v512 = vunpack.c.h.b16 %v507
  %v513 = vunpack.c.l.b16 %v508
  %v514 = vunpack.c.h.b16 %v508
  %v515 = vpack.c.b16 %v513, %v511
  %v516 = vpack.c.b16 %v514, %v512
  %519 = vmatprep.subr.bf16.mxu0 0
  %520 = vmatpush1.bf16.msra.mxu0 %v149
  %521 = vmatprep.subr.bf16.mxu0 0
  %522 = vmatpush1.bf16.msra.mxu0 %v148
  %523 = vmatprep.subr.bf16.mxu0 0
  %524 = vmatpush1.bf16.msra.mxu0 %v147
  %525 = vmatprep.subr.bf16.mxu0 0
  %526 = vmatpush1.bf16.msra.mxu0 %v146
  %527 = vmatprep.subr.bf16.mxu0 0
  %528 = vmatpush1.bf16.msra.mxu0 %v145
  %529 = vmatprep.subr.bf16.mxu0 0
  %530 = vmatpush1.bf16.msra.mxu0 %v144
  %531 = vmatprep.subr.bf16.mxu0 0
  %532 = vmatpush1.bf16.msra.mxu0 %v143
  %533 = vmatprep.subr.bf16.mxu0 0
  %534 = vmatpush1.bf16.msra.mxu0 %v142
  %535 = vmatprep.subr.bf16.mxu0 0
  %536 = vmatpush2.bf16.msra.mxu0 %v157
  %537 = vmatprep.subr.bf16.mxu0 0
  %538 = vmatpush2.bf16.msra.mxu0 %v156
  %539 = vmatprep.subr.bf16.mxu0 0
  %540 = vmatpush2.bf16.msra.mxu0 %v155
  %541 = vmatprep.subr.bf16.mxu0 0
  %542 = vmatpush2.bf16.msra.mxu0 %v154
  %543 = vmatprep.subr.bf16.mxu0 0
  %544 = vmatpush2.bf16.msra.mxu0 %v153
  %545 = vmatprep.subr.bf16.mxu0 0
  %546 = vmatpush2.bf16.msra.mxu0 %v152
  %547 = vmatprep.subr.bf16.mxu0 0
  %548 = vmatpush2.bf16.msra.mxu0 %v151
  %549 = vmatprep.subr.bf16.mxu0 0
  %550 = vmatpush2.bf16.msra.mxu0 %v150
  %551 = vmatprep.mubr.bf16.mxu0 %v516
  %552 = vmatmul.mubr.bf16.gmra.mxu0 %v515
  %v553 = vpop.f32.mrf.mxu0
  %v554 = vadd.f32 0.0, %v553
  %v555 = vpop.f32.mrf.mxu0
  %v556 = vpop.f32.mrf.mxu0
  %v557 = vadd.f32 0.0, %v556
  %v558 = vpop.f32.mrf.mxu0
  %559 = vdwg.mxu0
  %v560 = vmax.f32 %v504, %v554
  %v561 = vmax.f32 %v505, %v557
  %s562 = scalar_lea.vmem %s0, 1216
  %v563 = vld [vmem:[%s562] sm:$0xff]
  %v564 = vld [vmem:[%s562 + $0x8] sm:$0xff]
  %v567 = vunpack.c.l.b16 %v563
  %v568 = vunpack.c.h.b16 %v563
  %v569 = vunpack.c.l.b16 %v564
  %v570 = vunpack.c.h.b16 %v564
  %v571 = vpack.c.b16 %v569, %v567
  %v572 = vpack.c.b16 %v570, %v568
  %575 = vmatprep.subr.bf16.mxu0 0
  %576 = vmatpush1.bf16.msra.mxu0 %v149
  %577 = vmatprep.subr.bf16.mxu0 0
  %578 = vmatpush1.bf16.msra.mxu0 %v148
  %579 = vmatprep.subr.bf16.mxu0 0
  %580 = vmatpush1.bf16.msra.mxu0 %v147
  %581 = vmatprep.subr.bf16.mxu0 0
  %582 = vmatpush1.bf16.msra.mxu0 %v146
  %583 = vmatprep.subr.bf16.mxu0 0
  %584 = vmatpush1.bf16.msra.mxu0 %v145
  %585 = vmatprep.subr.bf16.mxu0 0
  %586 = vmatpush1.bf16.msra.mxu0 %v144
  %587 = vmatprep.subr.bf16.mxu0 0
  %588 = vmatpush1.bf16.msra.mxu0 %v143
  %589 = vmatprep.subr.bf16.mxu0 0
  %590 = vmatpush1.bf16.msra.mxu0 %v142
  %591 = vmatprep.subr.bf16.mxu0 0
  %592 = vmatpush2.bf16.msra.mxu0 %v157
  %593 = vmatprep.subr.bf16.mxu0 0
  %594 = vmatpush2.bf16.msra.mxu0 %v156
  %595 = vmatprep.subr.bf16.mxu0 0
  %596 = vmatpush2.bf16.msra.mxu0 %v155
  %597 = vmatprep.subr.bf16.mxu0 0
  %598 = vmatpush2.bf16.msra.mxu0 %v154
  %599 = vmatprep.subr.bf16.mxu0 0
  %600 = vmatpush2.bf16.msra.mxu0 %v153
  %601 = vmatprep.subr.bf16.mxu0 0
  %602 = vmatpush2.bf16.msra.mxu0 %v152
  %603 = vmatprep.subr.bf16.mxu0 0
  %604 = vmatpush2.bf16.msra.mxu0 %v151
  %605 = vmatprep.subr.bf16.mxu0 0
  %606 = vmatpush2.bf16.msra.mxu0 %v150
  %607 = vmatprep.mubr.bf16.mxu0 %v572
  %608 = vmatmul.mubr.bf16.gmra.mxu0 %v571
  %v609 = vpop.f32.mrf.mxu0
  %v610 = vadd.f32 0.0, %v609
  %v611 = vpop.f32.mrf.mxu0
  %v612 = vpop.f32.mrf.mxu0
  %v613 = vadd.f32 0.0, %v612
  %v614 = vpop.f32.mrf.mxu0
  %615 = vdwg.mxu0
  %v616 = vmax.f32 %v560, %v610
  %v617 = vmax.f32 %v561, %v613
  %v618 = vadd.f32 %v616, %v387
  %v619 = vadd.f32 %v617, %v387
  %v620 = vmax.f32 %v618, 0.0
  %v621 = vmax.f32 %v619, 0.0
  %v622 = vpack.c.bf16 %v621, %v620
  %v623 = vld [vmem:[%s3 + $0x8] sm:$0xf]
  %v624 = vld [vmem:[%s3 + $0xc] sm:$0xf]
  %v627 = vunpack.c.l.b16 %v623
  %v628 = vunpack.c.l.b16 %v624
  %v629 = vpack.c.b16 %v628, %v627
  %vm631 = vcmask 130048
  %v633 = vsel %vm631, %v622, 0
  %635 = vmatprep.subr.bf16.mxu0 0
  %636 = vmatpush1.bf16.msra.mxu0 0
  %637 = vmatprep.subr.bf16.mxu0 0
  %638 = vmatpush1.bf16.msra.mxu0 0
  %639 = vmatprep.subr.bf16.mxu0 0
  %640 = vmatpush1.bf16.msra.mxu0 0
  %641 = vmatprep.subr.bf16.mxu0 0
  %642 = vmatpush1.bf16.msra.mxu0 0
  %643 = vmatprep.subr.bf16.mxu0 0
  %644 = vmatpush1.bf16.msra.mxu0 0
  %645 = vmatprep.subr.bf16.mxu0 0
  %646 = vmatpush1.bf16.msra.mxu0 0
  %647 = vmatprep.subr.bf16.mxu0 0
  %648 = vmatpush1.bf16.msra.mxu0 0
  %649 = vmatprep.subr.bf16.mxu0 0
  %650 = vmatpush1.bf16.msra.mxu0 %v629
  %651 = vmatprep.subr.bf16.mxu0 0
  %652 = vmatpush2.bf16.msra.mxu0 0
  %653 = vmatprep.subr.bf16.mxu0 0
  %654 = vmatpush2.bf16.msra.mxu0 0
  %655 = vmatprep.subr.bf16.mxu0 0
  %656 = vmatpush2.bf16.msra.mxu0 0
  %657 = vmatprep.subr.bf16.mxu0 0
  %658 = vmatpush2.bf16.msra.mxu0 0
  %659 = vmatprep.subr.bf16.mxu0 0
  %660 = vmatpush2.bf16.msra.mxu0 0
  %661 = vmatprep.subr.bf16.mxu0 0
  %662 = vmatpush2.bf16.msra.mxu0 0
  %663 = vmatprep.subr.bf16.mxu0 0
  %664 = vmatpush2.bf16.msra.mxu0 0
  %665 = vmatprep.subr.bf16.mxu0 0
  %666 = vmatpush2.bf16.msra.mxu0 0
  %667 = vmatprep.mubr.bf16.mxu0 0
  %668 = vmatmul.mubr.bf16.gmra.mxu0 %v633
  %v669 = vpop.f32.mrf.mxu0
  %v670 = vadd.f32 0.0, %v669
  %v671 = vpop.f32.mrf.mxu0
  %v672 = vpop.f32.mrf.mxu0
  %v673 = vadd.f32 0.0, %v672
  %v674 = vpop.f32.mrf.mxu0
  %675 = vdwg.mxu0
  %v678 = vunpack.c.l.b16 %v394
  %v679 = vunpack.c.l.b16 %v395
  %v680 = vpack.c.b16 %v679, %v678
  %v683 = vsel %vm631, %v393, 0
  %685 = vmatprep.subr.bf16.mxu0 0
  %686 = vmatpush1.bf16.msra.mxu0 0
  %687 = vmatprep.subr.bf16.mxu0 0
  %688 = vmatpush1.bf16.msra.mxu0 0
  %689 = vmatprep.subr.bf16.mxu0 0
  %690 = vmatpush1.bf16.msra.mxu0 0
  %691 = vmatprep.subr.bf16.mxu0 0
  %692 = vmatpush1.bf16.msra.mxu0 0
  %693 = vmatprep.subr.bf16.mxu0 0
  %694 = vmatpush1.bf16.msra.mxu0 0
  %695 = vmatprep.subr.bf16.mxu0 0
  %696 = vmatpush1.bf16.msra.mxu0 0
  %697 = vmatprep.subr.bf16.mxu0 0
  %698 = vmatpush1.bf16.msra.mxu0 0
  %699 = vmatprep.subr.bf16.mxu0 0
  %700 = vmatpush1.bf16.msra.mxu0 %v680
  %701 = vmatprep.subr.bf16.mxu0 0
  %702 = vmatpush2.bf16.msra.mxu0 0
  %703 = vmatprep.subr.bf16.mxu0 0
  %704 = vmatpush2.bf16.msra.mxu0 0
  %705 = vmatprep.subr.bf16.mxu0 0
  %706 = vmatpush2.bf16.msra.mxu0 0
  %707 = vmatprep.subr.bf16.mxu0 0
  %708 = vmatpush2.bf16.msra.mxu0 0
  %709 = vmatprep.subr.bf16.mxu0 0
  %710 = vmatpush2.bf16.msra.mxu0 0
  %711 = vmatprep.subr.bf16.mxu0 0
  %712 = vmatpush2.bf16.msra.mxu0 0
  %713 = vmatprep.subr.bf16.mxu0 0
  %714 = vmatpush2.bf16.msra.mxu0 0
  %715 = vmatprep.subr.bf16.mxu0 0
  %716 = vmatpush2.bf16.msra.mxu0 0
  %717 = vmatprep.mubr.bf16.mxu0 0
  %718 = vmatmul.mubr.bf16.gmra.mxu0 %v683
  %v719 = vpop.f32.mrf.mxu0
  %v720 = vadd.f32 %v670, %v719
  %v721 = vpop.f32.mrf.mxu0
  %v722 = vpop.f32.mrf.mxu0
  %v723 = vadd.f32 %v673, %v722
  %v724 = vpop.f32.mrf.mxu0
  %725 = vdwg.mxu0
  %s726 = scalar_lea.vmem %s0, 32
  %v727 = vld [vmem:[%s726] sm:$0xff]
  %v728 = vld [vmem:[%s726 + $0x8] sm:$0xff]
  %v731 = vunpack.c.l.b16 %v727
  %v732 = vunpack.c.h.b16 %v727
  %v733 = vunpack.c.l.b16 %v728
  %v734 = vunpack.c.h.b16 %v728
  %v735 = vpack.c.b16 %v733, %v731
  %v736 = vpack.c.b16 %v734, %v732
  %739 = vmatprep.subr.bf16.mxu0 0
  %740 = vmatpush1.bf16.msra.mxu0 %v149
  %741 = vmatprep.subr.bf16.mxu0 0
  %742 = vmatpush1.bf16.msra.mxu0 %v148
  %743 = vmatprep.subr.bf16.mxu0 0
  %744 = vmatpush1.bf16.msra.mxu0 %v147
  %745 = vmatprep.subr.bf16.mxu0 0
  %746 = vmatpush1.bf16.msra.mxu0 %v146
  %747 = vmatprep.subr.bf16.mxu0 0
  %748 = vmatpush1.bf16.msra.mxu0 %v145
  %749 = vmatprep.subr.bf16.mxu0 0
  %750 = vmatpush1.bf16.msra.mxu0 %v144
  %751 = vmatprep.subr.bf16.mxu0 0
  %752 = vmatpush1.bf16.msra.mxu0 %v143
  %753 = vmatprep.subr.bf16.mxu0 0
  %754 = vmatpush1.bf16.msra.mxu0 %v142
  %755 = vmatprep.subr.bf16.mxu0 0
  %756 = vmatpush2.bf16.msra.mxu0 %v157
  %757 = vmatprep.subr.bf16.mxu0 0
  %758 = vmatpush2.bf16.msra.mxu0 %v156
  %759 = vmatprep.subr.bf16.mxu0 0
  %760 = vmatpush2.bf16.msra.mxu0 %v155
  %761 = vmatprep.subr.bf16.mxu0 0
  %762 = vmatpush2.bf16.msra.mxu0 %v154
  %763 = vmatprep.subr.bf16.mxu0 0
  %764 = vmatpush2.bf16.msra.mxu0 %v153
  %765 = vmatprep.subr.bf16.mxu0 0
  %766 = vmatpush2.bf16.msra.mxu0 %v152
  %767 = vmatprep.subr.bf16.mxu0 0
  %768 = vmatpush2.bf16.msra.mxu0 %v151
  %769 = vmatprep.subr.bf16.mxu0 0
  %770 = vmatpush2.bf16.msra.mxu0 %v150
  %771 = vmatprep.mubr.bf16.mxu0 %v736
  %772 = vmatmul.mubr.bf16.gmra.mxu0 %v735
  %v773 = vpop.f32.mrf.mxu0
  %v774 = vadd.f32 0.0, %v773
  %v775 = vpop.f32.mrf.mxu0
  %v776 = vpop.f32.mrf.mxu0
  %v777 = vadd.f32 0.0, %v776
  %v778 = vpop.f32.mrf.mxu0
  %779 = vdwg.mxu0
  %s780 = scalar_lea.vmem %s0, 432
  %v781 = vld [vmem:[%s780] sm:$0xff]
  %v782 = vld [vmem:[%s780 + $0x8] sm:$0xff]
  %v785 = vunpack.c.l.b16 %v781
  %v786 = vunpack.c.h.b16 %v781
  %v787 = vunpack.c.l.b16 %v782
  %v788 = vunpack.c.h.b16 %v782
  %v789 = vpack.c.b16 %v787, %v785
  %v790 = vpack.c.b16 %v788, %v786
  %793 = vmatprep.subr.bf16.mxu0 0
  %794 = vmatpush1.bf16.msra.mxu0 %v149
  %795 = vmatprep.subr.bf16.mxu0 0
  %796 = vmatpush1.bf16.msra.mxu0 %v148
  %797 = vmatprep.subr.bf16.mxu0 0
  %798 = vmatpush1.bf16.msra.mxu0 %v147
  %799 = vmatprep.subr.bf16.mxu0 0
  %800 = vmatpush1.bf16.msra.mxu0 %v146
  %801 = vmatprep.subr.bf16.mxu0 0
  %802 = vmatpush1.bf16.msra.mxu0 %v145
  %803 = vmatprep.subr.bf16.mxu0 0
  %804 = vmatpush1.bf16.msra.mxu0 %v144
  %805 = vmatprep.subr.bf16.mxu0 0
  %806 = vmatpush1.bf16.msra.mxu0 %v143
  %807 = vmatprep.subr.bf16.mxu0 0
  %808 = vmatpush1.bf16.msra.mxu0 %v142
  %809 = vmatprep.subr.bf16.mxu0 0
  %810 = vmatpush2.bf16.msra.mxu0 %v157
  %811 = vmatprep.subr.bf16.mxu0 0
  %812 = vmatpush2.bf16.msra.mxu0 %v156
  %813 = vmatprep.subr.bf16.mxu0 0
  %814 = vmatpush2.bf16.msra.mxu0 %v155
  %815 = vmatprep.subr.bf16.mxu0 0
  %816 = vmatpush2.bf16.msra.mxu0 %v154
  %817 = vmatprep.subr.bf16.mxu0 0
  %818 = vmatpush2.bf16.msra.mxu0 %v153
  %819 = vmatprep.subr.bf16.mxu0 0
  %820 = vmatpush2.bf16.msra.mxu0 %v152
  %821 = vmatprep.subr.bf16.mxu0 0
  %822 = vmatpush2.bf16.msra.mxu0 %v151
  %823 = vmatprep.subr.bf16.mxu0 0
  %824 = vmatpush2.bf16.msra.mxu0 %v150
  %825 = vmatprep.mubr.bf16.mxu0 %v790
  %826 = vmatmul.mubr.bf16.gmra.mxu0 %v789
  %v827 = vpop.f32.mrf.mxu0
  %v828 = vadd.f32 0.0, %v827
  %v829 = vpop.f32.mrf.mxu0
  %v830 = vpop.f32.mrf.mxu0
  %v831 = vadd.f32 0.0, %v830
  %v832 = vpop.f32.mrf.mxu0
  %833 = vdwg.mxu0
  %v834 = vmax.f32 %v774, %v828
  %v835 = vmax.f32 %v777, %v831
  %s836 = scalar_lea.vmem %s0, 832
  %v837 = vld [vmem:[%s836] sm:$0xff]
  %v838 = vld [vmem:[%s836 + $0x8] sm:$0xff]
  %v841 = vunpack.c.l.b16 %v837
  %v842 = vunpack.c.h.b16 %v837
  %v843 = vunpack.c.l.b16 %v838
  %v844 = vunpack.c.h.b16 %v838
  %v845 = vpack.c.b16 %v843, %v841
  %v846 = vpack.c.b16 %v844, %v842
  %849 = vmatprep.subr.bf16.mxu0 0
  %850 = vmatpush1.bf16.msra.mxu0 %v149
  %851 = vmatprep.subr.bf16.mxu0 0
  %852 = vmatpush1.bf16.msra.mxu0 %v148
  %853 = vmatprep.subr.bf16.mxu0 0
  %854 = vmatpush1.bf16.msra.mxu0 %v147
  %855 = vmatprep.subr.bf16.mxu0 0
  %856 = vmatpush1.bf16.msra.mxu0 %v146
  %857 = vmatprep.subr.bf16.mxu0 0
  %858 = vmatpush1.bf16.msra.mxu0 %v145
  %859 = vmatprep.subr.bf16.mxu0 0
  %860 = vmatpush1.bf16.msra.mxu0 %v144
  %861 = vmatprep.subr.bf16.mxu0 0
  %862 = vmatpush1.bf16.msra.mxu0 %v143
  %863 = vmatprep.subr.bf16.mxu0 0
  %864 = vmatpush1.bf16.msra.mxu0 %v142
  %865 = vmatprep.subr.bf16.mxu0 0
  %866 = vmatpush2.bf16.msra.mxu0 %v157
  %867 = vmatprep.subr.bf16.mxu0 0
  %868 = vmatpush2.bf16.msra.mxu0 %v156
  %869 = vmatprep.subr.bf16.mxu0 0
  %870 = vmatpush2.bf16.msra.mxu0 %v155
  %871 = vmatprep.subr.bf16.mxu0 0
  %872 = vmatpush2.bf16.msra.mxu0 %v154
  %873 = vmatprep.subr.bf16.mxu0 0
  %874 = vmatpush2.bf16.msra.mxu0 %v153
  %875 = vmatprep.subr.bf16.mxu0 0
  %876 = vmatpush2.bf16.msra.mxu0 %v152
  %877 = vmatprep.subr.bf16.mxu0 0
  %878 = vmatpush2.bf16.msra.mxu0 %v151
  %879 = vmatprep.subr.bf16.mxu0 0
  %880 = vmatpush2.bf16.msra.mxu0 %v150
  %881 = vmatprep.mubr.bf16.mxu0 %v846
  %882 = vmatmul.mubr.bf16.gmra.mxu0 %v845
  %v883 = vpop.f32.mrf.mxu0
  %v884 = vadd.f32 0.0, %v883
  %v885 = vpop.f32.mrf.mxu0
  %v886 = vpop.f32.mrf.mxu0
  %v887 = vadd.f32 0.0, %v886
  %v888 = vpop.f32.mrf.mxu0
  %889 = vdwg.mxu0
  %v890 = vmax.f32 %v834, %v884
  %v891 = vmax.f32 %v835, %v887
  %s892 = scalar_lea.vmem %s0, 1232
  %v893 = vld [vmem:[%s892] sm:$0xff]
  %v894 = vld [vmem:[%s892 + $0x8] sm:$0xff]
  %v897 = vunpack.c.l.b16 %v893
  %v898 = vunpack.c.h.b16 %v893
  %v899 = vunpack.c.l.b16 %v894
  %v900 = vunpack.c.h.b16 %v894
  %v901 = vpack.c.b16 %v899, %v897
  %v902 = vpack.c.b16 %v900, %v898
  %905 = vmatprep.subr.bf16.mxu0 0
  %906 = vmatpush1.bf16.msra.mxu0 %v149
  %907 = vmatprep.subr.bf16.mxu0 0
  %908 = vmatpush1.bf16.msra.mxu0 %v148
  %909 = vmatprep.subr.bf16.mxu0 0
  %910 = vmatpush1.bf16.msra.mxu0 %v147
  %911 = vmatprep.subr.bf16.mxu0 0
  %912 = vmatpush1.bf16.msra.mxu0 %v146
  %913 = vmatprep.subr.bf16.mxu0 0
  %914 = vmatpush1.bf16.msra.mxu0 %v145
  %915 = vmatprep.subr.bf16.mxu0 0
  %916 = vmatpush1.bf16.msra.mxu0 %v144
  %917 = vmatprep.subr.bf16.mxu0 0
  %918 = vmatpush1.bf16.msra.mxu0 %v143
  %919 = vmatprep.subr.bf16.mxu0 0
  %920 = vmatpush1.bf16.msra.mxu0 %v142
  %921 = vmatprep.subr.bf16.mxu0 0
  %922 = vmatpush2.bf16.msra.mxu0 %v157
  %923 = vmatprep.subr.bf16.mxu0 0
  %924 = vmatpush2.bf16.msra.mxu0 %v156
  %925 = vmatprep.subr.bf16.mxu0 0
  %926 = vmatpush2.bf16.msra.mxu0 %v155
  %927 = vmatprep.subr.bf16.mxu0 0
  %928 = vmatpush2.bf16.msra.mxu0 %v154
  %929 = vmatprep.subr.bf16.mxu0 0
  %930 = vmatpush2.bf16.msra.mxu0 %v153
  %931 = vmatprep.subr.bf16.mxu0 0
  %932 = vmatpush2.bf16.msra.mxu0 %v152
  %933 = vmatprep.subr.bf16.mxu0 0
  %934 = vmatpush2.bf16.msra.mxu0 %v151
  %935 = vmatprep.subr.bf16.mxu0 0
  %936 = vmatpush2.bf16.msra.mxu0 %v150
  %937 = vmatprep.mubr.bf16.mxu0 %v902
  %938 = vmatmul.mubr.bf16.gmra.mxu0 %v901
  %v939 = vpop.f32.mrf.mxu0
  %v940 = vadd.f32 0.0, %v939
  %v941 = vpop.f32.mrf.mxu0
  %v942 = vpop.f32.mrf.mxu0
  %v943 = vadd.f32 0.0, %v942
  %v944 = vpop.f32.mrf.mxu0
  %945 = vdwg.mxu0
  %v946 = vmax.f32 %v890, %v940
  %v947 = vmax.f32 %v891, %v943
  %v948 = vadd.f32 %v946, %v387
  %v949 = vadd.f32 %v947, %v387
  %v950 = vmax.f32 %v948, 0.0
  %v951 = vmax.f32 %v949, 0.0
  %v952 = vpack.c.bf16 %v951, %v950
  %v953 = vld [vmem:[%s3 + $0x10] sm:$0xf]
  %v954 = vld [vmem:[%s3 + $0x14] sm:$0xf]
  %v957 = vunpack.c.l.b16 %v953
  %v958 = vunpack.c.l.b16 %v954
  %v959 = vpack.c.b16 %v958, %v957
  %v962 = vsel %vm631, %v952, 0
  %964 = vmatprep.subr.bf16.mxu0 0
  %965 = vmatpush1.bf16.msra.mxu0 0
  %966 = vmatprep.subr.bf16.mxu0 0
  %967 = vmatpush1.bf16.msra.mxu0 0
  %968 = vmatprep.subr.bf16.mxu0 0
  %969 = vmatpush1.bf16.msra.mxu0 0
  %970 = vmatprep.subr.bf16.mxu0 0
  %971 = vmatpush1.bf16.msra.mxu0 0
  %972 = vmatprep.subr.bf16.mxu0 0
  %973 = vmatpush1.bf16.msra.mxu0 0
  %974 = vmatprep.subr.bf16.mxu0 0
  %975 = vmatpush1.bf16.msra.mxu0 0
  %976 = vmatprep.subr.bf16.mxu0 0
  %977 = vmatpush1.bf16.msra.mxu0 0
  %978 = vmatprep.subr.bf16.mxu0 0
  %979 = vmatpush1.bf16.msra.mxu0 %v959
  %980 = vmatprep.subr.bf16.mxu0 0
  %981 = vmatpush2.bf16.msra.mxu0 0
  %982 = vmatprep.subr.bf16.mxu0 0
  %983 = vmatpush2.bf16.msra.mxu0 0
  %984 = vmatprep.subr.bf16.mxu0 0
  %985 = vmatpush2.bf16.msra.mxu0 0
  %986 = vmatprep.subr.bf16.mxu0 0
  %987 = vmatpush2.bf16.msra.mxu0 0
  %988 = vmatprep.subr.bf16.mxu0 0
  %989 = vmatpush2.bf16.msra.mxu0 0
  %990 = vmatprep.subr.bf16.mxu0 0
  %991 = vmatpush2.bf16.msra.mxu0 0
  %992 = vmatprep.subr.bf16.mxu0 0
  %993 = vmatpush2.bf16.msra.mxu0 0
  %994 = vmatprep.subr.bf16.mxu0 0
  %995 = vmatpush2.bf16.msra.mxu0 0
  %996 = vmatprep.mubr.bf16.mxu0 0
  %997 = vmatmul.mubr.bf16.gmra.mxu0 %v962
  %v998 = vpop.f32.mrf.mxu0
  %v999 = vadd.f32 0.0, %v998
  %v1000 = vpop.f32.mrf.mxu0
  %v1001 = vpop.f32.mrf.mxu0
  %v1002 = vadd.f32 0.0, %v1001
  %v1003 = vpop.f32.mrf.mxu0
  %1004 = vdwg.mxu0
  %v1005 = vadd.f32 %v720, %v999
  %v1006 = vadd.f32 %v723, %v1002
  %s1007 = scalar_lea.vmem %s0, 48
  %v1008 = vld [vmem:[%s1007] sm:$0xff]
  %v1009 = vld [vmem:[%s1007 + $0x8] sm:$0xff]
  %v1012 = vunpack.c.l.b16 %v1008
  %v1013 = vunpack.c.h.b16 %v1008
  %v1014 = vunpack.c.l.b16 %v1009
  %v1015 = vunpack.c.h.b16 %v1009
  %v1016 = vpack.c.b16 %v1014, %v1012
  %v1017 = vpack.c.b16 %v1015, %v1013
  %1020 = vmatprep.subr.bf16.mxu0 0
  %1021 = vmatpush1.bf16.msra.mxu0 %v149
  %1022 = vmatprep.subr.bf16.mxu0 0
  %1023 = vmatpush1.bf16.msra.mxu0 %v148
  %1024 = vmatprep.subr.bf16.mxu0 0
  %1025 = vmatpush1.bf16.msra.mxu0 %v147
  %1026 = vmatprep.subr.bf16.mxu0 0
  %1027 = vmatpush1.bf16.msra.mxu0 %v146
  %1028 = vmatprep.subr.bf16.mxu0 0
  %1029 = vmatpush1.bf16.msra.mxu0 %v145
  %1030 = vmatprep.subr.bf16.mxu0 0
  %1031 = vmatpush1.bf16.msra.mxu0 %v144
  %1032 = vmatprep.subr.bf16.mxu0 0
  %1033 = vmatpush1.bf16.msra.mxu0 %v143
  %1034 = vmatprep.subr.bf16.mxu0 0
  %1035 = vmatpush1.bf16.msra.mxu0 %v142
  %1036 = vmatprep.subr.bf16.mxu0 0
  %1037 = vmatpush2.bf16.msra.mxu0 %v157
  %1038 = vmatprep.subr.bf16.mxu0 0
  %1039 = vmatpush2.bf16.msra.mxu0 %v156
  %1040 = vmatprep.subr.bf16.mxu0 0
  %1041 = vmatpush2.bf16.msra.mxu0 %v155
  %1042 = vmatprep.subr.bf16.mxu0 0
  %1043 = vmatpush2.bf16.msra.mxu0 %v154
  %1044 = vmatprep.subr.bf16.mxu0 0
  %1045 = vmatpush2.bf16.msra.mxu0 %v153
  %1046 = vmatprep.subr.bf16.mxu0 0
  %1047 = vmatpush2.bf16.msra.mxu0 %v152
  %1048 = vmatprep.subr.bf16.mxu0 0
  %1049 = vmatpush2.bf16.msra.mxu0 %v151
  %1050 = vmatprep.subr.bf16.mxu0 0
  %1051 = vmatpush2.bf16.msra.mxu0 %v150
  %1052 = vmatprep.mubr.bf16.mxu0 %v1017
  %1053 = vmatmul.mubr.bf16.gmra.mxu0 %v1016
  %v1054 = vpop.f32.mrf.mxu0
  %v1055 = vadd.f32 0.0, %v1054
  %v1056 = vpop.f32.mrf.mxu0
  %v1057 = vpop.f32.mrf.mxu0
  %v1058 = vadd.f32 0.0, %v1057
  %v1059 = vpop.f32.mrf.mxu0
  %1060 = vdwg.mxu0
  %s1061 = scalar_lea.vmem %s0, 448
  %v1062 = vld [vmem:[%s1061] sm:$0xff]
  %v1063 = vld [vmem:[%s1061 + $0x8] sm:$0xff]
  %v1066 = vunpack.c.l.b16 %v1062
  %v1067 = vunpack.c.h.b16 %v1062
  %v1068 = vunpack.c.l.b16 %v1063
  %v1069 = vunpack.c.h.b16 %v1063
  %v1070 = vpack.c.b16 %v1068, %v1066
  %v1071 = vpack.c.b16 %v1069, %v1067
  %1074 = vmatprep.subr.bf16.mxu0 0
  %1075 = vmatpush1.bf16.msra.mxu0 %v149
  %1076 = vmatprep.subr.bf16.mxu0 0
  %1077 = vmatpush1.bf16.msra.mxu0 %v148
  %1078 = vmatprep.subr.bf16.mxu0 0
  %1079 = vmatpush1.bf16.msra.mxu0 %v147
  %1080 = vmatprep.subr.bf16.mxu0 0
  %1081 = vmatpush1.bf16.msra.mxu0 %v146
  %1082 = vmatprep.subr.bf16.mxu0 0
  %1083 = vmatpush1.bf16.msra.mxu0 %v145
  %1084 = vmatprep.subr.bf16.mxu0 0
  %1085 = vmatpush1.bf16.msra.mxu0 %v144
  %1086 = vmatprep.subr.bf16.mxu0 0
  %1087 = vmatpush1.bf16.msra.mxu0 %v143
  %1088 = vmatprep.subr.bf16.mxu0 0
  %1089 = vmatpush1.bf16.msra.mxu0 %v142
  %1090 = vmatprep.subr.bf16.mxu0 0
  %1091 = vmatpush2.bf16.msra.mxu0 %v157
  %1092 = vmatprep.subr.bf16.mxu0 0
  %1093 = vmatpush2.bf16.msra.mxu0 %v156
  %1094 = vmatprep.subr.bf16.mxu0 0
  %1095 = vmatpush2.bf16.msra.mxu0 %v155
  %1096 = vmatprep.subr.bf16.mxu0 0
  %1097 = vmatpush2.bf16.msra.mxu0 %v154
  %1098 = vmatprep.subr.bf16.mxu0 0
  %1099 = vmatpush2.bf16.msra.mxu0 %v153
  %1100 = vmatprep.subr.bf16.mxu0 0
  %1101 = vmatpush2.bf16.msra.mxu0 %v152
  %1102 = vmatprep.subr.bf16.mxu0 0
  %1103 = vmatpush2.bf16.msra.mxu0 %v151
  %1104 = vmatprep.subr.bf16.mxu0 0
  %1105 = vmatpush2.bf16.msra.mxu0 %v150
  %1106 = vmatprep.mubr.bf16.mxu0 %v1071
  %1107 = vmatmul.mubr.bf16.gmra.mxu0 %v1070
  %v1108 = vpop.f32.mrf.mxu0
  %v1109 = vadd.f32 0.0, %v1108
  %v1110 = vpop.f32.mrf.mxu0
  %v1111 = vpop.f32.mrf.mxu0
  %v1112 = vadd.f32 0.0, %v1111
  %v1113 = vpop.f32.mrf.mxu0
  %1114 = vdwg.mxu0
  %v1115 = vmax.f32 %v1055, %v1109
  %v1116 = vmax.f32 %v1058, %v1112
  %s1117 = scalar_lea.vmem %s0, 848
  %v1118 = vld [vmem:[%s1117] sm:$0xff]
  %v1119 = vld [vmem:[%s1117 + $0x8] sm:$0xff]
  %v1122 = vunpack.c.l.b16 %v1118
  %v1123 = vunpack.c.h.b16 %v1118
  %v1124 = vunpack.c.l.b16 %v1119
  %v1125 = vunpack.c.h.b16 %v1119
  %v1126 = vpack.c.b16 %v1124, %v1122
  %v1127 = vpack.c.b16 %v1125, %v1123
  %1130 = vmatprep.subr.bf16.mxu0 0
  %1131 = vmatpush1.bf16.msra.mxu0 %v149
  %1132 = vmatprep.subr.bf16.mxu0 0
  %1133 = vmatpush1.bf16.msra.mxu0 %v148
  %1134 = vmatprep.subr.bf16.mxu0 0
  %1135 = vmatpush1.bf16.msra.mxu0 %v147
  %1136 = vmatprep.subr.bf16.mxu0 0
  %1137 = vmatpush1.bf16.msra.mxu0 %v146
  %1138 = vmatprep.subr.bf16.mxu0 0
  %1139 = vmatpush1.bf16.msra.mxu0 %v145
  %1140 = vmatprep.subr.bf16.mxu0 0
  %1141 = vmatpush1.bf16.msra.mxu0 %v144
  %1142 = vmatprep.subr.bf16.mxu0 0
  %1143 = vmatpush1.bf16.msra.mxu0 %v143
  %1144 = vmatprep.subr.bf16.mxu0 0
  %1145 = vmatpush1.bf16.msra.mxu0 %v142
  %1146 = vmatprep.subr.bf16.mxu0 0
  %1147 = vmatpush2.bf16.msra.mxu0 %v157
  %1148 = vmatprep.subr.bf16.mxu0 0
  %1149 = vmatpush2.bf16.msra.mxu0 %v156
  %1150 = vmatprep.subr.bf16.mxu0 0
  %1151 = vmatpush2.bf16.msra.mxu0 %v155
  %1152 = vmatprep.subr.bf16.mxu0 0
  %1153 = vmatpush2.bf16.msra.mxu0 %v154
  %1154 = vmatprep.subr.bf16.mxu0 0
  %1155 = vmatpush2.bf16.msra.mxu0 %v153
  %1156 = vmatprep.subr.bf16.mxu0 0
  %1157 = vmatpush2.bf16.msra.mxu0 %v152
  %1158 = vmatprep.subr.bf16.mxu0 0
  %1159 = vmatpush2.bf16.msra.mxu0 %v151
  %1160 = vmatprep.subr.bf16.mxu0 0
  %1161 = vmatpush2.bf16.msra.mxu0 %v150
  %1162 = vmatprep.mubr.bf16.mxu0 %v1127
  %1163 = vmatmul.mubr.bf16.gmra.mxu0 %v1126
  %v1164 = vpop.f32.mrf.mxu0
  %v1165 = vadd.f32 0.0, %v1164
  %v1166 = vpop.f32.mrf.mxu0
  %v1167 = vpop.f32.mrf.mxu0
  %v1168 = vadd.f32 0.0, %v1167
  %v1169 = vpop.f32.mrf.mxu0
  %1170 = vdwg.mxu0
  %v1171 = vmax.f32 %v1115, %v1165
  %v1172 = vmax.f32 %v1116, %v1168
  %s1173 = scalar_lea.vmem %s0, 1248
  %v1174 = vld [vmem:[%s1173] sm:$0xff]
  %v1175 = vld [vmem:[%s1173 + $0x8] sm:$0xff]
  %v1178 = vunpack.c.l.b16 %v1174
  %v1179 = vunpack.c.h.b16 %v1174
  %v1180 = vunpack.c.l.b16 %v1175
  %v1181 = vunpack.c.h.b16 %v1175
  %v1182 = vpack.c.b16 %v1180, %v1178
  %v1183 = vpack.c.b16 %v1181, %v1179
  %1186 = vmatprep.subr.bf16.mxu0 0
  %1187 = vmatpush1.bf16.msra.mxu0 %v149
  %1188 = vmatprep.subr.bf16.mxu0 0
  %1189 = vmatpush1.bf16.msra.mxu0 %v148
  %1190 = vmatprep.subr.bf16.mxu0 0
  %1191 = vmatpush1.bf16.msra.mxu0 %v147
  %1192 = vmatprep.subr.bf16.mxu0 0
  %1193 = vmatpush1.bf16.msra.mxu0 %v146
  %1194 = vmatprep.subr.bf16.mxu0 0
  %1195 = vmatpush1.bf16.msra.mxu0 %v145
  %1196 = vmatprep.subr.bf16.mxu0 0
  %1197 = vmatpush1.bf16.msra.mxu0 %v144
  %1198 = vmatprep.subr.bf16.mxu0 0
  %1199 = vmatpush1.bf16.msra.mxu0 %v143
  %1200 = vmatprep.subr.bf16.mxu0 0
  %1201 = vmatpush1.bf16.msra.mxu0 %v142
  %1202 = vmatprep.subr.bf16.mxu0 0
  %1203 = vmatpush2.bf16.msra.mxu0 %v157
  %1204 = vmatprep.subr.bf16.mxu0 0
  %1205 = vmatpush2.bf16.msra.mxu0 %v156
  %1206 = vmatprep.subr.bf16.mxu0 0
  %1207 = vmatpush2.bf16.msra.mxu0 %v155
  %1208 = vmatprep.subr.bf16.mxu0 0
  %1209 = vmatpush2.bf16.msra.mxu0 %v154
  %1210 = vmatprep.subr.bf16.mxu0 0
  %1211 = vmatpush2.bf16.msra.mxu0 %v153
  %1212 = vmatprep.subr.bf16.mxu0 0
  %1213 = vmatpush2.bf16.msra.mxu0 %v152
  %1214 = vmatprep.subr.bf16.mxu0 0
  %1215 = vmatpush2.bf16.msra.mxu0 %v151
  %1216 = vmatprep.subr.bf16.mxu0 0
  %1217 = vmatpush2.bf16.msra.mxu0 %v150
  %1218 = vmatprep.mubr.bf16.mxu0 %v1183
  %1219 = vmatmul.mubr.bf16.gmra.mxu0 %v1182
  %v1220 = vpop.f32.mrf.mxu0
  %v1221 = vadd.f32 0.0, %v1220
  %v1222 = vpop.f32.mrf.mxu0
  %v1223 = vpop.f32.mrf.mxu0
  %v1224 = vadd.f32 0.0, %v1223
  %v1225 = vpop.f32.mrf.mxu0
  %1226 = vdwg.mxu0
  %v1227 = vmax.f32 %v1171, %v1221
  %v1228 = vmax.f32 %v1172, %v1224
  %v1229 = vadd.f32 %v1227, %v387
  %v1230 = vadd.f32 %v1228, %v387
  %v1231 = vmax.f32 %v1229, 0.0
  %v1232 = vmax.f32 %v1230, 0.0
  %v1233 = vpack.c.bf16 %v1232, %v1231
  %v1234 = vld [vmem:[%s3 + $0x18] sm:$0xf]
  %v1235 = vld [vmem:[%s3 + $0x1c] sm:$0xf]
  %v1238 = vunpack.c.l.b16 %v1234
  %v1239 = vunpack.c.l.b16 %v1235
  %v1240 = vpack.c.b16 %v1239, %v1238
  %v1243 = vsel %vm631, %v1233, 0
  %1245 = vmatprep.subr.bf16.mxu0 0
  %1246 = vmatpush1.bf16.msra.mxu0 0
  %1247 = vmatprep.subr.bf16.mxu0 0
  %1248 = vmatpush1.bf16.msra.mxu0 0
  %1249 = vmatprep.subr.bf16.mxu0 0
  %1250 = vmatpush1.bf16.msra.mxu0 0
  %1251 = vmatprep.subr.bf16.mxu0 0
  %1252 = vmatpush1.bf16.msra.mxu0 0
  %1253 = vmatprep.subr.bf16.mxu0 0
  %1254 = vmatpush1.bf16.msra.mxu0 0
  %1255 = vmatprep.subr.bf16.mxu0 0
  %1256 = vmatpush1.bf16.msra.mxu0 0
  %1257 = vmatprep.subr.bf16.mxu0 0
  %1258 = vmatpush1.bf16.msra.mxu0 0
  %1259 = vmatprep.subr.bf16.mxu0 0
  %1260 = vmatpush1.bf16.msra.mxu0 %v1240
  %1261 = vmatprep.subr.bf16.mxu0 0
  %1262 = vmatpush2.bf16.msra.mxu0 0
  %1263 = vmatprep.subr.bf16.mxu0 0
  %1264 = vmatpush2.bf16.msra.mxu0 0
  %1265 = vmatprep.subr.bf16.mxu0 0
  %1266 = vmatpush2.bf16.msra.mxu0 0
  %1267 = vmatprep.subr.bf16.mxu0 0
  %1268 = vmatpush2.bf16.msra.mxu0 0
  %1269 = vmatprep.subr.bf16.mxu0 0
  %1270 = vmatpush2.bf16.msra.mxu0 0
  %1271 = vmatprep.subr.bf16.mxu0 0
  %1272 = vmatpush2.bf16.msra.mxu0 0
  %1273 = vmatprep.subr.bf16.mxu0 0
  %1274 = vmatpush2.bf16.msra.mxu0 0
  %1275 = vmatprep.subr.bf16.mxu0 0
  %1276 = vmatpush2.bf16.msra.mxu0 0
  %1277 = vmatprep.mubr.bf16.mxu0 0
  %1278 = vmatmul.mubr.bf16.gmra.mxu0 %v1243
  %v1279 = vpop.f32.mrf.mxu0
  %v1280 = vadd.f32 0.0, %v1279
  %v1281 = vpop.f32.mrf.mxu0
  %v1282 = vpop.f32.mrf.mxu0
  %v1283 = vadd.f32 0.0, %v1282
  %v1284 = vpop.f32.mrf.mxu0
  %1285 = vdwg.mxu0
  %v1286 = vadd.f32 %v1005, %v1280
  %v1287 = vadd.f32 %v1006, %v1283
  %s1288 = scalar_lea.vmem %s0, 64
  %v1289 = vld [vmem:[%s1288] sm:$0xff]
  %v1290 = vld [vmem:[%s1288 + $0x8] sm:$0xff]
  %v1293 = vunpack.c.l.b16 %v1289
  %v1294 = vunpack.c.h.b16 %v1289
  %v1295 = vunpack.c.l.b16 %v1290
  %v1296 = vunpack.c.h.b16 %v1290
  %v1297 = vpack.c.b16 %v1295, %v1293
  %v1298 = vpack.c.b16 %v1296, %v1294
  %1301 = vmatprep.subr.bf16.mxu0 0
  %1302 = vmatpush1.bf16.msra.mxu0 %v149
  %1303 = vmatprep.subr.bf16.mxu0 0
  %1304 = vmatpush1.bf16.msra.mxu0 %v148
  %1305 = vmatprep.subr.bf16.mxu0 0
  %1306 = vmatpush1.bf16.msra.mxu0 %v147
  %1307 = vmatprep.subr.bf16.mxu0 0
  %1308 = vmatpush1.bf16.msra.mxu0 %v146
  %1309 = vmatprep.subr.bf16.mxu0 0
  %1310 = vmatpush1.bf16.msra.mxu0 %v145
  %1311 = vmatprep.subr.bf16.mxu0 0
  %1312 = vmatpush1.bf16.msra.mxu0 %v144
  %1313 = vmatprep.subr.bf16.mxu0 0
  %1314 = vmatpush1.bf16.msra.mxu0 %v143
  %1315 = vmatprep.subr.bf16.mxu0 0
  %1316 = vmatpush1.bf16.msra.mxu0 %v142
  %1317 = vmatprep.subr.bf16.mxu0 0
  %1318 = vmatpush2.bf16.msra.mxu0 %v157
  %1319 = vmatprep.subr.bf16.mxu0 0
  %1320 = vmatpush2.bf16.msra.mxu0 %v156
  %1321 = vmatprep.subr.bf16.mxu0 0
  %1322 = vmatpush2.bf16.msra.mxu0 %v155
  %1323 = vmatprep.subr.bf16.mxu0 0
  %1324 = vmatpush2.bf16.msra.mxu0 %v154
  %1325 = vmatprep.subr.bf16.mxu0 0
  %1326 = vmatpush2.bf16.msra.mxu0 %v153
  %1327 = vmatprep.subr.bf16.mxu0 0
  %1328 = vmatpush2.bf16.msra.mxu0 %v152
  %1329 = vmatprep.subr.bf16.mxu0 0
  %1330 = vmatpush2.bf16.msra.mxu0 %v151
  %1331 = vmatprep.subr.bf16.mxu0 0
  %1332 = vmatpush2.bf16.msra.mxu0 %v150
  %1333 = vmatprep.mubr.bf16.mxu0 %v1298
  %1334 = vmatmul.mubr.bf16.gmra.mxu0 %v1297
  %v1335 = vpop.f32.mrf.mxu0
  %v1336 = vadd.f32 0.0, %v1335
  %v1337 = vpop.f32.mrf.mxu0
  %v1338 = vpop.f32.mrf.mxu0
  %v1339 = vadd.f32 0.0, %v1338
  %v1340 = vpop.f32.mrf.mxu0
  %1341 = vdwg.mxu0
  %s1342 = scalar_lea.vmem %s0, 464
  %v1343 = vld [vmem:[%s1342] sm:$0xff]
  %v1344 = vld [vmem:[%s1342 + $0x8] sm:$0xff]
  %v1347 = vunpack.c.l.b16 %v1343
  %v1348 = vunpack.c.h.b16 %v1343
  %v1349 = vunpack.c.l.b16 %v1344
  %v1350 = vunpack.c.h.b16 %v1344
  %v1351 = vpack.c.b16 %v1349, %v1347
  %v1352 = vpack.c.b16 %v1350, %v1348
  %1355 = vmatprep.subr.bf16.mxu0 0
  %1356 = vmatpush1.bf16.msra.mxu0 %v149
  %1357 = vmatprep.subr.bf16.mxu0 0
  %1358 = vmatpush1.bf16.msra.mxu0 %v148
  %1359 = vmatprep.subr.bf16.mxu0 0
  %1360 = vmatpush1.bf16.msra.mxu0 %v147
  %1361 = vmatprep.subr.bf16.mxu0 0
  %1362 = vmatpush1.bf16.msra.mxu0 %v146
  %1363 = vmatprep.subr.bf16.mxu0 0
  %1364 = vmatpush1.bf16.msra.mxu0 %v145
  %1365 = vmatprep.subr.bf16.mxu0 0
  %1366 = vmatpush1.bf16.msra.mxu0 %v144
  %1367 = vmatprep.subr.bf16.mxu0 0
  %1368 = vmatpush1.bf16.msra.mxu0 %v143
  %1369 = vmatprep.subr.bf16.mxu0 0
  %1370 = vmatpush1.bf16.msra.mxu0 %v142
  %1371 = vmatprep.subr.bf16.mxu0 0
  %1372 = vmatpush2.bf16.msra.mxu0 %v157
  %1373 = vmatprep.subr.bf16.mxu0 0
  %1374 = vmatpush2.bf16.msra.mxu0 %v156
  %1375 = vmatprep.subr.bf16.mxu0 0
  %1376 = vmatpush2.bf16.msra.mxu0 %v155
  %1377 = vmatprep.subr.bf16.mxu0 0
  %1378 = vmatpush2.bf16.msra.mxu0 %v154
  %1379 = vmatprep.subr.bf16.mxu0 0
  %1380 = vmatpush2.bf16.msra.mxu0 %v153
  %1381 = vmatprep.subr.bf16.mxu0 0
  %1382 = vmatpush2.bf16.msra.mxu0 %v152
  %1383 = vmatprep.subr.bf16.mxu0 0
  %1384 = vmatpush2.bf16.msra.mxu0 %v151
  %1385 = vmatprep.subr.bf16.mxu0 0
  %1386 = vmatpush2.bf16.msra.mxu0 %v150
  %1387 = vmatprep.mubr.bf16.mxu0 %v1352
  %1388 = vmatmul.mubr.bf16.gmra.mxu0 %v1351
  %v1389 = vpop.f32.mrf.mxu0
  %v1390 = vadd.f32 0.0, %v1389
  %v1391 = vpop.f32.mrf.mxu0
  %v1392 = vpop.f32.mrf.mxu0
  %v1393 = vadd.f32 0.0, %v1392
  %v1394 = vpop.f32.mrf.mxu0
  %1395 = vdwg.mxu0
  %v1396 = vmax.f32 %v1336, %v1390
  %v1397 = vmax.f32 %v1339, %v1393
  %s1398 = scalar_lea.vmem %s0, 864
  %v1399 = vld [vmem:[%s1398] sm:$0xff]
  %v1400 = vld [vmem:[%s1398 + $0x8] sm:$0xff]
  %v1403 = vunpack.c.l.b16 %v1399
  %v1404 = vunpack.c.h.b16 %v1399
  %v1405 = vunpack.c.l.b16 %v1400
  %v1406 = vunpack.c.h.b16 %v1400
  %v1407 = vpack.c.b16 %v1405, %v1403
  %v1408 = vpack.c.b16 %v1406, %v1404
  %1411 = vmatprep.subr.bf16.mxu0 0
  %1412 = vmatpush1.bf16.msra.mxu0 %v149
  %1413 = vmatprep.subr.bf16.mxu0 0
  %1414 = vmatpush1.bf16.msra.mxu0 %v148
  %1415 = vmatprep.subr.bf16.mxu0 0
  %1416 = vmatpush1.bf16.msra.mxu0 %v147
  %1417 = vmatprep.subr.bf16.mxu0 0
  %1418 = vmatpush1.bf16.msra.mxu0 %v146
  %1419 = vmatprep.subr.bf16.mxu0 0
  %1420 = vmatpush1.bf16.msra.mxu0 %v145
  %1421 = vmatprep.subr.bf16.mxu0 0
  %1422 = vmatpush1.bf16.msra.mxu0 %v144
  %1423 = vmatprep.subr.bf16.mxu0 0
  %1424 = vmatpush1.bf16.msra.mxu0 %v143
  %1425 = vmatprep.subr.bf16.mxu0 0
  %1426 = vmatpush1.bf16.msra.mxu0 %v142
  %1427 = vmatprep.subr.bf16.mxu0 0
  %1428 = vmatpush2.bf16.msra.mxu0 %v157
  %1429 = vmatprep.subr.bf16.mxu0 0
  %1430 = vmatpush2.bf16.msra.mxu0 %v156
  %1431 = vmatprep.subr.bf16.mxu0 0
  %1432 = vmatpush2.bf16.msra.mxu0 %v155
  %1433 = vmatprep.subr.bf16.mxu0 0
  %1434 = vmatpush2.bf16.msra.mxu0 %v154
  %1435 = vmatprep.subr.bf16.mxu0 0
  %1436 = vmatpush2.bf16.msra.mxu0 %v153
  %1437 = vmatprep.subr.bf16.mxu0 0
  %1438 = vmatpush2.bf16.msra.mxu0 %v152
  %1439 = vmatprep.subr.bf16.mxu0 0
  %1440 = vmatpush2.bf16.msra.mxu0 %v151
  %1441 = vmatprep.subr.bf16.mxu0 0
  %1442 = vmatpush2.bf16.msra.mxu0 %v150
  %1443 = vmatprep.mubr.bf16.mxu0 %v1408
  %1444 = vmatmul.mubr.bf16.gmra.mxu0 %v1407
  %v1445 = vpop.f32.mrf.mxu0
  %v1446 = vadd.f32 0.0, %v1445
  %v1447 = vpop.f32.mrf.mxu0
  %v1448 = vpop.f32.mrf.mxu0
  %v1449 = vadd.f32 0.0, %v1448
  %v1450 = vpop.f32.mrf.mxu0
  %1451 = vdwg.mxu0
  %v1452 = vmax.f32 %v1396, %v1446
  %v1453 = vmax.f32 %v1397, %v1449
  %s1454 = scalar_lea.vmem %s0, 1264
  %v1455 = vld [vmem:[%s1454] sm:$0xff]
  %v1456 = vld [vmem:[%s1454 + $0x8] sm:$0xff]
  %v1459 = vunpack.c.l.b16 %v1455
  %v1460 = vunpack.c.h.b16 %v1455
  %v1461 = vunpack.c.l.b16 %v1456
  %v1462 = vunpack.c.h.b16 %v1456
  %v1463 = vpack.c.b16 %v1461, %v1459
  %v1464 = vpack.c.b16 %v1462, %v1460
  %1467 = vmatprep.subr.bf16.mxu0 0
  %1468 = vmatpush1.bf16.msra.mxu0 %v149
  %1469 = vmatprep.subr.bf16.mxu0 0
  %1470 = vmatpush1.bf16.msra.mxu0 %v148
  %1471 = vmatprep.subr.bf16.mxu0 0
  %1472 = vmatpush1.bf16.msra.mxu0 %v147
  %1473 = vmatprep.subr.bf16.mxu0 0
  %1474 = vmatpush1.bf16.msra.mxu0 %v146
  %1475 = vmatprep.subr.bf16.mxu0 0
  %1476 = vmatpush1.bf16.msra.mxu0 %v145
  %1477 = vmatprep.subr.bf16.mxu0 0
  %1478 = vmatpush1.bf16.msra.mxu0 %v144
  %1479 = vmatprep.subr.bf16.mxu0 0
  %1480 = vmatpush1.bf16.msra.mxu0 %v143
  %1481 = vmatprep.subr.bf16.mxu0 0
  %1482 = vmatpush1.bf16.msra.mxu0 %v142
  %1483 = vmatprep.subr.bf16.mxu0 0
  %1484 = vmatpush2.bf16.msra.mxu0 %v157
  %1485 = vmatprep.subr.bf16.mxu0 0
  %1486 = vmatpush2.bf16.msra.mxu0 %v156
  %1487 = vmatprep.subr.bf16.mxu0 0
  %1488 = vmatpush2.bf16.msra.mxu0 %v155
  %1489 = vmatprep.subr.bf16.mxu0 0
  %1490 = vmatpush2.bf16.msra.mxu0 %v154
  %1491 = vmatprep.subr.bf16.mxu0 0
  %1492 = vmatpush2.bf16.msra.mxu0 %v153
  %1493 = vmatprep.subr.bf16.mxu0 0
  %1494 = vmatpush2.bf16.msra.mxu0 %v152
  %1495 = vmatprep.subr.bf16.mxu0 0
  %1496 = vmatpush2.bf16.msra.mxu0 %v151
  %1497 = vmatprep.subr.bf16.mxu0 0
  %1498 = vmatpush2.bf16.msra.mxu0 %v150
  %1499 = vmatprep.mubr.bf16.mxu0 %v1464
  %1500 = vmatmul.mubr.bf16.gmra.mxu0 %v1463
  %v1501 = vpop.f32.mrf.mxu0
  %v1502 = vadd.f32 0.0, %v1501
  %v1503 = vpop.f32.mrf.mxu0
  %v1504 = vpop.f32.mrf.mxu0
  %v1505 = vadd.f32 0.0, %v1504
  %v1506 = vpop.f32.mrf.mxu0
  %1507 = vdwg.mxu0
  %v1508 = vmax.f32 %v1452, %v1502
  %v1509 = vmax.f32 %v1453, %v1505
  %v1510 = vadd.f32 %v1508, %v387
  %v1511 = vadd.f32 %v1509, %v387
  %v1512 = vmax.f32 %v1510, 0.0
  %v1513 = vmax.f32 %v1511, 0.0
  %v1514 = vpack.c.bf16 %v1513, %v1512
  %v1515 = vld [vmem:[%s3 + $0x20] sm:$0xf]
  %v1516 = vld [vmem:[%s3 + $0x24] sm:$0xf]
  %v1519 = vunpack.c.l.b16 %v1515
  %v1520 = vunpack.c.l.b16 %v1516
  %v1521 = vpack.c.b16 %v1520, %v1519
  %v1524 = vsel %vm631, %v1514, 0
  %1526 = vmatprep.subr.bf16.mxu0 0
  %1527 = vmatpush1.bf16.msra.mxu0 0
  %1528 = vmatprep.subr.bf16.mxu0 0
  %1529 = vmatpush1.bf16.msra.mxu0 0
  %1530 = vmatprep.subr.bf16.mxu0 0
  %1531 = vmatpush1.bf16.msra.mxu0 0
  %1532 = vmatprep.subr.bf16.mxu0 0
  %1533 = vmatpush1.bf16.msra.mxu0 0
  %1534 = vmatprep.subr.bf16.mxu0 0
  %1535 = vmatpush1.bf16.msra.mxu0 0
  %1536 = vmatprep.subr.bf16.mxu0 0
  %1537 = vmatpush1.bf16.msra.mxu0 0
  %1538 = vmatprep.subr.bf16.mxu0 0
  %1539 = vmatpush1.bf16.msra.mxu0 0
  %1540 = vmatprep.subr.bf16.mxu0 0
  %1541 = vmatpush1.bf16.msra.mxu0 %v1521
  %1542 = vmatprep.subr.bf16.mxu0 0
  %1543 = vmatpush2.bf16.msra.mxu0 0
  %1544 = vmatprep.subr.bf16.mxu0 0
  %1545 = vmatpush2.bf16.msra.mxu0 0
  %1546 = vmatprep.subr.bf16.mxu0 0
  %1547 = vmatpush2.bf16.msra.mxu0 0
  %1548 = vmatprep.subr.bf16.mxu0 0
  %1549 = vmatpush2.bf16.msra.mxu0 0
  %1550 = vmatprep.subr.bf16.mxu0 0
  %1551 = vmatpush2.bf16.msra.mxu0 0
  %1552 = vmatprep.subr.bf16.mxu0 0
  %1553 = vmatpush2.bf16.msra.mxu0 0
  %1554 = vmatprep.subr.bf16.mxu0 0
  %1555 = vmatpush2.bf16.msra.mxu0 0
  %1556 = vmatprep.subr.bf16.mxu0 0
  %1557 = vmatpush2.bf16.msra.mxu0 0
  %1558 = vmatprep.mubr.bf16.mxu0 0
  %1559 = vmatmul.mubr.bf16.gmra.mxu0 %v1524
  %v1560 = vpop.f32.mrf.mxu0
  %v1561 = vadd.f32 0.0, %v1560
  %v1562 = vpop.f32.mrf.mxu0
  %v1563 = vpop.f32.mrf.mxu0
  %v1564 = vadd.f32 0.0, %v1563
  %v1565 = vpop.f32.mrf.mxu0
  %1566 = vdwg.mxu0
  %v1567 = vadd.f32 %v1286, %v1561
  %v1568 = vadd.f32 %v1287, %v1564
  %s1569 = scalar_lea.vmem %s0, 80
  %v1570 = vld [vmem:[%s1569] sm:$0xff]
  %v1571 = vld [vmem:[%s1569 + $0x8] sm:$0xff]
  %v1574 = vunpack.c.l.b16 %v1570
  %v1575 = vunpack.c.h.b16 %v1570
  %v1576 = vunpack.c.l.b16 %v1571
  %v1577 = vunpack.c.h.b16 %v1571
  %v1578 = vpack.c.b16 %v1576, %v1574
  %v1579 = vpack.c.b16 %v1577, %v1575
  %1582 = vmatprep.subr.bf16.mxu0 0
  %1583 = vmatpush1.bf16.msra.mxu0 %v149
  %1584 = vmatprep.subr.bf16.mxu0 0
  %1585 = vmatpush1.bf16.msra.mxu0 %v148
  %1586 = vmatprep.subr.bf16.mxu0 0
  %1587 = vmatpush1.bf16.msra.mxu0 %v147
  %1588 = vmatprep.subr.bf16.mxu0 0
  %1589 = vmatpush1.bf16.msra.mxu0 %v146
  %1590 = vmatprep.subr.bf16.mxu0 0
  %1591 = vmatpush1.bf16.msra.mxu0 %v145
  %1592 = vmatprep.subr.bf16.mxu0 0
  %1593 = vmatpush1.bf16.msra.mxu0 %v144
  %1594 = vmatprep.subr.bf16.mxu0 0
  %1595 = vmatpush1.bf16.msra.mxu0 %v143
  %1596 = vmatprep.subr.bf16.mxu0 0
  %1597 = vmatpush1.bf16.msra.mxu0 %v142
  %1598 = vmatprep.subr.bf16.mxu0 0
  %1599 = vmatpush2.bf16.msra.mxu0 %v157
  %1600 = vmatprep.subr.bf16.mxu0 0
  %1601 = vmatpush2.bf16.msra.mxu0 %v156
  %1602 = vmatprep.subr.bf16.mxu0 0
  %1603 = vmatpush2.bf16.msra.mxu0 %v155
  %1604 = vmatprep.subr.bf16.mxu0 0
  %1605 = vmatpush2.bf16.msra.mxu0 %v154
  %1606 = vmatprep.subr.bf16.mxu0 0
  %1607 = vmatpush2.bf16.msra.mxu0 %v153
  %1608 = vmatprep.subr.bf16.mxu0 0
  %1609 = vmatpush2.bf16.msra.mxu0 %v152
  %1610 = vmatprep.subr.bf16.mxu0 0
  %1611 = vmatpush2.bf16.msra.mxu0 %v151
  %1612 = vmatprep.subr.bf16.mxu0 0
  %1613 = vmatpush2.bf16.msra.mxu0 %v150
  %1614 = vmatprep.mubr.bf16.mxu0 %v1579
  %1615 = vmatmul.mubr.bf16.gmra.mxu0 %v1578
  %v1616 = vpop.f32.mrf.mxu0
  %v1617 = vadd.f32 0.0, %v1616
  %v1618 = vpop.f32.mrf.mxu0
  %v1619 = vpop.f32.mrf.mxu0
  %v1620 = vadd.f32 0.0, %v1619
  %v1621 = vpop.f32.mrf.mxu0
  %1622 = vdwg.mxu0
  %s1623 = scalar_lea.vmem %s0, 480
  %v1624 = vld [vmem:[%s1623] sm:$0xff]
  %v1625 = vld [vmem:[%s1623 + $0x8] sm:$0xff]
  %v1628 = vunpack.c.l.b16 %v1624
  %v1629 = vunpack.c.h.b16 %v1624
  %v1630 = vunpack.c.l.b16 %v1625
  %v1631 = vunpack.c.h.b16 %v1625
  %v1632 = vpack.c.b16 %v1630, %v1628
  %v1633 = vpack.c.b16 %v1631, %v1629
  %1636 = vmatprep.subr.bf16.mxu0 0
  %1637 = vmatpush1.bf16.msra.mxu0 %v149
  %1638 = vmatprep.subr.bf16.mxu0 0
  %1639 = vmatpush1.bf16.msra.mxu0 %v148
  %1640 = vmatprep.subr.bf16.mxu0 0
  %1641 = vmatpush1.bf16.msra.mxu0 %v147
  %1642 = vmatprep.subr.bf16.mxu0 0
  %1643 = vmatpush1.bf16.msra.mxu0 %v146
  %1644 = vmatprep.subr.bf16.mxu0 0
  %1645 = vmatpush1.bf16.msra.mxu0 %v145
  %1646 = vmatprep.subr.bf16.mxu0 0
  %1647 = vmatpush1.bf16.msra.mxu0 %v144
  %1648 = vmatprep.subr.bf16.mxu0 0
  %1649 = vmatpush1.bf16.msra.mxu0 %v143
  %1650 = vmatprep.subr.bf16.mxu0 0
  %1651 = vmatpush1.bf16.msra.mxu0 %v142
  %1652 = vmatprep.subr.bf16.mxu0 0
  %1653 = vmatpush2.bf16.msra.mxu0 %v157
  %1654 = vmatprep.subr.bf16.mxu0 0
  %1655 = vmatpush2.bf16.msra.mxu0 %v156
  %1656 = vmatprep.subr.bf16.mxu0 0
  %1657 = vmatpush2.bf16.msra.mxu0 %v155
  %1658 = vmatprep.subr.bf16.mxu0 0
  %1659 = vmatpush2.bf16.msra.mxu0 %v154
  %1660 = vmatprep.subr.bf16.mxu0 0
  %1661 = vmatpush2.bf16.msra.mxu0 %v153
  %1662 = vmatprep.subr.bf16.mxu0 0
  %1663 = vmatpush2.bf16.msra.mxu0 %v152
  %1664 = vmatprep.subr.bf16.mxu0 0
  %1665 = vmatpush2.bf16.msra.mxu0 %v151
  %1666 = vmatprep.subr.bf16.mxu0 0
  %1667 = vmatpush2.bf16.msra.mxu0 %v150
  %1668 = vmatprep.mubr.bf16.mxu0 %v1633
  %1669 = vmatmul.mubr.bf16.gmra.mxu0 %v1632
  %v1670 = vpop.f32.mrf.mxu0
  %v1671 = vadd.f32 0.0, %v1670
  %v1672 = vpop.f32.mrf.mxu0
  %v1673 = vpop.f32.mrf.mxu0
  %v1674 = vadd.f32 0.0, %v1673
  %v1675 = vpop.f32.mrf.mxu0
  %1676 = vdwg.mxu0
  %v1677 = vmax.f32 %v1617, %v1671
  %v1678 = vmax.f32 %v1620, %v1674
  %s1679 = scalar_lea.vmem %s0, 880
  %v1680 = vld [vmem:[%s1679] sm:$0xff]
  %v1681 = vld [vmem:[%s1679 + $0x8] sm:$0xff]
  %v1684 = vunpack.c.l.b16 %v1680
  %v1685 = vunpack.c.h.b16 %v1680
  %v1686 = vunpack.c.l.b16 %v1681
  %v1687 = vunpack.c.h.b16 %v1681
  %v1688 = vpack.c.b16 %v1686, %v1684
  %v1689 = vpack.c.b16 %v1687, %v1685
  %1692 = vmatprep.subr.bf16.mxu0 0
  %1693 = vmatpush1.bf16.msra.mxu0 %v149
  %1694 = vmatprep.subr.bf16.mxu0 0
  %1695 = vmatpush1.bf16.msra.mxu0 %v148
  %1696 = vmatprep.subr.bf16.mxu0 0
  %1697 = vmatpush1.bf16.msra.mxu0 %v147
  %1698 = vmatprep.subr.bf16.mxu0 0
  %1699 = vmatpush1.bf16.msra.mxu0 %v146
  %1700 = vmatprep.subr.bf16.mxu0 0
  %1701 = vmatpush1.bf16.msra.mxu0 %v145
  %1702 = vmatprep.subr.bf16.mxu0 0
  %1703 = vmatpush1.bf16.msra.mxu0 %v144
  %1704 = vmatprep.subr.bf16.mxu0 0
  %1705 = vmatpush1.bf16.msra.mxu0 %v143
  %1706 = vmatprep.subr.bf16.mxu0 0
  %1707 = vmatpush1.bf16.msra.mxu0 %v142
  %1708 = vmatprep.subr.bf16.mxu0 0
  %1709 = vmatpush2.bf16.msra.mxu0 %v157
  %1710 = vmatprep.subr.bf16.mxu0 0
  %1711 = vmatpush2.bf16.msra.mxu0 %v156
  %1712 = vmatprep.subr.bf16.mxu0 0
  %1713 = vmatpush2.bf16.msra.mxu0 %v155
  %1714 = vmatprep.subr.bf16.mxu0 0
  %1715 = vmatpush2.bf16.msra.mxu0 %v154
  %1716 = vmatprep.subr.bf16.mxu0 0
  %1717 = vmatpush2.bf16.msra.mxu0 %v153
  %1718 = vmatprep.subr.bf16.mxu0 0
  %1719 = vmatpush2.bf16.msra.mxu0 %v152
  %1720 = vmatprep.subr.bf16.mxu0 0
  %1721 = vmatpush2.bf16.msra.mxu0 %v151
  %1722 = vmatprep.subr.bf16.mxu0 0
  %1723 = vmatpush2.bf16.msra.mxu0 %v150
  %1724 = vmatprep.mubr.bf16.mxu0 %v1689
  %1725 = vmatmul.mubr.bf16.gmra.mxu0 %v1688
  %v1726 = vpop.f32.mrf.mxu0
  %v1727 = vadd.f32 0.0, %v1726
  %v1728 = vpop.f32.mrf.mxu0
  %v1729 = vpop.f32.mrf.mxu0
  %v1730 = vadd.f32 0.0, %v1729
  %v1731 = vpop.f32.mrf.mxu0
  %1732 = vdwg.mxu0
  %v1733 = vmax.f32 %v1677, %v1727
  %v1734 = vmax.f32 %v1678, %v1730
  %s1735 = scalar_lea.vmem %s0, 1280
  %v1736 = vld [vmem:[%s1735] sm:$0xff]
  %v1737 = vld [vmem:[%s1735 + $0x8] sm:$0xff]
  %v1740 = vunpack.c.l.b16 %v1736
  %v1741 = vunpack.c.h.b16 %v1736
  %v1742 = vunpack.c.l.b16 %v1737
  %v1743 = vunpack.c.h.b16 %v1737
  %v1744 = vpack.c.b16 %v1742, %v1740
  %v1745 = vpack.c.b16 %v1743, %v1741
  %1748 = vmatprep.subr.bf16.mxu0 0
  %1749 = vmatpush1.bf16.msra.mxu0 %v149
  %1750 = vmatprep.subr.bf16.mxu0 0
  %1751 = vmatpush1.bf16.msra.mxu0 %v148
  %1752 = vmatprep.subr.bf16.mxu0 0
  %1753 = vmatpush1.bf16.msra.mxu0 %v147
  %1754 = vmatprep.subr.bf16.mxu0 0
  %1755 = vmatpush1.bf16.msra.mxu0 %v146
  %1756 = vmatprep.subr.bf16.mxu0 0
  %1757 = vmatpush1.bf16.msra.mxu0 %v145
  %1758 = vmatprep.subr.bf16.mxu0 0
  %1759 = vmatpush1.bf16.msra.mxu0 %v144
  %1760 = vmatprep.subr.bf16.mxu0 0
  %1761 = vmatpush1.bf16.msra.mxu0 %v143
  %1762 = vmatprep.subr.bf16.mxu0 0
  %1763 = vmatpush1.bf16.msra.mxu0 %v142
  %1764 = vmatprep.subr.bf16.mxu0 0
  %1765 = vmatpush2.bf16.msra.mxu0 %v157
  %1766 = vmatprep.subr.bf16.mxu0 0
  %1767 = vmatpush2.bf16.msra.mxu0 %v156
  %1768 = vmatprep.subr.bf16.mxu0 0
  %1769 = vmatpush2.bf16.msra.mxu0 %v155
  %1770 = vmatprep.subr.bf16.mxu0 0
  %1771 = vmatpush2.bf16.msra.mxu0 %v154
  %1772 = vmatprep.subr.bf16.mxu0 0
  %1773 = vmatpush2.bf16.msra.mxu0 %v153
  %1774 = vmatprep.subr.bf16.mxu0 0
  %1775 = vmatpush2.bf16.msra.mxu0 %v152
  %1776 = vmatprep.subr.bf16.mxu0 0
  %1777 = vmatpush2.bf16.msra.mxu0 %v151
  %1778 = vmatprep.subr.bf16.mxu0 0
  %1779 = vmatpush2.bf16.msra.mxu0 %v150
  %1780 = vmatprep.mubr.bf16.mxu0 %v1745
  %1781 = vmatmul.mubr.bf16.gmra.mxu0 %v1744
  %v1782 = vpop.f32.mrf.mxu0
  %v1783 = vadd.f32 0.0, %v1782
  %v1784 = vpop.f32.mrf.mxu0
  %v1785 = vpop.f32.mrf.mxu0
  %v1786 = vadd.f32 0.0, %v1785
  %v1787 = vpop.f32.mrf.mxu0
  %1788 = vdwg.mxu0
  %v1789 = vmax.f32 %v1733, %v1783
  %v1790 = vmax.f32 %v1734, %v1786
  %v1791 = vadd.f32 %v1789, %v387
  %v1792 = vadd.f32 %v1790, %v387
  %v1793 = vmax.f32 %v1791, 0.0
  %v1794 = vmax.f32 %v1792, 0.0
  %v1795 = vpack.c.bf16 %v1794, %v1793
  %v1796 = vld [vmem:[%s3 + $0x28] sm:$0xf]
  %v1797 = vld [vmem:[%s3 + $0x2c] sm:$0xf]
  %v1800 = vunpack.c.l.b16 %v1796
  %v1801 = vunpack.c.l.b16 %v1797
  %v1802 = vpack.c.b16 %v1801, %v1800
  %v1805 = vsel %vm631, %v1795, 0
  %1807 = vmatprep.subr.bf16.mxu0 0
  %1808 = vmatpush1.bf16.msra.mxu0 0
  %1809 = vmatprep.subr.bf16.mxu0 0
  %1810 = vmatpush1.bf16.msra.mxu0 0
  %1811 = vmatprep.subr.bf16.mxu0 0
  %1812 = vmatpush1.bf16.msra.mxu0 0
  %1813 = vmatprep.subr.bf16.mxu0 0
  %1814 = vmatpush1.bf16.msra.mxu0 0
  %1815 = vmatprep.subr.bf16.mxu0 0
  %1816 = vmatpush1.bf16.msra.mxu0 0
  %1817 = vmatprep.subr.bf16.mxu0 0
  %1818 = vmatpush1.bf16.msra.mxu0 0
  %1819 = vmatprep.subr.bf16.mxu0 0
  %1820 = vmatpush1.bf16.msra.mxu0 0
  %1821 = vmatprep.subr.bf16.mxu0 0
  %1822 = vmatpush1.bf16.msra.mxu0 %v1802
  %1823 = vmatprep.subr.bf16.mxu0 0
  %1824 = vmatpush2.bf16.msra.mxu0 0
  %1825 = vmatprep.subr.bf16.mxu0 0
  %1826 = vmatpush2.bf16.msra.mxu0 0
  %1827 = vmatprep.subr.bf16.mxu0 0
  %1828 = vmatpush2.bf16.msra.mxu0 0
  %1829 = vmatprep.subr.bf16.mxu0 0
  %1830 = vmatpush2.bf16.msra.mxu0 0
  %1831 = vmatprep.subr.bf16.mxu0 0
  %1832 = vmatpush2.bf16.msra.mxu0 0
  %1833 = vmatprep.subr.bf16.mxu0 0
  %1834 = vmatpush2.bf16.msra.mxu0 0
  %1835 = vmatprep.subr.bf16.mxu0 0
  %1836 = vmatpush2.bf16.msra.mxu0 0
  %1837 = vmatprep.subr.bf16.mxu0 0
  %1838 = vmatpush2.bf16.msra.mxu0 0
  %1839 = vmatprep.mubr.bf16.mxu0 0
  %1840 = vmatmul.mubr.bf16.gmra.mxu0 %v1805
  %v1841 = vpop.f32.mrf.mxu0
  %v1842 = vadd.f32 0.0, %v1841
  %v1843 = vpop.f32.mrf.mxu0
  %v1844 = vpop.f32.mrf.mxu0
  %v1845 = vadd.f32 0.0, %v1844
  %v1846 = vpop.f32.mrf.mxu0
  %1847 = vdwg.mxu0
  %v1848 = vadd.f32 %v1567, %v1842
  %v1849 = vadd.f32 %v1568, %v1845
  %s1850 = scalar_lea.vmem %s0, 96
  %v1851 = vld [vmem:[%s1850] sm:$0xff]
  %v1852 = vld [vmem:[%s1850 + $0x8] sm:$0xff]
  %v1855 = vunpack.c.l.b16 %v1851
  %v1856 = vunpack.c.h.b16 %v1851
  %v1857 = vunpack.c.l.b16 %v1852
  %v1858 = vunpack.c.h.b16 %v1852
  %v1859 = vpack.c.b16 %v1857, %v1855
  %v1860 = vpack.c.b16 %v1858, %v1856
  %1863 = vmatprep.subr.bf16.mxu0 0
  %1864 = vmatpush1.bf16.msra.mxu0 %v149
  %1865 = vmatprep.subr.bf16.mxu0 0
  %1866 = vmatpush1.bf16.msra.mxu0 %v148
  %1867 = vmatprep.subr.bf16.mxu0 0
  %1868 = vmatpush1.bf16.msra.mxu0 %v147
  %1869 = vmatprep.subr.bf16.mxu0 0
  %1870 = vmatpush1.bf16.msra.mxu0 %v146
  %1871 = vmatprep.subr.bf16.mxu0 0
  %1872 = vmatpush1.bf16.msra.mxu0 %v145
  %1873 = vmatprep.subr.bf16.mxu0 0
  %1874 = vmatpush1.bf16.msra.mxu0 %v144
  %1875 = vmatprep.subr.bf16.mxu0 0
  %1876 = vmatpush1.bf16.msra.mxu0 %v143
  %1877 = vmatprep.subr.bf16.mxu0 0
  %1878 = vmatpush1.bf16.msra.mxu0 %v142
  %1879 = vmatprep.subr.bf16.mxu0 0
  %1880 = vmatpush2.bf16.msra.mxu0 %v157
  %1881 = vmatprep.subr.bf16.mxu0 0
  %1882 = vmatpush2.bf16.msra.mxu0 %v156
  %1883 = vmatprep.subr.bf16.mxu0 0
  %1884 = vmatpush2.bf16.msra.mxu0 %v155
  %1885 = vmatprep.subr.bf16.mxu0 0
  %1886 = vmatpush2.bf16.msra.mxu0 %v154
  %1887 = vmatprep.subr.bf16.mxu0 0
  %1888 = vmatpush2.bf16.msra.mxu0 %v153
  %1889 = vmatprep.subr.bf16.mxu0 0
  %1890 = vmatpush2.bf16.msra.mxu0 %v152
  %1891 = vmatprep.subr.bf16.mxu0 0
  %1892 = vmatpush2.bf16.msra.mxu0 %v151
  %1893 = vmatprep.subr.bf16.mxu0 0
  %1894 = vmatpush2.bf16.msra.mxu0 %v150
  %1895 = vmatprep.mubr.bf16.mxu0 %v1860
  %1896 = vmatmul.mubr.bf16.gmra.mxu0 %v1859
  %v1897 = vpop.f32.mrf.mxu0
  %v1898 = vadd.f32 0.0, %v1897
  %v1899 = vpop.f32.mrf.mxu0
  %v1900 = vpop.f32.mrf.mxu0
  %v1901 = vadd.f32 0.0, %v1900
  %v1902 = vpop.f32.mrf.mxu0
  %1903 = vdwg.mxu0
  %s1904 = scalar_lea.vmem %s0, 496
  %v1905 = vld [vmem:[%s1904] sm:$0xff]
  %v1906 = vld [vmem:[%s1904 + $0x8] sm:$0xff]
  %v1909 = vunpack.c.l.b16 %v1905
  %v1910 = vunpack.c.h.b16 %v1905
  %v1911 = vunpack.c.l.b16 %v1906
  %v1912 = vunpack.c.h.b16 %v1906
  %v1913 = vpack.c.b16 %v1911, %v1909
  %v1914 = vpack.c.b16 %v1912, %v1910
  %1917 = vmatprep.subr.bf16.mxu0 0
  %1918 = vmatpush1.bf16.msra.mxu0 %v149
  %1919 = vmatprep.subr.bf16.mxu0 0
  %1920 = vmatpush1.bf16.msra.mxu0 %v148
  %1921 = vmatprep.subr.bf16.mxu0 0
  %1922 = vmatpush1.bf16.msra.mxu0 %v147
  %1923 = vmatprep.subr.bf16.mxu0 0
  %1924 = vmatpush1.bf16.msra.mxu0 %v146
  %1925 = vmatprep.subr.bf16.mxu0 0
  %1926 = vmatpush1.bf16.msra.mxu0 %v145
  %1927 = vmatprep.subr.bf16.mxu0 0
  %1928 = vmatpush1.bf16.msra.mxu0 %v144
  %1929 = vmatprep.subr.bf16.mxu0 0
  %1930 = vmatpush1.bf16.msra.mxu0 %v143
  %1931 = vmatprep.subr.bf16.mxu0 0
  %1932 = vmatpush1.bf16.msra.mxu0 %v142
  %1933 = vmatprep.subr.bf16.mxu0 0
  %1934 = vmatpush2.bf16.msra.mxu0 %v157
  %1935 = vmatprep.subr.bf16.mxu0 0
  %1936 = vmatpush2.bf16.msra.mxu0 %v156
  %1937 = vmatprep.subr.bf16.mxu0 0
  %1938 = vmatpush2.bf16.msra.mxu0 %v155
  %1939 = vmatprep.subr.bf16.mxu0 0
  %1940 = vmatpush2.bf16.msra.mxu0 %v154
  %1941 = vmatprep.subr.bf16.mxu0 0
  %1942 = vmatpush2.bf16.msra.mxu0 %v153
  %1943 = vmatprep.subr.bf16.mxu0 0
  %1944 = vmatpush2.bf16.msra.mxu0 %v152
  %1945 = vmatprep.subr.bf16.mxu0 0
  %1946 = vmatpush2.bf16.msra.mxu0 %v151
  %1947 = vmatprep.subr.bf16.mxu0 0
  %1948 = vmatpush2.bf16.msra.mxu0 %v150
  %1949 = vmatprep.mubr.bf16.mxu0 %v1914
  %1950 = vmatmul.mubr.bf16.gmra.mxu0 %v1913
  %v1951 = vpop.f32.mrf.mxu0
  %v1952 = vadd.f32 0.0, %v1951
  %v1953 = vpop.f32.mrf.mxu0
  %v1954 = vpop.f32.mrf.mxu0
  %v1955 = vadd.f32 0.0, %v1954
  %v1956 = vpop.f32.mrf.mxu0
  %1957 = vdwg.mxu0
  %v1958 = vmax.f32 %v1898, %v1952
  %v1959 = vmax.f32 %v1901, %v1955
  %s1960 = scalar_lea.vmem %s0, 896
  %v1961 = vld [vmem:[%s1960] sm:$0xff]
  %v1962 = vld [vmem:[%s1960 + $0x8] sm:$0xff]
  %v1965 = vunpack.c.l.b16 %v1961
  %v1966 = vunpack.c.h.b16 %v1961
  %v1967 = vunpack.c.l.b16 %v1962
  %v1968 = vunpack.c.h.b16 %v1962
  %v1969 = vpack.c.b16 %v1967, %v1965
  %v1970 = vpack.c.b16 %v1968, %v1966
  %1973 = vmatprep.subr.bf16.mxu0 0
  %1974 = vmatpush1.bf16.msra.mxu0 %v149
  %1975 = vmatprep.subr.bf16.mxu0 0
  %1976 = vmatpush1.bf16.msra.mxu0 %v148
  %1977 = vmatprep.subr.bf16.mxu0 0
  %1978 = vmatpush1.bf16.msra.mxu0 %v147
  %1979 = vmatprep.subr.bf16.mxu0 0
  %1980 = vmatpush1.bf16.msra.mxu0 %v146
  %1981 = vmatprep.subr.bf16.mxu0 0
  %1982 = vmatpush1.bf16.msra.mxu0 %v145
  %1983 = vmatprep.subr.bf16.mxu0 0
  %1984 = vmatpush1.bf16.msra.mxu0 %v144
  %1985 = vmatprep.subr.bf16.mxu0 0
  %1986 = vmatpush1.bf16.msra.mxu0 %v143
  %1987 = vmatprep.subr.bf16.mxu0 0
  %1988 = vmatpush1.bf16.msra.mxu0 %v142
  %1989 = vmatprep.subr.bf16.mxu0 0
  %1990 = vmatpush2.bf16.msra.mxu0 %v157
  %1991 = vmatprep.subr.bf16.mxu0 0
  %1992 = vmatpush2.bf16.msra.mxu0 %v156
  %1993 = vmatprep.subr.bf16.mxu0 0
  %1994 = vmatpush2.bf16.msra.mxu0 %v155
  %1995 = vmatprep.subr.bf16.mxu0 0
  %1996 = vmatpush2.bf16.msra.mxu0 %v154
  %1997 = vmatprep.subr.bf16.mxu0 0
  %1998 = vmatpush2.bf16.msra.mxu0 %v153
  %1999 = vmatprep.subr.bf16.mxu0 0
  %2000 = vmatpush2.bf16.msra.mxu0 %v152
  %2001 = vmatprep.subr.bf16.mxu0 0
  %2002 = vmatpush2.bf16.msra.mxu0 %v151
  %2003 = vmatprep.subr.bf16.mxu0 0
  %2004 = vmatpush2.bf16.msra.mxu0 %v150
  %2005 = vmatprep.mubr.bf16.mxu0 %v1970
  %2006 = vmatmul.mubr.bf16.gmra.mxu0 %v1969
  %v2007 = vpop.f32.mrf.mxu0
  %v2008 = vadd.f32 0.0, %v2007
  %v2009 = vpop.f32.mrf.mxu0
  %v2010 = vpop.f32.mrf.mxu0
  %v2011 = vadd.f32 0.0, %v2010
  %v2012 = vpop.f32.mrf.mxu0
  %2013 = vdwg.mxu0
  %v2014 = vmax.f32 %v1958, %v2008
  %v2015 = vmax.f32 %v1959, %v2011
  %s2016 = scalar_lea.vmem %s0, 1296
  %v2017 = vld [vmem:[%s2016] sm:$0xff]
  %v2018 = vld [vmem:[%s2016 + $0x8] sm:$0xff]
  %v2021 = vunpack.c.l.b16 %v2017
  %v2022 = vunpack.c.h.b16 %v2017
  %v2023 = vunpack.c.l.b16 %v2018
  %v2024 = vunpack.c.h.b16 %v2018
  %v2025 = vpack.c.b16 %v2023, %v2021
  %v2026 = vpack.c.b16 %v2024, %v2022
  %2029 = vmatprep.subr.bf16.mxu0 0
  %2030 = vmatpush1.bf16.msra.mxu0 %v149
  %2031 = vmatprep.subr.bf16.mxu0 0
  %2032 = vmatpush1.bf16.msra.mxu0 %v148
  %2033 = vmatprep.subr.bf16.mxu0 0
  %2034 = vmatpush1.bf16.msra.mxu0 %v147
  %2035 = vmatprep.subr.bf16.mxu0 0
  %2036 = vmatpush1.bf16.msra.mxu0 %v146
  %2037 = vmatprep.subr.bf16.mxu0 0
  %2038 = vmatpush1.bf16.msra.mxu0 %v145
  %2039 = vmatprep.subr.bf16.mxu0 0
  %2040 = vmatpush1.bf16.msra.mxu0 %v144
  %2041 = vmatprep.subr.bf16.mxu0 0
  %2042 = vmatpush1.bf16.msra.mxu0 %v143
  %2043 = vmatprep.subr.bf16.mxu0 0
  %2044 = vmatpush1.bf16.msra.mxu0 %v142
  %2045 = vmatprep.subr.bf16.mxu0 0
  %2046 = vmatpush2.bf16.msra.mxu0 %v157
  %2047 = vmatprep.subr.bf16.mxu0 0
  %2048 = vmatpush2.bf16.msra.mxu0 %v156
  %2049 = vmatprep.subr.bf16.mxu0 0
  %2050 = vmatpush2.bf16.msra.mxu0 %v155
  %2051 = vmatprep.subr.bf16.mxu0 0
  %2052 = vmatpush2.bf16.msra.mxu0 %v154
  %2053 = vmatprep.subr.bf16.mxu0 0
  %2054 = vmatpush2.bf16.msra.mxu0 %v153
  %2055 = vmatprep.subr.bf16.mxu0 0
  %2056 = vmatpush2.bf16.msra.mxu0 %v152
  %2057 = vmatprep.subr.bf16.mxu0 0
  %2058 = vmatpush2.bf16.msra.mxu0 %v151
  %2059 = vmatprep.subr.bf16.mxu0 0
  %2060 = vmatpush2.bf16.msra.mxu0 %v150
  %2061 = vmatprep.mubr.bf16.mxu0 %v2026
  %2062 = vmatmul.mubr.bf16.gmra.mxu0 %v2025
  %v2063 = vpop.f32.mrf.mxu0
  %v2064 = vadd.f32 0.0, %v2063
  %v2065 = vpop.f32.mrf.mxu0
  %v2066 = vpop.f32.mrf.mxu0
  %v2067 = vadd.f32 0.0, %v2066
  %v2068 = vpop.f32.mrf.mxu0
  %2069 = vdwg.mxu0
  %v2070 = vmax.f32 %v2014, %v2064
  %v2071 = vmax.f32 %v2015, %v2067
  %v2072 = vadd.f32 %v2070, %v387
  %v2073 = vadd.f32 %v2071, %v387
  %v2074 = vmax.f32 %v2072, 0.0
  %v2075 = vmax.f32 %v2073, 0.0
  %v2076 = vpack.c.bf16 %v2075, %v2074
  %v2077 = vld [vmem:[%s3 + $0x30] sm:$0xf]
  %v2078 = vld [vmem:[%s3 + $0x34] sm:$0xf]
  %v2081 = vunpack.c.l.b16 %v2077
  %v2082 = vunpack.c.l.b16 %v2078
  %v2083 = vpack.c.b16 %v2082, %v2081
  %v2086 = vsel %vm631, %v2076, 0
  %2088 = vmatprep.subr.bf16.mxu0 0
  %2089 = vmatpush1.bf16.msra.mxu0 0
  %2090 = vmatprep.subr.bf16.mxu0 0
  %2091 = vmatpush1.bf16.msra.mxu0 0
  %2092 = vmatprep.subr.bf16.mxu0 0
  %2093 = vmatpush1.bf16.msra.mxu0 0
  %2094 = vmatprep.subr.bf16.mxu0 0
  %2095 = vmatpush1.bf16.msra.mxu0 0
  %2096 = vmatprep.subr.bf16.mxu0 0
  %2097 = vmatpush1.bf16.msra.mxu0 0
  %2098 = vmatprep.subr.bf16.mxu0 0
  %2099 = vmatpush1.bf16.msra.mxu0 0
  %2100 = vmatprep.subr.bf16.mxu0 0
  %2101 = vmatpush1.bf16.msra.mxu0 0
  %2102 = vmatprep.subr.bf16.mxu0 0
  %2103 = vmatpush1.bf16.msra.mxu0 %v2083
  %2104 = vmatprep.subr.bf16.mxu0 0
  %2105 = vmatpush2.bf16.msra.mxu0 0
  %2106 = vmatprep.subr.bf16.mxu0 0
  %2107 = vmatpush2.bf16.msra.mxu0 0
  %2108 = vmatprep.subr.bf16.mxu0 0
  %2109 = vmatpush2.bf16.msra.mxu0 0
  %2110 = vmatprep.subr.bf16.mxu0 0
  %2111 = vmatpush2.bf16.msra.mxu0 0
  %2112 = vmatprep.subr.bf16.mxu0 0
  %2113 = vmatpush2.bf16.msra.mxu0 0
  %2114 = vmatprep.subr.bf16.mxu0 0
  %2115 = vmatpush2.bf16.msra.mxu0 0
  %2116 = vmatprep.subr.bf16.mxu0 0
  %2117 = vmatpush2.bf16.msra.mxu0 0
  %2118 = vmatprep.subr.bf16.mxu0 0
  %2119 = vmatpush2.bf16.msra.mxu0 0
  %2120 = vmatprep.mubr.bf16.mxu0 0
  %2121 = vmatmul.mubr.bf16.gmra.mxu0 %v2086
  %v2122 = vpop.f32.mrf.mxu0
  %v2123 = vadd.f32 0.0, %v2122
  %v2124 = vpop.f32.mrf.mxu0
  %v2125 = vpop.f32.mrf.mxu0
  %v2126 = vadd.f32 0.0, %v2125
  %v2127 = vpop.f32.mrf.mxu0
  %2128 = vdwg.mxu0
  %v2129 = vadd.f32 %v1848, %v2123
  %v2130 = vadd.f32 %v1849, %v2126
  %s2131 = scalar_lea.vmem %s0, 112
  %v2132 = vld [vmem:[%s2131] sm:$0xff]
  %v2133 = vld [vmem:[%s2131 + $0x8] sm:$0xff]
  %v2136 = vunpack.c.l.b16 %v2132
  %v2137 = vunpack.c.h.b16 %v2132
  %v2138 = vunpack.c.l.b16 %v2133
  %v2139 = vunpack.c.h.b16 %v2133
  %v2140 = vpack.c.b16 %v2138, %v2136
  %v2141 = vpack.c.b16 %v2139, %v2137
  %2144 = vmatprep.subr.bf16.mxu0 0
  %2145 = vmatpush1.bf16.msra.mxu0 %v149
  %2146 = vmatprep.subr.bf16.mxu0 0
  %2147 = vmatpush1.bf16.msra.mxu0 %v148
  %2148 = vmatprep.subr.bf16.mxu0 0
  %2149 = vmatpush1.bf16.msra.mxu0 %v147
  %2150 = vmatprep.subr.bf16.mxu0 0
  %2151 = vmatpush1.bf16.msra.mxu0 %v146
  %2152 = vmatprep.subr.bf16.mxu0 0
  %2153 = vmatpush1.bf16.msra.mxu0 %v145
  %2154 = vmatprep.subr.bf16.mxu0 0
  %2155 = vmatpush1.bf16.msra.mxu0 %v144
  %2156 = vmatprep.subr.bf16.mxu0 0
  %2157 = vmatpush1.bf16.msra.mxu0 %v143
  %2158 = vmatprep.subr.bf16.mxu0 0
  %2159 = vmatpush1.bf16.msra.mxu0 %v142
  %2160 = vmatprep.subr.bf16.mxu0 0
  %2161 = vmatpush2.bf16.msra.mxu0 %v157
  %2162 = vmatprep.subr.bf16.mxu0 0
  %2163 = vmatpush2.bf16.msra.mxu0 %v156
  %2164 = vmatprep.subr.bf16.mxu0 0
  %2165 = vmatpush2.bf16.msra.mxu0 %v155
  %2166 = vmatprep.subr.bf16.mxu0 0
  %2167 = vmatpush2.bf16.msra.mxu0 %v154
  %2168 = vmatprep.subr.bf16.mxu0 0
  %2169 = vmatpush2.bf16.msra.mxu0 %v153
  %2170 = vmatprep.subr.bf16.mxu0 0
  %2171 = vmatpush2.bf16.msra.mxu0 %v152
  %2172 = vmatprep.subr.bf16.mxu0 0
  %2173 = vmatpush2.bf16.msra.mxu0 %v151
  %2174 = vmatprep.subr.bf16.mxu0 0
  %2175 = vmatpush2.bf16.msra.mxu0 %v150
  %2176 = vmatprep.mubr.bf16.mxu0 %v2141
  %2177 = vmatmul.mubr.bf16.gmra.mxu0 %v2140
  %v2178 = vpop.f32.mrf.mxu0
  %v2179 = vadd.f32 0.0, %v2178
  %v2180 = vpop.f32.mrf.mxu0
  %v2181 = vpop.f32.mrf.mxu0
  %v2182 = vadd.f32 0.0, %v2181
  %v2183 = vpop.f32.mrf.mxu0
  %2184 = vdwg.mxu0
  %s2185 = scalar_lea.vmem %s0, 512
  %v2186 = vld [vmem:[%s2185] sm:$0xff]
  %v2187 = vld [vmem:[%s2185 + $0x8] sm:$0xff]
  %v2190 = vunpack.c.l.b16 %v2186
  %v2191 = vunpack.c.h.b16 %v2186
  %v2192 = vunpack.c.l.b16 %v2187
  %v2193 = vunpack.c.h.b16 %v2187
  %v2194 = vpack.c.b16 %v2192, %v2190
  %v2195 = vpack.c.b16 %v2193, %v2191
  %2198 = vmatprep.subr.bf16.mxu0 0
  %2199 = vmatpush1.bf16.msra.mxu0 %v149
  %2200 = vmatprep.subr.bf16.mxu0 0
  %2201 = vmatpush1.bf16.msra.mxu0 %v148
  %2202 = vmatprep.subr.bf16.mxu0 0
  %2203 = vmatpush1.bf16.msra.mxu0 %v147
  %2204 = vmatprep.subr.bf16.mxu0 0
  %2205 = vmatpush1.bf16.msra.mxu0 %v146
  %2206 = vmatprep.subr.bf16.mxu0 0
  %2207 = vmatpush1.bf16.msra.mxu0 %v145
  %2208 = vmatprep.subr.bf16.mxu0 0
  %2209 = vmatpush1.bf16.msra.mxu0 %v144
  %2210 = vmatprep.subr.bf16.mxu0 0
  %2211 = vmatpush1.bf16.msra.mxu0 %v143
  %2212 = vmatprep.subr.bf16.mxu0 0
  %2213 = vmatpush1.bf16.msra.mxu0 %v142
  %2214 = vmatprep.subr.bf16.mxu0 0
  %2215 = vmatpush2.bf16.msra.mxu0 %v157
  %2216 = vmatprep.subr.bf16.mxu0 0
  %2217 = vmatpush2.bf16.msra.mxu0 %v156
  %2218 = vmatprep.subr.bf16.mxu0 0
  %2219 = vmatpush2.bf16.msra.mxu0 %v155
  %2220 = vmatprep.subr.bf16.mxu0 0
  %2221 = vmatpush2.bf16.msra.mxu0 %v154
  %2222 = vmatprep.subr.bf16.mxu0 0
  %2223 = vmatpush2.bf16.msra.mxu0 %v153
  %2224 = vmatprep.subr.bf16.mxu0 0
  %2225 = vmatpush2.bf16.msra.mxu0 %v152
  %2226 = vmatprep.subr.bf16.mxu0 0
  %2227 = vmatpush2.bf16.msra.mxu0 %v151
  %2228 = vmatprep.subr.bf16.mxu0 0
  %2229 = vmatpush2.bf16.msra.mxu0 %v150
  %2230 = vmatprep.mubr.bf16.mxu0 %v2195
  %2231 = vmatmul.mubr.bf16.gmra.mxu0 %v2194
  %v2232 = vpop.f32.mrf.mxu0
  %v2233 = vadd.f32 0.0, %v2232
  %v2234 = vpop.f32.mrf.mxu0
  %v2235 = vpop.f32.mrf.mxu0
  %v2236 = vadd.f32 0.0, %v2235
  %v2237 = vpop.f32.mrf.mxu0
  %2238 = vdwg.mxu0
  %v2239 = vmax.f32 %v2179, %v2233
  %v2240 = vmax.f32 %v2182, %v2236
  %s2241 = scalar_lea.vmem %s0, 912
  %v2242 = vld [vmem:[%s2241] sm:$0xff]
  %v2243 = vld [vmem:[%s2241 + $0x8] sm:$0xff]
  %v2246 = vunpack.c.l.b16 %v2242
  %v2247 = vunpack.c.h.b16 %v2242
  %v2248 = vunpack.c.l.b16 %v2243
  %v2249 = vunpack.c.h.b16 %v2243
  %v2250 = vpack.c.b16 %v2248, %v2246
  %v2251 = vpack.c.b16 %v2249, %v2247
  %2254 = vmatprep.subr.bf16.mxu0 0
  %2255 = vmatpush1.bf16.msra.mxu0 %v149
  %2256 = vmatprep.subr.bf16.mxu0 0
  %2257 = vmatpush1.bf16.msra.mxu0 %v148
  %2258 = vmatprep.subr.bf16.mxu0 0
  %2259 = vmatpush1.bf16.msra.mxu0 %v147
  %2260 = vmatprep.subr.bf16.mxu0 0
  %2261 = vmatpush1.bf16.msra.mxu0 %v146
  %2262 = vmatprep.subr.bf16.mxu0 0
  %2263 = vmatpush1.bf16.msra.mxu0 %v145
  %2264 = vmatprep.subr.bf16.mxu0 0
  %2265 = vmatpush1.bf16.msra.mxu0 %v144
  %2266 = vmatprep.subr.bf16.mxu0 0
  %2267 = vmatpush1.bf16.msra.mxu0 %v143
  %2268 = vmatprep.subr.bf16.mxu0 0
  %2269 = vmatpush1.bf16.msra.mxu0 %v142
  %2270 = vmatprep.subr.bf16.mxu0 0
  %2271 = vmatpush2.bf16.msra.mxu0 %v157
  %2272 = vmatprep.subr.bf16.mxu0 0
  %2273 = vmatpush2.bf16.msra.mxu0 %v156
  %2274 = vmatprep.subr.bf16.mxu0 0
  %2275 = vmatpush2.bf16.msra.mxu0 %v155
  %2276 = vmatprep.subr.bf16.mxu0 0
  %2277 = vmatpush2.bf16.msra.mxu0 %v154
  %2278 = vmatprep.subr.bf16.mxu0 0
  %2279 = vmatpush2.bf16.msra.mxu0 %v153
  %2280 = vmatprep.subr.bf16.mxu0 0
  %2281 = vmatpush2.bf16.msra.mxu0 %v152
  %2282 = vmatprep.subr.bf16.mxu0 0
  %2283 = vmatpush2.bf16.msra.mxu0 %v151
  %2284 = vmatprep.subr.bf16.mxu0 0
  %2285 = vmatpush2.bf16.msra.mxu0 %v150
  %2286 = vmatprep.mubr.bf16.mxu0 %v2251
  %2287 = vmatmul.mubr.bf16.gmra.mxu0 %v2250
  %v2288 = vpop.f32.mrf.mxu0
  %v2289 = vadd.f32 0.0, %v2288
  %v2290 = vpop.f32.mrf.mxu0
  %v2291 = vpop.f32.mrf.mxu0
  %v2292 = vadd.f32 0.0, %v2291
  %v2293 = vpop.f32.mrf.mxu0
  %2294 = vdwg.mxu0
  %v2295 = vmax.f32 %v2239, %v2289
  %v2296 = vmax.f32 %v2240, %v2292
  %s2297 = scalar_lea.vmem %s0, 1312
  %v2298 = vld [vmem:[%s2297] sm:$0xff]
  %v2299 = vld [vmem:[%s2297 + $0x8] sm:$0xff]
  %v2302 = vunpack.c.l.b16 %v2298
  %v2303 = vunpack.c.h.b16 %v2298
  %v2304 = vunpack.c.l.b16 %v2299
  %v2305 = vunpack.c.h.b16 %v2299
  %v2306 = vpack.c.b16 %v2304, %v2302
  %v2307 = vpack.c.b16 %v2305, %v2303
  %2310 = vmatprep.subr.bf16.mxu0 0
  %2311 = vmatpush1.bf16.msra.mxu0 %v149
  %2312 = vmatprep.subr.bf16.mxu0 0
  %2313 = vmatpush1.bf16.msra.mxu0 %v148
  %2314 = vmatprep.subr.bf16.mxu0 0
  %2315 = vmatpush1.bf16.msra.mxu0 %v147
  %2316 = vmatprep.subr.bf16.mxu0 0
  %2317 = vmatpush1.bf16.msra.mxu0 %v146
  %2318 = vmatprep.subr.bf16.mxu0 0
  %2319 = vmatpush1.bf16.msra.mxu0 %v145
  %2320 = vmatprep.subr.bf16.mxu0 0
  %2321 = vmatpush1.bf16.msra.mxu0 %v144
  %2322 = vmatprep.subr.bf16.mxu0 0
  %2323 = vmatpush1.bf16.msra.mxu0 %v143
  %2324 = vmatprep.subr.bf16.mxu0 0
  %2325 = vmatpush1.bf16.msra.mxu0 %v142
  %2326 = vmatprep.subr.bf16.mxu0 0
  %2327 = vmatpush2.bf16.msra.mxu0 %v157
  %2328 = vmatprep.subr.bf16.mxu0 0
  %2329 = vmatpush2.bf16.msra.mxu0 %v156
  %2330 = vmatprep.subr.bf16.mxu0 0
  %2331 = vmatpush2.bf16.msra.mxu0 %v155
  %2332 = vmatprep.subr.bf16.mxu0 0
  %2333 = vmatpush2.bf16.msra.mxu0 %v154
  %2334 = vmatprep.subr.bf16.mxu0 0
  %2335 = vmatpush2.bf16.msra.mxu0 %v153
  %2336 = vmatprep.subr.bf16.mxu0 0
  %2337 = vmatpush2.bf16.msra.mxu0 %v152
  %2338 = vmatprep.subr.bf16.mxu0 0
  %2339 = vmatpush2.bf16.msra.mxu0 %v151
  %2340 = vmatprep.subr.bf16.mxu0 0
  %2341 = vmatpush2.bf16.msra.mxu0 %v150
  %2342 = vmatprep.mubr.bf16.mxu0 %v2307
  %2343 = vmatmul.mubr.bf16.gmra.mxu0 %v2306
  %v2344 = vpop.f32.mrf.mxu0
  %v2345 = vadd.f32 0.0, %v2344
  %v2346 = vpop.f32.mrf.mxu0
  %v2347 = vpop.f32.mrf.mxu0
  %v2348 = vadd.f32 0.0, %v2347
  %v2349 = vpop.f32.mrf.mxu0
  %2350 = vdwg.mxu0
  %v2351 = vmax.f32 %v2295, %v2345
  %v2352 = vmax.f32 %v2296, %v2348
  %v2353 = vadd.f32 %v2351, %v387
  %v2354 = vadd.f32 %v2352, %v387
  %v2355 = vmax.f32 %v2353, 0.0
  %v2356 = vmax.f32 %v2354, 0.0
  %v2357 = vpack.c.bf16 %v2356, %v2355
  %v2358 = vld [vmem:[%s3 + $0x38] sm:$0xf]
  %v2359 = vld [vmem:[%s3 + $0x3c] sm:$0xf]
  %v2362 = vunpack.c.l.b16 %v2358
  %v2363 = vunpack.c.l.b16 %v2359
  %v2364 = vpack.c.b16 %v2363, %v2362
  %v2367 = vsel %vm631, %v2357, 0
  %2369 = vmatprep.subr.bf16.mxu0 0
  %2370 = vmatpush1.bf16.msra.mxu0 0
  %2371 = vmatprep.subr.bf16.mxu0 0
  %2372 = vmatpush1.bf16.msra.mxu0 0
  %2373 = vmatprep.subr.bf16.mxu0 0
  %2374 = vmatpush1.bf16.msra.mxu0 0
  %2375 = vmatprep.subr.bf16.mxu0 0
  %2376 = vmatpush1.bf16.msra.mxu0 0
  %2377 = vmatprep.subr.bf16.mxu0 0
  %2378 = vmatpush1.bf16.msra.mxu0 0
  %2379 = vmatprep.subr.bf16.mxu0 0
  %2380 = vmatpush1.bf16.msra.mxu0 0
  %2381 = vmatprep.subr.bf16.mxu0 0
  %2382 = vmatpush1.bf16.msra.mxu0 0
  %2383 = vmatprep.subr.bf16.mxu0 0
  %2384 = vmatpush1.bf16.msra.mxu0 %v2364
  %2385 = vmatprep.subr.bf16.mxu0 0
  %2386 = vmatpush2.bf16.msra.mxu0 0
  %2387 = vmatprep.subr.bf16.mxu0 0
  %2388 = vmatpush2.bf16.msra.mxu0 0
  %2389 = vmatprep.subr.bf16.mxu0 0
  %2390 = vmatpush2.bf16.msra.mxu0 0
  %2391 = vmatprep.subr.bf16.mxu0 0
  %2392 = vmatpush2.bf16.msra.mxu0 0
  %2393 = vmatprep.subr.bf16.mxu0 0
  %2394 = vmatpush2.bf16.msra.mxu0 0
  %2395 = vmatprep.subr.bf16.mxu0 0
  %2396 = vmatpush2.bf16.msra.mxu0 0
  %2397 = vmatprep.subr.bf16.mxu0 0
  %2398 = vmatpush2.bf16.msra.mxu0 0
  %2399 = vmatprep.subr.bf16.mxu0 0
  %2400 = vmatpush2.bf16.msra.mxu0 0
  %2401 = vmatprep.mubr.bf16.mxu0 0
  %2402 = vmatmul.mubr.bf16.gmra.mxu0 %v2367
  %v2403 = vpop.f32.mrf.mxu0
  %v2404 = vadd.f32 0.0, %v2403
  %v2405 = vpop.f32.mrf.mxu0
  %v2406 = vpop.f32.mrf.mxu0
  %v2407 = vadd.f32 0.0, %v2406
  %v2408 = vpop.f32.mrf.mxu0
  %2409 = vdwg.mxu0
  %v2410 = vadd.f32 %v2129, %v2404
  %v2411 = vadd.f32 %v2130, %v2407
  %s2412 = scalar_lea.vmem %s0, 128
  %v2413 = vld [vmem:[%s2412] sm:$0xff]
  %v2414 = vld [vmem:[%s2412 + $0x8] sm:$0xff]
  %v2417 = vunpack.c.l.b16 %v2413
  %v2418 = vunpack.c.h.b16 %v2413
  %v2419 = vunpack.c.l.b16 %v2414
  %v2420 = vunpack.c.h.b16 %v2414
  %v2421 = vpack.c.b16 %v2419, %v2417
  %v2422 = vpack.c.b16 %v2420, %v2418
  %2425 = vmatprep.subr.bf16.mxu0 0
  %2426 = vmatpush1.bf16.msra.mxu0 %v149
  %2427 = vmatprep.subr.bf16.mxu0 0
  %2428 = vmatpush1.bf16.msra.mxu0 %v148
  %2429 = vmatprep.subr.bf16.mxu0 0
  %2430 = vmatpush1.bf16.msra.mxu0 %v147
  %2431 = vmatprep.subr.bf16.mxu0 0
  %2432 = vmatpush1.bf16.msra.mxu0 %v146
  %2433 = vmatprep.subr.bf16.mxu0 0
  %2434 = vmatpush1.bf16.msra.mxu0 %v145
  %2435 = vmatprep.subr.bf16.mxu0 0
  %2436 = vmatpush1.bf16.msra.mxu0 %v144
  %2437 = vmatprep.subr.bf16.mxu0 0
  %2438 = vmatpush1.bf16.msra.mxu0 %v143
  %2439 = vmatprep.subr.bf16.mxu0 0
  %2440 = vmatpush1.bf16.msra.mxu0 %v142
  %2441 = vmatprep.subr.bf16.mxu0 0
  %2442 = vmatpush2.bf16.msra.mxu0 %v157
  %2443 = vmatprep.subr.bf16.mxu0 0
  %2444 = vmatpush2.bf16.msra.mxu0 %v156
  %2445 = vmatprep.subr.bf16.mxu0 0
  %2446 = vmatpush2.bf16.msra.mxu0 %v155
  %2447 = vmatprep.subr.bf16.mxu0 0
  %2448 = vmatpush2.bf16.msra.mxu0 %v154
  %2449 = vmatprep.subr.bf16.mxu0 0
  %2450 = vmatpush2.bf16.msra.mxu0 %v153
  %2451 = vmatprep.subr.bf16.mxu0 0
  %2452 = vmatpush2.bf16.msra.mxu0 %v152
  %2453 = vmatprep.subr.bf16.mxu0 0
  %2454 = vmatpush2.bf16.msra.mxu0 %v151
  %2455 = vmatprep.subr.bf16.mxu0 0
  %2456 = vmatpush2.bf16.msra.mxu0 %v150
  %2457 = vmatprep.mubr.bf16.mxu0 %v2422
  %2458 = vmatmul.mubr.bf16.gmra.mxu0 %v2421
  %v2459 = vpop.f32.mrf.mxu0
  %v2460 = vadd.f32 0.0, %v2459
  %v2461 = vpop.f32.mrf.mxu0
  %v2462 = vpop.f32.mrf.mxu0
  %v2463 = vadd.f32 0.0, %v2462
  %v2464 = vpop.f32.mrf.mxu0
  %2465 = vdwg.mxu0
  %s2466 = scalar_lea.vmem %s0, 528
  %v2467 = vld [vmem:[%s2466] sm:$0xff]
  %v2468 = vld [vmem:[%s2466 + $0x8] sm:$0xff]
  %v2471 = vunpack.c.l.b16 %v2467
  %v2472 = vunpack.c.h.b16 %v2467
  %v2473 = vunpack.c.l.b16 %v2468
  %v2474 = vunpack.c.h.b16 %v2468
  %v2475 = vpack.c.b16 %v2473, %v2471
  %v2476 = vpack.c.b16 %v2474, %v2472
  %2479 = vmatprep.subr.bf16.mxu0 0
  %2480 = vmatpush1.bf16.msra.mxu0 %v149
  %2481 = vmatprep.subr.bf16.mxu0 0
  %2482 = vmatpush1.bf16.msra.mxu0 %v148
  %2483 = vmatprep.subr.bf16.mxu0 0
  %2484 = vmatpush1.bf16.msra.mxu0 %v147
  %2485 = vmatprep.subr.bf16.mxu0 0
  %2486 = vmatpush1.bf16.msra.mxu0 %v146
  %2487 = vmatprep.subr.bf16.mxu0 0
  %2488 = vmatpush1.bf16.msra.mxu0 %v145
  %2489 = vmatprep.subr.bf16.mxu0 0
  %2490 = vmatpush1.bf16.msra.mxu0 %v144
  %2491 = vmatprep.subr.bf16.mxu0 0
  %2492 = vmatpush1.bf16.msra.mxu0 %v143
  %2493 = vmatprep.subr.bf16.mxu0 0
  %2494 = vmatpush1.bf16.msra.mxu0 %v142
  %2495 = vmatprep.subr.bf16.mxu0 0
  %2496 = vmatpush2.bf16.msra.mxu0 %v157
  %2497 = vmatprep.subr.bf16.mxu0 0
  %2498 = vmatpush2.bf16.msra.mxu0 %v156
  %2499 = vmatprep.subr.bf16.mxu0 0
  %2500 = vmatpush2.bf16.msra.mxu0 %v155
  %2501 = vmatprep.subr.bf16.mxu0 0
  %2502 = vmatpush2.bf16.msra.mxu0 %v154
  %2503 = vmatprep.subr.bf16.mxu0 0
  %2504 = vmatpush2.bf16.msra.mxu0 %v153
  %2505 = vmatprep.subr.bf16.mxu0 0
  %2506 = vmatpush2.bf16.msra.mxu0 %v152
  %2507 = vmatprep.subr.bf16.mxu0 0
  %2508 = vmatpush2.bf16.msra.mxu0 %v151
  %2509 = vmatprep.subr.bf16.mxu0 0
  %2510 = vmatpush2.bf16.msra.mxu0 %v150
  %2511 = vmatprep.mubr.bf16.mxu0 %v2476
  %2512 = vmatmul.mubr.bf16.gmra.mxu0 %v2475
  %v2513 = vpop.f32.mrf.mxu0
  %v2514 = vadd.f32 0.0, %v2513
  %v2515 = vpop.f32.mrf.mxu0
  %v2516 = vpop.f32.mrf.mxu0
  %v2517 = vadd.f32 0.0, %v2516
  %v2518 = vpop.f32.mrf.mxu0
  %2519 = vdwg.mxu0
  %v2520 = vmax.f32 %v2460, %v2514
  %v2521 = vmax.f32 %v2463, %v2517
  %s2522 = scalar_lea.vmem %s0, 928
  %v2523 = vld [vmem:[%s2522] sm:$0xff]
  %v2524 = vld [vmem:[%s2522 + $0x8] sm:$0xff]
  %v2527 = vunpack.c.l.b16 %v2523
  %v2528 = vunpack.c.h.b16 %v2523
  %v2529 = vunpack.c.l.b16 %v2524
  %v2530 = vunpack.c.h.b16 %v2524
  %v2531 = vpack.c.b16 %v2529, %v2527
  %v2532 = vpack.c.b16 %v2530, %v2528
  %2535 = vmatprep.subr.bf16.mxu0 0
  %2536 = vmatpush1.bf16.msra.mxu0 %v149
  %2537 = vmatprep.subr.bf16.mxu0 0
  %2538 = vmatpush1.bf16.msra.mxu0 %v148
  %2539 = vmatprep.subr.bf16.mxu0 0
  %2540 = vmatpush1.bf16.msra.mxu0 %v147
  %2541 = vmatprep.subr.bf16.mxu0 0
  %2542 = vmatpush1.bf16.msra.mxu0 %v146
  %2543 = vmatprep.subr.bf16.mxu0 0
  %2544 = vmatpush1.bf16.msra.mxu0 %v145
  %2545 = vmatprep.subr.bf16.mxu0 0
  %2546 = vmatpush1.bf16.msra.mxu0 %v144
  %2547 = vmatprep.subr.bf16.mxu0 0
  %2548 = vmatpush1.bf16.msra.mxu0 %v143
  %2549 = vmatprep.subr.bf16.mxu0 0
  %2550 = vmatpush1.bf16.msra.mxu0 %v142
  %2551 = vmatprep.subr.bf16.mxu0 0
  %2552 = vmatpush2.bf16.msra.mxu0 %v157
  %2553 = vmatprep.subr.bf16.mxu0 0
  %2554 = vmatpush2.bf16.msra.mxu0 %v156
  %2555 = vmatprep.subr.bf16.mxu0 0
  %2556 = vmatpush2.bf16.msra.mxu0 %v155
  %2557 = vmatprep.subr.bf16.mxu0 0
  %2558 = vmatpush2.bf16.msra.mxu0 %v154
  %2559 = vmatprep.subr.bf16.mxu0 0
  %2560 = vmatpush2.bf16.msra.mxu0 %v153
  %2561 = vmatprep.subr.bf16.mxu0 0
  %2562 = vmatpush2.bf16.msra.mxu0 %v152
  %2563 = vmatprep.subr.bf16.mxu0 0
  %2564 = vmatpush2.bf16.msra.mxu0 %v151
  %2565 = vmatprep.subr.bf16.mxu0 0
  %2566 = vmatpush2.bf16.msra.mxu0 %v150
  %2567 = vmatprep.mubr.bf16.mxu0 %v2532
  %2568 = vmatmul.mubr.bf16.gmra.mxu0 %v2531
  %v2569 = vpop.f32.mrf.mxu0
  %v2570 = vadd.f32 0.0, %v2569
  %v2571 = vpop.f32.mrf.mxu0
  %v2572 = vpop.f32.mrf.mxu0
  %v2573 = vadd.f32 0.0, %v2572
  %v2574 = vpop.f32.mrf.mxu0
  %2575 = vdwg.mxu0
  %v2576 = vmax.f32 %v2520, %v2570
  %v2577 = vmax.f32 %v2521, %v2573
  %s2578 = scalar_lea.vmem %s0, 1328
  %v2579 = vld [vmem:[%s2578] sm:$0xff]
  %v2580 = vld [vmem:[%s2578 + $0x8] sm:$0xff]
  %v2583 = vunpack.c.l.b16 %v2579
  %v2584 = vunpack.c.h.b16 %v2579
  %v2585 = vunpack.c.l.b16 %v2580
  %v2586 = vunpack.c.h.b16 %v2580
  %v2587 = vpack.c.b16 %v2585, %v2583
  %v2588 = vpack.c.b16 %v2586, %v2584
  %2591 = vmatprep.subr.bf16.mxu0 0
  %2592 = vmatpush1.bf16.msra.mxu0 %v149
  %2593 = vmatprep.subr.bf16.mxu0 0
  %2594 = vmatpush1.bf16.msra.mxu0 %v148
  %2595 = vmatprep.subr.bf16.mxu0 0
  %2596 = vmatpush1.bf16.msra.mxu0 %v147
  %2597 = vmatprep.subr.bf16.mxu0 0
  %2598 = vmatpush1.bf16.msra.mxu0 %v146
  %2599 = vmatprep.subr.bf16.mxu0 0
  %2600 = vmatpush1.bf16.msra.mxu0 %v145
  %2601 = vmatprep.subr.bf16.mxu0 0
  %2602 = vmatpush1.bf16.msra.mxu0 %v144
  %2603 = vmatprep.subr.bf16.mxu0 0
  %2604 = vmatpush1.bf16.msra.mxu0 %v143
  %2605 = vmatprep.subr.bf16.mxu0 0
  %2606 = vmatpush1.bf16.msra.mxu0 %v142
  %2607 = vmatprep.subr.bf16.mxu0 0
  %2608 = vmatpush2.bf16.msra.mxu0 %v157
  %2609 = vmatprep.subr.bf16.mxu0 0
  %2610 = vmatpush2.bf16.msra.mxu0 %v156
  %2611 = vmatprep.subr.bf16.mxu0 0
  %2612 = vmatpush2.bf16.msra.mxu0 %v155
  %2613 = vmatprep.subr.bf16.mxu0 0
  %2614 = vmatpush2.bf16.msra.mxu0 %v154
  %2615 = vmatprep.subr.bf16.mxu0 0
  %2616 = vmatpush2.bf16.msra.mxu0 %v153
  %2617 = vmatprep.subr.bf16.mxu0 0
  %2618 = vmatpush2.bf16.msra.mxu0 %v152
  %2619 = vmatprep.subr.bf16.mxu0 0
  %2620 = vmatpush2.bf16.msra.mxu0 %v151
  %2621 = vmatprep.subr.bf16.mxu0 0
  %2622 = vmatpush2.bf16.msra.mxu0 %v150
  %2623 = vmatprep.mubr.bf16.mxu0 %v2588
  %2624 = vmatmul.mubr.bf16.gmra.mxu0 %v2587
  %v2625 = vpop.f32.mrf.mxu0
  %v2626 = vadd.f32 0.0, %v2625
  %v2627 = vpop.f32.mrf.mxu0
  %v2628 = vpop.f32.mrf.mxu0
  %v2629 = vadd.f32 0.0, %v2628
  %v2630 = vpop.f32.mrf.mxu0
  %2631 = vdwg.mxu0
  %v2632 = vmax.f32 %v2576, %v2626
  %v2633 = vmax.f32 %v2577, %v2629
  %v2634 = vadd.f32 %v2632, %v387
  %v2635 = vadd.f32 %v2633, %v387
  %v2636 = vmax.f32 %v2634, 0.0
  %v2637 = vmax.f32 %v2635, 0.0
  %v2638 = vpack.c.bf16 %v2637, %v2636
  %v2639 = vld [vmem:[%s3 + $0x40] sm:$0xf]
  %v2640 = vld [vmem:[%s3 + $0x44] sm:$0xf]
  %v2643 = vunpack.c.l.b16 %v2639
  %v2644 = vunpack.c.l.b16 %v2640
  %v2645 = vpack.c.b16 %v2644, %v2643
  %v2648 = vsel %vm631, %v2638, 0
  %2650 = vmatprep.subr.bf16.mxu0 0
  %2651 = vmatpush1.bf16.msra.mxu0 0
  %2652 = vmatprep.subr.bf16.mxu0 0
  %2653 = vmatpush1.bf16.msra.mxu0 0
  %2654 = vmatprep.subr.bf16.mxu0 0
  %2655 = vmatpush1.bf16.msra.mxu0 0
  %2656 = vmatprep.subr.bf16.mxu0 0
  %2657 = vmatpush1.bf16.msra.mxu0 0
  %2658 = vmatprep.subr.bf16.mxu0 0
  %2659 = vmatpush1.bf16.msra.mxu0 0
  %2660 = vmatprep.subr.bf16.mxu0 0
  %2661 = vmatpush1.bf16.msra.mxu0 0
  %2662 = vmatprep.subr.bf16.mxu0 0
  %2663 = vmatpush1.bf16.msra.mxu0 0
  %2664 = vmatprep.subr.bf16.mxu0 0
  %2665 = vmatpush1.bf16.msra.mxu0 %v2645
  %2666 = vmatprep.subr.bf16.mxu0 0
  %2667 = vmatpush2.bf16.msra.mxu0 0
  %2668 = vmatprep.subr.bf16.mxu0 0
  %2669 = vmatpush2.bf16.msra.mxu0 0
  %2670 = vmatprep.subr.bf16.mxu0 0
  %2671 = vmatpush2.bf16.msra.mxu0 0
  %2672 = vmatprep.subr.bf16.mxu0 0
  %2673 = vmatpush2.bf16.msra.mxu0 0
  %2674 = vmatprep.subr.bf16.mxu0 0
  %2675 = vmatpush2.bf16.msra.mxu0 0
  %2676 = vmatprep.subr.bf16.mxu0 0
  %2677 = vmatpush2.bf16.msra.mxu0 0
  %2678 = vmatprep.subr.bf16.mxu0 0
  %2679 = vmatpush2.bf16.msra.mxu0 0
  %2680 = vmatprep.subr.bf16.mxu0 0
  %2681 = vmatpush2.bf16.msra.mxu0 0
  %2682 = vmatprep.mubr.bf16.mxu0 0
  %2683 = vmatmul.mubr.bf16.gmra.mxu0 %v2648
  %v2684 = vpop.f32.mrf.mxu0
  %v2685 = vadd.f32 0.0, %v2684
  %v2686 = vpop.f32.mrf.mxu0
  %v2687 = vpop.f32.mrf.mxu0
  %v2688 = vadd.f32 0.0, %v2687
  %v2689 = vpop.f32.mrf.mxu0
  %2690 = vdwg.mxu0
  %v2691 = vadd.f32 %v2410, %v2685
  %v2692 = vadd.f32 %v2411, %v2688
  %s2693 = scalar_lea.vmem %s0, 144
  %v2694 = vld [vmem:[%s2693] sm:$0xff]
  %v2695 = vld [vmem:[%s2693 + $0x8] sm:$0xff]
  %v2698 = vunpack.c.l.b16 %v2694
  %v2699 = vunpack.c.h.b16 %v2694
  %v2700 = vunpack.c.l.b16 %v2695
  %v2701 = vunpack.c.h.b16 %v2695
  %v2702 = vpack.c.b16 %v2700, %v2698
  %v2703 = vpack.c.b16 %v2701, %v2699
  %2706 = vmatprep.subr.bf16.mxu0 0
  %2707 = vmatpush1.bf16.msra.mxu0 %v149
  %2708 = vmatprep.subr.bf16.mxu0 0
  %2709 = vmatpush1.bf16.msra.mxu0 %v148
  %2710 = vmatprep.subr.bf16.mxu0 0
  %2711 = vmatpush1.bf16.msra.mxu0 %v147
  %2712 = vmatprep.subr.bf16.mxu0 0
  %2713 = vmatpush1.bf16.msra.mxu0 %v146
  %2714 = vmatprep.subr.bf16.mxu0 0
  %2715 = vmatpush1.bf16.msra.mxu0 %v145
  %2716 = vmatprep.subr.bf16.mxu0 0
  %2717 = vmatpush1.bf16.msra.mxu0 %v144
  %2718 = vmatprep.subr.bf16.mxu0 0
  %2719 = vmatpush1.bf16.msra.mxu0 %v143
  %2720 = vmatprep.subr.bf16.mxu0 0
  %2721 = vmatpush1.bf16.msra.mxu0 %v142
  %2722 = vmatprep.subr.bf16.mxu0 0
  %2723 = vmatpush2.bf16.msra.mxu0 %v157
  %2724 = vmatprep.subr.bf16.mxu0 0
  %2725 = vmatpush2.bf16.msra.mxu0 %v156
  %2726 = vmatprep.subr.bf16.mxu0 0
  %2727 = vmatpush2.bf16.msra.mxu0 %v155
  %2728 = vmatprep.subr.bf16.mxu0 0
  %2729 = vmatpush2.bf16.msra.mxu0 %v154
  %2730 = vmatprep.subr.bf16.mxu0 0
  %2731 = vmatpush2.bf16.msra.mxu0 %v153
  %2732 = vmatprep.subr.bf16.mxu0 0
  %2733 = vmatpush2.bf16.msra.mxu0 %v152
  %2734 = vmatprep.subr.bf16.mxu0 0
  %2735 = vmatpush2.bf16.msra.mxu0 %v151
  %2736 = vmatprep.subr.bf16.mxu0 0
  %2737 = vmatpush2.bf16.msra.mxu0 %v150
  %2738 = vmatprep.mubr.bf16.mxu0 %v2703
  %2739 = vmatmul.mubr.bf16.gmra.mxu0 %v2702
  %v2740 = vpop.f32.mrf.mxu0
  %v2741 = vadd.f32 0.0, %v2740
  %v2742 = vpop.f32.mrf.mxu0
  %v2743 = vpop.f32.mrf.mxu0
  %v2744 = vadd.f32 0.0, %v2743
  %v2745 = vpop.f32.mrf.mxu0
  %2746 = vdwg.mxu0
  %s2747 = scalar_lea.vmem %s0, 544
  %v2748 = vld [vmem:[%s2747] sm:$0xff]
  %v2749 = vld [vmem:[%s2747 + $0x8] sm:$0xff]
  %v2752 = vunpack.c.l.b16 %v2748
  %v2753 = vunpack.c.h.b16 %v2748
  %v2754 = vunpack.c.l.b16 %v2749
  %v2755 = vunpack.c.h.b16 %v2749
  %v2756 = vpack.c.b16 %v2754, %v2752
  %v2757 = vpack.c.b16 %v2755, %v2753
  %2760 = vmatprep.subr.bf16.mxu0 0
  %2761 = vmatpush1.bf16.msra.mxu0 %v149
  %2762 = vmatprep.subr.bf16.mxu0 0
  %2763 = vmatpush1.bf16.msra.mxu0 %v148
  %2764 = vmatprep.subr.bf16.mxu0 0
  %2765 = vmatpush1.bf16.msra.mxu0 %v147
  %2766 = vmatprep.subr.bf16.mxu0 0
  %2767 = vmatpush1.bf16.msra.mxu0 %v146
  %2768 = vmatprep.subr.bf16.mxu0 0
  %2769 = vmatpush1.bf16.msra.mxu0 %v145
  %2770 = vmatprep.subr.bf16.mxu0 0
  %2771 = vmatpush1.bf16.msra.mxu0 %v144
  %2772 = vmatprep.subr.bf16.mxu0 0
  %2773 = vmatpush1.bf16.msra.mxu0 %v143
  %2774 = vmatprep.subr.bf16.mxu0 0
  %2775 = vmatpush1.bf16.msra.mxu0 %v142
  %2776 = vmatprep.subr.bf16.mxu0 0
  %2777 = vmatpush2.bf16.msra.mxu0 %v157
  %2778 = vmatprep.subr.bf16.mxu0 0
  %2779 = vmatpush2.bf16.msra.mxu0 %v156
  %2780 = vmatprep.subr.bf16.mxu0 0
  %2781 = vmatpush2.bf16.msra.mxu0 %v155
  %2782 = vmatprep.subr.bf16.mxu0 0
  %2783 = vmatpush2.bf16.msra.mxu0 %v154
  %2784 = vmatprep.subr.bf16.mxu0 0
  %2785 = vmatpush2.bf16.msra.mxu0 %v153
  %2786 = vmatprep.subr.bf16.mxu0 0
  %2787 = vmatpush2.bf16.msra.mxu0 %v152
  %2788 = vmatprep.subr.bf16.mxu0 0
  %2789 = vmatpush2.bf16.msra.mxu0 %v151
  %2790 = vmatprep.subr.bf16.mxu0 0
  %2791 = vmatpush2.bf16.msra.mxu0 %v150
  %2792 = vmatprep.mubr.bf16.mxu0 %v2757
  %2793 = vmatmul.mubr.bf16.gmra.mxu0 %v2756
  %v2794 = vpop.f32.mrf.mxu0
  %v2795 = vadd.f32 0.0, %v2794
  %v2796 = vpop.f32.mrf.mxu0
  %v2797 = vpop.f32.mrf.mxu0
  %v2798 = vadd.f32 0.0, %v2797
  %v2799 = vpop.f32.mrf.mxu0
  %2800 = vdwg.mxu0
  %v2801 = vmax.f32 %v2741, %v2795
  %v2802 = vmax.f32 %v2744, %v2798
  %s2803 = scalar_lea.vmem %s0, 944
  %v2804 = vld [vmem:[%s2803] sm:$0xff]
  %v2805 = vld [vmem:[%s2803 + $0x8] sm:$0xff]
  %v2808 = vunpack.c.l.b16 %v2804
  %v2809 = vunpack.c.h.b16 %v2804
  %v2810 = vunpack.c.l.b16 %v2805
  %v2811 = vunpack.c.h.b16 %v2805
  %v2812 = vpack.c.b16 %v2810, %v2808
  %v2813 = vpack.c.b16 %v2811, %v2809
  %2816 = vmatprep.subr.bf16.mxu0 0
  %2817 = vmatpush1.bf16.msra.mxu0 %v149
  %2818 = vmatprep.subr.bf16.mxu0 0
  %2819 = vmatpush1.bf16.msra.mxu0 %v148
  %2820 = vmatprep.subr.bf16.mxu0 0
  %2821 = vmatpush1.bf16.msra.mxu0 %v147
  %2822 = vmatprep.subr.bf16.mxu0 0
  %2823 = vmatpush1.bf16.msra.mxu0 %v146
  %2824 = vmatprep.subr.bf16.mxu0 0
  %2825 = vmatpush1.bf16.msra.mxu0 %v145
  %2826 = vmatprep.subr.bf16.mxu0 0
  %2827 = vmatpush1.bf16.msra.mxu0 %v144
  %2828 = vmatprep.subr.bf16.mxu0 0
  %2829 = vmatpush1.bf16.msra.mxu0 %v143
  %2830 = vmatprep.subr.bf16.mxu0 0
  %2831 = vmatpush1.bf16.msra.mxu0 %v142
  %2832 = vmatprep.subr.bf16.mxu0 0
  %2833 = vmatpush2.bf16.msra.mxu0 %v157
  %2834 = vmatprep.subr.bf16.mxu0 0
  %2835 = vmatpush2.bf16.msra.mxu0 %v156
  %2836 = vmatprep.subr.bf16.mxu0 0
  %2837 = vmatpush2.bf16.msra.mxu0 %v155
  %2838 = vmatprep.subr.bf16.mxu0 0
  %2839 = vmatpush2.bf16.msra.mxu0 %v154
  %2840 = vmatprep.subr.bf16.mxu0 0
  %2841 = vmatpush2.bf16.msra.mxu0 %v153
  %2842 = vmatprep.subr.bf16.mxu0 0
  %2843 = vmatpush2.bf16.msra.mxu0 %v152
  %2844 = vmatprep.subr.bf16.mxu0 0
  %2845 = vmatpush2.bf16.msra.mxu0 %v151
  %2846 = vmatprep.subr.bf16.mxu0 0
  %2847 = vmatpush2.bf16.msra.mxu0 %v150
  %2848 = vmatprep.mubr.bf16.mxu0 %v2813
  %2849 = vmatmul.mubr.bf16.gmra.mxu0 %v2812
  %v2850 = vpop.f32.mrf.mxu0
  %v2851 = vadd.f32 0.0, %v2850
  %v2852 = vpop.f32.mrf.mxu0
  %v2853 = vpop.f32.mrf.mxu0
  %v2854 = vadd.f32 0.0, %v2853
  %v2855 = vpop.f32.mrf.mxu0
  %2856 = vdwg.mxu0
  %v2857 = vmax.f32 %v2801, %v2851
  %v2858 = vmax.f32 %v2802, %v2854
  %s2859 = scalar_lea.vmem %s0, 1344
  %v2860 = vld [vmem:[%s2859] sm:$0xff]
  %v2861 = vld [vmem:[%s2859 + $0x8] sm:$0xff]
  %v2864 = vunpack.c.l.b16 %v2860
  %v2865 = vunpack.c.h.b16 %v2860
  %v2866 = vunpack.c.l.b16 %v2861
  %v2867 = vunpack.c.h.b16 %v2861
  %v2868 = vpack.c.b16 %v2866, %v2864
  %v2869 = vpack.c.b16 %v2867, %v2865
  %2872 = vmatprep.subr.bf16.mxu0 0
  %2873 = vmatpush1.bf16.msra.mxu0 %v149
  %2874 = vmatprep.subr.bf16.mxu0 0
  %2875 = vmatpush1.bf16.msra.mxu0 %v148
  %2876 = vmatprep.subr.bf16.mxu0 0
  %2877 = vmatpush1.bf16.msra.mxu0 %v147
  %2878 = vmatprep.subr.bf16.mxu0 0
  %2879 = vmatpush1.bf16.msra.mxu0 %v146
  %2880 = vmatprep.subr.bf16.mxu0 0
  %2881 = vmatpush1.bf16.msra.mxu0 %v145
  %2882 = vmatprep.subr.bf16.mxu0 0
  %2883 = vmatpush1.bf16.msra.mxu0 %v144
  %2884 = vmatprep.subr.bf16.mxu0 0
  %2885 = vmatpush1.bf16.msra.mxu0 %v143
  %2886 = vmatprep.subr.bf16.mxu0 0
  %2887 = vmatpush1.bf16.msra.mxu0 %v142
  %2888 = vmatprep.subr.bf16.mxu0 0
  %2889 = vmatpush2.bf16.msra.mxu0 %v157
  %2890 = vmatprep.subr.bf16.mxu0 0
  %2891 = vmatpush2.bf16.msra.mxu0 %v156
  %2892 = vmatprep.subr.bf16.mxu0 0
  %2893 = vmatpush2.bf16.msra.mxu0 %v155
  %2894 = vmatprep.subr.bf16.mxu0 0
  %2895 = vmatpush2.bf16.msra.mxu0 %v154
  %2896 = vmatprep.subr.bf16.mxu0 0
  %2897 = vmatpush2.bf16.msra.mxu0 %v153
  %2898 = vmatprep.subr.bf16.mxu0 0
  %2899 = vmatpush2.bf16.msra.mxu0 %v152
  %2900 = vmatprep.subr.bf16.mxu0 0
  %2901 = vmatpush2.bf16.msra.mxu0 %v151
  %2902 = vmatprep.subr.bf16.mxu0 0
  %2903 = vmatpush2.bf16.msra.mxu0 %v150
  %2904 = vmatprep.mubr.bf16.mxu0 %v2869
  %2905 = vmatmul.mubr.bf16.gmra.mxu0 %v2868
  %v2906 = vpop.f32.mrf.mxu0
  %v2907 = vadd.f32 0.0, %v2906
  %v2908 = vpop.f32.mrf.mxu0
  %v2909 = vpop.f32.mrf.mxu0
  %v2910 = vadd.f32 0.0, %v2909
  %v2911 = vpop.f32.mrf.mxu0
  %2912 = vdwg.mxu0
  %v2913 = vmax.f32 %v2857, %v2907
  %v2914 = vmax.f32 %v2858, %v2910
  %v2915 = vadd.f32 %v2913, %v387
  %v2916 = vadd.f32 %v2914, %v387
  %v2917 = vmax.f32 %v2915, 0.0
  %v2918 = vmax.f32 %v2916, 0.0
  %v2919 = vpack.c.bf16 %v2918, %v2917
  %v2920 = vld [vmem:[%s3 + $0x48] sm:$0xf]
  %v2921 = vld [vmem:[%s3 + $0x4c] sm:$0xf]
  %v2924 = vunpack.c.l.b16 %v2920
  %v2925 = vunpack.c.l.b16 %v2921
  %v2926 = vpack.c.b16 %v2925, %v2924
  %v2929 = vsel %vm631, %v2919, 0
  %2931 = vmatprep.subr.bf16.mxu0 0
  %2932 = vmatpush1.bf16.msra.mxu0 0
  %2933 = vmatprep.subr.bf16.mxu0 0
  %2934 = vmatpush1.bf16.msra.mxu0 0
  %2935 = vmatprep.subr.bf16.mxu0 0
  %2936 = vmatpush1.bf16.msra.mxu0 0
  %2937 = vmatprep.subr.bf16.mxu0 0
  %2938 = vmatpush1.bf16.msra.mxu0 0
  %2939 = vmatprep.subr.bf16.mxu0 0
  %2940 = vmatpush1.bf16.msra.mxu0 0
  %2941 = vmatprep.subr.bf16.mxu0 0
  %2942 = vmatpush1.bf16.msra.mxu0 0
  %2943 = vmatprep.subr.bf16.mxu0 0
  %2944 = vmatpush1.bf16.msra.mxu0 0
  %2945 = vmatprep.subr.bf16.mxu0 0
  %2946 = vmatpush1.bf16.msra.mxu0 %v2926
  %2947 = vmatprep.subr.bf16.mxu0 0
  %2948 = vmatpush2.bf16.msra.mxu0 0
  %2949 = vmatprep.subr.bf16.mxu0 0
  %2950 = vmatpush2.bf16.msra.mxu0 0
  %2951 = vmatprep.subr.bf16.mxu0 0
  %2952 = vmatpush2.bf16.msra.mxu0 0
  %2953 = vmatprep.subr.bf16.mxu0 0
  %2954 = vmatpush2.bf16.msra.mxu0 0
  %2955 = vmatprep.subr.bf16.mxu0 0
  %2956 = vmatpush2.bf16.msra.mxu0 0
  %2957 = vmatprep.subr.bf16.mxu0 0
  %2958 = vmatpush2.bf16.msra.mxu0 0
  %2959 = vmatprep.subr.bf16.mxu0 0
  %2960 = vmatpush2.bf16.msra.mxu0 0
  %2961 = vmatprep.subr.bf16.mxu0 0
  %2962 = vmatpush2.bf16.msra.mxu0 0
  %2963 = vmatprep.mubr.bf16.mxu0 0
  %2964 = vmatmul.mubr.bf16.gmra.mxu0 %v2929
  %v2965 = vpop.f32.mrf.mxu0
  %v2966 = vadd.f32 0.0, %v2965
  %v2967 = vpop.f32.mrf.mxu0
  %v2968 = vpop.f32.mrf.mxu0
  %v2969 = vadd.f32 0.0, %v2968
  %v2970 = vpop.f32.mrf.mxu0
  %2971 = vdwg.mxu0
  %v2972 = vadd.f32 %v2691, %v2966
  %v2973 = vadd.f32 %v2692, %v2969
  %s2974 = scalar_lea.vmem %s0, 160
  %v2975 = vld [vmem:[%s2974] sm:$0xff]
  %v2976 = vld [vmem:[%s2974 + $0x8] sm:$0xff]
  %v2979 = vunpack.c.l.b16 %v2975
  %v2980 = vunpack.c.h.b16 %v2975
  %v2981 = vunpack.c.l.b16 %v2976
  %v2982 = vunpack.c.h.b16 %v2976
  %v2983 = vpack.c.b16 %v2981, %v2979
  %v2984 = vpack.c.b16 %v2982, %v2980
  %2987 = vmatprep.subr.bf16.mxu0 0
  %2988 = vmatpush1.bf16.msra.mxu0 %v149
  %2989 = vmatprep.subr.bf16.mxu0 0
  %2990 = vmatpush1.bf16.msra.mxu0 %v148
  %2991 = vmatprep.subr.bf16.mxu0 0
  %2992 = vmatpush1.bf16.msra.mxu0 %v147
  %2993 = vmatprep.subr.bf16.mxu0 0
  %2994 = vmatpush1.bf16.msra.mxu0 %v146
  %2995 = vmatprep.subr.bf16.mxu0 0
  %2996 = vmatpush1.bf16.msra.mxu0 %v145
  %2997 = vmatprep.subr.bf16.mxu0 0
  %2998 = vmatpush1.bf16.msra.mxu0 %v144
  %2999 = vmatprep.subr.bf16.mxu0 0
  %3000 = vmatpush1.bf16.msra.mxu0 %v143
  %3001 = vmatprep.subr.bf16.mxu0 0
  %3002 = vmatpush1.bf16.msra.mxu0 %v142
  %3003 = vmatprep.subr.bf16.mxu0 0
  %3004 = vmatpush2.bf16.msra.mxu0 %v157
  %3005 = vmatprep.subr.bf16.mxu0 0
  %3006 = vmatpush2.bf16.msra.mxu0 %v156
  %3007 = vmatprep.subr.bf16.mxu0 0
  %3008 = vmatpush2.bf16.msra.mxu0 %v155
  %3009 = vmatprep.subr.bf16.mxu0 0
  %3010 = vmatpush2.bf16.msra.mxu0 %v154
  %3011 = vmatprep.subr.bf16.mxu0 0
  %3012 = vmatpush2.bf16.msra.mxu0 %v153
  %3013 = vmatprep.subr.bf16.mxu0 0
  %3014 = vmatpush2.bf16.msra.mxu0 %v152
  %3015 = vmatprep.subr.bf16.mxu0 0
  %3016 = vmatpush2.bf16.msra.mxu0 %v151
  %3017 = vmatprep.subr.bf16.mxu0 0
  %3018 = vmatpush2.bf16.msra.mxu0 %v150
  %3019 = vmatprep.mubr.bf16.mxu0 %v2984
  %3020 = vmatmul.mubr.bf16.gmra.mxu0 %v2983
  %v3021 = vpop.f32.mrf.mxu0
  %v3022 = vadd.f32 0.0, %v3021
  %v3023 = vpop.f32.mrf.mxu0
  %v3024 = vpop.f32.mrf.mxu0
  %v3025 = vadd.f32 0.0, %v3024
  %v3026 = vpop.f32.mrf.mxu0
  %3027 = vdwg.mxu0
  %s3028 = scalar_lea.vmem %s0, 560
  %v3029 = vld [vmem:[%s3028] sm:$0xff]
  %v3030 = vld [vmem:[%s3028 + $0x8] sm:$0xff]
  %v3033 = vunpack.c.l.b16 %v3029
  %v3034 = vunpack.c.h.b16 %v3029
  %v3035 = vunpack.c.l.b16 %v3030
  %v3036 = vunpack.c.h.b16 %v3030
  %v3037 = vpack.c.b16 %v3035, %v3033
  %v3038 = vpack.c.b16 %v3036, %v3034
  %3041 = vmatprep.subr.bf16.mxu0 0
  %3042 = vmatpush1.bf16.msra.mxu0 %v149
  %3043 = vmatprep.subr.bf16.mxu0 0
  %3044 = vmatpush1.bf16.msra.mxu0 %v148
  %3045 = vmatprep.subr.bf16.mxu0 0
  %3046 = vmatpush1.bf16.msra.mxu0 %v147
  %3047 = vmatprep.subr.bf16.mxu0 0
  %3048 = vmatpush1.bf16.msra.mxu0 %v146
  %3049 = vmatprep.subr.bf16.mxu0 0
  %3050 = vmatpush1.bf16.msra.mxu0 %v145
  %3051 = vmatprep.subr.bf16.mxu0 0
  %3052 = vmatpush1.bf16.msra.mxu0 %v144
  %3053 = vmatprep.subr.bf16.mxu0 0
  %3054 = vmatpush1.bf16.msra.mxu0 %v143
  %3055 = vmatprep.subr.bf16.mxu0 0
  %3056 = vmatpush1.bf16.msra.mxu0 %v142
  %3057 = vmatprep.subr.bf16.mxu0 0
  %3058 = vmatpush2.bf16.msra.mxu0 %v157
  %3059 = vmatprep.subr.bf16.mxu0 0
  %3060 = vmatpush2.bf16.msra.mxu0 %v156
  %3061 = vmatprep.subr.bf16.mxu0 0
  %3062 = vmatpush2.bf16.msra.mxu0 %v155
  %3063 = vmatprep.subr.bf16.mxu0 0
  %3064 = vmatpush2.bf16.msra.mxu0 %v154
  %3065 = vmatprep.subr.bf16.mxu0 0
  %3066 = vmatpush2.bf16.msra.mxu0 %v153
  %3067 = vmatprep.subr.bf16.mxu0 0
  %3068 = vmatpush2.bf16.msra.mxu0 %v152
  %3069 = vmatprep.subr.bf16.mxu0 0
  %3070 = vmatpush2.bf16.msra.mxu0 %v151
  %3071 = vmatprep.subr.bf16.mxu0 0
  %3072 = vmatpush2.bf16.msra.mxu0 %v150
  %3073 = vmatprep.mubr.bf16.mxu0 %v3038
  %3074 = vmatmul.mubr.bf16.gmra.mxu0 %v3037
  %v3075 = vpop.f32.mrf.mxu0
  %v3076 = vadd.f32 0.0, %v3075
  %v3077 = vpop.f32.mrf.mxu0
  %v3078 = vpop.f32.mrf.mxu0
  %v3079 = vadd.f32 0.0, %v3078
  %v3080 = vpop.f32.mrf.mxu0
  %3081 = vdwg.mxu0
  %v3082 = vmax.f32 %v3022, %v3076
  %v3083 = vmax.f32 %v3025, %v3079
  %s3084 = scalar_lea.vmem %s0, 960
  %v3085 = vld [vmem:[%s3084] sm:$0xff]
  %v3086 = vld [vmem:[%s3084 + $0x8] sm:$0xff]
  %v3089 = vunpack.c.l.b16 %v3085
  %v3090 = vunpack.c.h.b16 %v3085
  %v3091 = vunpack.c.l.b16 %v3086
  %v3092 = vunpack.c.h.b16 %v3086
  %v3093 = vpack.c.b16 %v3091, %v3089
  %v3094 = vpack.c.b16 %v3092, %v3090
  %3097 = vmatprep.subr.bf16.mxu0 0
  %3098 = vmatpush1.bf16.msra.mxu0 %v149
  %3099 = vmatprep.subr.bf16.mxu0 0
  %3100 = vmatpush1.bf16.msra.mxu0 %v148
  %3101 = vmatprep.subr.bf16.mxu0 0
  %3102 = vmatpush1.bf16.msra.mxu0 %v147
  %3103 = vmatprep.subr.bf16.mxu0 0
  %3104 = vmatpush1.bf16.msra.mxu0 %v146
  %3105 = vmatprep.subr.bf16.mxu0 0
  %3106 = vmatpush1.bf16.msra.mxu0 %v145
  %3107 = vmatprep.subr.bf16.mxu0 0
  %3108 = vmatpush1.bf16.msra.mxu0 %v144
  %3109 = vmatprep.subr.bf16.mxu0 0
  %3110 = vmatpush1.bf16.msra.mxu0 %v143
  %3111 = vmatprep.subr.bf16.mxu0 0
  %3112 = vmatpush1.bf16.msra.mxu0 %v142
  %3113 = vmatprep.subr.bf16.mxu0 0
  %3114 = vmatpush2.bf16.msra.mxu0 %v157
  %3115 = vmatprep.subr.bf16.mxu0 0
  %3116 = vmatpush2.bf16.msra.mxu0 %v156
  %3117 = vmatprep.subr.bf16.mxu0 0
  %3118 = vmatpush2.bf16.msra.mxu0 %v155
  %3119 = vmatprep.subr.bf16.mxu0 0
  %3120 = vmatpush2.bf16.msra.mxu0 %v154
  %3121 = vmatprep.subr.bf16.mxu0 0
  %3122 = vmatpush2.bf16.msra.mxu0 %v153
  %3123 = vmatprep.subr.bf16.mxu0 0
  %3124 = vmatpush2.bf16.msra.mxu0 %v152
  %3125 = vmatprep.subr.bf16.mxu0 0
  %3126 = vmatpush2.bf16.msra.mxu0 %v151
  %3127 = vmatprep.subr.bf16.mxu0 0
  %3128 = vmatpush2.bf16.msra.mxu0 %v150
  %3129 = vmatprep.mubr.bf16.mxu0 %v3094
  %3130 = vmatmul.mubr.bf16.gmra.mxu0 %v3093
  %v3131 = vpop.f32.mrf.mxu0
  %v3132 = vadd.f32 0.0, %v3131
  %v3133 = vpop.f32.mrf.mxu0
  %v3134 = vpop.f32.mrf.mxu0
  %v3135 = vadd.f32 0.0, %v3134
  %v3136 = vpop.f32.mrf.mxu0
  %3137 = vdwg.mxu0
  %v3138 = vmax.f32 %v3082, %v3132
  %v3139 = vmax.f32 %v3083, %v3135
  %s3140 = scalar_lea.vmem %s0, 1360
  %v3141 = vld [vmem:[%s3140] sm:$0xff]
  %v3142 = vld [vmem:[%s3140 + $0x8] sm:$0xff]
  %v3145 = vunpack.c.l.b16 %v3141
  %v3146 = vunpack.c.h.b16 %v3141
  %v3147 = vunpack.c.l.b16 %v3142
  %v3148 = vunpack.c.h.b16 %v3142
  %v3149 = vpack.c.b16 %v3147, %v3145
  %v3150 = vpack.c.b16 %v3148, %v3146
  %3153 = vmatprep.subr.bf16.mxu0 0
  %3154 = vmatpush1.bf16.msra.mxu0 %v149
  %3155 = vmatprep.subr.bf16.mxu0 0
  %3156 = vmatpush1.bf16.msra.mxu0 %v148
  %3157 = vmatprep.subr.bf16.mxu0 0
  %3158 = vmatpush1.bf16.msra.mxu0 %v147
  %3159 = vmatprep.subr.bf16.mxu0 0
  %3160 = vmatpush1.bf16.msra.mxu0 %v146
  %3161 = vmatprep.subr.bf16.mxu0 0
  %3162 = vmatpush1.bf16.msra.mxu0 %v145
  %3163 = vmatprep.subr.bf16.mxu0 0
  %3164 = vmatpush1.bf16.msra.mxu0 %v144
  %3165 = vmatprep.subr.bf16.mxu0 0
  %3166 = vmatpush1.bf16.msra.mxu0 %v143
  %3167 = vmatprep.subr.bf16.mxu0 0
  %3168 = vmatpush1.bf16.msra.mxu0 %v142
  %3169 = vmatprep.subr.bf16.mxu0 0
  %3170 = vmatpush2.bf16.msra.mxu0 %v157
  %3171 = vmatprep.subr.bf16.mxu0 0
  %3172 = vmatpush2.bf16.msra.mxu0 %v156
  %3173 = vmatprep.subr.bf16.mxu0 0
  %3174 = vmatpush2.bf16.msra.mxu0 %v155
  %3175 = vmatprep.subr.bf16.mxu0 0
  %3176 = vmatpush2.bf16.msra.mxu0 %v154
  %3177 = vmatprep.subr.bf16.mxu0 0
  %3178 = vmatpush2.bf16.msra.mxu0 %v153
  %3179 = vmatprep.subr.bf16.mxu0 0
  %3180 = vmatpush2.bf16.msra.mxu0 %v152
  %3181 = vmatprep.subr.bf16.mxu0 0
  %3182 = vmatpush2.bf16.msra.mxu0 %v151
  %3183 = vmatprep.subr.bf16.mxu0 0
  %3184 = vmatpush2.bf16.msra.mxu0 %v150
  %3185 = vmatprep.mubr.bf16.mxu0 %v3150
  %3186 = vmatmul.mubr.bf16.gmra.mxu0 %v3149
  %v3187 = vpop.f32.mrf.mxu0
  %v3188 = vadd.f32 0.0, %v3187
  %v3189 = vpop.f32.mrf.mxu0
  %v3190 = vpop.f32.mrf.mxu0
  %v3191 = vadd.f32 0.0, %v3190
  %v3192 = vpop.f32.mrf.mxu0
  %3193 = vdwg.mxu0
  %v3194 = vmax.f32 %v3138, %v3188
  %v3195 = vmax.f32 %v3139, %v3191
  %v3196 = vadd.f32 %v3194, %v387
  %v3197 = vadd.f32 %v3195, %v387
  %v3198 = vmax.f32 %v3196, 0.0
  %v3199 = vmax.f32 %v3197, 0.0
  %v3200 = vpack.c.bf16 %v3199, %v3198
  %v3201 = vld [vmem:[%s3 + $0x50] sm:$0xf]
  %v3202 = vld [vmem:[%s3 + $0x54] sm:$0xf]
  %v3205 = vunpack.c.l.b16 %v3201
  %v3206 = vunpack.c.l.b16 %v3202
  %v3207 = vpack.c.b16 %v3206, %v3205
  %v3210 = vsel %vm631, %v3200, 0
  %3212 = vmatprep.subr.bf16.mxu0 0
  %3213 = vmatpush1.bf16.msra.mxu0 0
  %3214 = vmatprep.subr.bf16.mxu0 0
  %3215 = vmatpush1.bf16.msra.mxu0 0
  %3216 = vmatprep.subr.bf16.mxu0 0
  %3217 = vmatpush1.bf16.msra.mxu0 0
  %3218 = vmatprep.subr.bf16.mxu0 0
  %3219 = vmatpush1.bf16.msra.mxu0 0
  %3220 = vmatprep.subr.bf16.mxu0 0
  %3221 = vmatpush1.bf16.msra.mxu0 0
  %3222 = vmatprep.subr.bf16.mxu0 0
  %3223 = vmatpush1.bf16.msra.mxu0 0
  %3224 = vmatprep.subr.bf16.mxu0 0
  %3225 = vmatpush1.bf16.msra.mxu0 0
  %3226 = vmatprep.subr.bf16.mxu0 0
  %3227 = vmatpush1.bf16.msra.mxu0 %v3207
  %3228 = vmatprep.subr.bf16.mxu0 0
  %3229 = vmatpush2.bf16.msra.mxu0 0
  %3230 = vmatprep.subr.bf16.mxu0 0
  %3231 = vmatpush2.bf16.msra.mxu0 0
  %3232 = vmatprep.subr.bf16.mxu0 0
  %3233 = vmatpush2.bf16.msra.mxu0 0
  %3234 = vmatprep.subr.bf16.mxu0 0
  %3235 = vmatpush2.bf16.msra.mxu0 0
  %3236 = vmatprep.subr.bf16.mxu0 0
  %3237 = vmatpush2.bf16.msra.mxu0 0
  %3238 = vmatprep.subr.bf16.mxu0 0
  %3239 = vmatpush2.bf16.msra.mxu0 0
  %3240 = vmatprep.subr.bf16.mxu0 0
  %3241 = vmatpush2.bf16.msra.mxu0 0
  %3242 = vmatprep.subr.bf16.mxu0 0
  %3243 = vmatpush2.bf16.msra.mxu0 0
  %3244 = vmatprep.mubr.bf16.mxu0 0
  %3245 = vmatmul.mubr.bf16.gmra.mxu0 %v3210
  %v3246 = vpop.f32.mrf.mxu0
  %v3247 = vadd.f32 0.0, %v3246
  %v3248 = vpop.f32.mrf.mxu0
  %v3249 = vpop.f32.mrf.mxu0
  %v3250 = vadd.f32 0.0, %v3249
  %v3251 = vpop.f32.mrf.mxu0
  %3252 = vdwg.mxu0
  %v3253 = vadd.f32 %v2972, %v3247
  %v3254 = vadd.f32 %v2973, %v3250
  %s3255 = scalar_lea.vmem %s0, 176
  %v3256 = vld [vmem:[%s3255] sm:$0xff]
  %v3257 = vld [vmem:[%s3255 + $0x8] sm:$0xff]
  %v3260 = vunpack.c.l.b16 %v3256
  %v3261 = vunpack.c.h.b16 %v3256
  %v3262 = vunpack.c.l.b16 %v3257
  %v3263 = vunpack.c.h.b16 %v3257
  %v3264 = vpack.c.b16 %v3262, %v3260
  %v3265 = vpack.c.b16 %v3263, %v3261
  %3268 = vmatprep.subr.bf16.mxu0 0
  %3269 = vmatpush1.bf16.msra.mxu0 %v149
  %3270 = vmatprep.subr.bf16.mxu0 0
  %3271 = vmatpush1.bf16.msra.mxu0 %v148
  %3272 = vmatprep.subr.bf16.mxu0 0
  %3273 = vmatpush1.bf16.msra.mxu0 %v147
  %3274 = vmatprep.subr.bf16.mxu0 0
  %3275 = vmatpush1.bf16.msra.mxu0 %v146
  %3276 = vmatprep.subr.bf16.mxu0 0
  %3277 = vmatpush1.bf16.msra.mxu0 %v145
  %3278 = vmatprep.subr.bf16.mxu0 0
  %3279 = vmatpush1.bf16.msra.mxu0 %v144
  %3280 = vmatprep.subr.bf16.mxu0 0
  %3281 = vmatpush1.bf16.msra.mxu0 %v143
  %3282 = vmatprep.subr.bf16.mxu0 0
  %3283 = vmatpush1.bf16.msra.mxu0 %v142
  %3284 = vmatprep.subr.bf16.mxu0 0
  %3285 = vmatpush2.bf16.msra.mxu0 %v157
  %3286 = vmatprep.subr.bf16.mxu0 0
  %3287 = vmatpush2.bf16.msra.mxu0 %v156
  %3288 = vmatprep.subr.bf16.mxu0 0
  %3289 = vmatpush2.bf16.msra.mxu0 %v155
  %3290 = vmatprep.subr.bf16.mxu0 0
  %3291 = vmatpush2.bf16.msra.mxu0 %v154
  %3292 = vmatprep.subr.bf16.mxu0 0
  %3293 = vmatpush2.bf16.msra.mxu0 %v153
  %3294 = vmatprep.subr.bf16.mxu0 0
  %3295 = vmatpush2.bf16.msra.mxu0 %v152
  %3296 = vmatprep.subr.bf16.mxu0 0
  %3297 = vmatpush2.bf16.msra.mxu0 %v151
  %3298 = vmatprep.subr.bf16.mxu0 0
  %3299 = vmatpush2.bf16.msra.mxu0 %v150
  %3300 = vmatprep.mubr.bf16.mxu0 %v3265
  %3301 = vmatmul.mubr.bf16.gmra.mxu0 %v3264
  %v3302 = vpop.f32.mrf.mxu0
  %v3303 = vadd.f32 0.0, %v3302
  %v3304 = vpop.f32.mrf.mxu0
  %v3305 = vpop.f32.mrf.mxu0
  %v3306 = vadd.f32 0.0, %v3305
  %v3307 = vpop.f32.mrf.mxu0
  %3308 = vdwg.mxu0
  %s3309 = scalar_lea.vmem %s0, 576
  %v3310 = vld [vmem:[%s3309] sm:$0xff]
  %v3311 = vld [vmem:[%s3309 + $0x8] sm:$0xff]
  %v3314 = vunpack.c.l.b16 %v3310
  %v3315 = vunpack.c.h.b16 %v3310
  %v3316 = vunpack.c.l.b16 %v3311
  %v3317 = vunpack.c.h.b16 %v3311
  %v3318 = vpack.c.b16 %v3316, %v3314
  %v3319 = vpack.c.b16 %v3317, %v3315
  %3322 = vmatprep.subr.bf16.mxu0 0
  %3323 = vmatpush1.bf16.msra.mxu0 %v149
  %3324 = vmatprep.subr.bf16.mxu0 0
  %3325 = vmatpush1.bf16.msra.mxu0 %v148
  %3326 = vmatprep.subr.bf16.mxu0 0
  %3327 = vmatpush1.bf16.msra.mxu0 %v147
  %3328 = vmatprep.subr.bf16.mxu0 0
  %3329 = vmatpush1.bf16.msra.mxu0 %v146
  %3330 = vmatprep.subr.bf16.mxu0 0
  %3331 = vmatpush1.bf16.msra.mxu0 %v145
  %3332 = vmatprep.subr.bf16.mxu0 0
  %3333 = vmatpush1.bf16.msra.mxu0 %v144
  %3334 = vmatprep.subr.bf16.mxu0 0
  %3335 = vmatpush1.bf16.msra.mxu0 %v143
  %3336 = vmatprep.subr.bf16.mxu0 0
  %3337 = vmatpush1.bf16.msra.mxu0 %v142
  %3338 = vmatprep.subr.bf16.mxu0 0
  %3339 = vmatpush2.bf16.msra.mxu0 %v157
  %3340 = vmatprep.subr.bf16.mxu0 0
  %3341 = vmatpush2.bf16.msra.mxu0 %v156
  %3342 = vmatprep.subr.bf16.mxu0 0
  %3343 = vmatpush2.bf16.msra.mxu0 %v155
  %3344 = vmatprep.subr.bf16.mxu0 0
  %3345 = vmatpush2.bf16.msra.mxu0 %v154
  %3346 = vmatprep.subr.bf16.mxu0 0
  %3347 = vmatpush2.bf16.msra.mxu0 %v153
  %3348 = vmatprep.subr.bf16.mxu0 0
  %3349 = vmatpush2.bf16.msra.mxu0 %v152
  %3350 = vmatprep.subr.bf16.mxu0 0
  %3351 = vmatpush2.bf16.msra.mxu0 %v151
  %3352 = vmatprep.subr.bf16.mxu0 0
  %3353 = vmatpush2.bf16.msra.mxu0 %v150
  %3354 = vmatprep.mubr.bf16.mxu0 %v3319
  %3355 = vmatmul.mubr.bf16.gmra.mxu0 %v3318
  %v3356 = vpop.f32.mrf.mxu0
  %v3357 = vadd.f32 0.0, %v3356
  %v3358 = vpop.f32.mrf.mxu0
  %v3359 = vpop.f32.mrf.mxu0
  %v3360 = vadd.f32 0.0, %v3359
  %v3361 = vpop.f32.mrf.mxu0
  %3362 = vdwg.mxu0
  %v3363 = vmax.f32 %v3303, %v3357
  %v3364 = vmax.f32 %v3306, %v3360
  %s3365 = scalar_lea.vmem %s0, 976
  %v3366 = vld [vmem:[%s3365] sm:$0xff]
  %v3367 = vld [vmem:[%s3365 + $0x8] sm:$0xff]
  %v3370 = vunpack.c.l.b16 %v3366
  %v3371 = vunpack.c.h.b16 %v3366
  %v3372 = vunpack.c.l.b16 %v3367
  %v3373 = vunpack.c.h.b16 %v3367
  %v3374 = vpack.c.b16 %v3372, %v3370
  %v3375 = vpack.c.b16 %v3373, %v3371
  %3378 = vmatprep.subr.bf16.mxu0 0
  %3379 = vmatpush1.bf16.msra.mxu0 %v149
  %3380 = vmatprep.subr.bf16.mxu0 0
  %3381 = vmatpush1.bf16.msra.mxu0 %v148
  %3382 = vmatprep.subr.bf16.mxu0 0
  %3383 = vmatpush1.bf16.msra.mxu0 %v147
  %3384 = vmatprep.subr.bf16.mxu0 0
  %3385 = vmatpush1.bf16.msra.mxu0 %v146
  %3386 = vmatprep.subr.bf16.mxu0 0
  %3387 = vmatpush1.bf16.msra.mxu0 %v145
  %3388 = vmatprep.subr.bf16.mxu0 0
  %3389 = vmatpush1.bf16.msra.mxu0 %v144
  %3390 = vmatprep.subr.bf16.mxu0 0
  %3391 = vmatpush1.bf16.msra.mxu0 %v143
  %3392 = vmatprep.subr.bf16.mxu0 0
  %3393 = vmatpush1.bf16.msra.mxu0 %v142
  %3394 = vmatprep.subr.bf16.mxu0 0
  %3395 = vmatpush2.bf16.msra.mxu0 %v157
  %3396 = vmatprep.subr.bf16.mxu0 0
  %3397 = vmatpush2.bf16.msra.mxu0 %v156
  %3398 = vmatprep.subr.bf16.mxu0 0
  %3399 = vmatpush2.bf16.msra.mxu0 %v155
  %3400 = vmatprep.subr.bf16.mxu0 0
  %3401 = vmatpush2.bf16.msra.mxu0 %v154
  %3402 = vmatprep.subr.bf16.mxu0 0
  %3403 = vmatpush2.bf16.msra.mxu0 %v153
  %3404 = vmatprep.subr.bf16.mxu0 0
  %3405 = vmatpush2.bf16.msra.mxu0 %v152
  %3406 = vmatprep.subr.bf16.mxu0 0
  %3407 = vmatpush2.bf16.msra.mxu0 %v151
  %3408 = vmatprep.subr.bf16.mxu0 0
  %3409 = vmatpush2.bf16.msra.mxu0 %v150
  %3410 = vmatprep.mubr.bf16.mxu0 %v3375
  %3411 = vmatmul.mubr.bf16.gmra.mxu0 %v3374
  %v3412 = vpop.f32.mrf.mxu0
  %v3413 = vadd.f32 0.0, %v3412
  %v3414 = vpop.f32.mrf.mxu0
  %v3415 = vpop.f32.mrf.mxu0
  %v3416 = vadd.f32 0.0, %v3415
  %v3417 = vpop.f32.mrf.mxu0
  %3418 = vdwg.mxu0
  %v3419 = vmax.f32 %v3363, %v3413
  %v3420 = vmax.f32 %v3364, %v3416
  %s3421 = scalar_lea.vmem %s0, 1376
  %v3422 = vld [vmem:[%s3421] sm:$0xff]
  %v3423 = vld [vmem:[%s3421 + $0x8] sm:$0xff]
  %v3426 = vunpack.c.l.b16 %v3422
  %v3427 = vunpack.c.h.b16 %v3422
  %v3428 = vunpack.c.l.b16 %v3423
  %v3429 = vunpack.c.h.b16 %v3423
  %v3430 = vpack.c.b16 %v3428, %v3426
  %v3431 = vpack.c.b16 %v3429, %v3427
  %3434 = vmatprep.subr.bf16.mxu0 0
  %3435 = vmatpush1.bf16.msra.mxu0 %v149
  %3436 = vmatprep.subr.bf16.mxu0 0
  %3437 = vmatpush1.bf16.msra.mxu0 %v148
  %3438 = vmatprep.subr.bf16.mxu0 0
  %3439 = vmatpush1.bf16.msra.mxu0 %v147
  %3440 = vmatprep.subr.bf16.mxu0 0
  %3441 = vmatpush1.bf16.msra.mxu0 %v146
  %3442 = vmatprep.subr.bf16.mxu0 0
  %3443 = vmatpush1.bf16.msra.mxu0 %v145
  %3444 = vmatprep.subr.bf16.mxu0 0
  %3445 = vmatpush1.bf16.msra.mxu0 %v144
  %3446 = vmatprep.subr.bf16.mxu0 0
  %3447 = vmatpush1.bf16.msra.mxu0 %v143
  %3448 = vmatprep.subr.bf16.mxu0 0
  %3449 = vmatpush1.bf16.msra.mxu0 %v142
  %3450 = vmatprep.subr.bf16.mxu0 0
  %3451 = vmatpush2.bf16.msra.mxu0 %v157
  %3452 = vmatprep.subr.bf16.mxu0 0
  %3453 = vmatpush2.bf16.msra.mxu0 %v156
  %3454 = vmatprep.subr.bf16.mxu0 0
  %3455 = vmatpush2.bf16.msra.mxu0 %v155
  %3456 = vmatprep.subr.bf16.mxu0 0
  %3457 = vmatpush2.bf16.msra.mxu0 %v154
  %3458 = vmatprep.subr.bf16.mxu0 0
  %3459 = vmatpush2.bf16.msra.mxu0 %v153
  %3460 = vmatprep.subr.bf16.mxu0 0
  %3461 = vmatpush2.bf16.msra.mxu0 %v152
  %3462 = vmatprep.subr.bf16.mxu0 0
  %3463 = vmatpush2.bf16.msra.mxu0 %v151
  %3464 = vmatprep.subr.bf16.mxu0 0
  %3465 = vmatpush2.bf16.msra.mxu0 %v150
  %3466 = vmatprep.mubr.bf16.mxu0 %v3431
  %3467 = vmatmul.mubr.bf16.gmra.mxu0 %v3430
  %v3468 = vpop.f32.mrf.mxu0
  %v3469 = vadd.f32 0.0, %v3468
  %v3470 = vpop.f32.mrf.mxu0
  %v3471 = vpop.f32.mrf.mxu0
  %v3472 = vadd.f32 0.0, %v3471
  %v3473 = vpop.f32.mrf.mxu0
  %3474 = vdwg.mxu0
  %v3475 = vmax.f32 %v3419, %v3469
  %v3476 = vmax.f32 %v3420, %v3472
  %v3477 = vadd.f32 %v3475, %v387
  %v3478 = vadd.f32 %v3476, %v387
  %v3479 = vmax.f32 %v3477, 0.0
  %v3480 = vmax.f32 %v3478, 0.0
  %v3481 = vpack.c.bf16 %v3480, %v3479
  %v3482 = vld [vmem:[%s3 + $0x58] sm:$0xf]
  %v3483 = vld [vmem:[%s3 + $0x5c] sm:$0xf]
  %v3486 = vunpack.c.l.b16 %v3482
  %v3487 = vunpack.c.l.b16 %v3483
  %v3488 = vpack.c.b16 %v3487, %v3486
  %v3491 = vsel %vm631, %v3481, 0
  %3493 = vmatprep.subr.bf16.mxu0 0
  %3494 = vmatpush1.bf16.msra.mxu0 0
  %3495 = vmatprep.subr.bf16.mxu0 0
  %3496 = vmatpush1.bf16.msra.mxu0 0
  %3497 = vmatprep.subr.bf16.mxu0 0
  %3498 = vmatpush1.bf16.msra.mxu0 0
  %3499 = vmatprep.subr.bf16.mxu0 0
  %3500 = vmatpush1.bf16.msra.mxu0 0
  %3501 = vmatprep.subr.bf16.mxu0 0
  %3502 = vmatpush1.bf16.msra.mxu0 0
  %3503 = vmatprep.subr.bf16.mxu0 0
  %3504 = vmatpush1.bf16.msra.mxu0 0
  %3505 = vmatprep.subr.bf16.mxu0 0
  %3506 = vmatpush1.bf16.msra.mxu0 0
  %3507 = vmatprep.subr.bf16.mxu0 0
  %3508 = vmatpush1.bf16.msra.mxu0 %v3488
  %3509 = vmatprep.subr.bf16.mxu0 0
  %3510 = vmatpush2.bf16.msra.mxu0 0
  %3511 = vmatprep.subr.bf16.mxu0 0
  %3512 = vmatpush2.bf16.msra.mxu0 0
  %3513 = vmatprep.subr.bf16.mxu0 0
  %3514 = vmatpush2.bf16.msra.mxu0 0
  %3515 = vmatprep.subr.bf16.mxu0 0
  %3516 = vmatpush2.bf16.msra.mxu0 0
  %3517 = vmatprep.subr.bf16.mxu0 0
  %3518 = vmatpush2.bf16.msra.mxu0 0
  %3519 = vmatprep.subr.bf16.mxu0 0
  %3520 = vmatpush2.bf16.msra.mxu0 0
  %3521 = vmatprep.subr.bf16.mxu0 0
  %3522 = vmatpush2.bf16.msra.mxu0 0
  %3523 = vmatprep.subr.bf16.mxu0 0
  %3524 = vmatpush2.bf16.msra.mxu0 0
  %3525 = vmatprep.mubr.bf16.mxu0 0
  %3526 = vmatmul.mubr.bf16.gmra.mxu0 %v3491
  %v3527 = vpop.f32.mrf.mxu0
  %v3528 = vadd.f32 0.0, %v3527
  %v3529 = vpop.f32.mrf.mxu0
  %v3530 = vpop.f32.mrf.mxu0
  %v3531 = vadd.f32 0.0, %v3530
  %v3532 = vpop.f32.mrf.mxu0
  %3533 = vdwg.mxu0
  %v3534 = vadd.f32 %v3253, %v3528
  %v3535 = vadd.f32 %v3254, %v3531
  %s3536 = scalar_lea.vmem %s0, 192
  %v3537 = vld [vmem:[%s3536] sm:$0xff]
  %v3538 = vld [vmem:[%s3536 + $0x8] sm:$0xff]
  %v3541 = vunpack.c.l.b16 %v3537
  %v3542 = vunpack.c.h.b16 %v3537
  %v3543 = vunpack.c.l.b16 %v3538
  %v3544 = vunpack.c.h.b16 %v3538
  %v3545 = vpack.c.b16 %v3543, %v3541
  %v3546 = vpack.c.b16 %v3544, %v3542
  %3549 = vmatprep.subr.bf16.mxu0 0
  %3550 = vmatpush1.bf16.msra.mxu0 %v149
  %3551 = vmatprep.subr.bf16.mxu0 0
  %3552 = vmatpush1.bf16.msra.mxu0 %v148
  %3553 = vmatprep.subr.bf16.mxu0 0
  %3554 = vmatpush1.bf16.msra.mxu0 %v147
  %3555 = vmatprep.subr.bf16.mxu0 0
  %3556 = vmatpush1.bf16.msra.mxu0 %v146
  %3557 = vmatprep.subr.bf16.mxu0 0
  %3558 = vmatpush1.bf16.msra.mxu0 %v145
  %3559 = vmatprep.subr.bf16.mxu0 0
  %3560 = vmatpush1.bf16.msra.mxu0 %v144
  %3561 = vmatprep.subr.bf16.mxu0 0
  %3562 = vmatpush1.bf16.msra.mxu0 %v143
  %3563 = vmatprep.subr.bf16.mxu0 0
  %3564 = vmatpush1.bf16.msra.mxu0 %v142
  %3565 = vmatprep.subr.bf16.mxu0 0
  %3566 = vmatpush2.bf16.msra.mxu0 %v157
  %3567 = vmatprep.subr.bf16.mxu0 0
  %3568 = vmatpush2.bf16.msra.mxu0 %v156
  %3569 = vmatprep.subr.bf16.mxu0 0
  %3570 = vmatpush2.bf16.msra.mxu0 %v155
  %3571 = vmatprep.subr.bf16.mxu0 0
  %3572 = vmatpush2.bf16.msra.mxu0 %v154
  %3573 = vmatprep.subr.bf16.mxu0 0
  %3574 = vmatpush2.bf16.msra.mxu0 %v153
  %3575 = vmatprep.subr.bf16.mxu0 0
  %3576 = vmatpush2.bf16.msra.mxu0 %v152
  %3577 = vmatprep.subr.bf16.mxu0 0
  %3578 = vmatpush2.bf16.msra.mxu0 %v151
  %3579 = vmatprep.subr.bf16.mxu0 0
  %3580 = vmatpush2.bf16.msra.mxu0 %v150
  %3581 = vmatprep.mubr.bf16.mxu0 %v3546
  %3582 = vmatmul.mubr.bf16.gmra.mxu0 %v3545
  %v3583 = vpop.f32.mrf.mxu0
  %v3584 = vadd.f32 0.0, %v3583
  %v3585 = vpop.f32.mrf.mxu0
  %v3586 = vpop.f32.mrf.mxu0
  %v3587 = vadd.f32 0.0, %v3586
  %v3588 = vpop.f32.mrf.mxu0
  %3589 = vdwg.mxu0
  %s3590 = scalar_lea.vmem %s0, 592
  %v3591 = vld [vmem:[%s3590] sm:$0xff]
  %v3592 = vld [vmem:[%s3590 + $0x8] sm:$0xff]
  %v3595 = vunpack.c.l.b16 %v3591
  %v3596 = vunpack.c.h.b16 %v3591
  %v3597 = vunpack.c.l.b16 %v3592
  %v3598 = vunpack.c.h.b16 %v3592
  %v3599 = vpack.c.b16 %v3597, %v3595
  %v3600 = vpack.c.b16 %v3598, %v3596
  %3603 = vmatprep.subr.bf16.mxu0 0
  %3604 = vmatpush1.bf16.msra.mxu0 %v149
  %3605 = vmatprep.subr.bf16.mxu0 0
  %3606 = vmatpush1.bf16.msra.mxu0 %v148
  %3607 = vmatprep.subr.bf16.mxu0 0
  %3608 = vmatpush1.bf16.msra.mxu0 %v147
  %3609 = vmatprep.subr.bf16.mxu0 0
  %3610 = vmatpush1.bf16.msra.mxu0 %v146
  %3611 = vmatprep.subr.bf16.mxu0 0
  %3612 = vmatpush1.bf16.msra.mxu0 %v145
  %3613 = vmatprep.subr.bf16.mxu0 0
  %3614 = vmatpush1.bf16.msra.mxu0 %v144
  %3615 = vmatprep.subr.bf16.mxu0 0
  %3616 = vmatpush1.bf16.msra.mxu0 %v143
  %3617 = vmatprep.subr.bf16.mxu0 0
  %3618 = vmatpush1.bf16.msra.mxu0 %v142
  %3619 = vmatprep.subr.bf16.mxu0 0
  %3620 = vmatpush2.bf16.msra.mxu0 %v157
  %3621 = vmatprep.subr.bf16.mxu0 0
  %3622 = vmatpush2.bf16.msra.mxu0 %v156
  %3623 = vmatprep.subr.bf16.mxu0 0
  %3624 = vmatpush2.bf16.msra.mxu0 %v155
  %3625 = vmatprep.subr.bf16.mxu0 0
  %3626 = vmatpush2.bf16.msra.mxu0 %v154
  %3627 = vmatprep.subr.bf16.mxu0 0
  %3628 = vmatpush2.bf16.msra.mxu0 %v153
  %3629 = vmatprep.subr.bf16.mxu0 0
  %3630 = vmatpush2.bf16.msra.mxu0 %v152
  %3631 = vmatprep.subr.bf16.mxu0 0
  %3632 = vmatpush2.bf16.msra.mxu0 %v151
  %3633 = vmatprep.subr.bf16.mxu0 0
  %3634 = vmatpush2.bf16.msra.mxu0 %v150
  %3635 = vmatprep.mubr.bf16.mxu0 %v3600
  %3636 = vmatmul.mubr.bf16.gmra.mxu0 %v3599
  %v3637 = vpop.f32.mrf.mxu0
  %v3638 = vadd.f32 0.0, %v3637
  %v3639 = vpop.f32.mrf.mxu0
  %v3640 = vpop.f32.mrf.mxu0
  %v3641 = vadd.f32 0.0, %v3640
  %v3642 = vpop.f32.mrf.mxu0
  %3643 = vdwg.mxu0
  %v3644 = vmax.f32 %v3584, %v3638
  %v3645 = vmax.f32 %v3587, %v3641
  %s3646 = scalar_lea.vmem %s0, 992
  %v3647 = vld [vmem:[%s3646] sm:$0xff]
  %v3648 = vld [vmem:[%s3646 + $0x8] sm:$0xff]
  %v3651 = vunpack.c.l.b16 %v3647
  %v3652 = vunpack.c.h.b16 %v3647
  %v3653 = vunpack.c.l.b16 %v3648
  %v3654 = vunpack.c.h.b16 %v3648
  %v3655 = vpack.c.b16 %v3653, %v3651
  %v3656 = vpack.c.b16 %v3654, %v3652
  %3659 = vmatprep.subr.bf16.mxu0 0
  %3660 = vmatpush1.bf16.msra.mxu0 %v149
  %3661 = vmatprep.subr.bf16.mxu0 0
  %3662 = vmatpush1.bf16.msra.mxu0 %v148
  %3663 = vmatprep.subr.bf16.mxu0 0
  %3664 = vmatpush1.bf16.msra.mxu0 %v147
  %3665 = vmatprep.subr.bf16.mxu0 0
  %3666 = vmatpush1.bf16.msra.mxu0 %v146
  %3667 = vmatprep.subr.bf16.mxu0 0
  %3668 = vmatpush1.bf16.msra.mxu0 %v145
  %3669 = vmatprep.subr.bf16.mxu0 0
  %3670 = vmatpush1.bf16.msra.mxu0 %v144
  %3671 = vmatprep.subr.bf16.mxu0 0
  %3672 = vmatpush1.bf16.msra.mxu0 %v143
  %3673 = vmatprep.subr.bf16.mxu0 0
  %3674 = vmatpush1.bf16.msra.mxu0 %v142
  %3675 = vmatprep.subr.bf16.mxu0 0
  %3676 = vmatpush2.bf16.msra.mxu0 %v157
  %3677 = vmatprep.subr.bf16.mxu0 0
  %3678 = vmatpush2.bf16.msra.mxu0 %v156
  %3679 = vmatprep.subr.bf16.mxu0 0
  %3680 = vmatpush2.bf16.msra.mxu0 %v155
  %3681 = vmatprep.subr.bf16.mxu0 0
  %3682 = vmatpush2.bf16.msra.mxu0 %v154
  %3683 = vmatprep.subr.bf16.mxu0 0
  %3684 = vmatpush2.bf16.msra.mxu0 %v153
  %3685 = vmatprep.subr.bf16.mxu0 0
  %3686 = vmatpush2.bf16.msra.mxu0 %v152
  %3687 = vmatprep.subr.bf16.mxu0 0
  %3688 = vmatpush2.bf16.msra.mxu0 %v151
  %3689 = vmatprep.subr.bf16.mxu0 0
  %3690 = vmatpush2.bf16.msra.mxu0 %v150
  %3691 = vmatprep.mubr.bf16.mxu0 %v3656
  %3692 = vmatmul.mubr.bf16.gmra.mxu0 %v3655
  %v3693 = vpop.f32.mrf.mxu0
  %v3694 = vadd.f32 0.0, %v3693
  %v3695 = vpop.f32.mrf.mxu0
  %v3696 = vpop.f32.mrf.mxu0
  %v3697 = vadd.f32 0.0, %v3696
  %v3698 = vpop.f32.mrf.mxu0
  %3699 = vdwg.mxu0
  %v3700 = vmax.f32 %v3644, %v3694
  %v3701 = vmax.f32 %v3645, %v3697
  %s3702 = scalar_lea.vmem %s0, 1392
  %v3703 = vld [vmem:[%s3702] sm:$0xff]
  %v3704 = vld [vmem:[%s3702 + $0x8] sm:$0xff]
  %v3707 = vunpack.c.l.b16 %v3703
  %v3708 = vunpack.c.h.b16 %v3703
  %v3709 = vunpack.c.l.b16 %v3704
  %v3710 = vunpack.c.h.b16 %v3704
  %v3711 = vpack.c.b16 %v3709, %v3707
  %v3712 = vpack.c.b16 %v3710, %v3708
  %3715 = vmatprep.subr.bf16.mxu0 0
  %3716 = vmatpush1.bf16.msra.mxu0 %v149
  %3717 = vmatprep.subr.bf16.mxu0 0
  %3718 = vmatpush1.bf16.msra.mxu0 %v148
  %3719 = vmatprep.subr.bf16.mxu0 0
  %3720 = vmatpush1.bf16.msra.mxu0 %v147
  %3721 = vmatprep.subr.bf16.mxu0 0
  %3722 = vmatpush1.bf16.msra.mxu0 %v146
  %3723 = vmatprep.subr.bf16.mxu0 0
  %3724 = vmatpush1.bf16.msra.mxu0 %v145
  %3725 = vmatprep.subr.bf16.mxu0 0
  %3726 = vmatpush1.bf16.msra.mxu0 %v144
  %3727 = vmatprep.subr.bf16.mxu0 0
  %3728 = vmatpush1.bf16.msra.mxu0 %v143
  %3729 = vmatprep.subr.bf16.mxu0 0
  %3730 = vmatpush1.bf16.msra.mxu0 %v142
  %3731 = vmatprep.subr.bf16.mxu0 0
  %3732 = vmatpush2.bf16.msra.mxu0 %v157
  %3733 = vmatprep.subr.bf16.mxu0 0
  %3734 = vmatpush2.bf16.msra.mxu0 %v156
  %3735 = vmatprep.subr.bf16.mxu0 0
  %3736 = vmatpush2.bf16.msra.mxu0 %v155
  %3737 = vmatprep.subr.bf16.mxu0 0
  %3738 = vmatpush2.bf16.msra.mxu0 %v154
  %3739 = vmatprep.subr.bf16.mxu0 0
  %3740 = vmatpush2.bf16.msra.mxu0 %v153
  %3741 = vmatprep.subr.bf16.mxu0 0
  %3742 = vmatpush2.bf16.msra.mxu0 %v152
  %3743 = vmatprep.subr.bf16.mxu0 0
  %3744 = vmatpush2.bf16.msra.mxu0 %v151
  %3745 = vmatprep.subr.bf16.mxu0 0
  %3746 = vmatpush2.bf16.msra.mxu0 %v150
  %3747 = vmatprep.mubr.bf16.mxu0 %v3712
  %3748 = vmatmul.mubr.bf16.gmra.mxu0 %v3711
  %v3749 = vpop.f32.mrf.mxu0
  %v3750 = vadd.f32 0.0, %v3749
  %v3751 = vpop.f32.mrf.mxu0
  %v3752 = vpop.f32.mrf.mxu0
  %v3753 = vadd.f32 0.0, %v3752
  %v3754 = vpop.f32.mrf.mxu0
  %3755 = vdwg.mxu0
  %v3756 = vmax.f32 %v3700, %v3750
  %v3757 = vmax.f32 %v3701, %v3753
  %v3758 = vadd.f32 %v3756, %v387
  %v3759 = vadd.f32 %v3757, %v387
  %v3760 = vmax.f32 %v3758, 0.0
  %v3761 = vmax.f32 %v3759, 0.0
  %v3762 = vpack.c.bf16 %v3761, %v3760
  %v3763 = vld [vmem:[%s3 + $0x60] sm:$0xf]
  %v3764 = vld [vmem:[%s3 + $0x64] sm:$0xf]
  %v3767 = vunpack.c.l.b16 %v3763
  %v3768 = vunpack.c.l.b16 %v3764
  %v3769 = vpack.c.b16 %v3768, %v3767
  %v3772 = vsel %vm631, %v3762, 0
  %3774 = vmatprep.subr.bf16.mxu0 0
  %3775 = vmatpush1.bf16.msra.mxu0 0
  %3776 = vmatprep.subr.bf16.mxu0 0
  %3777 = vmatpush1.bf16.msra.mxu0 0
  %3778 = vmatprep.subr.bf16.mxu0 0
  %3779 = vmatpush1.bf16.msra.mxu0 0
  %3780 = vmatprep.subr.bf16.mxu0 0
  %3781 = vmatpush1.bf16.msra.mxu0 0
  %3782 = vmatprep.subr.bf16.mxu0 0
  %3783 = vmatpush1.bf16.msra.mxu0 0
  %3784 = vmatprep.subr.bf16.mxu0 0
  %3785 = vmatpush1.bf16.msra.mxu0 0
  %3786 = vmatprep.subr.bf16.mxu0 0
  %3787 = vmatpush1.bf16.msra.mxu0 0
  %3788 = vmatprep.subr.bf16.mxu0 0
  %3789 = vmatpush1.bf16.msra.mxu0 %v3769
  %3790 = vmatprep.subr.bf16.mxu0 0
  %3791 = vmatpush2.bf16.msra.mxu0 0
  %3792 = vmatprep.subr.bf16.mxu0 0
  %3793 = vmatpush2.bf16.msra.mxu0 0
  %3794 = vmatprep.subr.bf16.mxu0 0
  %3795 = vmatpush2.bf16.msra.mxu0 0
  %3796 = vmatprep.subr.bf16.mxu0 0
  %3797 = vmatpush2.bf16.msra.mxu0 0
  %3798 = vmatprep.subr.bf16.mxu0 0
  %3799 = vmatpush2.bf16.msra.mxu0 0
  %3800 = vmatprep.subr.bf16.mxu0 0
  %3801 = vmatpush2.bf16.msra.mxu0 0
  %3802 = vmatprep.subr.bf16.mxu0 0
  %3803 = vmatpush2.bf16.msra.mxu0 0
  %3804 = vmatprep.subr.bf16.mxu0 0
  %3805 = vmatpush2.bf16.msra.mxu0 0
  %3806 = vmatprep.mubr.bf16.mxu0 0
  %3807 = vmatmul.mubr.bf16.gmra.mxu0 %v3772
  %v3808 = vpop.f32.mrf.mxu0
  %v3809 = vadd.f32 0.0, %v3808
  %v3810 = vpop.f32.mrf.mxu0
  %v3811 = vpop.f32.mrf.mxu0
  %v3812 = vadd.f32 0.0, %v3811
  %v3813 = vpop.f32.mrf.mxu0
  %3814 = vdwg.mxu0
  %v3815 = vadd.f32 %v3534, %v3809
  %v3816 = vadd.f32 %v3535, %v3812
  %s3817 = scalar_lea.vmem %s0, 208
  %v3818 = vld [vmem:[%s3817] sm:$0xff]
  %v3819 = vld [vmem:[%s3817 + $0x8] sm:$0xff]
  %v3822 = vunpack.c.l.b16 %v3818
  %v3823 = vunpack.c.h.b16 %v3818
  %v3824 = vunpack.c.l.b16 %v3819
  %v3825 = vunpack.c.h.b16 %v3819
  %v3826 = vpack.c.b16 %v3824, %v3822
  %v3827 = vpack.c.b16 %v3825, %v3823
  %3830 = vmatprep.subr.bf16.mxu0 0
  %3831 = vmatpush1.bf16.msra.mxu0 %v149
  %3832 = vmatprep.subr.bf16.mxu0 0
  %3833 = vmatpush1.bf16.msra.mxu0 %v148
  %3834 = vmatprep.subr.bf16.mxu0 0
  %3835 = vmatpush1.bf16.msra.mxu0 %v147
  %3836 = vmatprep.subr.bf16.mxu0 0
  %3837 = vmatpush1.bf16.msra.mxu0 %v146
  %3838 = vmatprep.subr.bf16.mxu0 0
  %3839 = vmatpush1.bf16.msra.mxu0 %v145
  %3840 = vmatprep.subr.bf16.mxu0 0
  %3841 = vmatpush1.bf16.msra.mxu0 %v144
  %3842 = vmatprep.subr.bf16.mxu0 0
  %3843 = vmatpush1.bf16.msra.mxu0 %v143
  %3844 = vmatprep.subr.bf16.mxu0 0
  %3845 = vmatpush1.bf16.msra.mxu0 %v142
  %3846 = vmatprep.subr.bf16.mxu0 0
  %3847 = vmatpush2.bf16.msra.mxu0 %v157
  %3848 = vmatprep.subr.bf16.mxu0 0
  %3849 = vmatpush2.bf16.msra.mxu0 %v156
  %3850 = vmatprep.subr.bf16.mxu0 0
  %3851 = vmatpush2.bf16.msra.mxu0 %v155
  %3852 = vmatprep.subr.bf16.mxu0 0
  %3853 = vmatpush2.bf16.msra.mxu0 %v154
  %3854 = vmatprep.subr.bf16.mxu0 0
  %3855 = vmatpush2.bf16.msra.mxu0 %v153
  %3856 = vmatprep.subr.bf16.mxu0 0
  %3857 = vmatpush2.bf16.msra.mxu0 %v152
  %3858 = vmatprep.subr.bf16.mxu0 0
  %3859 = vmatpush2.bf16.msra.mxu0 %v151
  %3860 = vmatprep.subr.bf16.mxu0 0
  %3861 = vmatpush2.bf16.msra.mxu0 %v150
  %3862 = vmatprep.mubr.bf16.mxu0 %v3827
  %3863 = vmatmul.mubr.bf16.gmra.mxu0 %v3826
  %v3864 = vpop.f32.mrf.mxu0
  %v3865 = vadd.f32 0.0, %v3864
  %v3866 = vpop.f32.mrf.mxu0
  %v3867 = vpop.f32.mrf.mxu0
  %v3868 = vadd.f32 0.0, %v3867
  %v3869 = vpop.f32.mrf.mxu0
  %3870 = vdwg.mxu0
  %s3871 = scalar_lea.vmem %s0, 608
  %v3872 = vld [vmem:[%s3871] sm:$0xff]
  %v3873 = vld [vmem:[%s3871 + $0x8] sm:$0xff]
  %v3876 = vunpack.c.l.b16 %v3872
  %v3877 = vunpack.c.h.b16 %v3872
  %v3878 = vunpack.c.l.b16 %v3873
  %v3879 = vunpack.c.h.b16 %v3873
  %v3880 = vpack.c.b16 %v3878, %v3876
  %v3881 = vpack.c.b16 %v3879, %v3877
  %3884 = vmatprep.subr.bf16.mxu0 0
  %3885 = vmatpush1.bf16.msra.mxu0 %v149
  %3886 = vmatprep.subr.bf16.mxu0 0
  %3887 = vmatpush1.bf16.msra.mxu0 %v148
  %3888 = vmatprep.subr.bf16.mxu0 0
  %3889 = vmatpush1.bf16.msra.mxu0 %v147
  %3890 = vmatprep.subr.bf16.mxu0 0
  %3891 = vmatpush1.bf16.msra.mxu0 %v146
  %3892 = vmatprep.subr.bf16.mxu0 0
  %3893 = vmatpush1.bf16.msra.mxu0 %v145
  %3894 = vmatprep.subr.bf16.mxu0 0
  %3895 = vmatpush1.bf16.msra.mxu0 %v144
  %3896 = vmatprep.subr.bf16.mxu0 0
  %3897 = vmatpush1.bf16.msra.mxu0 %v143
  %3898 = vmatprep.subr.bf16.mxu0 0
  %3899 = vmatpush1.bf16.msra.mxu0 %v142
  %3900 = vmatprep.subr.bf16.mxu0 0
  %3901 = vmatpush2.bf16.msra.mxu0 %v157
  %3902 = vmatprep.subr.bf16.mxu0 0
  %3903 = vmatpush2.bf16.msra.mxu0 %v156
  %3904 = vmatprep.subr.bf16.mxu0 0
  %3905 = vmatpush2.bf16.msra.mxu0 %v155
  %3906 = vmatprep.subr.bf16.mxu0 0
  %3907 = vmatpush2.bf16.msra.mxu0 %v154
  %3908 = vmatprep.subr.bf16.mxu0 0
  %3909 = vmatpush2.bf16.msra.mxu0 %v153
  %3910 = vmatprep.subr.bf16.mxu0 0
  %3911 = vmatpush2.bf16.msra.mxu0 %v152
  %3912 = vmatprep.subr.bf16.mxu0 0
  %3913 = vmatpush2.bf16.msra.mxu0 %v151
  %3914 = vmatprep.subr.bf16.mxu0 0
  %3915 = vmatpush2.bf16.msra.mxu0 %v150
  %3916 = vmatprep.mubr.bf16.mxu0 %v3881
  %3917 = vmatmul.mubr.bf16.gmra.mxu0 %v3880
  %v3918 = vpop.f32.mrf.mxu0
  %v3919 = vadd.f32 0.0, %v3918
  %v3920 = vpop.f32.mrf.mxu0
  %v3921 = vpop.f32.mrf.mxu0
  %v3922 = vadd.f32 0.0, %v3921
  %v3923 = vpop.f32.mrf.mxu0
  %3924 = vdwg.mxu0
  %v3925 = vmax.f32 %v3865, %v3919
  %v3926 = vmax.f32 %v3868, %v3922
  %s3927 = scalar_lea.vmem %s0, 1008
  %v3928 = vld [vmem:[%s3927] sm:$0xff]
  %v3929 = vld [vmem:[%s3927 + $0x8] sm:$0xff]
  %v3932 = vunpack.c.l.b16 %v3928
  %v3933 = vunpack.c.h.b16 %v3928
  %v3934 = vunpack.c.l.b16 %v3929
  %v3935 = vunpack.c.h.b16 %v3929
  %v3936 = vpack.c.b16 %v3934, %v3932
  %v3937 = vpack.c.b16 %v3935, %v3933
  %3940 = vmatprep.subr.bf16.mxu0 0
  %3941 = vmatpush1.bf16.msra.mxu0 %v149
  %3942 = vmatprep.subr.bf16.mxu0 0
  %3943 = vmatpush1.bf16.msra.mxu0 %v148
  %3944 = vmatprep.subr.bf16.mxu0 0
  %3945 = vmatpush1.bf16.msra.mxu0 %v147
  %3946 = vmatprep.subr.bf16.mxu0 0
  %3947 = vmatpush1.bf16.msra.mxu0 %v146
  %3948 = vmatprep.subr.bf16.mxu0 0
  %3949 = vmatpush1.bf16.msra.mxu0 %v145
  %3950 = vmatprep.subr.bf16.mxu0 0
  %3951 = vmatpush1.bf16.msra.mxu0 %v144
  %3952 = vmatprep.subr.bf16.mxu0 0
  %3953 = vmatpush1.bf16.msra.mxu0 %v143
  %3954 = vmatprep.subr.bf16.mxu0 0
  %3955 = vmatpush1.bf16.msra.mxu0 %v142
  %3956 = vmatprep.subr.bf16.mxu0 0
  %3957 = vmatpush2.bf16.msra.mxu0 %v157
  %3958 = vmatprep.subr.bf16.mxu0 0
  %3959 = vmatpush2.bf16.msra.mxu0 %v156
  %3960 = vmatprep.subr.bf16.mxu0 0
  %3961 = vmatpush2.bf16.msra.mxu0 %v155
  %3962 = vmatprep.subr.bf16.mxu0 0
  %3963 = vmatpush2.bf16.msra.mxu0 %v154
  %3964 = vmatprep.subr.bf16.mxu0 0
  %3965 = vmatpush2.bf16.msra.mxu0 %v153
  %3966 = vmatprep.subr.bf16.mxu0 0
  %3967 = vmatpush2.bf16.msra.mxu0 %v152
  %3968 = vmatprep.subr.bf16.mxu0 0
  %3969 = vmatpush2.bf16.msra.mxu0 %v151
  %3970 = vmatprep.subr.bf16.mxu0 0
  %3971 = vmatpush2.bf16.msra.mxu0 %v150
  %3972 = vmatprep.mubr.bf16.mxu0 %v3937
  %3973 = vmatmul.mubr.bf16.gmra.mxu0 %v3936
  %v3974 = vpop.f32.mrf.mxu0
  %v3975 = vadd.f32 0.0, %v3974
  %v3976 = vpop.f32.mrf.mxu0
  %v3977 = vpop.f32.mrf.mxu0
  %v3978 = vadd.f32 0.0, %v3977
  %v3979 = vpop.f32.mrf.mxu0
  %3980 = vdwg.mxu0
  %v3981 = vmax.f32 %v3925, %v3975
  %v3982 = vmax.f32 %v3926, %v3978
  %s3983 = scalar_lea.vmem %s0, 1408
  %v3984 = vld [vmem:[%s3983] sm:$0xff]
  %v3985 = vld [vmem:[%s3983 + $0x8] sm:$0xff]
  %v3988 = vunpack.c.l.b16 %v3984
  %v3989 = vunpack.c.h.b16 %v3984
  %v3990 = vunpack.c.l.b16 %v3985
  %v3991 = vunpack.c.h.b16 %v3985
  %v3992 = vpack.c.b16 %v3990, %v3988
  %v3993 = vpack.c.b16 %v3991, %v3989
  %3996 = vmatprep.subr.bf16.mxu0 0
  %3997 = vmatpush1.bf16.msra.mxu0 %v149
  %3998 = vmatprep.subr.bf16.mxu0 0
  %3999 = vmatpush1.bf16.msra.mxu0 %v148
  %4000 = vmatprep.subr.bf16.mxu0 0
  %4001 = vmatpush1.bf16.msra.mxu0 %v147
  %4002 = vmatprep.subr.bf16.mxu0 0
  %4003 = vmatpush1.bf16.msra.mxu0 %v146
  %4004 = vmatprep.subr.bf16.mxu0 0
  %4005 = vmatpush1.bf16.msra.mxu0 %v145
  %4006 = vmatprep.subr.bf16.mxu0 0
  %4007 = vmatpush1.bf16.msra.mxu0 %v144
  %4008 = vmatprep.subr.bf16.mxu0 0
  %4009 = vmatpush1.bf16.msra.mxu0 %v143
  %4010 = vmatprep.subr.bf16.mxu0 0
  %4011 = vmatpush1.bf16.msra.mxu0 %v142
  %4012 = vmatprep.subr.bf16.mxu0 0
  %4013 = vmatpush2.bf16.msra.mxu0 %v157
  %4014 = vmatprep.subr.bf16.mxu0 0
  %4015 = vmatpush2.bf16.msra.mxu0 %v156
  %4016 = vmatprep.subr.bf16.mxu0 0
  %4017 = vmatpush2.bf16.msra.mxu0 %v155
  %4018 = vmatprep.subr.bf16.mxu0 0
  %4019 = vmatpush2.bf16.msra.mxu0 %v154
  %4020 = vmatprep.subr.bf16.mxu0 0
  %4021 = vmatpush2.bf16.msra.mxu0 %v153
  %4022 = vmatprep.subr.bf16.mxu0 0
  %4023 = vmatpush2.bf16.msra.mxu0 %v152
  %4024 = vmatprep.subr.bf16.mxu0 0
  %4025 = vmatpush2.bf16.msra.mxu0 %v151
  %4026 = vmatprep.subr.bf16.mxu0 0
  %4027 = vmatpush2.bf16.msra.mxu0 %v150
  %4028 = vmatprep.mubr.bf16.mxu0 %v3993
  %4029 = vmatmul.mubr.bf16.gmra.mxu0 %v3992
  %v4030 = vpop.f32.mrf.mxu0
  %v4031 = vadd.f32 0.0, %v4030
  %v4032 = vpop.f32.mrf.mxu0
  %v4033 = vpop.f32.mrf.mxu0
  %v4034 = vadd.f32 0.0, %v4033
  %v4035 = vpop.f32.mrf.mxu0
  %4036 = vdwg.mxu0
  %v4037 = vmax.f32 %v3981, %v4031
  %v4038 = vmax.f32 %v3982, %v4034
  %v4039 = vadd.f32 %v4037, %v387
  %v4040 = vadd.f32 %v4038, %v387
  %v4041 = vmax.f32 %v4039, 0.0
  %v4042 = vmax.f32 %v4040, 0.0
  %v4043 = vpack.c.bf16 %v4042, %v4041
  %v4044 = vld [vmem:[%s3 + $0x68] sm:$0xf]
  %v4045 = vld [vmem:[%s3 + $0x6c] sm:$0xf]
  %v4048 = vunpack.c.l.b16 %v4044
  %v4049 = vunpack.c.l.b16 %v4045
  %v4050 = vpack.c.b16 %v4049, %v4048
  %v4053 = vsel %vm631, %v4043, 0
  %4055 = vmatprep.subr.bf16.mxu0 0
  %4056 = vmatpush1.bf16.msra.mxu0 0
  %4057 = vmatprep.subr.bf16.mxu0 0
  %4058 = vmatpush1.bf16.msra.mxu0 0
  %4059 = vmatprep.subr.bf16.mxu0 0
  %4060 = vmatpush1.bf16.msra.mxu0 0
  %4061 = vmatprep.subr.bf16.mxu0 0
  %4062 = vmatpush1.bf16.msra.mxu0 0
  %4063 = vmatprep.subr.bf16.mxu0 0
  %4064 = vmatpush1.bf16.msra.mxu0 0
  %4065 = vmatprep.subr.bf16.mxu0 0
  %4066 = vmatpush1.bf16.msra.mxu0 0
  %4067 = vmatprep.subr.bf16.mxu0 0
  %4068 = vmatpush1.bf16.msra.mxu0 0
  %4069 = vmatprep.subr.bf16.mxu0 0
  %4070 = vmatpush1.bf16.msra.mxu0 %v4050
  %4071 = vmatprep.subr.bf16.mxu0 0
  %4072 = vmatpush2.bf16.msra.mxu0 0
  %4073 = vmatprep.subr.bf16.mxu0 0
  %4074 = vmatpush2.bf16.msra.mxu0 0
  %4075 = vmatprep.subr.bf16.mxu0 0
  %4076 = vmatpush2.bf16.msra.mxu0 0
  %4077 = vmatprep.subr.bf16.mxu0 0
  %4078 = vmatpush2.bf16.msra.mxu0 0
  %4079 = vmatprep.subr.bf16.mxu0 0
  %4080 = vmatpush2.bf16.msra.mxu0 0
  %4081 = vmatprep.subr.bf16.mxu0 0
  %4082 = vmatpush2.bf16.msra.mxu0 0
  %4083 = vmatprep.subr.bf16.mxu0 0
  %4084 = vmatpush2.bf16.msra.mxu0 0
  %4085 = vmatprep.subr.bf16.mxu0 0
  %4086 = vmatpush2.bf16.msra.mxu0 0
  %4087 = vmatprep.mubr.bf16.mxu0 0
  %4088 = vmatmul.mubr.bf16.gmra.mxu0 %v4053
  %v4089 = vpop.f32.mrf.mxu0
  %v4090 = vadd.f32 0.0, %v4089
  %v4091 = vpop.f32.mrf.mxu0
  %v4092 = vpop.f32.mrf.mxu0
  %v4093 = vadd.f32 0.0, %v4092
  %v4094 = vpop.f32.mrf.mxu0
  %4095 = vdwg.mxu0
  %v4096 = vadd.f32 %v3815, %v4090
  %v4097 = vadd.f32 %v3816, %v4093
  %s4098 = scalar_lea.vmem %s0, 224
  %v4099 = vld [vmem:[%s4098] sm:$0xff]
  %v4100 = vld [vmem:[%s4098 + $0x8] sm:$0xff]
  %v4103 = vunpack.c.l.b16 %v4099
  %v4104 = vunpack.c.h.b16 %v4099
  %v4105 = vunpack.c.l.b16 %v4100
  %v4106 = vunpack.c.h.b16 %v4100
  %v4107 = vpack.c.b16 %v4105, %v4103
  %v4108 = vpack.c.b16 %v4106, %v4104
  %4111 = vmatprep.subr.bf16.mxu0 0
  %4112 = vmatpush1.bf16.msra.mxu0 %v149
  %4113 = vmatprep.subr.bf16.mxu0 0
  %4114 = vmatpush1.bf16.msra.mxu0 %v148
  %4115 = vmatprep.subr.bf16.mxu0 0
  %4116 = vmatpush1.bf16.msra.mxu0 %v147
  %4117 = vmatprep.subr.bf16.mxu0 0
  %4118 = vmatpush1.bf16.msra.mxu0 %v146
  %4119 = vmatprep.subr.bf16.mxu0 0
  %4120 = vmatpush1.bf16.msra.mxu0 %v145
  %4121 = vmatprep.subr.bf16.mxu0 0
  %4122 = vmatpush1.bf16.msra.mxu0 %v144
  %4123 = vmatprep.subr.bf16.mxu0 0
  %4124 = vmatpush1.bf16.msra.mxu0 %v143
  %4125 = vmatprep.subr.bf16.mxu0 0
  %4126 = vmatpush1.bf16.msra.mxu0 %v142
  %4127 = vmatprep.subr.bf16.mxu0 0
  %4128 = vmatpush2.bf16.msra.mxu0 %v157
  %4129 = vmatprep.subr.bf16.mxu0 0
  %4130 = vmatpush2.bf16.msra.mxu0 %v156
  %4131 = vmatprep.subr.bf16.mxu0 0
  %4132 = vmatpush2.bf16.msra.mxu0 %v155
  %4133 = vmatprep.subr.bf16.mxu0 0
  %4134 = vmatpush2.bf16.msra.mxu0 %v154
  %4135 = vmatprep.subr.bf16.mxu0 0
  %4136 = vmatpush2.bf16.msra.mxu0 %v153
  %4137 = vmatprep.subr.bf16.mxu0 0
  %4138 = vmatpush2.bf16.msra.mxu0 %v152
  %4139 = vmatprep.subr.bf16.mxu0 0
  %4140 = vmatpush2.bf16.msra.mxu0 %v151
  %4141 = vmatprep.subr.bf16.mxu0 0
  %4142 = vmatpush2.bf16.msra.mxu0 %v150
  %4143 = vmatprep.mubr.bf16.mxu0 %v4108
  %4144 = vmatmul.mubr.bf16.gmra.mxu0 %v4107
  %v4145 = vpop.f32.mrf.mxu0
  %v4146 = vadd.f32 0.0, %v4145
  %v4147 = vpop.f32.mrf.mxu0
  %v4148 = vpop.f32.mrf.mxu0
  %v4149 = vadd.f32 0.0, %v4148
  %v4150 = vpop.f32.mrf.mxu0
  %4151 = vdwg.mxu0
  %s4152 = scalar_lea.vmem %s0, 624
  %v4153 = vld [vmem:[%s4152] sm:$0xff]
  %v4154 = vld [vmem:[%s4152 + $0x8] sm:$0xff]
  %v4157 = vunpack.c.l.b16 %v4153
  %v4158 = vunpack.c.h.b16 %v4153
  %v4159 = vunpack.c.l.b16 %v4154
  %v4160 = vunpack.c.h.b16 %v4154
  %v4161 = vpack.c.b16 %v4159, %v4157
  %v4162 = vpack.c.b16 %v4160, %v4158
  %4165 = vmatprep.subr.bf16.mxu0 0
  %4166 = vmatpush1.bf16.msra.mxu0 %v149
  %4167 = vmatprep.subr.bf16.mxu0 0
  %4168 = vmatpush1.bf16.msra.mxu0 %v148
  %4169 = vmatprep.subr.bf16.mxu0 0
  %4170 = vmatpush1.bf16.msra.mxu0 %v147
  %4171 = vmatprep.subr.bf16.mxu0 0
  %4172 = vmatpush1.bf16.msra.mxu0 %v146
  %4173 = vmatprep.subr.bf16.mxu0 0
  %4174 = vmatpush1.bf16.msra.mxu0 %v145
  %4175 = vmatprep.subr.bf16.mxu0 0
  %4176 = vmatpush1.bf16.msra.mxu0 %v144
  %4177 = vmatprep.subr.bf16.mxu0 0
  %4178 = vmatpush1.bf16.msra.mxu0 %v143
  %4179 = vmatprep.subr.bf16.mxu0 0
  %4180 = vmatpush1.bf16.msra.mxu0 %v142
  %4181 = vmatprep.subr.bf16.mxu0 0
  %4182 = vmatpush2.bf16.msra.mxu0 %v157
  %4183 = vmatprep.subr.bf16.mxu0 0
  %4184 = vmatpush2.bf16.msra.mxu0 %v156
  %4185 = vmatprep.subr.bf16.mxu0 0
  %4186 = vmatpush2.bf16.msra.mxu0 %v155
  %4187 = vmatprep.subr.bf16.mxu0 0
  %4188 = vmatpush2.bf16.msra.mxu0 %v154
  %4189 = vmatprep.subr.bf16.mxu0 0
  %4190 = vmatpush2.bf16.msra.mxu0 %v153
  %4191 = vmatprep.subr.bf16.mxu0 0
  %4192 = vmatpush2.bf16.msra.mxu0 %v152
  %4193 = vmatprep.subr.bf16.mxu0 0
  %4194 = vmatpush2.bf16.msra.mxu0 %v151
  %4195 = vmatprep.subr.bf16.mxu0 0
  %4196 = vmatpush2.bf16.msra.mxu0 %v150
  %4197 = vmatprep.mubr.bf16.mxu0 %v4162
  %4198 = vmatmul.mubr.bf16.gmra.mxu0 %v4161
  %v4199 = vpop.f32.mrf.mxu0
  %v4200 = vadd.f32 0.0, %v4199
  %v4201 = vpop.f32.mrf.mxu0
  %v4202 = vpop.f32.mrf.mxu0
  %v4203 = vadd.f32 0.0, %v4202
  %v4204 = vpop.f32.mrf.mxu0
  %4205 = vdwg.mxu0
  %v4206 = vmax.f32 %v4146, %v4200
  %v4207 = vmax.f32 %v4149, %v4203
  %s4208 = scalar_lea.vmem %s0, 1024
  %v4209 = vld [vmem:[%s4208] sm:$0xff]
  %v4210 = vld [vmem:[%s4208 + $0x8] sm:$0xff]
  %v4213 = vunpack.c.l.b16 %v4209
  %v4214 = vunpack.c.h.b16 %v4209
  %v4215 = vunpack.c.l.b16 %v4210
  %v4216 = vunpack.c.h.b16 %v4210
  %v4217 = vpack.c.b16 %v4215, %v4213
  %v4218 = vpack.c.b16 %v4216, %v4214
  %4221 = vmatprep.subr.bf16.mxu0 0
  %4222 = vmatpush1.bf16.msra.mxu0 %v149
  %4223 = vmatprep.subr.bf16.mxu0 0
  %4224 = vmatpush1.bf16.msra.mxu0 %v148
  %4225 = vmatprep.subr.bf16.mxu0 0
  %4226 = vmatpush1.bf16.msra.mxu0 %v147
  %4227 = vmatprep.subr.bf16.mxu0 0
  %4228 = vmatpush1.bf16.msra.mxu0 %v146
  %4229 = vmatprep.subr.bf16.mxu0 0
  %4230 = vmatpush1.bf16.msra.mxu0 %v145
  %4231 = vmatprep.subr.bf16.mxu0 0
  %4232 = vmatpush1.bf16.msra.mxu0 %v144
  %4233 = vmatprep.subr.bf16.mxu0 0
  %4234 = vmatpush1.bf16.msra.mxu0 %v143
  %4235 = vmatprep.subr.bf16.mxu0 0
  %4236 = vmatpush1.bf16.msra.mxu0 %v142
  %4237 = vmatprep.subr.bf16.mxu0 0
  %4238 = vmatpush2.bf16.msra.mxu0 %v157
  %4239 = vmatprep.subr.bf16.mxu0 0
  %4240 = vmatpush2.bf16.msra.mxu0 %v156
  %4241 = vmatprep.subr.bf16.mxu0 0
  %4242 = vmatpush2.bf16.msra.mxu0 %v155
  %4243 = vmatprep.subr.bf16.mxu0 0
  %4244 = vmatpush2.bf16.msra.mxu0 %v154
  %4245 = vmatprep.subr.bf16.mxu0 0
  %4246 = vmatpush2.bf16.msra.mxu0 %v153
  %4247 = vmatprep.subr.bf16.mxu0 0
  %4248 = vmatpush2.bf16.msra.mxu0 %v152
  %4249 = vmatprep.subr.bf16.mxu0 0
  %4250 = vmatpush2.bf16.msra.mxu0 %v151
  %4251 = vmatprep.subr.bf16.mxu0 0
  %4252 = vmatpush2.bf16.msra.mxu0 %v150
  %4253 = vmatprep.mubr.bf16.mxu0 %v4218
  %4254 = vmatmul.mubr.bf16.gmra.mxu0 %v4217
  %v4255 = vpop.f32.mrf.mxu0
  %v4256 = vadd.f32 0.0, %v4255
  %v4257 = vpop.f32.mrf.mxu0
  %v4258 = vpop.f32.mrf.mxu0
  %v4259 = vadd.f32 0.0, %v4258
  %v4260 = vpop.f32.mrf.mxu0
  %4261 = vdwg.mxu0
  %v4262 = vmax.f32 %v4206, %v4256
  %v4263 = vmax.f32 %v4207, %v4259
  %s4264 = scalar_lea.vmem %s0, 1424
  %v4265 = vld [vmem:[%s4264] sm:$0xff]
  %v4266 = vld [vmem:[%s4264 + $0x8] sm:$0xff]
  %v4269 = vunpack.c.l.b16 %v4265
  %v4270 = vunpack.c.h.b16 %v4265
  %v4271 = vunpack.c.l.b16 %v4266
  %v4272 = vunpack.c.h.b16 %v4266
  %v4273 = vpack.c.b16 %v4271, %v4269
  %v4274 = vpack.c.b16 %v4272, %v4270
  %4277 = vmatprep.subr.bf16.mxu0 0
  %4278 = vmatpush1.bf16.msra.mxu0 %v149
  %4279 = vmatprep.subr.bf16.mxu0 0
  %4280 = vmatpush1.bf16.msra.mxu0 %v148
  %4281 = vmatprep.subr.bf16.mxu0 0
  %4282 = vmatpush1.bf16.msra.mxu0 %v147
  %4283 = vmatprep.subr.bf16.mxu0 0
  %4284 = vmatpush1.bf16.msra.mxu0 %v146
  %4285 = vmatprep.subr.bf16.mxu0 0
  %4286 = vmatpush1.bf16.msra.mxu0 %v145
  %4287 = vmatprep.subr.bf16.mxu0 0
  %4288 = vmatpush1.bf16.msra.mxu0 %v144
  %4289 = vmatprep.subr.bf16.mxu0 0
  %4290 = vmatpush1.bf16.msra.mxu0 %v143
  %4291 = vmatprep.subr.bf16.mxu0 0
  %4292 = vmatpush1.bf16.msra.mxu0 %v142
  %4293 = vmatprep.subr.bf16.mxu0 0
  %4294 = vmatpush2.bf16.msra.mxu0 %v157
  %4295 = vmatprep.subr.bf16.mxu0 0
  %4296 = vmatpush2.bf16.msra.mxu0 %v156
  %4297 = vmatprep.subr.bf16.mxu0 0
  %4298 = vmatpush2.bf16.msra.mxu0 %v155
  %4299 = vmatprep.subr.bf16.mxu0 0
  %4300 = vmatpush2.bf16.msra.mxu0 %v154
  %4301 = vmatprep.subr.bf16.mxu0 0
  %4302 = vmatpush2.bf16.msra.mxu0 %v153
  %4303 = vmatprep.subr.bf16.mxu0 0
  %4304 = vmatpush2.bf16.msra.mxu0 %v152
  %4305 = vmatprep.subr.bf16.mxu0 0
  %4306 = vmatpush2.bf16.msra.mxu0 %v151
  %4307 = vmatprep.subr.bf16.mxu0 0
  %4308 = vmatpush2.bf16.msra.mxu0 %v150
  %4309 = vmatprep.mubr.bf16.mxu0 %v4274
  %4310 = vmatmul.mubr.bf16.gmra.mxu0 %v4273
  %v4311 = vpop.f32.mrf.mxu0
  %v4312 = vadd.f32 0.0, %v4311
  %v4313 = vpop.f32.mrf.mxu0
  %v4314 = vpop.f32.mrf.mxu0
  %v4315 = vadd.f32 0.0, %v4314
  %v4316 = vpop.f32.mrf.mxu0
  %4317 = vdwg.mxu0
  %v4318 = vmax.f32 %v4262, %v4312
  %v4319 = vmax.f32 %v4263, %v4315
  %v4320 = vadd.f32 %v4318, %v387
  %v4321 = vadd.f32 %v4319, %v387
  %v4322 = vmax.f32 %v4320, 0.0
  %v4323 = vmax.f32 %v4321, 0.0
  %v4324 = vpack.c.bf16 %v4323, %v4322
  %v4325 = vld [vmem:[%s3 + $0x70] sm:$0xf]
  %v4326 = vld [vmem:[%s3 + $0x74] sm:$0xf]
  %v4329 = vunpack.c.l.b16 %v4325
  %v4330 = vunpack.c.l.b16 %v4326
  %v4331 = vpack.c.b16 %v4330, %v4329
  %v4334 = vsel %vm631, %v4324, 0
  %4336 = vmatprep.subr.bf16.mxu0 0
  %4337 = vmatpush1.bf16.msra.mxu0 0
  %4338 = vmatprep.subr.bf16.mxu0 0
  %4339 = vmatpush1.bf16.msra.mxu0 0
  %4340 = vmatprep.subr.bf16.mxu0 0
  %4341 = vmatpush1.bf16.msra.mxu0 0
  %4342 = vmatprep.subr.bf16.mxu0 0
  %4343 = vmatpush1.bf16.msra.mxu0 0
  %4344 = vmatprep.subr.bf16.mxu0 0
  %4345 = vmatpush1.bf16.msra.mxu0 0
  %4346 = vmatprep.subr.bf16.mxu0 0
  %4347 = vmatpush1.bf16.msra.mxu0 0
  %4348 = vmatprep.subr.bf16.mxu0 0
  %4349 = vmatpush1.bf16.msra.mxu0 0
  %4350 = vmatprep.subr.bf16.mxu0 0
  %4351 = vmatpush1.bf16.msra.mxu0 %v4331
  %4352 = vmatprep.subr.bf16.mxu0 0
  %4353 = vmatpush2.bf16.msra.mxu0 0
  %4354 = vmatprep.subr.bf16.mxu0 0
  %4355 = vmatpush2.bf16.msra.mxu0 0
  %4356 = vmatprep.subr.bf16.mxu0 0
  %4357 = vmatpush2.bf16.msra.mxu0 0
  %4358 = vmatprep.subr.bf16.mxu0 0
  %4359 = vmatpush2.bf16.msra.mxu0 0
  %4360 = vmatprep.subr.bf16.mxu0 0
  %4361 = vmatpush2.bf16.msra.mxu0 0
  %4362 = vmatprep.subr.bf16.mxu0 0
  %4363 = vmatpush2.bf16.msra.mxu0 0
  %4364 = vmatprep.subr.bf16.mxu0 0
  %4365 = vmatpush2.bf16.msra.mxu0 0
  %4366 = vmatprep.subr.bf16.mxu0 0
  %4367 = vmatpush2.bf16.msra.mxu0 0
  %4368 = vmatprep.mubr.bf16.mxu0 0
  %4369 = vmatmul.mubr.bf16.gmra.mxu0 %v4334
  %v4370 = vpop.f32.mrf.mxu0
  %v4371 = vadd.f32 0.0, %v4370
  %v4372 = vpop.f32.mrf.mxu0
  %v4373 = vpop.f32.mrf.mxu0
  %v4374 = vadd.f32 0.0, %v4373
  %v4375 = vpop.f32.mrf.mxu0
  %4376 = vdwg.mxu0
  %v4377 = vadd.f32 %v4096, %v4371
  %v4378 = vadd.f32 %v4097, %v4374
  %s4379 = scalar_lea.vmem %s0, 240
  %v4380 = vld [vmem:[%s4379] sm:$0xff]
  %v4381 = vld [vmem:[%s4379 + $0x8] sm:$0xff]
  %v4384 = vunpack.c.l.b16 %v4380
  %v4385 = vunpack.c.h.b16 %v4380
  %v4386 = vunpack.c.l.b16 %v4381
  %v4387 = vunpack.c.h.b16 %v4381
  %v4388 = vpack.c.b16 %v4386, %v4384
  %v4389 = vpack.c.b16 %v4387, %v4385
  %4392 = vmatprep.subr.bf16.mxu0 0
  %4393 = vmatpush1.bf16.msra.mxu0 %v149
  %4394 = vmatprep.subr.bf16.mxu0 0
  %4395 = vmatpush1.bf16.msra.mxu0 %v148
  %4396 = vmatprep.subr.bf16.mxu0 0
  %4397 = vmatpush1.bf16.msra.mxu0 %v147
  %4398 = vmatprep.subr.bf16.mxu0 0
  %4399 = vmatpush1.bf16.msra.mxu0 %v146
  %4400 = vmatprep.subr.bf16.mxu0 0
  %4401 = vmatpush1.bf16.msra.mxu0 %v145
  %4402 = vmatprep.subr.bf16.mxu0 0
  %4403 = vmatpush1.bf16.msra.mxu0 %v144
  %4404 = vmatprep.subr.bf16.mxu0 0
  %4405 = vmatpush1.bf16.msra.mxu0 %v143
  %4406 = vmatprep.subr.bf16.mxu0 0
  %4407 = vmatpush1.bf16.msra.mxu0 %v142
  %4408 = vmatprep.subr.bf16.mxu0 0
  %4409 = vmatpush2.bf16.msra.mxu0 %v157
  %4410 = vmatprep.subr.bf16.mxu0 0
  %4411 = vmatpush2.bf16.msra.mxu0 %v156
  %4412 = vmatprep.subr.bf16.mxu0 0
  %4413 = vmatpush2.bf16.msra.mxu0 %v155
  %4414 = vmatprep.subr.bf16.mxu0 0
  %4415 = vmatpush2.bf16.msra.mxu0 %v154
  %4416 = vmatprep.subr.bf16.mxu0 0
  %4417 = vmatpush2.bf16.msra.mxu0 %v153
  %4418 = vmatprep.subr.bf16.mxu0 0
  %4419 = vmatpush2.bf16.msra.mxu0 %v152
  %4420 = vmatprep.subr.bf16.mxu0 0
  %4421 = vmatpush2.bf16.msra.mxu0 %v151
  %4422 = vmatprep.subr.bf16.mxu0 0
  %4423 = vmatpush2.bf16.msra.mxu0 %v150
  %4424 = vmatprep.mubr.bf16.mxu0 %v4389
  %4425 = vmatmul.mubr.bf16.gmra.mxu0 %v4388
  %v4426 = vpop.f32.mrf.mxu0
  %v4427 = vadd.f32 0.0, %v4426
  %v4428 = vpop.f32.mrf.mxu0
  %v4429 = vpop.f32.mrf.mxu0
  %v4430 = vadd.f32 0.0, %v4429
  %v4431 = vpop.f32.mrf.mxu0
  %4432 = vdwg.mxu0
  %s4433 = scalar_lea.vmem %s0, 640
  %v4434 = vld [vmem:[%s4433] sm:$0xff]
  %v4435 = vld [vmem:[%s4433 + $0x8] sm:$0xff]
  %v4438 = vunpack.c.l.b16 %v4434
  %v4439 = vunpack.c.h.b16 %v4434
  %v4440 = vunpack.c.l.b16 %v4435
  %v4441 = vunpack.c.h.b16 %v4435
  %v4442 = vpack.c.b16 %v4440, %v4438
  %v4443 = vpack.c.b16 %v4441, %v4439
  %4446 = vmatprep.subr.bf16.mxu0 0
  %4447 = vmatpush1.bf16.msra.mxu0 %v149
  %4448 = vmatprep.subr.bf16.mxu0 0
  %4449 = vmatpush1.bf16.msra.mxu0 %v148
  %4450 = vmatprep.subr.bf16.mxu0 0
  %4451 = vmatpush1.bf16.msra.mxu0 %v147
  %4452 = vmatprep.subr.bf16.mxu0 0
  %4453 = vmatpush1.bf16.msra.mxu0 %v146
  %4454 = vmatprep.subr.bf16.mxu0 0
  %4455 = vmatpush1.bf16.msra.mxu0 %v145
  %4456 = vmatprep.subr.bf16.mxu0 0
  %4457 = vmatpush1.bf16.msra.mxu0 %v144
  %4458 = vmatprep.subr.bf16.mxu0 0
  %4459 = vmatpush1.bf16.msra.mxu0 %v143
  %4460 = vmatprep.subr.bf16.mxu0 0
  %4461 = vmatpush1.bf16.msra.mxu0 %v142
  %4462 = vmatprep.subr.bf16.mxu0 0
  %4463 = vmatpush2.bf16.msra.mxu0 %v157
  %4464 = vmatprep.subr.bf16.mxu0 0
  %4465 = vmatpush2.bf16.msra.mxu0 %v156
  %4466 = vmatprep.subr.bf16.mxu0 0
  %4467 = vmatpush2.bf16.msra.mxu0 %v155
  %4468 = vmatprep.subr.bf16.mxu0 0
  %4469 = vmatpush2.bf16.msra.mxu0 %v154
  %4470 = vmatprep.subr.bf16.mxu0 0
  %4471 = vmatpush2.bf16.msra.mxu0 %v153
  %4472 = vmatprep.subr.bf16.mxu0 0
  %4473 = vmatpush2.bf16.msra.mxu0 %v152
  %4474 = vmatprep.subr.bf16.mxu0 0
  %4475 = vmatpush2.bf16.msra.mxu0 %v151
  %4476 = vmatprep.subr.bf16.mxu0 0
  %4477 = vmatpush2.bf16.msra.mxu0 %v150
  %4478 = vmatprep.mubr.bf16.mxu0 %v4443
  %4479 = vmatmul.mubr.bf16.gmra.mxu0 %v4442
  %v4480 = vpop.f32.mrf.mxu0
  %v4481 = vadd.f32 0.0, %v4480
  %v4482 = vpop.f32.mrf.mxu0
  %v4483 = vpop.f32.mrf.mxu0
  %v4484 = vadd.f32 0.0, %v4483
  %v4485 = vpop.f32.mrf.mxu0
  %4486 = vdwg.mxu0
  %v4487 = vmax.f32 %v4427, %v4481
  %v4488 = vmax.f32 %v4430, %v4484
  %s4489 = scalar_lea.vmem %s0, 1040
  %v4490 = vld [vmem:[%s4489] sm:$0xff]
  %v4491 = vld [vmem:[%s4489 + $0x8] sm:$0xff]
  %v4494 = vunpack.c.l.b16 %v4490
  %v4495 = vunpack.c.h.b16 %v4490
  %v4496 = vunpack.c.l.b16 %v4491
  %v4497 = vunpack.c.h.b16 %v4491
  %v4498 = vpack.c.b16 %v4496, %v4494
  %v4499 = vpack.c.b16 %v4497, %v4495
  %4502 = vmatprep.subr.bf16.mxu0 0
  %4503 = vmatpush1.bf16.msra.mxu0 %v149
  %4504 = vmatprep.subr.bf16.mxu0 0
  %4505 = vmatpush1.bf16.msra.mxu0 %v148
  %4506 = vmatprep.subr.bf16.mxu0 0
  %4507 = vmatpush1.bf16.msra.mxu0 %v147
  %4508 = vmatprep.subr.bf16.mxu0 0
  %4509 = vmatpush1.bf16.msra.mxu0 %v146
  %4510 = vmatprep.subr.bf16.mxu0 0
  %4511 = vmatpush1.bf16.msra.mxu0 %v145
  %4512 = vmatprep.subr.bf16.mxu0 0
  %4513 = vmatpush1.bf16.msra.mxu0 %v144
  %4514 = vmatprep.subr.bf16.mxu0 0
  %4515 = vmatpush1.bf16.msra.mxu0 %v143
  %4516 = vmatprep.subr.bf16.mxu0 0
  %4517 = vmatpush1.bf16.msra.mxu0 %v142
  %4518 = vmatprep.subr.bf16.mxu0 0
  %4519 = vmatpush2.bf16.msra.mxu0 %v157
  %4520 = vmatprep.subr.bf16.mxu0 0
  %4521 = vmatpush2.bf16.msra.mxu0 %v156
  %4522 = vmatprep.subr.bf16.mxu0 0
  %4523 = vmatpush2.bf16.msra.mxu0 %v155
  %4524 = vmatprep.subr.bf16.mxu0 0
  %4525 = vmatpush2.bf16.msra.mxu0 %v154
  %4526 = vmatprep.subr.bf16.mxu0 0
  %4527 = vmatpush2.bf16.msra.mxu0 %v153
  %4528 = vmatprep.subr.bf16.mxu0 0
  %4529 = vmatpush2.bf16.msra.mxu0 %v152
  %4530 = vmatprep.subr.bf16.mxu0 0
  %4531 = vmatpush2.bf16.msra.mxu0 %v151
  %4532 = vmatprep.subr.bf16.mxu0 0
  %4533 = vmatpush2.bf16.msra.mxu0 %v150
  %4534 = vmatprep.mubr.bf16.mxu0 %v4499
  %4535 = vmatmul.mubr.bf16.gmra.mxu0 %v4498
  %v4536 = vpop.f32.mrf.mxu0
  %v4537 = vadd.f32 0.0, %v4536
  %v4538 = vpop.f32.mrf.mxu0
  %v4539 = vpop.f32.mrf.mxu0
  %v4540 = vadd.f32 0.0, %v4539
  %v4541 = vpop.f32.mrf.mxu0
  %4542 = vdwg.mxu0
  %v4543 = vmax.f32 %v4487, %v4537
  %v4544 = vmax.f32 %v4488, %v4540
  %s4545 = scalar_lea.vmem %s0, 1440
  %v4546 = vld [vmem:[%s4545] sm:$0xff]
  %v4547 = vld [vmem:[%s4545 + $0x8] sm:$0xff]
  %v4550 = vunpack.c.l.b16 %v4546
  %v4551 = vunpack.c.h.b16 %v4546
  %v4552 = vunpack.c.l.b16 %v4547
  %v4553 = vunpack.c.h.b16 %v4547
  %v4554 = vpack.c.b16 %v4552, %v4550
  %v4555 = vpack.c.b16 %v4553, %v4551
  %4558 = vmatprep.subr.bf16.mxu0 0
  %4559 = vmatpush1.bf16.msra.mxu0 %v149
  %4560 = vmatprep.subr.bf16.mxu0 0
  %4561 = vmatpush1.bf16.msra.mxu0 %v148
  %4562 = vmatprep.subr.bf16.mxu0 0
  %4563 = vmatpush1.bf16.msra.mxu0 %v147
  %4564 = vmatprep.subr.bf16.mxu0 0
  %4565 = vmatpush1.bf16.msra.mxu0 %v146
  %4566 = vmatprep.subr.bf16.mxu0 0
  %4567 = vmatpush1.bf16.msra.mxu0 %v145
  %4568 = vmatprep.subr.bf16.mxu0 0
  %4569 = vmatpush1.bf16.msra.mxu0 %v144
  %4570 = vmatprep.subr.bf16.mxu0 0
  %4571 = vmatpush1.bf16.msra.mxu0 %v143
  %4572 = vmatprep.subr.bf16.mxu0 0
  %4573 = vmatpush1.bf16.msra.mxu0 %v142
  %4574 = vmatprep.subr.bf16.mxu0 0
  %4575 = vmatpush2.bf16.msra.mxu0 %v157
  %4576 = vmatprep.subr.bf16.mxu0 0
  %4577 = vmatpush2.bf16.msra.mxu0 %v156
  %4578 = vmatprep.subr.bf16.mxu0 0
  %4579 = vmatpush2.bf16.msra.mxu0 %v155
  %4580 = vmatprep.subr.bf16.mxu0 0
  %4581 = vmatpush2.bf16.msra.mxu0 %v154
  %4582 = vmatprep.subr.bf16.mxu0 0
  %4583 = vmatpush2.bf16.msra.mxu0 %v153
  %4584 = vmatprep.subr.bf16.mxu0 0
  %4585 = vmatpush2.bf16.msra.mxu0 %v152
  %4586 = vmatprep.subr.bf16.mxu0 0
  %4587 = vmatpush2.bf16.msra.mxu0 %v151
  %4588 = vmatprep.subr.bf16.mxu0 0
  %4589 = vmatpush2.bf16.msra.mxu0 %v150
  %4590 = vmatprep.mubr.bf16.mxu0 %v4555
  %4591 = vmatmul.mubr.bf16.gmra.mxu0 %v4554
  %v4592 = vpop.f32.mrf.mxu0
  %v4593 = vadd.f32 0.0, %v4592
  %v4594 = vpop.f32.mrf.mxu0
  %v4595 = vpop.f32.mrf.mxu0
  %v4596 = vadd.f32 0.0, %v4595
  %v4597 = vpop.f32.mrf.mxu0
  %4598 = vdwg.mxu0
  %v4599 = vmax.f32 %v4543, %v4593
  %v4600 = vmax.f32 %v4544, %v4596
  %v4601 = vadd.f32 %v4599, %v387
  %v4602 = vadd.f32 %v4600, %v387
  %v4603 = vmax.f32 %v4601, 0.0
  %v4604 = vmax.f32 %v4602, 0.0
  %v4605 = vpack.c.bf16 %v4604, %v4603
  %v4606 = vld [vmem:[%s3 + $0x78] sm:$0xf]
  %v4607 = vld [vmem:[%s3 + $0x7c] sm:$0xf]
  %v4610 = vunpack.c.l.b16 %v4606
  %v4611 = vunpack.c.l.b16 %v4607
  %v4612 = vpack.c.b16 %v4611, %v4610
  %v4615 = vsel %vm631, %v4605, 0
  %4617 = vmatprep.subr.bf16.mxu0 0
  %4618 = vmatpush1.bf16.msra.mxu0 0
  %4619 = vmatprep.subr.bf16.mxu0 0
  %4620 = vmatpush1.bf16.msra.mxu0 0
  %4621 = vmatprep.subr.bf16.mxu0 0
  %4622 = vmatpush1.bf16.msra.mxu0 0
  %4623 = vmatprep.subr.bf16.mxu0 0
  %4624 = vmatpush1.bf16.msra.mxu0 0
  %4625 = vmatprep.subr.bf16.mxu0 0
  %4626 = vmatpush1.bf16.msra.mxu0 0
  %4627 = vmatprep.subr.bf16.mxu0 0
  %4628 = vmatpush1.bf16.msra.mxu0 0
  %4629 = vmatprep.subr.bf16.mxu0 0
  %4630 = vmatpush1.bf16.msra.mxu0 0
  %4631 = vmatprep.subr.bf16.mxu0 0
  %4632 = vmatpush1.bf16.msra.mxu0 %v4612
  %4633 = vmatprep.subr.bf16.mxu0 0
  %4634 = vmatpush2.bf16.msra.mxu0 0
  %4635 = vmatprep.subr.bf16.mxu0 0
  %4636 = vmatpush2.bf16.msra.mxu0 0
  %4637 = vmatprep.subr.bf16.mxu0 0
  %4638 = vmatpush2.bf16.msra.mxu0 0
  %4639 = vmatprep.subr.bf16.mxu0 0
  %4640 = vmatpush2.bf16.msra.mxu0 0
  %4641 = vmatprep.subr.bf16.mxu0 0
  %4642 = vmatpush2.bf16.msra.mxu0 0
  %4643 = vmatprep.subr.bf16.mxu0 0
  %4644 = vmatpush2.bf16.msra.mxu0 0
  %4645 = vmatprep.subr.bf16.mxu0 0
  %4646 = vmatpush2.bf16.msra.mxu0 0
  %4647 = vmatprep.subr.bf16.mxu0 0
  %4648 = vmatpush2.bf16.msra.mxu0 0
  %4649 = vmatprep.mubr.bf16.mxu0 0
  %4650 = vmatmul.mubr.bf16.gmra.mxu0 %v4615
  %v4651 = vpop.f32.mrf.mxu0
  %v4652 = vadd.f32 0.0, %v4651
  %v4653 = vpop.f32.mrf.mxu0
  %v4654 = vpop.f32.mrf.mxu0
  %v4655 = vadd.f32 0.0, %v4654
  %v4656 = vpop.f32.mrf.mxu0
  %4657 = vdwg.mxu0
  %v4658 = vadd.f32 %v4377, %v4652
  %v4659 = vadd.f32 %v4378, %v4655
  %s4660 = scalar_lea.vmem %s0, 256
  %v4661 = vld [vmem:[%s4660] sm:$0xff]
  %v4662 = vld [vmem:[%s4660 + $0x8] sm:$0xff]
  %v4665 = vunpack.c.l.b16 %v4661
  %v4666 = vunpack.c.h.b16 %v4661
  %v4667 = vunpack.c.l.b16 %v4662
  %v4668 = vunpack.c.h.b16 %v4662
  %v4669 = vpack.c.b16 %v4667, %v4665
  %v4670 = vpack.c.b16 %v4668, %v4666
  %4673 = vmatprep.subr.bf16.mxu0 0
  %4674 = vmatpush1.bf16.msra.mxu0 %v149
  %4675 = vmatprep.subr.bf16.mxu0 0
  %4676 = vmatpush1.bf16.msra.mxu0 %v148
  %4677 = vmatprep.subr.bf16.mxu0 0
  %4678 = vmatpush1.bf16.msra.mxu0 %v147
  %4679 = vmatprep.subr.bf16.mxu0 0
  %4680 = vmatpush1.bf16.msra.mxu0 %v146
  %4681 = vmatprep.subr.bf16.mxu0 0
  %4682 = vmatpush1.bf16.msra.mxu0 %v145
  %4683 = vmatprep.subr.bf16.mxu0 0
  %4684 = vmatpush1.bf16.msra.mxu0 %v144
  %4685 = vmatprep.subr.bf16.mxu0 0
  %4686 = vmatpush1.bf16.msra.mxu0 %v143
  %4687 = vmatprep.subr.bf16.mxu0 0
  %4688 = vmatpush1.bf16.msra.mxu0 %v142
  %4689 = vmatprep.subr.bf16.mxu0 0
  %4690 = vmatpush2.bf16.msra.mxu0 %v157
  %4691 = vmatprep.subr.bf16.mxu0 0
  %4692 = vmatpush2.bf16.msra.mxu0 %v156
  %4693 = vmatprep.subr.bf16.mxu0 0
  %4694 = vmatpush2.bf16.msra.mxu0 %v155
  %4695 = vmatprep.subr.bf16.mxu0 0
  %4696 = vmatpush2.bf16.msra.mxu0 %v154
  %4697 = vmatprep.subr.bf16.mxu0 0
  %4698 = vmatpush2.bf16.msra.mxu0 %v153
  %4699 = vmatprep.subr.bf16.mxu0 0
  %4700 = vmatpush2.bf16.msra.mxu0 %v152
  %4701 = vmatprep.subr.bf16.mxu0 0
  %4702 = vmatpush2.bf16.msra.mxu0 %v151
  %4703 = vmatprep.subr.bf16.mxu0 0
  %4704 = vmatpush2.bf16.msra.mxu0 %v150
  %4705 = vmatprep.mubr.bf16.mxu0 %v4670
  %4706 = vmatmul.mubr.bf16.gmra.mxu0 %v4669
  %v4707 = vpop.f32.mrf.mxu0
  %v4708 = vadd.f32 0.0, %v4707
  %v4709 = vpop.f32.mrf.mxu0
  %v4710 = vpop.f32.mrf.mxu0
  %v4711 = vadd.f32 0.0, %v4710
  %v4712 = vpop.f32.mrf.mxu0
  %4713 = vdwg.mxu0
  %s4714 = scalar_lea.vmem %s0, 656
  %v4715 = vld [vmem:[%s4714] sm:$0xff]
  %v4716 = vld [vmem:[%s4714 + $0x8] sm:$0xff]
  %v4719 = vunpack.c.l.b16 %v4715
  %v4720 = vunpack.c.h.b16 %v4715
  %v4721 = vunpack.c.l.b16 %v4716
  %v4722 = vunpack.c.h.b16 %v4716
  %v4723 = vpack.c.b16 %v4721, %v4719
  %v4724 = vpack.c.b16 %v4722, %v4720
  %4727 = vmatprep.subr.bf16.mxu0 0
  %4728 = vmatpush1.bf16.msra.mxu0 %v149
  %4729 = vmatprep.subr.bf16.mxu0 0
  %4730 = vmatpush1.bf16.msra.mxu0 %v148
  %4731 = vmatprep.subr.bf16.mxu0 0
  %4732 = vmatpush1.bf16.msra.mxu0 %v147
  %4733 = vmatprep.subr.bf16.mxu0 0
  %4734 = vmatpush1.bf16.msra.mxu0 %v146
  %4735 = vmatprep.subr.bf16.mxu0 0
  %4736 = vmatpush1.bf16.msra.mxu0 %v145
  %4737 = vmatprep.subr.bf16.mxu0 0
  %4738 = vmatpush1.bf16.msra.mxu0 %v144
  %4739 = vmatprep.subr.bf16.mxu0 0
  %4740 = vmatpush1.bf16.msra.mxu0 %v143
  %4741 = vmatprep.subr.bf16.mxu0 0
  %4742 = vmatpush1.bf16.msra.mxu0 %v142
  %4743 = vmatprep.subr.bf16.mxu0 0
  %4744 = vmatpush2.bf16.msra.mxu0 %v157
  %4745 = vmatprep.subr.bf16.mxu0 0
  %4746 = vmatpush2.bf16.msra.mxu0 %v156
  %4747 = vmatprep.subr.bf16.mxu0 0
  %4748 = vmatpush2.bf16.msra.mxu0 %v155
  %4749 = vmatprep.subr.bf16.mxu0 0
  %4750 = vmatpush2.bf16.msra.mxu0 %v154
  %4751 = vmatprep.subr.bf16.mxu0 0
  %4752 = vmatpush2.bf16.msra.mxu0 %v153
  %4753 = vmatprep.subr.bf16.mxu0 0
  %4754 = vmatpush2.bf16.msra.mxu0 %v152
  %4755 = vmatprep.subr.bf16.mxu0 0
  %4756 = vmatpush2.bf16.msra.mxu0 %v151
  %4757 = vmatprep.subr.bf16.mxu0 0
  %4758 = vmatpush2.bf16.msra.mxu0 %v150
  %4759 = vmatprep.mubr.bf16.mxu0 %v4724
  %4760 = vmatmul.mubr.bf16.gmra.mxu0 %v4723
  %v4761 = vpop.f32.mrf.mxu0
  %v4762 = vadd.f32 0.0, %v4761
  %v4763 = vpop.f32.mrf.mxu0
  %v4764 = vpop.f32.mrf.mxu0
  %v4765 = vadd.f32 0.0, %v4764
  %v4766 = vpop.f32.mrf.mxu0
  %4767 = vdwg.mxu0
  %v4768 = vmax.f32 %v4708, %v4762
  %v4769 = vmax.f32 %v4711, %v4765
  %s4770 = scalar_lea.vmem %s0, 1056
  %v4771 = vld [vmem:[%s4770] sm:$0xff]
  %v4772 = vld [vmem:[%s4770 + $0x8] sm:$0xff]
  %v4775 = vunpack.c.l.b16 %v4771
  %v4776 = vunpack.c.h.b16 %v4771
  %v4777 = vunpack.c.l.b16 %v4772
  %v4778 = vunpack.c.h.b16 %v4772
  %v4779 = vpack.c.b16 %v4777, %v4775
  %v4780 = vpack.c.b16 %v4778, %v4776
  %4783 = vmatprep.subr.bf16.mxu0 0
  %4784 = vmatpush1.bf16.msra.mxu0 %v149
  %4785 = vmatprep.subr.bf16.mxu0 0
  %4786 = vmatpush1.bf16.msra.mxu0 %v148
  %4787 = vmatprep.subr.bf16.mxu0 0
  %4788 = vmatpush1.bf16.msra.mxu0 %v147
  %4789 = vmatprep.subr.bf16.mxu0 0
  %4790 = vmatpush1.bf16.msra.mxu0 %v146
  %4791 = vmatprep.subr.bf16.mxu0 0
  %4792 = vmatpush1.bf16.msra.mxu0 %v145
  %4793 = vmatprep.subr.bf16.mxu0 0
  %4794 = vmatpush1.bf16.msra.mxu0 %v144
  %4795 = vmatprep.subr.bf16.mxu0 0
  %4796 = vmatpush1.bf16.msra.mxu0 %v143
  %4797 = vmatprep.subr.bf16.mxu0 0
  %4798 = vmatpush1.bf16.msra.mxu0 %v142
  %4799 = vmatprep.subr.bf16.mxu0 0
  %4800 = vmatpush2.bf16.msra.mxu0 %v157
  %4801 = vmatprep.subr.bf16.mxu0 0
  %4802 = vmatpush2.bf16.msra.mxu0 %v156
  %4803 = vmatprep.subr.bf16.mxu0 0
  %4804 = vmatpush2.bf16.msra.mxu0 %v155
  %4805 = vmatprep.subr.bf16.mxu0 0
  %4806 = vmatpush2.bf16.msra.mxu0 %v154
  %4807 = vmatprep.subr.bf16.mxu0 0
  %4808 = vmatpush2.bf16.msra.mxu0 %v153
  %4809 = vmatprep.subr.bf16.mxu0 0
  %4810 = vmatpush2.bf16.msra.mxu0 %v152
  %4811 = vmatprep.subr.bf16.mxu0 0
  %4812 = vmatpush2.bf16.msra.mxu0 %v151
  %4813 = vmatprep.subr.bf16.mxu0 0
  %4814 = vmatpush2.bf16.msra.mxu0 %v150
  %4815 = vmatprep.mubr.bf16.mxu0 %v4780
  %4816 = vmatmul.mubr.bf16.gmra.mxu0 %v4779
  %v4817 = vpop.f32.mrf.mxu0
  %v4818 = vadd.f32 0.0, %v4817
  %v4819 = vpop.f32.mrf.mxu0
  %v4820 = vpop.f32.mrf.mxu0
  %v4821 = vadd.f32 0.0, %v4820
  %v4822 = vpop.f32.mrf.mxu0
  %4823 = vdwg.mxu0
  %v4824 = vmax.f32 %v4768, %v4818
  %v4825 = vmax.f32 %v4769, %v4821
  %s4826 = scalar_lea.vmem %s0, 1456
  %v4827 = vld [vmem:[%s4826] sm:$0xff]
  %v4828 = vld [vmem:[%s4826 + $0x8] sm:$0xff]
  %v4831 = vunpack.c.l.b16 %v4827
  %v4832 = vunpack.c.h.b16 %v4827
  %v4833 = vunpack.c.l.b16 %v4828
  %v4834 = vunpack.c.h.b16 %v4828
  %v4835 = vpack.c.b16 %v4833, %v4831
  %v4836 = vpack.c.b16 %v4834, %v4832
  %4839 = vmatprep.subr.bf16.mxu0 0
  %4840 = vmatpush1.bf16.msra.mxu0 %v149
  %4841 = vmatprep.subr.bf16.mxu0 0
  %4842 = vmatpush1.bf16.msra.mxu0 %v148
  %4843 = vmatprep.subr.bf16.mxu0 0
  %4844 = vmatpush1.bf16.msra.mxu0 %v147
  %4845 = vmatprep.subr.bf16.mxu0 0
  %4846 = vmatpush1.bf16.msra.mxu0 %v146
  %4847 = vmatprep.subr.bf16.mxu0 0
  %4848 = vmatpush1.bf16.msra.mxu0 %v145
  %4849 = vmatprep.subr.bf16.mxu0 0
  %4850 = vmatpush1.bf16.msra.mxu0 %v144
  %4851 = vmatprep.subr.bf16.mxu0 0
  %4852 = vmatpush1.bf16.msra.mxu0 %v143
  %4853 = vmatprep.subr.bf16.mxu0 0
  %4854 = vmatpush1.bf16.msra.mxu0 %v142
  %4855 = vmatprep.subr.bf16.mxu0 0
  %4856 = vmatpush2.bf16.msra.mxu0 %v157
  %4857 = vmatprep.subr.bf16.mxu0 0
  %4858 = vmatpush2.bf16.msra.mxu0 %v156
  %4859 = vmatprep.subr.bf16.mxu0 0
  %4860 = vmatpush2.bf16.msra.mxu0 %v155
  %4861 = vmatprep.subr.bf16.mxu0 0
  %4862 = vmatpush2.bf16.msra.mxu0 %v154
  %4863 = vmatprep.subr.bf16.mxu0 0
  %4864 = vmatpush2.bf16.msra.mxu0 %v153
  %4865 = vmatprep.subr.bf16.mxu0 0
  %4866 = vmatpush2.bf16.msra.mxu0 %v152
  %4867 = vmatprep.subr.bf16.mxu0 0
  %4868 = vmatpush2.bf16.msra.mxu0 %v151
  %4869 = vmatprep.subr.bf16.mxu0 0
  %4870 = vmatpush2.bf16.msra.mxu0 %v150
  %4871 = vmatprep.mubr.bf16.mxu0 %v4836
  %4872 = vmatmul.mubr.bf16.gmra.mxu0 %v4835
  %v4873 = vpop.f32.mrf.mxu0
  %v4874 = vadd.f32 0.0, %v4873
  %v4875 = vpop.f32.mrf.mxu0
  %v4876 = vpop.f32.mrf.mxu0
  %v4877 = vadd.f32 0.0, %v4876
  %v4878 = vpop.f32.mrf.mxu0
  %4879 = vdwg.mxu0
  %v4880 = vmax.f32 %v4824, %v4874
  %v4881 = vmax.f32 %v4825, %v4877
  %v4882 = vadd.f32 %v4880, %v387
  %v4883 = vadd.f32 %v4881, %v387
  %v4884 = vmax.f32 %v4882, 0.0
  %v4885 = vmax.f32 %v4883, 0.0
  %v4886 = vpack.c.bf16 %v4885, %v4884
  %v4887 = vld [vmem:[%s3 + $0x80] sm:$0xf]
  %v4888 = vld [vmem:[%s3 + $0x84] sm:$0xf]
  %v4891 = vunpack.c.l.b16 %v4887
  %v4892 = vunpack.c.l.b16 %v4888
  %v4893 = vpack.c.b16 %v4892, %v4891
  %v4896 = vsel %vm631, %v4886, 0
  %4898 = vmatprep.subr.bf16.mxu0 0
  %4899 = vmatpush1.bf16.msra.mxu0 0
  %4900 = vmatprep.subr.bf16.mxu0 0
  %4901 = vmatpush1.bf16.msra.mxu0 0
  %4902 = vmatprep.subr.bf16.mxu0 0
  %4903 = vmatpush1.bf16.msra.mxu0 0
  %4904 = vmatprep.subr.bf16.mxu0 0
  %4905 = vmatpush1.bf16.msra.mxu0 0
  %4906 = vmatprep.subr.bf16.mxu0 0
  %4907 = vmatpush1.bf16.msra.mxu0 0
  %4908 = vmatprep.subr.bf16.mxu0 0
  %4909 = vmatpush1.bf16.msra.mxu0 0
  %4910 = vmatprep.subr.bf16.mxu0 0
  %4911 = vmatpush1.bf16.msra.mxu0 0
  %4912 = vmatprep.subr.bf16.mxu0 0
  %4913 = vmatpush1.bf16.msra.mxu0 %v4893
  %4914 = vmatprep.subr.bf16.mxu0 0
  %4915 = vmatpush2.bf16.msra.mxu0 0
  %4916 = vmatprep.subr.bf16.mxu0 0
  %4917 = vmatpush2.bf16.msra.mxu0 0
  %4918 = vmatprep.subr.bf16.mxu0 0
  %4919 = vmatpush2.bf16.msra.mxu0 0
  %4920 = vmatprep.subr.bf16.mxu0 0
  %4921 = vmatpush2.bf16.msra.mxu0 0
  %4922 = vmatprep.subr.bf16.mxu0 0
  %4923 = vmatpush2.bf16.msra.mxu0 0
  %4924 = vmatprep.subr.bf16.mxu0 0
  %4925 = vmatpush2.bf16.msra.mxu0 0
  %4926 = vmatprep.subr.bf16.mxu0 0
  %4927 = vmatpush2.bf16.msra.mxu0 0
  %4928 = vmatprep.subr.bf16.mxu0 0
  %4929 = vmatpush2.bf16.msra.mxu0 0
  %4930 = vmatprep.mubr.bf16.mxu0 0
  %4931 = vmatmul.mubr.bf16.gmra.mxu0 %v4896
  %v4932 = vpop.f32.mrf.mxu0
  %v4933 = vadd.f32 0.0, %v4932
  %v4934 = vpop.f32.mrf.mxu0
  %v4935 = vpop.f32.mrf.mxu0
  %v4936 = vadd.f32 0.0, %v4935
  %v4937 = vpop.f32.mrf.mxu0
  %4938 = vdwg.mxu0
  %v4939 = vadd.f32 %v4658, %v4933
  %v4940 = vadd.f32 %v4659, %v4936
  %s4941 = scalar_lea.vmem %s0, 272
  %v4942 = vld [vmem:[%s4941] sm:$0xff]
  %v4943 = vld [vmem:[%s4941 + $0x8] sm:$0xff]
  %v4946 = vunpack.c.l.b16 %v4942
  %v4947 = vunpack.c.h.b16 %v4942
  %v4948 = vunpack.c.l.b16 %v4943
  %v4949 = vunpack.c.h.b16 %v4943
  %v4950 = vpack.c.b16 %v4948, %v4946
  %v4951 = vpack.c.b16 %v4949, %v4947
  %4954 = vmatprep.subr.bf16.mxu0 0
  %4955 = vmatpush1.bf16.msra.mxu0 %v149
  %4956 = vmatprep.subr.bf16.mxu0 0
  %4957 = vmatpush1.bf16.msra.mxu0 %v148
  %4958 = vmatprep.subr.bf16.mxu0 0
  %4959 = vmatpush1.bf16.msra.mxu0 %v147
  %4960 = vmatprep.subr.bf16.mxu0 0
  %4961 = vmatpush1.bf16.msra.mxu0 %v146
  %4962 = vmatprep.subr.bf16.mxu0 0
  %4963 = vmatpush1.bf16.msra.mxu0 %v145
  %4964 = vmatprep.subr.bf16.mxu0 0
  %4965 = vmatpush1.bf16.msra.mxu0 %v144
  %4966 = vmatprep.subr.bf16.mxu0 0
  %4967 = vmatpush1.bf16.msra.mxu0 %v143
  %4968 = vmatprep.subr.bf16.mxu0 0
  %4969 = vmatpush1.bf16.msra.mxu0 %v142
  %4970 = vmatprep.subr.bf16.mxu0 0
  %4971 = vmatpush2.bf16.msra.mxu0 %v157
  %4972 = vmatprep.subr.bf16.mxu0 0
  %4973 = vmatpush2.bf16.msra.mxu0 %v156
  %4974 = vmatprep.subr.bf16.mxu0 0
  %4975 = vmatpush2.bf16.msra.mxu0 %v155
  %4976 = vmatprep.subr.bf16.mxu0 0
  %4977 = vmatpush2.bf16.msra.mxu0 %v154
  %4978 = vmatprep.subr.bf16.mxu0 0
  %4979 = vmatpush2.bf16.msra.mxu0 %v153
  %4980 = vmatprep.subr.bf16.mxu0 0
  %4981 = vmatpush2.bf16.msra.mxu0 %v152
  %4982 = vmatprep.subr.bf16.mxu0 0
  %4983 = vmatpush2.bf16.msra.mxu0 %v151
  %4984 = vmatprep.subr.bf16.mxu0 0
  %4985 = vmatpush2.bf16.msra.mxu0 %v150
  %4986 = vmatprep.mubr.bf16.mxu0 %v4951
  %4987 = vmatmul.mubr.bf16.gmra.mxu0 %v4950
  %v4988 = vpop.f32.mrf.mxu0
  %v4989 = vadd.f32 0.0, %v4988
  %v4990 = vpop.f32.mrf.mxu0
  %v4991 = vpop.f32.mrf.mxu0
  %v4992 = vadd.f32 0.0, %v4991
  %v4993 = vpop.f32.mrf.mxu0
  %4994 = vdwg.mxu0
  %s4995 = scalar_lea.vmem %s0, 672
  %v4996 = vld [vmem:[%s4995] sm:$0xff]
  %v4997 = vld [vmem:[%s4995 + $0x8] sm:$0xff]
  %v5000 = vunpack.c.l.b16 %v4996
  %v5001 = vunpack.c.h.b16 %v4996
  %v5002 = vunpack.c.l.b16 %v4997
  %v5003 = vunpack.c.h.b16 %v4997
  %v5004 = vpack.c.b16 %v5002, %v5000
  %v5005 = vpack.c.b16 %v5003, %v5001
  %5008 = vmatprep.subr.bf16.mxu0 0
  %5009 = vmatpush1.bf16.msra.mxu0 %v149
  %5010 = vmatprep.subr.bf16.mxu0 0
  %5011 = vmatpush1.bf16.msra.mxu0 %v148
  %5012 = vmatprep.subr.bf16.mxu0 0
  %5013 = vmatpush1.bf16.msra.mxu0 %v147
  %5014 = vmatprep.subr.bf16.mxu0 0
  %5015 = vmatpush1.bf16.msra.mxu0 %v146
  %5016 = vmatprep.subr.bf16.mxu0 0
  %5017 = vmatpush1.bf16.msra.mxu0 %v145
  %5018 = vmatprep.subr.bf16.mxu0 0
  %5019 = vmatpush1.bf16.msra.mxu0 %v144
  %5020 = vmatprep.subr.bf16.mxu0 0
  %5021 = vmatpush1.bf16.msra.mxu0 %v143
  %5022 = vmatprep.subr.bf16.mxu0 0
  %5023 = vmatpush1.bf16.msra.mxu0 %v142
  %5024 = vmatprep.subr.bf16.mxu0 0
  %5025 = vmatpush2.bf16.msra.mxu0 %v157
  %5026 = vmatprep.subr.bf16.mxu0 0
  %5027 = vmatpush2.bf16.msra.mxu0 %v156
  %5028 = vmatprep.subr.bf16.mxu0 0
  %5029 = vmatpush2.bf16.msra.mxu0 %v155
  %5030 = vmatprep.subr.bf16.mxu0 0
  %5031 = vmatpush2.bf16.msra.mxu0 %v154
  %5032 = vmatprep.subr.bf16.mxu0 0
  %5033 = vmatpush2.bf16.msra.mxu0 %v153
  %5034 = vmatprep.subr.bf16.mxu0 0
  %5035 = vmatpush2.bf16.msra.mxu0 %v152
  %5036 = vmatprep.subr.bf16.mxu0 0
  %5037 = vmatpush2.bf16.msra.mxu0 %v151
  %5038 = vmatprep.subr.bf16.mxu0 0
  %5039 = vmatpush2.bf16.msra.mxu0 %v150
  %5040 = vmatprep.mubr.bf16.mxu0 %v5005
  %5041 = vmatmul.mubr.bf16.gmra.mxu0 %v5004
  %v5042 = vpop.f32.mrf.mxu0
  %v5043 = vadd.f32 0.0, %v5042
  %v5044 = vpop.f32.mrf.mxu0
  %v5045 = vpop.f32.mrf.mxu0
  %v5046 = vadd.f32 0.0, %v5045
  %v5047 = vpop.f32.mrf.mxu0
  %5048 = vdwg.mxu0
  %v5049 = vmax.f32 %v4989, %v5043
  %v5050 = vmax.f32 %v4992, %v5046
  %s5051 = scalar_lea.vmem %s0, 1072
  %v5052 = vld [vmem:[%s5051] sm:$0xff]
  %v5053 = vld [vmem:[%s5051 + $0x8] sm:$0xff]
  %v5056 = vunpack.c.l.b16 %v5052
  %v5057 = vunpack.c.h.b16 %v5052
  %v5058 = vunpack.c.l.b16 %v5053
  %v5059 = vunpack.c.h.b16 %v5053
  %v5060 = vpack.c.b16 %v5058, %v5056
  %v5061 = vpack.c.b16 %v5059, %v5057
  %5064 = vmatprep.subr.bf16.mxu0 0
  %5065 = vmatpush1.bf16.msra.mxu0 %v149
  %5066 = vmatprep.subr.bf16.mxu0 0
  %5067 = vmatpush1.bf16.msra.mxu0 %v148
  %5068 = vmatprep.subr.bf16.mxu0 0
  %5069 = vmatpush1.bf16.msra.mxu0 %v147
  %5070 = vmatprep.subr.bf16.mxu0 0
  %5071 = vmatpush1.bf16.msra.mxu0 %v146
  %5072 = vmatprep.subr.bf16.mxu0 0
  %5073 = vmatpush1.bf16.msra.mxu0 %v145
  %5074 = vmatprep.subr.bf16.mxu0 0
  %5075 = vmatpush1.bf16.msra.mxu0 %v144
  %5076 = vmatprep.subr.bf16.mxu0 0
  %5077 = vmatpush1.bf16.msra.mxu0 %v143
  %5078 = vmatprep.subr.bf16.mxu0 0
  %5079 = vmatpush1.bf16.msra.mxu0 %v142
  %5080 = vmatprep.subr.bf16.mxu0 0
  %5081 = vmatpush2.bf16.msra.mxu0 %v157
  %5082 = vmatprep.subr.bf16.mxu0 0
  %5083 = vmatpush2.bf16.msra.mxu0 %v156
  %5084 = vmatprep.subr.bf16.mxu0 0
  %5085 = vmatpush2.bf16.msra.mxu0 %v155
  %5086 = vmatprep.subr.bf16.mxu0 0
  %5087 = vmatpush2.bf16.msra.mxu0 %v154
  %5088 = vmatprep.subr.bf16.mxu0 0
  %5089 = vmatpush2.bf16.msra.mxu0 %v153
  %5090 = vmatprep.subr.bf16.mxu0 0
  %5091 = vmatpush2.bf16.msra.mxu0 %v152
  %5092 = vmatprep.subr.bf16.mxu0 0
  %5093 = vmatpush2.bf16.msra.mxu0 %v151
  %5094 = vmatprep.subr.bf16.mxu0 0
  %5095 = vmatpush2.bf16.msra.mxu0 %v150
  %5096 = vmatprep.mubr.bf16.mxu0 %v5061
  %5097 = vmatmul.mubr.bf16.gmra.mxu0 %v5060
  %v5098 = vpop.f32.mrf.mxu0
  %v5099 = vadd.f32 0.0, %v5098
  %v5100 = vpop.f32.mrf.mxu0
  %v5101 = vpop.f32.mrf.mxu0
  %v5102 = vadd.f32 0.0, %v5101
  %v5103 = vpop.f32.mrf.mxu0
  %5104 = vdwg.mxu0
  %v5105 = vmax.f32 %v5049, %v5099
  %v5106 = vmax.f32 %v5050, %v5102
  %s5107 = scalar_lea.vmem %s0, 1472
  %v5108 = vld [vmem:[%s5107] sm:$0xff]
  %v5109 = vld [vmem:[%s5107 + $0x8] sm:$0xff]
  %v5112 = vunpack.c.l.b16 %v5108
  %v5113 = vunpack.c.h.b16 %v5108
  %v5114 = vunpack.c.l.b16 %v5109
  %v5115 = vunpack.c.h.b16 %v5109
  %v5116 = vpack.c.b16 %v5114, %v5112
  %v5117 = vpack.c.b16 %v5115, %v5113
  %5120 = vmatprep.subr.bf16.mxu0 0
  %5121 = vmatpush1.bf16.msra.mxu0 %v149
  %5122 = vmatprep.subr.bf16.mxu0 0
  %5123 = vmatpush1.bf16.msra.mxu0 %v148
  %5124 = vmatprep.subr.bf16.mxu0 0
  %5125 = vmatpush1.bf16.msra.mxu0 %v147
  %5126 = vmatprep.subr.bf16.mxu0 0
  %5127 = vmatpush1.bf16.msra.mxu0 %v146
  %5128 = vmatprep.subr.bf16.mxu0 0
  %5129 = vmatpush1.bf16.msra.mxu0 %v145
  %5130 = vmatprep.subr.bf16.mxu0 0
  %5131 = vmatpush1.bf16.msra.mxu0 %v144
  %5132 = vmatprep.subr.bf16.mxu0 0
  %5133 = vmatpush1.bf16.msra.mxu0 %v143
  %5134 = vmatprep.subr.bf16.mxu0 0
  %5135 = vmatpush1.bf16.msra.mxu0 %v142
  %5136 = vmatprep.subr.bf16.mxu0 0
  %5137 = vmatpush2.bf16.msra.mxu0 %v157
  %5138 = vmatprep.subr.bf16.mxu0 0
  %5139 = vmatpush2.bf16.msra.mxu0 %v156
  %5140 = vmatprep.subr.bf16.mxu0 0
  %5141 = vmatpush2.bf16.msra.mxu0 %v155
  %5142 = vmatprep.subr.bf16.mxu0 0
  %5143 = vmatpush2.bf16.msra.mxu0 %v154
  %5144 = vmatprep.subr.bf16.mxu0 0
  %5145 = vmatpush2.bf16.msra.mxu0 %v153
  %5146 = vmatprep.subr.bf16.mxu0 0
  %5147 = vmatpush2.bf16.msra.mxu0 %v152
  %5148 = vmatprep.subr.bf16.mxu0 0
  %5149 = vmatpush2.bf16.msra.mxu0 %v151
  %5150 = vmatprep.subr.bf16.mxu0 0
  %5151 = vmatpush2.bf16.msra.mxu0 %v150
  %5152 = vmatprep.mubr.bf16.mxu0 %v5117
  %5153 = vmatmul.mubr.bf16.gmra.mxu0 %v5116
  %v5154 = vpop.f32.mrf.mxu0
  %v5155 = vadd.f32 0.0, %v5154
  %v5156 = vpop.f32.mrf.mxu0
  %v5157 = vpop.f32.mrf.mxu0
  %v5158 = vadd.f32 0.0, %v5157
  %v5159 = vpop.f32.mrf.mxu0
  %5160 = vdwg.mxu0
  %v5161 = vmax.f32 %v5105, %v5155
  %v5162 = vmax.f32 %v5106, %v5158
  %v5163 = vadd.f32 %v5161, %v387
  %v5164 = vadd.f32 %v5162, %v387
  %v5165 = vmax.f32 %v5163, 0.0
  %v5166 = vmax.f32 %v5164, 0.0
  %v5167 = vpack.c.bf16 %v5166, %v5165
  %v5168 = vld [vmem:[%s3 + $0x88] sm:$0xf]
  %v5169 = vld [vmem:[%s3 + $0x8c] sm:$0xf]
  %v5172 = vunpack.c.l.b16 %v5168
  %v5173 = vunpack.c.l.b16 %v5169
  %v5174 = vpack.c.b16 %v5173, %v5172
  %v5177 = vsel %vm631, %v5167, 0
  %5179 = vmatprep.subr.bf16.mxu0 0
  %5180 = vmatpush1.bf16.msra.mxu0 0
  %5181 = vmatprep.subr.bf16.mxu0 0
  %5182 = vmatpush1.bf16.msra.mxu0 0
  %5183 = vmatprep.subr.bf16.mxu0 0
  %5184 = vmatpush1.bf16.msra.mxu0 0
  %5185 = vmatprep.subr.bf16.mxu0 0
  %5186 = vmatpush1.bf16.msra.mxu0 0
  %5187 = vmatprep.subr.bf16.mxu0 0
  %5188 = vmatpush1.bf16.msra.mxu0 0
  %5189 = vmatprep.subr.bf16.mxu0 0
  %5190 = vmatpush1.bf16.msra.mxu0 0
  %5191 = vmatprep.subr.bf16.mxu0 0
  %5192 = vmatpush1.bf16.msra.mxu0 0
  %5193 = vmatprep.subr.bf16.mxu0 0
  %5194 = vmatpush1.bf16.msra.mxu0 %v5174
  %5195 = vmatprep.subr.bf16.mxu0 0
  %5196 = vmatpush2.bf16.msra.mxu0 0
  %5197 = vmatprep.subr.bf16.mxu0 0
  %5198 = vmatpush2.bf16.msra.mxu0 0
  %5199 = vmatprep.subr.bf16.mxu0 0
  %5200 = vmatpush2.bf16.msra.mxu0 0
  %5201 = vmatprep.subr.bf16.mxu0 0
  %5202 = vmatpush2.bf16.msra.mxu0 0
  %5203 = vmatprep.subr.bf16.mxu0 0
  %5204 = vmatpush2.bf16.msra.mxu0 0
  %5205 = vmatprep.subr.bf16.mxu0 0
  %5206 = vmatpush2.bf16.msra.mxu0 0
  %5207 = vmatprep.subr.bf16.mxu0 0
  %5208 = vmatpush2.bf16.msra.mxu0 0
  %5209 = vmatprep.subr.bf16.mxu0 0
  %5210 = vmatpush2.bf16.msra.mxu0 0
  %5211 = vmatprep.mubr.bf16.mxu0 0
  %5212 = vmatmul.mubr.bf16.gmra.mxu0 %v5177
  %v5213 = vpop.f32.mrf.mxu0
  %v5214 = vadd.f32 0.0, %v5213
  %v5215 = vpop.f32.mrf.mxu0
  %v5216 = vpop.f32.mrf.mxu0
  %v5217 = vadd.f32 0.0, %v5216
  %v5218 = vpop.f32.mrf.mxu0
  %5219 = vdwg.mxu0
  %v5220 = vadd.f32 %v4939, %v5214
  %v5221 = vadd.f32 %v4940, %v5217
  %s5222 = scalar_lea.vmem %s0, 288
  %v5223 = vld [vmem:[%s5222] sm:$0xff]
  %v5224 = vld [vmem:[%s5222 + $0x8] sm:$0xff]
  %v5227 = vunpack.c.l.b16 %v5223
  %v5228 = vunpack.c.h.b16 %v5223
  %v5229 = vunpack.c.l.b16 %v5224
  %v5230 = vunpack.c.h.b16 %v5224
  %v5231 = vpack.c.b16 %v5229, %v5227
  %v5232 = vpack.c.b16 %v5230, %v5228
  %5235 = vmatprep.subr.bf16.mxu0 0
  %5236 = vmatpush1.bf16.msra.mxu0 %v149
  %5237 = vmatprep.subr.bf16.mxu0 0
  %5238 = vmatpush1.bf16.msra.mxu0 %v148
  %5239 = vmatprep.subr.bf16.mxu0 0
  %5240 = vmatpush1.bf16.msra.mxu0 %v147
  %5241 = vmatprep.subr.bf16.mxu0 0
  %5242 = vmatpush1.bf16.msra.mxu0 %v146
  %5243 = vmatprep.subr.bf16.mxu0 0
  %5244 = vmatpush1.bf16.msra.mxu0 %v145
  %5245 = vmatprep.subr.bf16.mxu0 0
  %5246 = vmatpush1.bf16.msra.mxu0 %v144
  %5247 = vmatprep.subr.bf16.mxu0 0
  %5248 = vmatpush1.bf16.msra.mxu0 %v143
  %5249 = vmatprep.subr.bf16.mxu0 0
  %5250 = vmatpush1.bf16.msra.mxu0 %v142
  %5251 = vmatprep.subr.bf16.mxu0 0
  %5252 = vmatpush2.bf16.msra.mxu0 %v157
  %5253 = vmatprep.subr.bf16.mxu0 0
  %5254 = vmatpush2.bf16.msra.mxu0 %v156
  %5255 = vmatprep.subr.bf16.mxu0 0
  %5256 = vmatpush2.bf16.msra.mxu0 %v155
  %5257 = vmatprep.subr.bf16.mxu0 0
  %5258 = vmatpush2.bf16.msra.mxu0 %v154
  %5259 = vmatprep.subr.bf16.mxu0 0
  %5260 = vmatpush2.bf16.msra.mxu0 %v153
  %5261 = vmatprep.subr.bf16.mxu0 0
  %5262 = vmatpush2.bf16.msra.mxu0 %v152
  %5263 = vmatprep.subr.bf16.mxu0 0
  %5264 = vmatpush2.bf16.msra.mxu0 %v151
  %5265 = vmatprep.subr.bf16.mxu0 0
  %5266 = vmatpush2.bf16.msra.mxu0 %v150
  %5267 = vmatprep.mubr.bf16.mxu0 %v5232
  %5268 = vmatmul.mubr.bf16.gmra.mxu0 %v5231
  %v5269 = vpop.f32.mrf.mxu0
  %v5270 = vadd.f32 0.0, %v5269
  %v5271 = vpop.f32.mrf.mxu0
  %v5272 = vpop.f32.mrf.mxu0
  %v5273 = vadd.f32 0.0, %v5272
  %v5274 = vpop.f32.mrf.mxu0
  %5275 = vdwg.mxu0
  %s5276 = scalar_lea.vmem %s0, 688
  %v5277 = vld [vmem:[%s5276] sm:$0xff]
  %v5278 = vld [vmem:[%s5276 + $0x8] sm:$0xff]
  %v5281 = vunpack.c.l.b16 %v5277
  %v5282 = vunpack.c.h.b16 %v5277
  %v5283 = vunpack.c.l.b16 %v5278
  %v5284 = vunpack.c.h.b16 %v5278
  %v5285 = vpack.c.b16 %v5283, %v5281
  %v5286 = vpack.c.b16 %v5284, %v5282
  %5289 = vmatprep.subr.bf16.mxu0 0
  %5290 = vmatpush1.bf16.msra.mxu0 %v149
  %5291 = vmatprep.subr.bf16.mxu0 0
  %5292 = vmatpush1.bf16.msra.mxu0 %v148
  %5293 = vmatprep.subr.bf16.mxu0 0
  %5294 = vmatpush1.bf16.msra.mxu0 %v147
  %5295 = vmatprep.subr.bf16.mxu0 0
  %5296 = vmatpush1.bf16.msra.mxu0 %v146
  %5297 = vmatprep.subr.bf16.mxu0 0
  %5298 = vmatpush1.bf16.msra.mxu0 %v145
  %5299 = vmatprep.subr.bf16.mxu0 0
  %5300 = vmatpush1.bf16.msra.mxu0 %v144
  %5301 = vmatprep.subr.bf16.mxu0 0
  %5302 = vmatpush1.bf16.msra.mxu0 %v143
  %5303 = vmatprep.subr.bf16.mxu0 0
  %5304 = vmatpush1.bf16.msra.mxu0 %v142
  %5305 = vmatprep.subr.bf16.mxu0 0
  %5306 = vmatpush2.bf16.msra.mxu0 %v157
  %5307 = vmatprep.subr.bf16.mxu0 0
  %5308 = vmatpush2.bf16.msra.mxu0 %v156
  %5309 = vmatprep.subr.bf16.mxu0 0
  %5310 = vmatpush2.bf16.msra.mxu0 %v155
  %5311 = vmatprep.subr.bf16.mxu0 0
  %5312 = vmatpush2.bf16.msra.mxu0 %v154
  %5313 = vmatprep.subr.bf16.mxu0 0
  %5314 = vmatpush2.bf16.msra.mxu0 %v153
  %5315 = vmatprep.subr.bf16.mxu0 0
  %5316 = vmatpush2.bf16.msra.mxu0 %v152
  %5317 = vmatprep.subr.bf16.mxu0 0
  %5318 = vmatpush2.bf16.msra.mxu0 %v151
  %5319 = vmatprep.subr.bf16.mxu0 0
  %5320 = vmatpush2.bf16.msra.mxu0 %v150
  %5321 = vmatprep.mubr.bf16.mxu0 %v5286
  %5322 = vmatmul.mubr.bf16.gmra.mxu0 %v5285
  %v5323 = vpop.f32.mrf.mxu0
  %v5324 = vadd.f32 0.0, %v5323
  %v5325 = vpop.f32.mrf.mxu0
  %v5326 = vpop.f32.mrf.mxu0
  %v5327 = vadd.f32 0.0, %v5326
  %v5328 = vpop.f32.mrf.mxu0
  %5329 = vdwg.mxu0
  %v5330 = vmax.f32 %v5270, %v5324
  %v5331 = vmax.f32 %v5273, %v5327
  %s5332 = scalar_lea.vmem %s0, 1088
  %v5333 = vld [vmem:[%s5332] sm:$0xff]
  %v5334 = vld [vmem:[%s5332 + $0x8] sm:$0xff]
  %v5337 = vunpack.c.l.b16 %v5333
  %v5338 = vunpack.c.h.b16 %v5333
  %v5339 = vunpack.c.l.b16 %v5334
  %v5340 = vunpack.c.h.b16 %v5334
  %v5341 = vpack.c.b16 %v5339, %v5337
  %v5342 = vpack.c.b16 %v5340, %v5338
  %5345 = vmatprep.subr.bf16.mxu0 0
  %5346 = vmatpush1.bf16.msra.mxu0 %v149
  %5347 = vmatprep.subr.bf16.mxu0 0
  %5348 = vmatpush1.bf16.msra.mxu0 %v148
  %5349 = vmatprep.subr.bf16.mxu0 0
  %5350 = vmatpush1.bf16.msra.mxu0 %v147
  %5351 = vmatprep.subr.bf16.mxu0 0
  %5352 = vmatpush1.bf16.msra.mxu0 %v146
  %5353 = vmatprep.subr.bf16.mxu0 0
  %5354 = vmatpush1.bf16.msra.mxu0 %v145
  %5355 = vmatprep.subr.bf16.mxu0 0
  %5356 = vmatpush1.bf16.msra.mxu0 %v144
  %5357 = vmatprep.subr.bf16.mxu0 0
  %5358 = vmatpush1.bf16.msra.mxu0 %v143
  %5359 = vmatprep.subr.bf16.mxu0 0
  %5360 = vmatpush1.bf16.msra.mxu0 %v142
  %5361 = vmatprep.subr.bf16.mxu0 0
  %5362 = vmatpush2.bf16.msra.mxu0 %v157
  %5363 = vmatprep.subr.bf16.mxu0 0
  %5364 = vmatpush2.bf16.msra.mxu0 %v156
  %5365 = vmatprep.subr.bf16.mxu0 0
  %5366 = vmatpush2.bf16.msra.mxu0 %v155
  %5367 = vmatprep.subr.bf16.mxu0 0
  %5368 = vmatpush2.bf16.msra.mxu0 %v154
  %5369 = vmatprep.subr.bf16.mxu0 0
  %5370 = vmatpush2.bf16.msra.mxu0 %v153
  %5371 = vmatprep.subr.bf16.mxu0 0
  %5372 = vmatpush2.bf16.msra.mxu0 %v152
  %5373 = vmatprep.subr.bf16.mxu0 0
  %5374 = vmatpush2.bf16.msra.mxu0 %v151
  %5375 = vmatprep.subr.bf16.mxu0 0
  %5376 = vmatpush2.bf16.msra.mxu0 %v150
  %5377 = vmatprep.mubr.bf16.mxu0 %v5342
  %5378 = vmatmul.mubr.bf16.gmra.mxu0 %v5341
  %v5379 = vpop.f32.mrf.mxu0
  %v5380 = vadd.f32 0.0, %v5379
  %v5381 = vpop.f32.mrf.mxu0
  %v5382 = vpop.f32.mrf.mxu0
  %v5383 = vadd.f32 0.0, %v5382
  %v5384 = vpop.f32.mrf.mxu0
  %5385 = vdwg.mxu0
  %v5386 = vmax.f32 %v5330, %v5380
  %v5387 = vmax.f32 %v5331, %v5383
  %s5388 = scalar_lea.vmem %s0, 1488
  %v5389 = vld [vmem:[%s5388] sm:$0xff]
  %v5390 = vld [vmem:[%s5388 + $0x8] sm:$0xff]
  %v5393 = vunpack.c.l.b16 %v5389
  %v5394 = vunpack.c.h.b16 %v5389
  %v5395 = vunpack.c.l.b16 %v5390
  %v5396 = vunpack.c.h.b16 %v5390
  %v5397 = vpack.c.b16 %v5395, %v5393
  %v5398 = vpack.c.b16 %v5396, %v5394
  %5401 = vmatprep.subr.bf16.mxu0 0
  %5402 = vmatpush1.bf16.msra.mxu0 %v149
  %5403 = vmatprep.subr.bf16.mxu0 0
  %5404 = vmatpush1.bf16.msra.mxu0 %v148
  %5405 = vmatprep.subr.bf16.mxu0 0
  %5406 = vmatpush1.bf16.msra.mxu0 %v147
  %5407 = vmatprep.subr.bf16.mxu0 0
  %5408 = vmatpush1.bf16.msra.mxu0 %v146
  %5409 = vmatprep.subr.bf16.mxu0 0
  %5410 = vmatpush1.bf16.msra.mxu0 %v145
  %5411 = vmatprep.subr.bf16.mxu0 0
  %5412 = vmatpush1.bf16.msra.mxu0 %v144
  %5413 = vmatprep.subr.bf16.mxu0 0
  %5414 = vmatpush1.bf16.msra.mxu0 %v143
  %5415 = vmatprep.subr.bf16.mxu0 0
  %5416 = vmatpush1.bf16.msra.mxu0 %v142
  %5417 = vmatprep.subr.bf16.mxu0 0
  %5418 = vmatpush2.bf16.msra.mxu0 %v157
  %5419 = vmatprep.subr.bf16.mxu0 0
  %5420 = vmatpush2.bf16.msra.mxu0 %v156
  %5421 = vmatprep.subr.bf16.mxu0 0
  %5422 = vmatpush2.bf16.msra.mxu0 %v155
  %5423 = vmatprep.subr.bf16.mxu0 0
  %5424 = vmatpush2.bf16.msra.mxu0 %v154
  %5425 = vmatprep.subr.bf16.mxu0 0
  %5426 = vmatpush2.bf16.msra.mxu0 %v153
  %5427 = vmatprep.subr.bf16.mxu0 0
  %5428 = vmatpush2.bf16.msra.mxu0 %v152
  %5429 = vmatprep.subr.bf16.mxu0 0
  %5430 = vmatpush2.bf16.msra.mxu0 %v151
  %5431 = vmatprep.subr.bf16.mxu0 0
  %5432 = vmatpush2.bf16.msra.mxu0 %v150
  %5433 = vmatprep.mubr.bf16.mxu0 %v5398
  %5434 = vmatmul.mubr.bf16.gmra.mxu0 %v5397
  %v5435 = vpop.f32.mrf.mxu0
  %v5436 = vadd.f32 0.0, %v5435
  %v5437 = vpop.f32.mrf.mxu0
  %v5438 = vpop.f32.mrf.mxu0
  %v5439 = vadd.f32 0.0, %v5438
  %v5440 = vpop.f32.mrf.mxu0
  %5441 = vdwg.mxu0
  %v5442 = vmax.f32 %v5386, %v5436
  %v5443 = vmax.f32 %v5387, %v5439
  %v5444 = vadd.f32 %v5442, %v387
  %v5445 = vadd.f32 %v5443, %v387
  %v5446 = vmax.f32 %v5444, 0.0
  %v5447 = vmax.f32 %v5445, 0.0
  %v5448 = vpack.c.bf16 %v5447, %v5446
  %v5449 = vld [vmem:[%s3 + $0x90] sm:$0xf]
  %v5450 = vld [vmem:[%s3 + $0x94] sm:$0xf]
  %v5453 = vunpack.c.l.b16 %v5449
  %v5454 = vunpack.c.l.b16 %v5450
  %v5455 = vpack.c.b16 %v5454, %v5453
  %v5458 = vsel %vm631, %v5448, 0
  %5460 = vmatprep.subr.bf16.mxu0 0
  %5461 = vmatpush1.bf16.msra.mxu0 0
  %5462 = vmatprep.subr.bf16.mxu0 0
  %5463 = vmatpush1.bf16.msra.mxu0 0
  %5464 = vmatprep.subr.bf16.mxu0 0
  %5465 = vmatpush1.bf16.msra.mxu0 0
  %5466 = vmatprep.subr.bf16.mxu0 0
  %5467 = vmatpush1.bf16.msra.mxu0 0
  %5468 = vmatprep.subr.bf16.mxu0 0
  %5469 = vmatpush1.bf16.msra.mxu0 0
  %5470 = vmatprep.subr.bf16.mxu0 0
  %5471 = vmatpush1.bf16.msra.mxu0 0
  %5472 = vmatprep.subr.bf16.mxu0 0
  %5473 = vmatpush1.bf16.msra.mxu0 0
  %5474 = vmatprep.subr.bf16.mxu0 0
  %5475 = vmatpush1.bf16.msra.mxu0 %v5455
  %5476 = vmatprep.subr.bf16.mxu0 0
  %5477 = vmatpush2.bf16.msra.mxu0 0
  %5478 = vmatprep.subr.bf16.mxu0 0
  %5479 = vmatpush2.bf16.msra.mxu0 0
  %5480 = vmatprep.subr.bf16.mxu0 0
  %5481 = vmatpush2.bf16.msra.mxu0 0
  %5482 = vmatprep.subr.bf16.mxu0 0
  %5483 = vmatpush2.bf16.msra.mxu0 0
  %5484 = vmatprep.subr.bf16.mxu0 0
  %5485 = vmatpush2.bf16.msra.mxu0 0
  %5486 = vmatprep.subr.bf16.mxu0 0
  %5487 = vmatpush2.bf16.msra.mxu0 0
  %5488 = vmatprep.subr.bf16.mxu0 0
  %5489 = vmatpush2.bf16.msra.mxu0 0
  %5490 = vmatprep.subr.bf16.mxu0 0
  %5491 = vmatpush2.bf16.msra.mxu0 0
  %5492 = vmatprep.mubr.bf16.mxu0 0
  %5493 = vmatmul.mubr.bf16.gmra.mxu0 %v5458
  %v5494 = vpop.f32.mrf.mxu0
  %v5495 = vadd.f32 0.0, %v5494
  %v5496 = vpop.f32.mrf.mxu0
  %v5497 = vpop.f32.mrf.mxu0
  %v5498 = vadd.f32 0.0, %v5497
  %v5499 = vpop.f32.mrf.mxu0
  %5500 = vdwg.mxu0
  %v5501 = vadd.f32 %v5220, %v5495
  %v5502 = vadd.f32 %v5221, %v5498
  %s5503 = scalar_lea.vmem %s0, 304
  %v5504 = vld [vmem:[%s5503] sm:$0xff]
  %v5505 = vld [vmem:[%s5503 + $0x8] sm:$0xff]
  %v5508 = vunpack.c.l.b16 %v5504
  %v5509 = vunpack.c.h.b16 %v5504
  %v5510 = vunpack.c.l.b16 %v5505
  %v5511 = vunpack.c.h.b16 %v5505
  %v5512 = vpack.c.b16 %v5510, %v5508
  %v5513 = vpack.c.b16 %v5511, %v5509
  %5516 = vmatprep.subr.bf16.mxu0 0
  %5517 = vmatpush1.bf16.msra.mxu0 %v149
  %5518 = vmatprep.subr.bf16.mxu0 0
  %5519 = vmatpush1.bf16.msra.mxu0 %v148
  %5520 = vmatprep.subr.bf16.mxu0 0
  %5521 = vmatpush1.bf16.msra.mxu0 %v147
  %5522 = vmatprep.subr.bf16.mxu0 0
  %5523 = vmatpush1.bf16.msra.mxu0 %v146
  %5524 = vmatprep.subr.bf16.mxu0 0
  %5525 = vmatpush1.bf16.msra.mxu0 %v145
  %5526 = vmatprep.subr.bf16.mxu0 0
  %5527 = vmatpush1.bf16.msra.mxu0 %v144
  %5528 = vmatprep.subr.bf16.mxu0 0
  %5529 = vmatpush1.bf16.msra.mxu0 %v143
  %5530 = vmatprep.subr.bf16.mxu0 0
  %5531 = vmatpush1.bf16.msra.mxu0 %v142
  %5532 = vmatprep.subr.bf16.mxu0 0
  %5533 = vmatpush2.bf16.msra.mxu0 %v157
  %5534 = vmatprep.subr.bf16.mxu0 0
  %5535 = vmatpush2.bf16.msra.mxu0 %v156
  %5536 = vmatprep.subr.bf16.mxu0 0
  %5537 = vmatpush2.bf16.msra.mxu0 %v155
  %5538 = vmatprep.subr.bf16.mxu0 0
  %5539 = vmatpush2.bf16.msra.mxu0 %v154
  %5540 = vmatprep.subr.bf16.mxu0 0
  %5541 = vmatpush2.bf16.msra.mxu0 %v153
  %5542 = vmatprep.subr.bf16.mxu0 0
  %5543 = vmatpush2.bf16.msra.mxu0 %v152
  %5544 = vmatprep.subr.bf16.mxu0 0
  %5545 = vmatpush2.bf16.msra.mxu0 %v151
  %5546 = vmatprep.subr.bf16.mxu0 0
  %5547 = vmatpush2.bf16.msra.mxu0 %v150
  %5548 = vmatprep.mubr.bf16.mxu0 %v5513
  %5549 = vmatmul.mubr.bf16.gmra.mxu0 %v5512
  %v5550 = vpop.f32.mrf.mxu0
  %v5551 = vadd.f32 0.0, %v5550
  %v5552 = vpop.f32.mrf.mxu0
  %v5553 = vpop.f32.mrf.mxu0
  %v5554 = vadd.f32 0.0, %v5553
  %v5555 = vpop.f32.mrf.mxu0
  %5556 = vdwg.mxu0
  %s5557 = scalar_lea.vmem %s0, 704
  %v5558 = vld [vmem:[%s5557] sm:$0xff]
  %v5559 = vld [vmem:[%s5557 + $0x8] sm:$0xff]
  %v5562 = vunpack.c.l.b16 %v5558
  %v5563 = vunpack.c.h.b16 %v5558
  %v5564 = vunpack.c.l.b16 %v5559
  %v5565 = vunpack.c.h.b16 %v5559
  %v5566 = vpack.c.b16 %v5564, %v5562
  %v5567 = vpack.c.b16 %v5565, %v5563
  %5570 = vmatprep.subr.bf16.mxu0 0
  %5571 = vmatpush1.bf16.msra.mxu0 %v149
  %5572 = vmatprep.subr.bf16.mxu0 0
  %5573 = vmatpush1.bf16.msra.mxu0 %v148
  %5574 = vmatprep.subr.bf16.mxu0 0
  %5575 = vmatpush1.bf16.msra.mxu0 %v147
  %5576 = vmatprep.subr.bf16.mxu0 0
  %5577 = vmatpush1.bf16.msra.mxu0 %v146
  %5578 = vmatprep.subr.bf16.mxu0 0
  %5579 = vmatpush1.bf16.msra.mxu0 %v145
  %5580 = vmatprep.subr.bf16.mxu0 0
  %5581 = vmatpush1.bf16.msra.mxu0 %v144
  %5582 = vmatprep.subr.bf16.mxu0 0
  %5583 = vmatpush1.bf16.msra.mxu0 %v143
  %5584 = vmatprep.subr.bf16.mxu0 0
  %5585 = vmatpush1.bf16.msra.mxu0 %v142
  %5586 = vmatprep.subr.bf16.mxu0 0
  %5587 = vmatpush2.bf16.msra.mxu0 %v157
  %5588 = vmatprep.subr.bf16.mxu0 0
  %5589 = vmatpush2.bf16.msra.mxu0 %v156
  %5590 = vmatprep.subr.bf16.mxu0 0
  %5591 = vmatpush2.bf16.msra.mxu0 %v155
  %5592 = vmatprep.subr.bf16.mxu0 0
  %5593 = vmatpush2.bf16.msra.mxu0 %v154
  %5594 = vmatprep.subr.bf16.mxu0 0
  %5595 = vmatpush2.bf16.msra.mxu0 %v153
  %5596 = vmatprep.subr.bf16.mxu0 0
  %5597 = vmatpush2.bf16.msra.mxu0 %v152
  %5598 = vmatprep.subr.bf16.mxu0 0
  %5599 = vmatpush2.bf16.msra.mxu0 %v151
  %5600 = vmatprep.subr.bf16.mxu0 0
  %5601 = vmatpush2.bf16.msra.mxu0 %v150
  %5602 = vmatprep.mubr.bf16.mxu0 %v5567
  %5603 = vmatmul.mubr.bf16.gmra.mxu0 %v5566
  %v5604 = vpop.f32.mrf.mxu0
  %v5605 = vadd.f32 0.0, %v5604
  %v5606 = vpop.f32.mrf.mxu0
  %v5607 = vpop.f32.mrf.mxu0
  %v5608 = vadd.f32 0.0, %v5607
  %v5609 = vpop.f32.mrf.mxu0
  %5610 = vdwg.mxu0
  %v5611 = vmax.f32 %v5551, %v5605
  %v5612 = vmax.f32 %v5554, %v5608
  %s5613 = scalar_lea.vmem %s0, 1104
  %v5614 = vld [vmem:[%s5613] sm:$0xff]
  %v5615 = vld [vmem:[%s5613 + $0x8] sm:$0xff]
  %v5618 = vunpack.c.l.b16 %v5614
  %v5619 = vunpack.c.h.b16 %v5614
  %v5620 = vunpack.c.l.b16 %v5615
  %v5621 = vunpack.c.h.b16 %v5615
  %v5622 = vpack.c.b16 %v5620, %v5618
  %v5623 = vpack.c.b16 %v5621, %v5619
  %5626 = vmatprep.subr.bf16.mxu0 0
  %5627 = vmatpush1.bf16.msra.mxu0 %v149
  %5628 = vmatprep.subr.bf16.mxu0 0
  %5629 = vmatpush1.bf16.msra.mxu0 %v148
  %5630 = vmatprep.subr.bf16.mxu0 0
  %5631 = vmatpush1.bf16.msra.mxu0 %v147
  %5632 = vmatprep.subr.bf16.mxu0 0
  %5633 = vmatpush1.bf16.msra.mxu0 %v146
  %5634 = vmatprep.subr.bf16.mxu0 0
  %5635 = vmatpush1.bf16.msra.mxu0 %v145
  %5636 = vmatprep.subr.bf16.mxu0 0
  %5637 = vmatpush1.bf16.msra.mxu0 %v144
  %5638 = vmatprep.subr.bf16.mxu0 0
  %5639 = vmatpush1.bf16.msra.mxu0 %v143
  %5640 = vmatprep.subr.bf16.mxu0 0
  %5641 = vmatpush1.bf16.msra.mxu0 %v142
  %5642 = vmatprep.subr.bf16.mxu0 0
  %5643 = vmatpush2.bf16.msra.mxu0 %v157
  %5644 = vmatprep.subr.bf16.mxu0 0
  %5645 = vmatpush2.bf16.msra.mxu0 %v156
  %5646 = vmatprep.subr.bf16.mxu0 0
  %5647 = vmatpush2.bf16.msra.mxu0 %v155
  %5648 = vmatprep.subr.bf16.mxu0 0
  %5649 = vmatpush2.bf16.msra.mxu0 %v154
  %5650 = vmatprep.subr.bf16.mxu0 0
  %5651 = vmatpush2.bf16.msra.mxu0 %v153
  %5652 = vmatprep.subr.bf16.mxu0 0
  %5653 = vmatpush2.bf16.msra.mxu0 %v152
  %5654 = vmatprep.subr.bf16.mxu0 0
  %5655 = vmatpush2.bf16.msra.mxu0 %v151
  %5656 = vmatprep.subr.bf16.mxu0 0
  %5657 = vmatpush2.bf16.msra.mxu0 %v150
  %5658 = vmatprep.mubr.bf16.mxu0 %v5623
  %5659 = vmatmul.mubr.bf16.gmra.mxu0 %v5622
  %v5660 = vpop.f32.mrf.mxu0
  %v5661 = vadd.f32 0.0, %v5660
  %v5662 = vpop.f32.mrf.mxu0
  %v5663 = vpop.f32.mrf.mxu0
  %v5664 = vadd.f32 0.0, %v5663
  %v5665 = vpop.f32.mrf.mxu0
  %5666 = vdwg.mxu0
  %v5667 = vmax.f32 %v5611, %v5661
  %v5668 = vmax.f32 %v5612, %v5664
  %s5669 = scalar_lea.vmem %s0, 1504
  %v5670 = vld [vmem:[%s5669] sm:$0xff]
  %v5671 = vld [vmem:[%s5669 + $0x8] sm:$0xff]
  %v5674 = vunpack.c.l.b16 %v5670
  %v5675 = vunpack.c.h.b16 %v5670
  %v5676 = vunpack.c.l.b16 %v5671
  %v5677 = vunpack.c.h.b16 %v5671
  %v5678 = vpack.c.b16 %v5676, %v5674
  %v5679 = vpack.c.b16 %v5677, %v5675
  %5682 = vmatprep.subr.bf16.mxu0 0
  %5683 = vmatpush1.bf16.msra.mxu0 %v149
  %5684 = vmatprep.subr.bf16.mxu0 0
  %5685 = vmatpush1.bf16.msra.mxu0 %v148
  %5686 = vmatprep.subr.bf16.mxu0 0
  %5687 = vmatpush1.bf16.msra.mxu0 %v147
  %5688 = vmatprep.subr.bf16.mxu0 0
  %5689 = vmatpush1.bf16.msra.mxu0 %v146
  %5690 = vmatprep.subr.bf16.mxu0 0
  %5691 = vmatpush1.bf16.msra.mxu0 %v145
  %5692 = vmatprep.subr.bf16.mxu0 0
  %5693 = vmatpush1.bf16.msra.mxu0 %v144
  %5694 = vmatprep.subr.bf16.mxu0 0
  %5695 = vmatpush1.bf16.msra.mxu0 %v143
  %5696 = vmatprep.subr.bf16.mxu0 0
  %5697 = vmatpush1.bf16.msra.mxu0 %v142
  %5698 = vmatprep.subr.bf16.mxu0 0
  %5699 = vmatpush2.bf16.msra.mxu0 %v157
  %5700 = vmatprep.subr.bf16.mxu0 0
  %5701 = vmatpush2.bf16.msra.mxu0 %v156
  %5702 = vmatprep.subr.bf16.mxu0 0
  %5703 = vmatpush2.bf16.msra.mxu0 %v155
  %5704 = vmatprep.subr.bf16.mxu0 0
  %5705 = vmatpush2.bf16.msra.mxu0 %v154
  %5706 = vmatprep.subr.bf16.mxu0 0
  %5707 = vmatpush2.bf16.msra.mxu0 %v153
  %5708 = vmatprep.subr.bf16.mxu0 0
  %5709 = vmatpush2.bf16.msra.mxu0 %v152
  %5710 = vmatprep.subr.bf16.mxu0 0
  %5711 = vmatpush2.bf16.msra.mxu0 %v151
  %5712 = vmatprep.subr.bf16.mxu0 0
  %5713 = vmatpush2.bf16.msra.mxu0 %v150
  %5714 = vmatprep.mubr.bf16.mxu0 %v5679
  %5715 = vmatmul.mubr.bf16.gmra.mxu0 %v5678
  %v5716 = vpop.f32.mrf.mxu0
  %v5717 = vadd.f32 0.0, %v5716
  %v5718 = vpop.f32.mrf.mxu0
  %v5719 = vpop.f32.mrf.mxu0
  %v5720 = vadd.f32 0.0, %v5719
  %v5721 = vpop.f32.mrf.mxu0
  %5722 = vdwg.mxu0
  %v5723 = vmax.f32 %v5667, %v5717
  %v5724 = vmax.f32 %v5668, %v5720
  %v5725 = vadd.f32 %v5723, %v387
  %v5726 = vadd.f32 %v5724, %v387
  %v5727 = vmax.f32 %v5725, 0.0
  %v5728 = vmax.f32 %v5726, 0.0
  %v5729 = vpack.c.bf16 %v5728, %v5727
  %v5730 = vld [vmem:[%s3 + $0x98] sm:$0xf]
  %v5731 = vld [vmem:[%s3 + $0x9c] sm:$0xf]
  %v5734 = vunpack.c.l.b16 %v5730
  %v5735 = vunpack.c.l.b16 %v5731
  %v5736 = vpack.c.b16 %v5735, %v5734
  %v5739 = vsel %vm631, %v5729, 0
  %5741 = vmatprep.subr.bf16.mxu0 0
  %5742 = vmatpush1.bf16.msra.mxu0 0
  %5743 = vmatprep.subr.bf16.mxu0 0
  %5744 = vmatpush1.bf16.msra.mxu0 0
  %5745 = vmatprep.subr.bf16.mxu0 0
  %5746 = vmatpush1.bf16.msra.mxu0 0
  %5747 = vmatprep.subr.bf16.mxu0 0
  %5748 = vmatpush1.bf16.msra.mxu0 0
  %5749 = vmatprep.subr.bf16.mxu0 0
  %5750 = vmatpush1.bf16.msra.mxu0 0
  %5751 = vmatprep.subr.bf16.mxu0 0
  %5752 = vmatpush1.bf16.msra.mxu0 0
  %5753 = vmatprep.subr.bf16.mxu0 0
  %5754 = vmatpush1.bf16.msra.mxu0 0
  %5755 = vmatprep.subr.bf16.mxu0 0
  %5756 = vmatpush1.bf16.msra.mxu0 %v5736
  %5757 = vmatprep.subr.bf16.mxu0 0
  %5758 = vmatpush2.bf16.msra.mxu0 0
  %5759 = vmatprep.subr.bf16.mxu0 0
  %5760 = vmatpush2.bf16.msra.mxu0 0
  %5761 = vmatprep.subr.bf16.mxu0 0
  %5762 = vmatpush2.bf16.msra.mxu0 0
  %5763 = vmatprep.subr.bf16.mxu0 0
  %5764 = vmatpush2.bf16.msra.mxu0 0
  %5765 = vmatprep.subr.bf16.mxu0 0
  %5766 = vmatpush2.bf16.msra.mxu0 0
  %5767 = vmatprep.subr.bf16.mxu0 0
  %5768 = vmatpush2.bf16.msra.mxu0 0
  %5769 = vmatprep.subr.bf16.mxu0 0
  %5770 = vmatpush2.bf16.msra.mxu0 0
  %5771 = vmatprep.subr.bf16.mxu0 0
  %5772 = vmatpush2.bf16.msra.mxu0 0
  %5773 = vmatprep.mubr.bf16.mxu0 0
  %5774 = vmatmul.mubr.bf16.gmra.mxu0 %v5739
  %v5775 = vpop.f32.mrf.mxu0
  %v5776 = vadd.f32 0.0, %v5775
  %v5777 = vpop.f32.mrf.mxu0
  %v5778 = vpop.f32.mrf.mxu0
  %v5779 = vadd.f32 0.0, %v5778
  %v5780 = vpop.f32.mrf.mxu0
  %5781 = vdwg.mxu0
  %v5782 = vadd.f32 %v5501, %v5776
  %v5783 = vadd.f32 %v5502, %v5779
  %s5784 = scalar_lea.vmem %s0, 320
  %v5785 = vld [vmem:[%s5784] sm:$0xff]
  %v5786 = vld [vmem:[%s5784 + $0x8] sm:$0xff]
  %v5789 = vunpack.c.l.b16 %v5785
  %v5790 = vunpack.c.h.b16 %v5785
  %v5791 = vunpack.c.l.b16 %v5786
  %v5792 = vunpack.c.h.b16 %v5786
  %v5793 = vpack.c.b16 %v5791, %v5789
  %v5794 = vpack.c.b16 %v5792, %v5790
  %5797 = vmatprep.subr.bf16.mxu0 0
  %5798 = vmatpush1.bf16.msra.mxu0 %v149
  %5799 = vmatprep.subr.bf16.mxu0 0
  %5800 = vmatpush1.bf16.msra.mxu0 %v148
  %5801 = vmatprep.subr.bf16.mxu0 0
  %5802 = vmatpush1.bf16.msra.mxu0 %v147
  %5803 = vmatprep.subr.bf16.mxu0 0
  %5804 = vmatpush1.bf16.msra.mxu0 %v146
  %5805 = vmatprep.subr.bf16.mxu0 0
  %5806 = vmatpush1.bf16.msra.mxu0 %v145
  %5807 = vmatprep.subr.bf16.mxu0 0
  %5808 = vmatpush1.bf16.msra.mxu0 %v144
  %5809 = vmatprep.subr.bf16.mxu0 0
  %5810 = vmatpush1.bf16.msra.mxu0 %v143
  %5811 = vmatprep.subr.bf16.mxu0 0
  %5812 = vmatpush1.bf16.msra.mxu0 %v142
  %5813 = vmatprep.subr.bf16.mxu0 0
  %5814 = vmatpush2.bf16.msra.mxu0 %v157
  %5815 = vmatprep.subr.bf16.mxu0 0
  %5816 = vmatpush2.bf16.msra.mxu0 %v156
  %5817 = vmatprep.subr.bf16.mxu0 0
  %5818 = vmatpush2.bf16.msra.mxu0 %v155
  %5819 = vmatprep.subr.bf16.mxu0 0
  %5820 = vmatpush2.bf16.msra.mxu0 %v154
  %5821 = vmatprep.subr.bf16.mxu0 0
  %5822 = vmatpush2.bf16.msra.mxu0 %v153
  %5823 = vmatprep.subr.bf16.mxu0 0
  %5824 = vmatpush2.bf16.msra.mxu0 %v152
  %5825 = vmatprep.subr.bf16.mxu0 0
  %5826 = vmatpush2.bf16.msra.mxu0 %v151
  %5827 = vmatprep.subr.bf16.mxu0 0
  %5828 = vmatpush2.bf16.msra.mxu0 %v150
  %5829 = vmatprep.mubr.bf16.mxu0 %v5794
  %5830 = vmatmul.mubr.bf16.gmra.mxu0 %v5793
  %v5831 = vpop.f32.mrf.mxu0
  %v5832 = vadd.f32 0.0, %v5831
  %v5833 = vpop.f32.mrf.mxu0
  %v5834 = vpop.f32.mrf.mxu0
  %v5835 = vadd.f32 0.0, %v5834
  %v5836 = vpop.f32.mrf.mxu0
  %5837 = vdwg.mxu0
  %s5838 = scalar_lea.vmem %s0, 720
  %v5839 = vld [vmem:[%s5838] sm:$0xff]
  %v5840 = vld [vmem:[%s5838 + $0x8] sm:$0xff]
  %v5843 = vunpack.c.l.b16 %v5839
  %v5844 = vunpack.c.h.b16 %v5839
  %v5845 = vunpack.c.l.b16 %v5840
  %v5846 = vunpack.c.h.b16 %v5840
  %v5847 = vpack.c.b16 %v5845, %v5843
  %v5848 = vpack.c.b16 %v5846, %v5844
  %5851 = vmatprep.subr.bf16.mxu0 0
  %5852 = vmatpush1.bf16.msra.mxu0 %v149
  %5853 = vmatprep.subr.bf16.mxu0 0
  %5854 = vmatpush1.bf16.msra.mxu0 %v148
  %5855 = vmatprep.subr.bf16.mxu0 0
  %5856 = vmatpush1.bf16.msra.mxu0 %v147
  %5857 = vmatprep.subr.bf16.mxu0 0
  %5858 = vmatpush1.bf16.msra.mxu0 %v146
  %5859 = vmatprep.subr.bf16.mxu0 0
  %5860 = vmatpush1.bf16.msra.mxu0 %v145
  %5861 = vmatprep.subr.bf16.mxu0 0
  %5862 = vmatpush1.bf16.msra.mxu0 %v144
  %5863 = vmatprep.subr.bf16.mxu0 0
  %5864 = vmatpush1.bf16.msra.mxu0 %v143
  %5865 = vmatprep.subr.bf16.mxu0 0
  %5866 = vmatpush1.bf16.msra.mxu0 %v142
  %5867 = vmatprep.subr.bf16.mxu0 0
  %5868 = vmatpush2.bf16.msra.mxu0 %v157
  %5869 = vmatprep.subr.bf16.mxu0 0
  %5870 = vmatpush2.bf16.msra.mxu0 %v156
  %5871 = vmatprep.subr.bf16.mxu0 0
  %5872 = vmatpush2.bf16.msra.mxu0 %v155
  %5873 = vmatprep.subr.bf16.mxu0 0
  %5874 = vmatpush2.bf16.msra.mxu0 %v154
  %5875 = vmatprep.subr.bf16.mxu0 0
  %5876 = vmatpush2.bf16.msra.mxu0 %v153
  %5877 = vmatprep.subr.bf16.mxu0 0
  %5878 = vmatpush2.bf16.msra.mxu0 %v152
  %5879 = vmatprep.subr.bf16.mxu0 0
  %5880 = vmatpush2.bf16.msra.mxu0 %v151
  %5881 = vmatprep.subr.bf16.mxu0 0
  %5882 = vmatpush2.bf16.msra.mxu0 %v150
  %5883 = vmatprep.mubr.bf16.mxu0 %v5848
  %5884 = vmatmul.mubr.bf16.gmra.mxu0 %v5847
  %v5885 = vpop.f32.mrf.mxu0
  %v5886 = vadd.f32 0.0, %v5885
  %v5887 = vpop.f32.mrf.mxu0
  %v5888 = vpop.f32.mrf.mxu0
  %v5889 = vadd.f32 0.0, %v5888
  %v5890 = vpop.f32.mrf.mxu0
  %5891 = vdwg.mxu0
  %v5892 = vmax.f32 %v5832, %v5886
  %v5893 = vmax.f32 %v5835, %v5889
  %s5894 = scalar_lea.vmem %s0, 1120
  %v5895 = vld [vmem:[%s5894] sm:$0xff]
  %v5896 = vld [vmem:[%s5894 + $0x8] sm:$0xff]
  %v5899 = vunpack.c.l.b16 %v5895
  %v5900 = vunpack.c.h.b16 %v5895
  %v5901 = vunpack.c.l.b16 %v5896
  %v5902 = vunpack.c.h.b16 %v5896
  %v5903 = vpack.c.b16 %v5901, %v5899
  %v5904 = vpack.c.b16 %v5902, %v5900
  %5907 = vmatprep.subr.bf16.mxu0 0
  %5908 = vmatpush1.bf16.msra.mxu0 %v149
  %5909 = vmatprep.subr.bf16.mxu0 0
  %5910 = vmatpush1.bf16.msra.mxu0 %v148
  %5911 = vmatprep.subr.bf16.mxu0 0
  %5912 = vmatpush1.bf16.msra.mxu0 %v147
  %5913 = vmatprep.subr.bf16.mxu0 0
  %5914 = vmatpush1.bf16.msra.mxu0 %v146
  %5915 = vmatprep.subr.bf16.mxu0 0
  %5916 = vmatpush1.bf16.msra.mxu0 %v145
  %5917 = vmatprep.subr.bf16.mxu0 0
  %5918 = vmatpush1.bf16.msra.mxu0 %v144
  %5919 = vmatprep.subr.bf16.mxu0 0
  %5920 = vmatpush1.bf16.msra.mxu0 %v143
  %5921 = vmatprep.subr.bf16.mxu0 0
  %5922 = vmatpush1.bf16.msra.mxu0 %v142
  %5923 = vmatprep.subr.bf16.mxu0 0
  %5924 = vmatpush2.bf16.msra.mxu0 %v157
  %5925 = vmatprep.subr.bf16.mxu0 0
  %5926 = vmatpush2.bf16.msra.mxu0 %v156
  %5927 = vmatprep.subr.bf16.mxu0 0
  %5928 = vmatpush2.bf16.msra.mxu0 %v155
  %5929 = vmatprep.subr.bf16.mxu0 0
  %5930 = vmatpush2.bf16.msra.mxu0 %v154
  %5931 = vmatprep.subr.bf16.mxu0 0
  %5932 = vmatpush2.bf16.msra.mxu0 %v153
  %5933 = vmatprep.subr.bf16.mxu0 0
  %5934 = vmatpush2.bf16.msra.mxu0 %v152
  %5935 = vmatprep.subr.bf16.mxu0 0
  %5936 = vmatpush2.bf16.msra.mxu0 %v151
  %5937 = vmatprep.subr.bf16.mxu0 0
  %5938 = vmatpush2.bf16.msra.mxu0 %v150
  %5939 = vmatprep.mubr.bf16.mxu0 %v5904
  %5940 = vmatmul.mubr.bf16.gmra.mxu0 %v5903
  %v5941 = vpop.f32.mrf.mxu0
  %v5942 = vadd.f32 0.0, %v5941
  %v5943 = vpop.f32.mrf.mxu0
  %v5944 = vpop.f32.mrf.mxu0
  %v5945 = vadd.f32 0.0, %v5944
  %v5946 = vpop.f32.mrf.mxu0
  %5947 = vdwg.mxu0
  %v5948 = vmax.f32 %v5892, %v5942
  %v5949 = vmax.f32 %v5893, %v5945
  %s5950 = scalar_lea.vmem %s0, 1520
  %v5951 = vld [vmem:[%s5950] sm:$0xff]
  %v5952 = vld [vmem:[%s5950 + $0x8] sm:$0xff]
  %v5955 = vunpack.c.l.b16 %v5951
  %v5956 = vunpack.c.h.b16 %v5951
  %v5957 = vunpack.c.l.b16 %v5952
  %v5958 = vunpack.c.h.b16 %v5952
  %v5959 = vpack.c.b16 %v5957, %v5955
  %v5960 = vpack.c.b16 %v5958, %v5956
  %5963 = vmatprep.subr.bf16.mxu0 0
  %5964 = vmatpush1.bf16.msra.mxu0 %v149
  %5965 = vmatprep.subr.bf16.mxu0 0
  %5966 = vmatpush1.bf16.msra.mxu0 %v148
  %5967 = vmatprep.subr.bf16.mxu0 0
  %5968 = vmatpush1.bf16.msra.mxu0 %v147
  %5969 = vmatprep.subr.bf16.mxu0 0
  %5970 = vmatpush1.bf16.msra.mxu0 %v146
  %5971 = vmatprep.subr.bf16.mxu0 0
  %5972 = vmatpush1.bf16.msra.mxu0 %v145
  %5973 = vmatprep.subr.bf16.mxu0 0
  %5974 = vmatpush1.bf16.msra.mxu0 %v144
  %5975 = vmatprep.subr.bf16.mxu0 0
  %5976 = vmatpush1.bf16.msra.mxu0 %v143
  %5977 = vmatprep.subr.bf16.mxu0 0
  %5978 = vmatpush1.bf16.msra.mxu0 %v142
  %5979 = vmatprep.subr.bf16.mxu0 0
  %5980 = vmatpush2.bf16.msra.mxu0 %v157
  %5981 = vmatprep.subr.bf16.mxu0 0
  %5982 = vmatpush2.bf16.msra.mxu0 %v156
  %5983 = vmatprep.subr.bf16.mxu0 0
  %5984 = vmatpush2.bf16.msra.mxu0 %v155
  %5985 = vmatprep.subr.bf16.mxu0 0
  %5986 = vmatpush2.bf16.msra.mxu0 %v154
  %5987 = vmatprep.subr.bf16.mxu0 0
  %5988 = vmatpush2.bf16.msra.mxu0 %v153
  %5989 = vmatprep.subr.bf16.mxu0 0
  %5990 = vmatpush2.bf16.msra.mxu0 %v152
  %5991 = vmatprep.subr.bf16.mxu0 0
  %5992 = vmatpush2.bf16.msra.mxu0 %v151
  %5993 = vmatprep.subr.bf16.mxu0 0
  %5994 = vmatpush2.bf16.msra.mxu0 %v150
  %5995 = vmatprep.mubr.bf16.mxu0 %v5960
  %5996 = vmatmul.mubr.bf16.gmra.mxu0 %v5959
  %v5997 = vpop.f32.mrf.mxu0
  %v5998 = vadd.f32 0.0, %v5997
  %v5999 = vpop.f32.mrf.mxu0
  %v6000 = vpop.f32.mrf.mxu0
  %v6001 = vadd.f32 0.0, %v6000
  %v6002 = vpop.f32.mrf.mxu0
  %6003 = vdwg.mxu0
  %v6004 = vmax.f32 %v5948, %v5998
  %v6005 = vmax.f32 %v5949, %v6001
  %v6006 = vadd.f32 %v6004, %v387
  %v6007 = vadd.f32 %v6005, %v387
  %v6008 = vmax.f32 %v6006, 0.0
  %v6009 = vmax.f32 %v6007, 0.0
  %v6010 = vpack.c.bf16 %v6009, %v6008
  %v6011 = vld [vmem:[%s3 + $0xa0] sm:$0xf]
  %v6012 = vld [vmem:[%s3 + $0xa4] sm:$0xf]
  %v6015 = vunpack.c.l.b16 %v6011
  %v6016 = vunpack.c.l.b16 %v6012
  %v6017 = vpack.c.b16 %v6016, %v6015
  %v6020 = vsel %vm631, %v6010, 0
  %6022 = vmatprep.subr.bf16.mxu0 0
  %6023 = vmatpush1.bf16.msra.mxu0 0
  %6024 = vmatprep.subr.bf16.mxu0 0
  %6025 = vmatpush1.bf16.msra.mxu0 0
  %6026 = vmatprep.subr.bf16.mxu0 0
  %6027 = vmatpush1.bf16.msra.mxu0 0
  %6028 = vmatprep.subr.bf16.mxu0 0
  %6029 = vmatpush1.bf16.msra.mxu0 0
  %6030 = vmatprep.subr.bf16.mxu0 0
  %6031 = vmatpush1.bf16.msra.mxu0 0
  %6032 = vmatprep.subr.bf16.mxu0 0
  %6033 = vmatpush1.bf16.msra.mxu0 0
  %6034 = vmatprep.subr.bf16.mxu0 0
  %6035 = vmatpush1.bf16.msra.mxu0 0
  %6036 = vmatprep.subr.bf16.mxu0 0
  %6037 = vmatpush1.bf16.msra.mxu0 %v6017
  %6038 = vmatprep.subr.bf16.mxu0 0
  %6039 = vmatpush2.bf16.msra.mxu0 0
  %6040 = vmatprep.subr.bf16.mxu0 0
  %6041 = vmatpush2.bf16.msra.mxu0 0
  %6042 = vmatprep.subr.bf16.mxu0 0
  %6043 = vmatpush2.bf16.msra.mxu0 0
  %6044 = vmatprep.subr.bf16.mxu0 0
  %6045 = vmatpush2.bf16.msra.mxu0 0
  %6046 = vmatprep.subr.bf16.mxu0 0
  %6047 = vmatpush2.bf16.msra.mxu0 0
  %6048 = vmatprep.subr.bf16.mxu0 0
  %6049 = vmatpush2.bf16.msra.mxu0 0
  %6050 = vmatprep.subr.bf16.mxu0 0
  %6051 = vmatpush2.bf16.msra.mxu0 0
  %6052 = vmatprep.subr.bf16.mxu0 0
  %6053 = vmatpush2.bf16.msra.mxu0 0
  %6054 = vmatprep.mubr.bf16.mxu0 0
  %6055 = vmatmul.mubr.bf16.gmra.mxu0 %v6020
  %v6056 = vpop.f32.mrf.mxu0
  %v6057 = vadd.f32 0.0, %v6056
  %v6058 = vpop.f32.mrf.mxu0
  %v6059 = vpop.f32.mrf.mxu0
  %v6060 = vadd.f32 0.0, %v6059
  %v6061 = vpop.f32.mrf.mxu0
  %6062 = vdwg.mxu0
  %v6063 = vadd.f32 %v5782, %v6057
  %v6064 = vadd.f32 %v5783, %v6060
  %s6065 = scalar_lea.vmem %s0, 336
  %v6066 = vld [vmem:[%s6065] sm:$0xff]
  %v6067 = vld [vmem:[%s6065 + $0x8] sm:$0xff]
  %v6070 = vunpack.c.l.b16 %v6066
  %v6071 = vunpack.c.h.b16 %v6066
  %v6072 = vunpack.c.l.b16 %v6067
  %v6073 = vunpack.c.h.b16 %v6067
  %v6074 = vpack.c.b16 %v6072, %v6070
  %v6075 = vpack.c.b16 %v6073, %v6071
  %6078 = vmatprep.subr.bf16.mxu0 0
  %6079 = vmatpush1.bf16.msra.mxu0 %v149
  %6080 = vmatprep.subr.bf16.mxu0 0
  %6081 = vmatpush1.bf16.msra.mxu0 %v148
  %6082 = vmatprep.subr.bf16.mxu0 0
  %6083 = vmatpush1.bf16.msra.mxu0 %v147
  %6084 = vmatprep.subr.bf16.mxu0 0
  %6085 = vmatpush1.bf16.msra.mxu0 %v146
  %6086 = vmatprep.subr.bf16.mxu0 0
  %6087 = vmatpush1.bf16.msra.mxu0 %v145
  %6088 = vmatprep.subr.bf16.mxu0 0
  %6089 = vmatpush1.bf16.msra.mxu0 %v144
  %6090 = vmatprep.subr.bf16.mxu0 0
  %6091 = vmatpush1.bf16.msra.mxu0 %v143
  %6092 = vmatprep.subr.bf16.mxu0 0
  %6093 = vmatpush1.bf16.msra.mxu0 %v142
  %6094 = vmatprep.subr.bf16.mxu0 0
  %6095 = vmatpush2.bf16.msra.mxu0 %v157
  %6096 = vmatprep.subr.bf16.mxu0 0
  %6097 = vmatpush2.bf16.msra.mxu0 %v156
  %6098 = vmatprep.subr.bf16.mxu0 0
  %6099 = vmatpush2.bf16.msra.mxu0 %v155
  %6100 = vmatprep.subr.bf16.mxu0 0
  %6101 = vmatpush2.bf16.msra.mxu0 %v154
  %6102 = vmatprep.subr.bf16.mxu0 0
  %6103 = vmatpush2.bf16.msra.mxu0 %v153
  %6104 = vmatprep.subr.bf16.mxu0 0
  %6105 = vmatpush2.bf16.msra.mxu0 %v152
  %6106 = vmatprep.subr.bf16.mxu0 0
  %6107 = vmatpush2.bf16.msra.mxu0 %v151
  %6108 = vmatprep.subr.bf16.mxu0 0
  %6109 = vmatpush2.bf16.msra.mxu0 %v150
  %6110 = vmatprep.mubr.bf16.mxu0 %v6075
  %6111 = vmatmul.mubr.bf16.gmra.mxu0 %v6074
  %v6112 = vpop.f32.mrf.mxu0
  %v6113 = vadd.f32 0.0, %v6112
  %v6114 = vpop.f32.mrf.mxu0
  %v6115 = vpop.f32.mrf.mxu0
  %v6116 = vadd.f32 0.0, %v6115
  %v6117 = vpop.f32.mrf.mxu0
  %6118 = vdwg.mxu0
  %s6119 = scalar_lea.vmem %s0, 736
  %v6120 = vld [vmem:[%s6119] sm:$0xff]
  %v6121 = vld [vmem:[%s6119 + $0x8] sm:$0xff]
  %v6124 = vunpack.c.l.b16 %v6120
  %v6125 = vunpack.c.h.b16 %v6120
  %v6126 = vunpack.c.l.b16 %v6121
  %v6127 = vunpack.c.h.b16 %v6121
  %v6128 = vpack.c.b16 %v6126, %v6124
  %v6129 = vpack.c.b16 %v6127, %v6125
  %6132 = vmatprep.subr.bf16.mxu0 0
  %6133 = vmatpush1.bf16.msra.mxu0 %v149
  %6134 = vmatprep.subr.bf16.mxu0 0
  %6135 = vmatpush1.bf16.msra.mxu0 %v148
  %6136 = vmatprep.subr.bf16.mxu0 0
  %6137 = vmatpush1.bf16.msra.mxu0 %v147
  %6138 = vmatprep.subr.bf16.mxu0 0
  %6139 = vmatpush1.bf16.msra.mxu0 %v146
  %6140 = vmatprep.subr.bf16.mxu0 0
  %6141 = vmatpush1.bf16.msra.mxu0 %v145
  %6142 = vmatprep.subr.bf16.mxu0 0
  %6143 = vmatpush1.bf16.msra.mxu0 %v144
  %6144 = vmatprep.subr.bf16.mxu0 0
  %6145 = vmatpush1.bf16.msra.mxu0 %v143
  %6146 = vmatprep.subr.bf16.mxu0 0
  %6147 = vmatpush1.bf16.msra.mxu0 %v142
  %6148 = vmatprep.subr.bf16.mxu0 0
  %6149 = vmatpush2.bf16.msra.mxu0 %v157
  %6150 = vmatprep.subr.bf16.mxu0 0
  %6151 = vmatpush2.bf16.msra.mxu0 %v156
  %6152 = vmatprep.subr.bf16.mxu0 0
  %6153 = vmatpush2.bf16.msra.mxu0 %v155
  %6154 = vmatprep.subr.bf16.mxu0 0
  %6155 = vmatpush2.bf16.msra.mxu0 %v154
  %6156 = vmatprep.subr.bf16.mxu0 0
  %6157 = vmatpush2.bf16.msra.mxu0 %v153
  %6158 = vmatprep.subr.bf16.mxu0 0
  %6159 = vmatpush2.bf16.msra.mxu0 %v152
  %6160 = vmatprep.subr.bf16.mxu0 0
  %6161 = vmatpush2.bf16.msra.mxu0 %v151
  %6162 = vmatprep.subr.bf16.mxu0 0
  %6163 = vmatpush2.bf16.msra.mxu0 %v150
  %6164 = vmatprep.mubr.bf16.mxu0 %v6129
  %6165 = vmatmul.mubr.bf16.gmra.mxu0 %v6128
  %v6166 = vpop.f32.mrf.mxu0
  %v6167 = vadd.f32 0.0, %v6166
  %v6168 = vpop.f32.mrf.mxu0
  %v6169 = vpop.f32.mrf.mxu0
  %v6170 = vadd.f32 0.0, %v6169
  %v6171 = vpop.f32.mrf.mxu0
  %6172 = vdwg.mxu0
  %v6173 = vmax.f32 %v6113, %v6167
  %v6174 = vmax.f32 %v6116, %v6170
  %s6175 = scalar_lea.vmem %s0, 1136
  %v6176 = vld [vmem:[%s6175] sm:$0xff]
  %v6177 = vld [vmem:[%s6175 + $0x8] sm:$0xff]
  %v6180 = vunpack.c.l.b16 %v6176
  %v6181 = vunpack.c.h.b16 %v6176
  %v6182 = vunpack.c.l.b16 %v6177
  %v6183 = vunpack.c.h.b16 %v6177
  %v6184 = vpack.c.b16 %v6182, %v6180
  %v6185 = vpack.c.b16 %v6183, %v6181
  %6188 = vmatprep.subr.bf16.mxu0 0
  %6189 = vmatpush1.bf16.msra.mxu0 %v149
  %6190 = vmatprep.subr.bf16.mxu0 0
  %6191 = vmatpush1.bf16.msra.mxu0 %v148
  %6192 = vmatprep.subr.bf16.mxu0 0
  %6193 = vmatpush1.bf16.msra.mxu0 %v147
  %6194 = vmatprep.subr.bf16.mxu0 0
  %6195 = vmatpush1.bf16.msra.mxu0 %v146
  %6196 = vmatprep.subr.bf16.mxu0 0
  %6197 = vmatpush1.bf16.msra.mxu0 %v145
  %6198 = vmatprep.subr.bf16.mxu0 0
  %6199 = vmatpush1.bf16.msra.mxu0 %v144
  %6200 = vmatprep.subr.bf16.mxu0 0
  %6201 = vmatpush1.bf16.msra.mxu0 %v143
  %6202 = vmatprep.subr.bf16.mxu0 0
  %6203 = vmatpush1.bf16.msra.mxu0 %v142
  %6204 = vmatprep.subr.bf16.mxu0 0
  %6205 = vmatpush2.bf16.msra.mxu0 %v157
  %6206 = vmatprep.subr.bf16.mxu0 0
  %6207 = vmatpush2.bf16.msra.mxu0 %v156
  %6208 = vmatprep.subr.bf16.mxu0 0
  %6209 = vmatpush2.bf16.msra.mxu0 %v155
  %6210 = vmatprep.subr.bf16.mxu0 0
  %6211 = vmatpush2.bf16.msra.mxu0 %v154
  %6212 = vmatprep.subr.bf16.mxu0 0
  %6213 = vmatpush2.bf16.msra.mxu0 %v153
  %6214 = vmatprep.subr.bf16.mxu0 0
  %6215 = vmatpush2.bf16.msra.mxu0 %v152
  %6216 = vmatprep.subr.bf16.mxu0 0
  %6217 = vmatpush2.bf16.msra.mxu0 %v151
  %6218 = vmatprep.subr.bf16.mxu0 0
  %6219 = vmatpush2.bf16.msra.mxu0 %v150
  %6220 = vmatprep.mubr.bf16.mxu0 %v6185
  %6221 = vmatmul.mubr.bf16.gmra.mxu0 %v6184
  %v6222 = vpop.f32.mrf.mxu0
  %v6223 = vadd.f32 0.0, %v6222
  %v6224 = vpop.f32.mrf.mxu0
  %v6225 = vpop.f32.mrf.mxu0
  %v6226 = vadd.f32 0.0, %v6225
  %v6227 = vpop.f32.mrf.mxu0
  %6228 = vdwg.mxu0
  %v6229 = vmax.f32 %v6173, %v6223
  %v6230 = vmax.f32 %v6174, %v6226
  %s6231 = scalar_lea.vmem %s0, 1536
  %v6232 = vld [vmem:[%s6231] sm:$0xff]
  %v6233 = vld [vmem:[%s6231 + $0x8] sm:$0xff]
  %v6236 = vunpack.c.l.b16 %v6232
  %v6237 = vunpack.c.h.b16 %v6232
  %v6238 = vunpack.c.l.b16 %v6233
  %v6239 = vunpack.c.h.b16 %v6233
  %v6240 = vpack.c.b16 %v6238, %v6236
  %v6241 = vpack.c.b16 %v6239, %v6237
  %6244 = vmatprep.subr.bf16.mxu0 0
  %6245 = vmatpush1.bf16.msra.mxu0 %v149
  %6246 = vmatprep.subr.bf16.mxu0 0
  %6247 = vmatpush1.bf16.msra.mxu0 %v148
  %6248 = vmatprep.subr.bf16.mxu0 0
  %6249 = vmatpush1.bf16.msra.mxu0 %v147
  %6250 = vmatprep.subr.bf16.mxu0 0
  %6251 = vmatpush1.bf16.msra.mxu0 %v146
  %6252 = vmatprep.subr.bf16.mxu0 0
  %6253 = vmatpush1.bf16.msra.mxu0 %v145
  %6254 = vmatprep.subr.bf16.mxu0 0
  %6255 = vmatpush1.bf16.msra.mxu0 %v144
  %6256 = vmatprep.subr.bf16.mxu0 0
  %6257 = vmatpush1.bf16.msra.mxu0 %v143
  %6258 = vmatprep.subr.bf16.mxu0 0
  %6259 = vmatpush1.bf16.msra.mxu0 %v142
  %6260 = vmatprep.subr.bf16.mxu0 0
  %6261 = vmatpush2.bf16.msra.mxu0 %v157
  %6262 = vmatprep.subr.bf16.mxu0 0
  %6263 = vmatpush2.bf16.msra.mxu0 %v156
  %6264 = vmatprep.subr.bf16.mxu0 0
  %6265 = vmatpush2.bf16.msra.mxu0 %v155
  %6266 = vmatprep.subr.bf16.mxu0 0
  %6267 = vmatpush2.bf16.msra.mxu0 %v154
  %6268 = vmatprep.subr.bf16.mxu0 0
  %6269 = vmatpush2.bf16.msra.mxu0 %v153
  %6270 = vmatprep.subr.bf16.mxu0 0
  %6271 = vmatpush2.bf16.msra.mxu0 %v152
  %6272 = vmatprep.subr.bf16.mxu0 0
  %6273 = vmatpush2.bf16.msra.mxu0 %v151
  %6274 = vmatprep.subr.bf16.mxu0 0
  %6275 = vmatpush2.bf16.msra.mxu0 %v150
  %6276 = vmatprep.mubr.bf16.mxu0 %v6241
  %6277 = vmatmul.mubr.bf16.gmra.mxu0 %v6240
  %v6278 = vpop.f32.mrf.mxu0
  %v6279 = vadd.f32 0.0, %v6278
  %v6280 = vpop.f32.mrf.mxu0
  %v6281 = vpop.f32.mrf.mxu0
  %v6282 = vadd.f32 0.0, %v6281
  %v6283 = vpop.f32.mrf.mxu0
  %6284 = vdwg.mxu0
  %v6285 = vmax.f32 %v6229, %v6279
  %v6286 = vmax.f32 %v6230, %v6282
  %v6287 = vadd.f32 %v6285, %v387
  %v6288 = vadd.f32 %v6286, %v387
  %v6289 = vmax.f32 %v6287, 0.0
  %v6290 = vmax.f32 %v6288, 0.0
  %v6291 = vpack.c.bf16 %v6290, %v6289
  %v6292 = vld [vmem:[%s3 + $0xa8] sm:$0xf]
  %v6293 = vld [vmem:[%s3 + $0xac] sm:$0xf]
  %v6296 = vunpack.c.l.b16 %v6292
  %v6297 = vunpack.c.l.b16 %v6293
  %v6298 = vpack.c.b16 %v6297, %v6296
  %v6301 = vsel %vm631, %v6291, 0
  %6303 = vmatprep.subr.bf16.mxu0 0
  %6304 = vmatpush1.bf16.msra.mxu0 0
  %6305 = vmatprep.subr.bf16.mxu0 0
  %6306 = vmatpush1.bf16.msra.mxu0 0
  %6307 = vmatprep.subr.bf16.mxu0 0
  %6308 = vmatpush1.bf16.msra.mxu0 0
  %6309 = vmatprep.subr.bf16.mxu0 0
  %6310 = vmatpush1.bf16.msra.mxu0 0
  %6311 = vmatprep.subr.bf16.mxu0 0
  %6312 = vmatpush1.bf16.msra.mxu0 0
  %6313 = vmatprep.subr.bf16.mxu0 0
  %6314 = vmatpush1.bf16.msra.mxu0 0
  %6315 = vmatprep.subr.bf16.mxu0 0
  %6316 = vmatpush1.bf16.msra.mxu0 0
  %6317 = vmatprep.subr.bf16.mxu0 0
  %6318 = vmatpush1.bf16.msra.mxu0 %v6298
  %6319 = vmatprep.subr.bf16.mxu0 0
  %6320 = vmatpush2.bf16.msra.mxu0 0
  %6321 = vmatprep.subr.bf16.mxu0 0
  %6322 = vmatpush2.bf16.msra.mxu0 0
  %6323 = vmatprep.subr.bf16.mxu0 0
  %6324 = vmatpush2.bf16.msra.mxu0 0
  %6325 = vmatprep.subr.bf16.mxu0 0
  %6326 = vmatpush2.bf16.msra.mxu0 0
  %6327 = vmatprep.subr.bf16.mxu0 0
  %6328 = vmatpush2.bf16.msra.mxu0 0
  %6329 = vmatprep.subr.bf16.mxu0 0
  %6330 = vmatpush2.bf16.msra.mxu0 0
  %6331 = vmatprep.subr.bf16.mxu0 0
  %6332 = vmatpush2.bf16.msra.mxu0 0
  %6333 = vmatprep.subr.bf16.mxu0 0
  %6334 = vmatpush2.bf16.msra.mxu0 0
  %6335 = vmatprep.mubr.bf16.mxu0 0
  %6336 = vmatmul.mubr.bf16.gmra.mxu0 %v6301
  %v6337 = vpop.f32.mrf.mxu0
  %v6338 = vadd.f32 0.0, %v6337
  %v6339 = vpop.f32.mrf.mxu0
  %v6340 = vpop.f32.mrf.mxu0
  %v6341 = vadd.f32 0.0, %v6340
  %v6342 = vpop.f32.mrf.mxu0
  %6343 = vdwg.mxu0
  %v6344 = vadd.f32 %v6063, %v6338
  %v6345 = vadd.f32 %v6064, %v6341
  %s6346 = scalar_lea.vmem %s0, 352
  %v6347 = vld [vmem:[%s6346] sm:$0xff]
  %v6348 = vld [vmem:[%s6346 + $0x8] sm:$0xff]
  %v6351 = vunpack.c.l.b16 %v6347
  %v6352 = vunpack.c.h.b16 %v6347
  %v6353 = vunpack.c.l.b16 %v6348
  %v6354 = vunpack.c.h.b16 %v6348
  %v6355 = vpack.c.b16 %v6353, %v6351
  %v6356 = vpack.c.b16 %v6354, %v6352
  %6359 = vmatprep.subr.bf16.mxu0 0
  %6360 = vmatpush1.bf16.msra.mxu0 %v149
  %6361 = vmatprep.subr.bf16.mxu0 0
  %6362 = vmatpush1.bf16.msra.mxu0 %v148
  %6363 = vmatprep.subr.bf16.mxu0 0
  %6364 = vmatpush1.bf16.msra.mxu0 %v147
  %6365 = vmatprep.subr.bf16.mxu0 0
  %6366 = vmatpush1.bf16.msra.mxu0 %v146
  %6367 = vmatprep.subr.bf16.mxu0 0
  %6368 = vmatpush1.bf16.msra.mxu0 %v145
  %6369 = vmatprep.subr.bf16.mxu0 0
  %6370 = vmatpush1.bf16.msra.mxu0 %v144
  %6371 = vmatprep.subr.bf16.mxu0 0
  %6372 = vmatpush1.bf16.msra.mxu0 %v143
  %6373 = vmatprep.subr.bf16.mxu0 0
  %6374 = vmatpush1.bf16.msra.mxu0 %v142
  %6375 = vmatprep.subr.bf16.mxu0 0
  %6376 = vmatpush2.bf16.msra.mxu0 %v157
  %6377 = vmatprep.subr.bf16.mxu0 0
  %6378 = vmatpush2.bf16.msra.mxu0 %v156
  %6379 = vmatprep.subr.bf16.mxu0 0
  %6380 = vmatpush2.bf16.msra.mxu0 %v155
  %6381 = vmatprep.subr.bf16.mxu0 0
  %6382 = vmatpush2.bf16.msra.mxu0 %v154
  %6383 = vmatprep.subr.bf16.mxu0 0
  %6384 = vmatpush2.bf16.msra.mxu0 %v153
  %6385 = vmatprep.subr.bf16.mxu0 0
  %6386 = vmatpush2.bf16.msra.mxu0 %v152
  %6387 = vmatprep.subr.bf16.mxu0 0
  %6388 = vmatpush2.bf16.msra.mxu0 %v151
  %6389 = vmatprep.subr.bf16.mxu0 0
  %6390 = vmatpush2.bf16.msra.mxu0 %v150
  %6391 = vmatprep.mubr.bf16.mxu0 %v6356
  %6392 = vmatmul.mubr.bf16.gmra.mxu0 %v6355
  %v6393 = vpop.f32.mrf.mxu0
  %v6394 = vadd.f32 0.0, %v6393
  %v6395 = vpop.f32.mrf.mxu0
  %v6396 = vpop.f32.mrf.mxu0
  %v6397 = vadd.f32 0.0, %v6396
  %v6398 = vpop.f32.mrf.mxu0
  %6399 = vdwg.mxu0
  %s6400 = scalar_lea.vmem %s0, 752
  %v6401 = vld [vmem:[%s6400] sm:$0xff]
  %v6402 = vld [vmem:[%s6400 + $0x8] sm:$0xff]
  %v6405 = vunpack.c.l.b16 %v6401
  %v6406 = vunpack.c.h.b16 %v6401
  %v6407 = vunpack.c.l.b16 %v6402
  %v6408 = vunpack.c.h.b16 %v6402
  %v6409 = vpack.c.b16 %v6407, %v6405
  %v6410 = vpack.c.b16 %v6408, %v6406
  %6413 = vmatprep.subr.bf16.mxu0 0
  %6414 = vmatpush1.bf16.msra.mxu0 %v149
  %6415 = vmatprep.subr.bf16.mxu0 0
  %6416 = vmatpush1.bf16.msra.mxu0 %v148
  %6417 = vmatprep.subr.bf16.mxu0 0
  %6418 = vmatpush1.bf16.msra.mxu0 %v147
  %6419 = vmatprep.subr.bf16.mxu0 0
  %6420 = vmatpush1.bf16.msra.mxu0 %v146
  %6421 = vmatprep.subr.bf16.mxu0 0
  %6422 = vmatpush1.bf16.msra.mxu0 %v145
  %6423 = vmatprep.subr.bf16.mxu0 0
  %6424 = vmatpush1.bf16.msra.mxu0 %v144
  %6425 = vmatprep.subr.bf16.mxu0 0
  %6426 = vmatpush1.bf16.msra.mxu0 %v143
  %6427 = vmatprep.subr.bf16.mxu0 0
  %6428 = vmatpush1.bf16.msra.mxu0 %v142
  %6429 = vmatprep.subr.bf16.mxu0 0
  %6430 = vmatpush2.bf16.msra.mxu0 %v157
  %6431 = vmatprep.subr.bf16.mxu0 0
  %6432 = vmatpush2.bf16.msra.mxu0 %v156
  %6433 = vmatprep.subr.bf16.mxu0 0
  %6434 = vmatpush2.bf16.msra.mxu0 %v155
  %6435 = vmatprep.subr.bf16.mxu0 0
  %6436 = vmatpush2.bf16.msra.mxu0 %v154
  %6437 = vmatprep.subr.bf16.mxu0 0
  %6438 = vmatpush2.bf16.msra.mxu0 %v153
  %6439 = vmatprep.subr.bf16.mxu0 0
  %6440 = vmatpush2.bf16.msra.mxu0 %v152
  %6441 = vmatprep.subr.bf16.mxu0 0
  %6442 = vmatpush2.bf16.msra.mxu0 %v151
  %6443 = vmatprep.subr.bf16.mxu0 0
  %6444 = vmatpush2.bf16.msra.mxu0 %v150
  %6445 = vmatprep.mubr.bf16.mxu0 %v6410
  %6446 = vmatmul.mubr.bf16.gmra.mxu0 %v6409
  %v6447 = vpop.f32.mrf.mxu0
  %v6448 = vadd.f32 0.0, %v6447
  %v6449 = vpop.f32.mrf.mxu0
  %v6450 = vpop.f32.mrf.mxu0
  %v6451 = vadd.f32 0.0, %v6450
  %v6452 = vpop.f32.mrf.mxu0
  %6453 = vdwg.mxu0
  %v6454 = vmax.f32 %v6394, %v6448
  %v6455 = vmax.f32 %v6397, %v6451
  %s6456 = scalar_lea.vmem %s0, 1152
  %v6457 = vld [vmem:[%s6456] sm:$0xff]
  %v6458 = vld [vmem:[%s6456 + $0x8] sm:$0xff]
  %v6461 = vunpack.c.l.b16 %v6457
  %v6462 = vunpack.c.h.b16 %v6457
  %v6463 = vunpack.c.l.b16 %v6458
  %v6464 = vunpack.c.h.b16 %v6458
  %v6465 = vpack.c.b16 %v6463, %v6461
  %v6466 = vpack.c.b16 %v6464, %v6462
  %6469 = vmatprep.subr.bf16.mxu0 0
  %6470 = vmatpush1.bf16.msra.mxu0 %v149
  %6471 = vmatprep.subr.bf16.mxu0 0
  %6472 = vmatpush1.bf16.msra.mxu0 %v148
  %6473 = vmatprep.subr.bf16.mxu0 0
  %6474 = vmatpush1.bf16.msra.mxu0 %v147
  %6475 = vmatprep.subr.bf16.mxu0 0
  %6476 = vmatpush1.bf16.msra.mxu0 %v146
  %6477 = vmatprep.subr.bf16.mxu0 0
  %6478 = vmatpush1.bf16.msra.mxu0 %v145
  %6479 = vmatprep.subr.bf16.mxu0 0
  %6480 = vmatpush1.bf16.msra.mxu0 %v144
  %6481 = vmatprep.subr.bf16.mxu0 0
  %6482 = vmatpush1.bf16.msra.mxu0 %v143
  %6483 = vmatprep.subr.bf16.mxu0 0
  %6484 = vmatpush1.bf16.msra.mxu0 %v142
  %6485 = vmatprep.subr.bf16.mxu0 0
  %6486 = vmatpush2.bf16.msra.mxu0 %v157
  %6487 = vmatprep.subr.bf16.mxu0 0
  %6488 = vmatpush2.bf16.msra.mxu0 %v156
  %6489 = vmatprep.subr.bf16.mxu0 0
  %6490 = vmatpush2.bf16.msra.mxu0 %v155
  %6491 = vmatprep.subr.bf16.mxu0 0
  %6492 = vmatpush2.bf16.msra.mxu0 %v154
  %6493 = vmatprep.subr.bf16.mxu0 0
  %6494 = vmatpush2.bf16.msra.mxu0 %v153
  %6495 = vmatprep.subr.bf16.mxu0 0
  %6496 = vmatpush2.bf16.msra.mxu0 %v152
  %6497 = vmatprep.subr.bf16.mxu0 0
  %6498 = vmatpush2.bf16.msra.mxu0 %v151
  %6499 = vmatprep.subr.bf16.mxu0 0
  %6500 = vmatpush2.bf16.msra.mxu0 %v150
  %6501 = vmatprep.mubr.bf16.mxu0 %v6466
  %6502 = vmatmul.mubr.bf16.gmra.mxu0 %v6465
  %v6503 = vpop.f32.mrf.mxu0
  %v6504 = vadd.f32 0.0, %v6503
  %v6505 = vpop.f32.mrf.mxu0
  %v6506 = vpop.f32.mrf.mxu0
  %v6507 = vadd.f32 0.0, %v6506
  %v6508 = vpop.f32.mrf.mxu0
  %6509 = vdwg.mxu0
  %v6510 = vmax.f32 %v6454, %v6504
  %v6511 = vmax.f32 %v6455, %v6507
  %s6512 = scalar_lea.vmem %s0, 1552
  %v6513 = vld [vmem:[%s6512] sm:$0xff]
  %v6514 = vld [vmem:[%s6512 + $0x8] sm:$0xff]
  %v6517 = vunpack.c.l.b16 %v6513
  %v6518 = vunpack.c.h.b16 %v6513
  %v6519 = vunpack.c.l.b16 %v6514
  %v6520 = vunpack.c.h.b16 %v6514
  %v6521 = vpack.c.b16 %v6519, %v6517
  %v6522 = vpack.c.b16 %v6520, %v6518
  %6525 = vmatprep.subr.bf16.mxu0 0
  %6526 = vmatpush1.bf16.msra.mxu0 %v149
  %6527 = vmatprep.subr.bf16.mxu0 0
  %6528 = vmatpush1.bf16.msra.mxu0 %v148
  %6529 = vmatprep.subr.bf16.mxu0 0
  %6530 = vmatpush1.bf16.msra.mxu0 %v147
  %6531 = vmatprep.subr.bf16.mxu0 0
  %6532 = vmatpush1.bf16.msra.mxu0 %v146
  %6533 = vmatprep.subr.bf16.mxu0 0
  %6534 = vmatpush1.bf16.msra.mxu0 %v145
  %6535 = vmatprep.subr.bf16.mxu0 0
  %6536 = vmatpush1.bf16.msra.mxu0 %v144
  %6537 = vmatprep.subr.bf16.mxu0 0
  %6538 = vmatpush1.bf16.msra.mxu0 %v143
  %6539 = vmatprep.subr.bf16.mxu0 0
  %6540 = vmatpush1.bf16.msra.mxu0 %v142
  %6541 = vmatprep.subr.bf16.mxu0 0
  %6542 = vmatpush2.bf16.msra.mxu0 %v157
  %6543 = vmatprep.subr.bf16.mxu0 0
  %6544 = vmatpush2.bf16.msra.mxu0 %v156
  %6545 = vmatprep.subr.bf16.mxu0 0
  %6546 = vmatpush2.bf16.msra.mxu0 %v155
  %6547 = vmatprep.subr.bf16.mxu0 0
  %6548 = vmatpush2.bf16.msra.mxu0 %v154
  %6549 = vmatprep.subr.bf16.mxu0 0
  %6550 = vmatpush2.bf16.msra.mxu0 %v153
  %6551 = vmatprep.subr.bf16.mxu0 0
  %6552 = vmatpush2.bf16.msra.mxu0 %v152
  %6553 = vmatprep.subr.bf16.mxu0 0
  %6554 = vmatpush2.bf16.msra.mxu0 %v151
  %6555 = vmatprep.subr.bf16.mxu0 0
  %6556 = vmatpush2.bf16.msra.mxu0 %v150
  %6557 = vmatprep.mubr.bf16.mxu0 %v6522
  %6558 = vmatmul.mubr.bf16.gmra.mxu0 %v6521
  %v6559 = vpop.f32.mrf.mxu0
  %v6560 = vadd.f32 0.0, %v6559
  %v6561 = vpop.f32.mrf.mxu0
  %v6562 = vpop.f32.mrf.mxu0
  %v6563 = vadd.f32 0.0, %v6562
  %v6564 = vpop.f32.mrf.mxu0
  %6565 = vdwg.mxu0
  %v6566 = vmax.f32 %v6510, %v6560
  %v6567 = vmax.f32 %v6511, %v6563
  %v6568 = vadd.f32 %v6566, %v387
  %v6569 = vadd.f32 %v6567, %v387
  %v6570 = vmax.f32 %v6568, 0.0
  %v6571 = vmax.f32 %v6569, 0.0
  %v6572 = vpack.c.bf16 %v6571, %v6570
  %v6573 = vld [vmem:[%s3 + $0xb0] sm:$0xf]
  %v6574 = vld [vmem:[%s3 + $0xb4] sm:$0xf]
  %v6577 = vunpack.c.l.b16 %v6573
  %v6578 = vunpack.c.l.b16 %v6574
  %v6579 = vpack.c.b16 %v6578, %v6577
  %v6582 = vsel %vm631, %v6572, 0
  %6584 = vmatprep.subr.bf16.mxu0 0
  %6585 = vmatpush1.bf16.msra.mxu0 0
  %6586 = vmatprep.subr.bf16.mxu0 0
  %6587 = vmatpush1.bf16.msra.mxu0 0
  %6588 = vmatprep.subr.bf16.mxu0 0
  %6589 = vmatpush1.bf16.msra.mxu0 0
  %6590 = vmatprep.subr.bf16.mxu0 0
  %6591 = vmatpush1.bf16.msra.mxu0 0
  %6592 = vmatprep.subr.bf16.mxu0 0
  %6593 = vmatpush1.bf16.msra.mxu0 0
  %6594 = vmatprep.subr.bf16.mxu0 0
  %6595 = vmatpush1.bf16.msra.mxu0 0
  %6596 = vmatprep.subr.bf16.mxu0 0
  %6597 = vmatpush1.bf16.msra.mxu0 0
  %6598 = vmatprep.subr.bf16.mxu0 0
  %6599 = vmatpush1.bf16.msra.mxu0 %v6579
  %6600 = vmatprep.subr.bf16.mxu0 0
  %6601 = vmatpush2.bf16.msra.mxu0 0
  %6602 = vmatprep.subr.bf16.mxu0 0
  %6603 = vmatpush2.bf16.msra.mxu0 0
  %6604 = vmatprep.subr.bf16.mxu0 0
  %6605 = vmatpush2.bf16.msra.mxu0 0
  %6606 = vmatprep.subr.bf16.mxu0 0
  %6607 = vmatpush2.bf16.msra.mxu0 0
  %6608 = vmatprep.subr.bf16.mxu0 0
  %6609 = vmatpush2.bf16.msra.mxu0 0
  %6610 = vmatprep.subr.bf16.mxu0 0
  %6611 = vmatpush2.bf16.msra.mxu0 0
  %6612 = vmatprep.subr.bf16.mxu0 0
  %6613 = vmatpush2.bf16.msra.mxu0 0
  %6614 = vmatprep.subr.bf16.mxu0 0
  %6615 = vmatpush2.bf16.msra.mxu0 0
  %6616 = vmatprep.mubr.bf16.mxu0 0
  %6617 = vmatmul.mubr.bf16.gmra.mxu0 %v6582
  %v6618 = vpop.f32.mrf.mxu0
  %v6619 = vadd.f32 0.0, %v6618
  %v6620 = vpop.f32.mrf.mxu0
  %v6621 = vpop.f32.mrf.mxu0
  %v6622 = vadd.f32 0.0, %v6621
  %v6623 = vpop.f32.mrf.mxu0
  %6624 = vdwg.mxu0
  %v6625 = vadd.f32 %v6344, %v6619
  %v6626 = vadd.f32 %v6345, %v6622
  %s6627 = scalar_lea.vmem %s0, 368
  %v6628 = vld [vmem:[%s6627] sm:$0xff]
  %v6629 = vld [vmem:[%s6627 + $0x8] sm:$0xff]
  %v6632 = vunpack.c.l.b16 %v6628
  %v6633 = vunpack.c.h.b16 %v6628
  %v6634 = vunpack.c.l.b16 %v6629
  %v6635 = vunpack.c.h.b16 %v6629
  %v6636 = vpack.c.b16 %v6634, %v6632
  %v6637 = vpack.c.b16 %v6635, %v6633
  %6640 = vmatprep.subr.bf16.mxu0 0
  %6641 = vmatpush1.bf16.msra.mxu0 %v149
  %6642 = vmatprep.subr.bf16.mxu0 0
  %6643 = vmatpush1.bf16.msra.mxu0 %v148
  %6644 = vmatprep.subr.bf16.mxu0 0
  %6645 = vmatpush1.bf16.msra.mxu0 %v147
  %6646 = vmatprep.subr.bf16.mxu0 0
  %6647 = vmatpush1.bf16.msra.mxu0 %v146
  %6648 = vmatprep.subr.bf16.mxu0 0
  %6649 = vmatpush1.bf16.msra.mxu0 %v145
  %6650 = vmatprep.subr.bf16.mxu0 0
  %6651 = vmatpush1.bf16.msra.mxu0 %v144
  %6652 = vmatprep.subr.bf16.mxu0 0
  %6653 = vmatpush1.bf16.msra.mxu0 %v143
  %6654 = vmatprep.subr.bf16.mxu0 0
  %6655 = vmatpush1.bf16.msra.mxu0 %v142
  %6656 = vmatprep.subr.bf16.mxu0 0
  %6657 = vmatpush2.bf16.msra.mxu0 %v157
  %6658 = vmatprep.subr.bf16.mxu0 0
  %6659 = vmatpush2.bf16.msra.mxu0 %v156
  %6660 = vmatprep.subr.bf16.mxu0 0
  %6661 = vmatpush2.bf16.msra.mxu0 %v155
  %6662 = vmatprep.subr.bf16.mxu0 0
  %6663 = vmatpush2.bf16.msra.mxu0 %v154
  %6664 = vmatprep.subr.bf16.mxu0 0
  %6665 = vmatpush2.bf16.msra.mxu0 %v153
  %6666 = vmatprep.subr.bf16.mxu0 0
  %6667 = vmatpush2.bf16.msra.mxu0 %v152
  %6668 = vmatprep.subr.bf16.mxu0 0
  %6669 = vmatpush2.bf16.msra.mxu0 %v151
  %6670 = vmatprep.subr.bf16.mxu0 0
  %6671 = vmatpush2.bf16.msra.mxu0 %v150
  %6672 = vmatprep.mubr.bf16.mxu0 %v6637
  %6673 = vmatmul.mubr.bf16.gmra.mxu0 %v6636
  %v6674 = vpop.f32.mrf.mxu0
  %v6675 = vadd.f32 0.0, %v6674
  %v6676 = vpop.f32.mrf.mxu0
  %v6677 = vpop.f32.mrf.mxu0
  %v6678 = vadd.f32 0.0, %v6677
  %v6679 = vpop.f32.mrf.mxu0
  %6680 = vdwg.mxu0
  %s6681 = scalar_lea.vmem %s0, 768
  %v6682 = vld [vmem:[%s6681] sm:$0xff]
  %v6683 = vld [vmem:[%s6681 + $0x8] sm:$0xff]
  %v6686 = vunpack.c.l.b16 %v6682
  %v6687 = vunpack.c.h.b16 %v6682
  %v6688 = vunpack.c.l.b16 %v6683
  %v6689 = vunpack.c.h.b16 %v6683
  %v6690 = vpack.c.b16 %v6688, %v6686
  %v6691 = vpack.c.b16 %v6689, %v6687
  %6694 = vmatprep.subr.bf16.mxu0 0
  %6695 = vmatpush1.bf16.msra.mxu0 %v149
  %6696 = vmatprep.subr.bf16.mxu0 0
  %6697 = vmatpush1.bf16.msra.mxu0 %v148
  %6698 = vmatprep.subr.bf16.mxu0 0
  %6699 = vmatpush1.bf16.msra.mxu0 %v147
  %6700 = vmatprep.subr.bf16.mxu0 0
  %6701 = vmatpush1.bf16.msra.mxu0 %v146
  %6702 = vmatprep.subr.bf16.mxu0 0
  %6703 = vmatpush1.bf16.msra.mxu0 %v145
  %6704 = vmatprep.subr.bf16.mxu0 0
  %6705 = vmatpush1.bf16.msra.mxu0 %v144
  %6706 = vmatprep.subr.bf16.mxu0 0
  %6707 = vmatpush1.bf16.msra.mxu0 %v143
  %6708 = vmatprep.subr.bf16.mxu0 0
  %6709 = vmatpush1.bf16.msra.mxu0 %v142
  %6710 = vmatprep.subr.bf16.mxu0 0
  %6711 = vmatpush2.bf16.msra.mxu0 %v157
  %6712 = vmatprep.subr.bf16.mxu0 0
  %6713 = vmatpush2.bf16.msra.mxu0 %v156
  %6714 = vmatprep.subr.bf16.mxu0 0
  %6715 = vmatpush2.bf16.msra.mxu0 %v155
  %6716 = vmatprep.subr.bf16.mxu0 0
  %6717 = vmatpush2.bf16.msra.mxu0 %v154
  %6718 = vmatprep.subr.bf16.mxu0 0
  %6719 = vmatpush2.bf16.msra.mxu0 %v153
  %6720 = vmatprep.subr.bf16.mxu0 0
  %6721 = vmatpush2.bf16.msra.mxu0 %v152
  %6722 = vmatprep.subr.bf16.mxu0 0
  %6723 = vmatpush2.bf16.msra.mxu0 %v151
  %6724 = vmatprep.subr.bf16.mxu0 0
  %6725 = vmatpush2.bf16.msra.mxu0 %v150
  %6726 = vmatprep.mubr.bf16.mxu0 %v6691
  %6727 = vmatmul.mubr.bf16.gmra.mxu0 %v6690
  %v6728 = vpop.f32.mrf.mxu0
  %v6729 = vadd.f32 0.0, %v6728
  %v6730 = vpop.f32.mrf.mxu0
  %v6731 = vpop.f32.mrf.mxu0
  %v6732 = vadd.f32 0.0, %v6731
  %v6733 = vpop.f32.mrf.mxu0
  %6734 = vdwg.mxu0
  %v6735 = vmax.f32 %v6675, %v6729
  %v6736 = vmax.f32 %v6678, %v6732
  %s6737 = scalar_lea.vmem %s0, 1168
  %v6738 = vld [vmem:[%s6737] sm:$0xff]
  %v6739 = vld [vmem:[%s6737 + $0x8] sm:$0xff]
  %v6742 = vunpack.c.l.b16 %v6738
  %v6743 = vunpack.c.h.b16 %v6738
  %v6744 = vunpack.c.l.b16 %v6739
  %v6745 = vunpack.c.h.b16 %v6739
  %v6746 = vpack.c.b16 %v6744, %v6742
  %v6747 = vpack.c.b16 %v6745, %v6743
  %6750 = vmatprep.subr.bf16.mxu0 0
  %6751 = vmatpush1.bf16.msra.mxu0 %v149
  %6752 = vmatprep.subr.bf16.mxu0 0
  %6753 = vmatpush1.bf16.msra.mxu0 %v148
  %6754 = vmatprep.subr.bf16.mxu0 0
  %6755 = vmatpush1.bf16.msra.mxu0 %v147
  %6756 = vmatprep.subr.bf16.mxu0 0
  %6757 = vmatpush1.bf16.msra.mxu0 %v146
  %6758 = vmatprep.subr.bf16.mxu0 0
  %6759 = vmatpush1.bf16.msra.mxu0 %v145
  %6760 = vmatprep.subr.bf16.mxu0 0
  %6761 = vmatpush1.bf16.msra.mxu0 %v144
  %6762 = vmatprep.subr.bf16.mxu0 0
  %6763 = vmatpush1.bf16.msra.mxu0 %v143
  %6764 = vmatprep.subr.bf16.mxu0 0
  %6765 = vmatpush1.bf16.msra.mxu0 %v142
  %6766 = vmatprep.subr.bf16.mxu0 0
  %6767 = vmatpush2.bf16.msra.mxu0 %v157
  %6768 = vmatprep.subr.bf16.mxu0 0
  %6769 = vmatpush2.bf16.msra.mxu0 %v156
  %6770 = vmatprep.subr.bf16.mxu0 0
  %6771 = vmatpush2.bf16.msra.mxu0 %v155
  %6772 = vmatprep.subr.bf16.mxu0 0
  %6773 = vmatpush2.bf16.msra.mxu0 %v154
  %6774 = vmatprep.subr.bf16.mxu0 0
  %6775 = vmatpush2.bf16.msra.mxu0 %v153
  %6776 = vmatprep.subr.bf16.mxu0 0
  %6777 = vmatpush2.bf16.msra.mxu0 %v152
  %6778 = vmatprep.subr.bf16.mxu0 0
  %6779 = vmatpush2.bf16.msra.mxu0 %v151
  %6780 = vmatprep.subr.bf16.mxu0 0
  %6781 = vmatpush2.bf16.msra.mxu0 %v150
  %6782 = vmatprep.mubr.bf16.mxu0 %v6747
  %6783 = vmatmul.mubr.bf16.gmra.mxu0 %v6746
  %v6784 = vpop.f32.mrf.mxu0
  %v6785 = vadd.f32 0.0, %v6784
  %v6786 = vpop.f32.mrf.mxu0
  %v6787 = vpop.f32.mrf.mxu0
  %v6788 = vadd.f32 0.0, %v6787
  %v6789 = vpop.f32.mrf.mxu0
  %6790 = vdwg.mxu0
  %v6791 = vmax.f32 %v6735, %v6785
  %v6792 = vmax.f32 %v6736, %v6788
  %s6793 = scalar_lea.vmem %s0, 1568
  %v6794 = vld [vmem:[%s6793] sm:$0xff]
  %v6795 = vld [vmem:[%s6793 + $0x8] sm:$0xff]
  %v6798 = vunpack.c.l.b16 %v6794
  %v6799 = vunpack.c.h.b16 %v6794
  %v6800 = vunpack.c.l.b16 %v6795
  %v6801 = vunpack.c.h.b16 %v6795
  %v6802 = vpack.c.b16 %v6800, %v6798
  %v6803 = vpack.c.b16 %v6801, %v6799
  %6806 = vmatprep.subr.bf16.mxu0 0
  %6807 = vmatpush1.bf16.msra.mxu0 %v149
  %6808 = vmatprep.subr.bf16.mxu0 0
  %6809 = vmatpush1.bf16.msra.mxu0 %v148
  %6810 = vmatprep.subr.bf16.mxu0 0
  %6811 = vmatpush1.bf16.msra.mxu0 %v147
  %6812 = vmatprep.subr.bf16.mxu0 0
  %6813 = vmatpush1.bf16.msra.mxu0 %v146
  %6814 = vmatprep.subr.bf16.mxu0 0
  %6815 = vmatpush1.bf16.msra.mxu0 %v145
  %6816 = vmatprep.subr.bf16.mxu0 0
  %6817 = vmatpush1.bf16.msra.mxu0 %v144
  %6818 = vmatprep.subr.bf16.mxu0 0
  %6819 = vmatpush1.bf16.msra.mxu0 %v143
  %6820 = vmatprep.subr.bf16.mxu0 0
  %6821 = vmatpush1.bf16.msra.mxu0 %v142
  %6822 = vmatprep.subr.bf16.mxu0 0
  %6823 = vmatpush2.bf16.msra.mxu0 %v157
  %6824 = vmatprep.subr.bf16.mxu0 0
  %6825 = vmatpush2.bf16.msra.mxu0 %v156
  %6826 = vmatprep.subr.bf16.mxu0 0
  %6827 = vmatpush2.bf16.msra.mxu0 %v155
  %6828 = vmatprep.subr.bf16.mxu0 0
  %6829 = vmatpush2.bf16.msra.mxu0 %v154
  %6830 = vmatprep.subr.bf16.mxu0 0
  %6831 = vmatpush2.bf16.msra.mxu0 %v153
  %6832 = vmatprep.subr.bf16.mxu0 0
  %6833 = vmatpush2.bf16.msra.mxu0 %v152
  %6834 = vmatprep.subr.bf16.mxu0 0
  %6835 = vmatpush2.bf16.msra.mxu0 %v151
  %6836 = vmatprep.subr.bf16.mxu0 0
  %6837 = vmatpush2.bf16.msra.mxu0 %v150
  %6838 = vmatprep.mubr.bf16.mxu0 %v6803
  %6839 = vmatmul.mubr.bf16.gmra.mxu0 %v6802
  %v6840 = vpop.f32.mrf.mxu0
  %v6841 = vadd.f32 0.0, %v6840
  %v6842 = vpop.f32.mrf.mxu0
  %v6843 = vpop.f32.mrf.mxu0
  %v6844 = vadd.f32 0.0, %v6843
  %v6845 = vpop.f32.mrf.mxu0
  %6846 = vdwg.mxu0
  %v6847 = vmax.f32 %v6791, %v6841
  %v6848 = vmax.f32 %v6792, %v6844
  %v6849 = vadd.f32 %v6847, %v387
  %v6850 = vadd.f32 %v6848, %v387
  %v6851 = vmax.f32 %v6849, 0.0
  %v6852 = vmax.f32 %v6850, 0.0
  %v6853 = vpack.c.bf16 %v6852, %v6851
  %v6854 = vld [vmem:[%s3 + $0xb8] sm:$0xf]
  %v6855 = vld [vmem:[%s3 + $0xbc] sm:$0xf]
  %v6858 = vunpack.c.l.b16 %v6854
  %v6859 = vunpack.c.l.b16 %v6855
  %v6860 = vpack.c.b16 %v6859, %v6858
  %v6863 = vsel %vm631, %v6853, 0
  %6865 = vmatprep.subr.bf16.mxu0 0
  %6866 = vmatpush1.bf16.msra.mxu0 0
  %6867 = vmatprep.subr.bf16.mxu0 0
  %6868 = vmatpush1.bf16.msra.mxu0 0
  %6869 = vmatprep.subr.bf16.mxu0 0
  %6870 = vmatpush1.bf16.msra.mxu0 0
  %6871 = vmatprep.subr.bf16.mxu0 0
  %6872 = vmatpush1.bf16.msra.mxu0 0
  %6873 = vmatprep.subr.bf16.mxu0 0
  %6874 = vmatpush1.bf16.msra.mxu0 0
  %6875 = vmatprep.subr.bf16.mxu0 0
  %6876 = vmatpush1.bf16.msra.mxu0 0
  %6877 = vmatprep.subr.bf16.mxu0 0
  %6878 = vmatpush1.bf16.msra.mxu0 0
  %6879 = vmatprep.subr.bf16.mxu0 0
  %6880 = vmatpush1.bf16.msra.mxu0 %v6860
  %6881 = vmatprep.subr.bf16.mxu0 0
  %6882 = vmatpush2.bf16.msra.mxu0 0
  %6883 = vmatprep.subr.bf16.mxu0 0
  %6884 = vmatpush2.bf16.msra.mxu0 0
  %6885 = vmatprep.subr.bf16.mxu0 0
  %6886 = vmatpush2.bf16.msra.mxu0 0
  %6887 = vmatprep.subr.bf16.mxu0 0
  %6888 = vmatpush2.bf16.msra.mxu0 0
  %6889 = vmatprep.subr.bf16.mxu0 0
  %6890 = vmatpush2.bf16.msra.mxu0 0
  %6891 = vmatprep.subr.bf16.mxu0 0
  %6892 = vmatpush2.bf16.msra.mxu0 0
  %6893 = vmatprep.subr.bf16.mxu0 0
  %6894 = vmatpush2.bf16.msra.mxu0 0
  %6895 = vmatprep.subr.bf16.mxu0 0
  %6896 = vmatpush2.bf16.msra.mxu0 0
  %6897 = vmatprep.mubr.bf16.mxu0 0
  %6898 = vmatmul.mubr.bf16.gmra.mxu0 %v6863
  %v6899 = vpop.f32.mrf.mxu0
  %v6900 = vadd.f32 0.0, %v6899
  %v6901 = vpop.f32.mrf.mxu0
  %v6902 = vpop.f32.mrf.mxu0
  %v6903 = vadd.f32 0.0, %v6902
  %v6904 = vpop.f32.mrf.mxu0
  %6905 = vdwg.mxu0
  %v6906 = vadd.f32 %v6625, %v6900
  %v6907 = vadd.f32 %v6626, %v6903
  %s6908 = scalar_lea.vmem %s0, 384
  %v6909 = vld [vmem:[%s6908] sm:$0xff]
  %v6910 = vld [vmem:[%s6908 + $0x8] sm:$0xff]
  %v6913 = vunpack.c.l.b16 %v6909
  %v6914 = vunpack.c.h.b16 %v6909
  %v6915 = vunpack.c.l.b16 %v6910
  %v6916 = vunpack.c.h.b16 %v6910
  %v6917 = vpack.c.b16 %v6915, %v6913
  %v6918 = vpack.c.b16 %v6916, %v6914
  %6921 = vmatprep.subr.bf16.mxu0 0
  %6922 = vmatpush1.bf16.msra.mxu0 %v149
  %6923 = vmatprep.subr.bf16.mxu0 0
  %6924 = vmatpush1.bf16.msra.mxu0 %v148
  %6925 = vmatprep.subr.bf16.mxu0 0
  %6926 = vmatpush1.bf16.msra.mxu0 %v147
  %6927 = vmatprep.subr.bf16.mxu0 0
  %6928 = vmatpush1.bf16.msra.mxu0 %v146
  %6929 = vmatprep.subr.bf16.mxu0 0
  %6930 = vmatpush1.bf16.msra.mxu0 %v145
  %6931 = vmatprep.subr.bf16.mxu0 0
  %6932 = vmatpush1.bf16.msra.mxu0 %v144
  %6933 = vmatprep.subr.bf16.mxu0 0
  %6934 = vmatpush1.bf16.msra.mxu0 %v143
  %6935 = vmatprep.subr.bf16.mxu0 0
  %6936 = vmatpush1.bf16.msra.mxu0 %v142
  %6937 = vmatprep.subr.bf16.mxu0 0
  %6938 = vmatpush2.bf16.msra.mxu0 %v157
  %6939 = vmatprep.subr.bf16.mxu0 0
  %6940 = vmatpush2.bf16.msra.mxu0 %v156
  %6941 = vmatprep.subr.bf16.mxu0 0
  %6942 = vmatpush2.bf16.msra.mxu0 %v155
  %6943 = vmatprep.subr.bf16.mxu0 0
  %6944 = vmatpush2.bf16.msra.mxu0 %v154
  %6945 = vmatprep.subr.bf16.mxu0 0
  %6946 = vmatpush2.bf16.msra.mxu0 %v153
  %6947 = vmatprep.subr.bf16.mxu0 0
  %6948 = vmatpush2.bf16.msra.mxu0 %v152
  %6949 = vmatprep.subr.bf16.mxu0 0
  %6950 = vmatpush2.bf16.msra.mxu0 %v151
  %6951 = vmatprep.subr.bf16.mxu0 0
  %6952 = vmatpush2.bf16.msra.mxu0 %v150
  %6953 = vmatprep.mubr.bf16.mxu0 %v6918
  %6954 = vmatmul.mubr.bf16.gmra.mxu0 %v6917
  %v6955 = vpop.f32.mrf.mxu0
  %v6956 = vadd.f32 0.0, %v6955
  %v6957 = vpop.f32.mrf.mxu0
  %v6958 = vpop.f32.mrf.mxu0
  %v6959 = vadd.f32 0.0, %v6958
  %v6960 = vpop.f32.mrf.mxu0
  %6961 = vdwg.mxu0
  %s6962 = scalar_lea.vmem %s0, 784
  %v6963 = vld [vmem:[%s6962] sm:$0xff]
  %v6964 = vld [vmem:[%s6962 + $0x8] sm:$0xff]
  %v6967 = vunpack.c.l.b16 %v6963
  %v6968 = vunpack.c.h.b16 %v6963
  %v6969 = vunpack.c.l.b16 %v6964
  %v6970 = vunpack.c.h.b16 %v6964
  %v6971 = vpack.c.b16 %v6969, %v6967
  %v6972 = vpack.c.b16 %v6970, %v6968
  %6975 = vmatprep.subr.bf16.mxu0 0
  %6976 = vmatpush1.bf16.msra.mxu0 %v149
  %6977 = vmatprep.subr.bf16.mxu0 0
  %6978 = vmatpush1.bf16.msra.mxu0 %v148
  %6979 = vmatprep.subr.bf16.mxu0 0
  %6980 = vmatpush1.bf16.msra.mxu0 %v147
  %6981 = vmatprep.subr.bf16.mxu0 0
  %6982 = vmatpush1.bf16.msra.mxu0 %v146
  %6983 = vmatprep.subr.bf16.mxu0 0
  %6984 = vmatpush1.bf16.msra.mxu0 %v145
  %6985 = vmatprep.subr.bf16.mxu0 0
  %6986 = vmatpush1.bf16.msra.mxu0 %v144
  %6987 = vmatprep.subr.bf16.mxu0 0
  %6988 = vmatpush1.bf16.msra.mxu0 %v143
  %6989 = vmatprep.subr.bf16.mxu0 0
  %6990 = vmatpush1.bf16.msra.mxu0 %v142
  %6991 = vmatprep.subr.bf16.mxu0 0
  %6992 = vmatpush2.bf16.msra.mxu0 %v157
  %6993 = vmatprep.subr.bf16.mxu0 0
  %6994 = vmatpush2.bf16.msra.mxu0 %v156
  %6995 = vmatprep.subr.bf16.mxu0 0
  %6996 = vmatpush2.bf16.msra.mxu0 %v155
  %6997 = vmatprep.subr.bf16.mxu0 0
  %6998 = vmatpush2.bf16.msra.mxu0 %v154
  %6999 = vmatprep.subr.bf16.mxu0 0
  %7000 = vmatpush2.bf16.msra.mxu0 %v153
  %7001 = vmatprep.subr.bf16.mxu0 0
  %7002 = vmatpush2.bf16.msra.mxu0 %v152
  %7003 = vmatprep.subr.bf16.mxu0 0
  %7004 = vmatpush2.bf16.msra.mxu0 %v151
  %7005 = vmatprep.subr.bf16.mxu0 0
  %7006 = vmatpush2.bf16.msra.mxu0 %v150
  %7007 = vmatprep.mubr.bf16.mxu0 %v6972
  %7008 = vmatmul.mubr.bf16.gmra.mxu0 %v6971
  %v7009 = vpop.f32.mrf.mxu0
  %v7010 = vadd.f32 0.0, %v7009
  %v7011 = vpop.f32.mrf.mxu0
  %v7012 = vpop.f32.mrf.mxu0
  %v7013 = vadd.f32 0.0, %v7012
  %v7014 = vpop.f32.mrf.mxu0
  %7015 = vdwg.mxu0
  %v7016 = vmax.f32 %v6956, %v7010
  %v7017 = vmax.f32 %v6959, %v7013
  %s7018 = scalar_lea.vmem %s0, 1184
  %v7019 = vld [vmem:[%s7018] sm:$0xff]
  %v7020 = vld [vmem:[%s7018 + $0x8] sm:$0xff]
  %v7023 = vunpack.c.l.b16 %v7019
  %v7024 = vunpack.c.h.b16 %v7019
  %v7025 = vunpack.c.l.b16 %v7020
  %v7026 = vunpack.c.h.b16 %v7020
  %v7027 = vpack.c.b16 %v7025, %v7023
  %v7028 = vpack.c.b16 %v7026, %v7024
  %7031 = vmatprep.subr.bf16.mxu0 0
  %7032 = vmatpush1.bf16.msra.mxu0 %v149
  %7033 = vmatprep.subr.bf16.mxu0 0
  %7034 = vmatpush1.bf16.msra.mxu0 %v148
  %7035 = vmatprep.subr.bf16.mxu0 0
  %7036 = vmatpush1.bf16.msra.mxu0 %v147
  %7037 = vmatprep.subr.bf16.mxu0 0
  %7038 = vmatpush1.bf16.msra.mxu0 %v146
  %7039 = vmatprep.subr.bf16.mxu0 0
  %7040 = vmatpush1.bf16.msra.mxu0 %v145
  %7041 = vmatprep.subr.bf16.mxu0 0
  %7042 = vmatpush1.bf16.msra.mxu0 %v144
  %7043 = vmatprep.subr.bf16.mxu0 0
  %7044 = vmatpush1.bf16.msra.mxu0 %v143
  %7045 = vmatprep.subr.bf16.mxu0 0
  %7046 = vmatpush1.bf16.msra.mxu0 %v142
  %7047 = vmatprep.subr.bf16.mxu0 0
  %7048 = vmatpush2.bf16.msra.mxu0 %v157
  %7049 = vmatprep.subr.bf16.mxu0 0
  %7050 = vmatpush2.bf16.msra.mxu0 %v156
  %7051 = vmatprep.subr.bf16.mxu0 0
  %7052 = vmatpush2.bf16.msra.mxu0 %v155
  %7053 = vmatprep.subr.bf16.mxu0 0
  %7054 = vmatpush2.bf16.msra.mxu0 %v154
  %7055 = vmatprep.subr.bf16.mxu0 0
  %7056 = vmatpush2.bf16.msra.mxu0 %v153
  %7057 = vmatprep.subr.bf16.mxu0 0
  %7058 = vmatpush2.bf16.msra.mxu0 %v152
  %7059 = vmatprep.subr.bf16.mxu0 0
  %7060 = vmatpush2.bf16.msra.mxu0 %v151
  %7061 = vmatprep.subr.bf16.mxu0 0
  %7062 = vmatpush2.bf16.msra.mxu0 %v150
  %7063 = vmatprep.mubr.bf16.mxu0 %v7028
  %7064 = vmatmul.mubr.bf16.gmra.mxu0 %v7027
  %v7065 = vpop.f32.mrf.mxu0
  %v7066 = vadd.f32 0.0, %v7065
  %v7067 = vpop.f32.mrf.mxu0
  %v7068 = vpop.f32.mrf.mxu0
  %v7069 = vadd.f32 0.0, %v7068
  %v7070 = vpop.f32.mrf.mxu0
  %7071 = vdwg.mxu0
  %v7072 = vmax.f32 %v7016, %v7066
  %v7073 = vmax.f32 %v7017, %v7069
  %s7074 = scalar_lea.vmem %s0, 1584
  %v7075 = vld [vmem:[%s7074] sm:$0xff]
  %v7076 = vld [vmem:[%s7074 + $0x8] sm:$0xff]
  %v7079 = vunpack.c.l.b16 %v7075
  %v7080 = vunpack.c.h.b16 %v7075
  %v7081 = vunpack.c.l.b16 %v7076
  %v7082 = vunpack.c.h.b16 %v7076
  %v7083 = vpack.c.b16 %v7081, %v7079
  %v7084 = vpack.c.b16 %v7082, %v7080
  %7087 = vmatprep.subr.bf16.mxu0 0
  %7088 = vmatpush1.bf16.msra.mxu0 %v149
  %7089 = vmatprep.subr.bf16.mxu0 0
  %7090 = vmatpush1.bf16.msra.mxu0 %v148
  %7091 = vmatprep.subr.bf16.mxu0 0
  %7092 = vmatpush1.bf16.msra.mxu0 %v147
  %7093 = vmatprep.subr.bf16.mxu0 0
  %7094 = vmatpush1.bf16.msra.mxu0 %v146
  %7095 = vmatprep.subr.bf16.mxu0 0
  %7096 = vmatpush1.bf16.msra.mxu0 %v145
  %7097 = vmatprep.subr.bf16.mxu0 0
  %7098 = vmatpush1.bf16.msra.mxu0 %v144
  %7099 = vmatprep.subr.bf16.mxu0 0
  %7100 = vmatpush1.bf16.msra.mxu0 %v143
  %7101 = vmatprep.subr.bf16.mxu0 0
  %7102 = vmatpush1.bf16.msra.mxu0 %v142
  %7103 = vmatprep.subr.bf16.mxu0 0
  %7104 = vmatpush2.bf16.msra.mxu0 %v157
  %7105 = vmatprep.subr.bf16.mxu0 0
  %7106 = vmatpush2.bf16.msra.mxu0 %v156
  %7107 = vmatprep.subr.bf16.mxu0 0
  %7108 = vmatpush2.bf16.msra.mxu0 %v155
  %7109 = vmatprep.subr.bf16.mxu0 0
  %7110 = vmatpush2.bf16.msra.mxu0 %v154
  %7111 = vmatprep.subr.bf16.mxu0 0
  %7112 = vmatpush2.bf16.msra.mxu0 %v153
  %7113 = vmatprep.subr.bf16.mxu0 0
  %7114 = vmatpush2.bf16.msra.mxu0 %v152
  %7115 = vmatprep.subr.bf16.mxu0 0
  %7116 = vmatpush2.bf16.msra.mxu0 %v151
  %7117 = vmatprep.subr.bf16.mxu0 0
  %7118 = vmatpush2.bf16.msra.mxu0 %v150
  %7119 = vmatprep.mubr.bf16.mxu0 %v7084
  %7120 = vmatmul.mubr.bf16.gmra.mxu0 %v7083
  %v7121 = vpop.f32.mrf.mxu0
  %v7122 = vadd.f32 0.0, %v7121
  %v7123 = vpop.f32.mrf.mxu0
  %v7124 = vpop.f32.mrf.mxu0
  %v7125 = vadd.f32 0.0, %v7124
  %v7126 = vpop.f32.mrf.mxu0
  %7127 = vdwg.mxu0
  %v7128 = vmax.f32 %v7072, %v7122
  %v7129 = vmax.f32 %v7073, %v7125
  %v7130 = vadd.f32 %v7128, %v387
  %v7131 = vadd.f32 %v7129, %v387
  %v7132 = vmax.f32 %v7130, 0.0
  %v7133 = vmax.f32 %v7131, 0.0
  %v7134 = vpack.c.bf16 %v7133, %v7132
  %v7135 = vld [vmem:[%s3 + $0xc0] sm:$0xf]
  %v7136 = vld [vmem:[%s3 + $0xc4] sm:$0xf]
  %v7139 = vunpack.c.l.b16 %v7135
  %v7140 = vunpack.c.l.b16 %v7136
  %v7141 = vpack.c.b16 %v7140, %v7139
  %v7144 = vsel %vm631, %v7134, 0
  %7146 = vmatprep.subr.bf16.mxu0 0
  %7147 = vmatpush1.bf16.msra.mxu0 0
  %7148 = vmatprep.subr.bf16.mxu0 0
  %7149 = vmatpush1.bf16.msra.mxu0 0
  %7150 = vmatprep.subr.bf16.mxu0 0
  %7151 = vmatpush1.bf16.msra.mxu0 0
  %7152 = vmatprep.subr.bf16.mxu0 0
  %7153 = vmatpush1.bf16.msra.mxu0 0
  %7154 = vmatprep.subr.bf16.mxu0 0
  %7155 = vmatpush1.bf16.msra.mxu0 0
  %7156 = vmatprep.subr.bf16.mxu0 0
  %7157 = vmatpush1.bf16.msra.mxu0 0
  %7158 = vmatprep.subr.bf16.mxu0 0
  %7159 = vmatpush1.bf16.msra.mxu0 0
  %7160 = vmatprep.subr.bf16.mxu0 0
  %7161 = vmatpush1.bf16.msra.mxu0 %v7141
  %7162 = vmatprep.subr.bf16.mxu0 0
  %7163 = vmatpush2.bf16.msra.mxu0 0
  %7164 = vmatprep.subr.bf16.mxu0 0
  %7165 = vmatpush2.bf16.msra.mxu0 0
  %7166 = vmatprep.subr.bf16.mxu0 0
  %7167 = vmatpush2.bf16.msra.mxu0 0
  %7168 = vmatprep.subr.bf16.mxu0 0
  %7169 = vmatpush2.bf16.msra.mxu0 0
  %7170 = vmatprep.subr.bf16.mxu0 0
  %7171 = vmatpush2.bf16.msra.mxu0 0
  %7172 = vmatprep.subr.bf16.mxu0 0
  %7173 = vmatpush2.bf16.msra.mxu0 0
  %7174 = vmatprep.subr.bf16.mxu0 0
  %7175 = vmatpush2.bf16.msra.mxu0 0
  %7176 = vmatprep.subr.bf16.mxu0 0
  %7177 = vmatpush2.bf16.msra.mxu0 0
  %7178 = vmatprep.mubr.bf16.mxu0 0
  %7179 = vmatmul.mubr.bf16.gmra.mxu0 %v7144
  %v7180 = vpop.f32.mrf.mxu0
  %v7181 = vadd.f32 0.0, %v7180
  %v7182 = vpop.f32.mrf.mxu0
  %v7183 = vpop.f32.mrf.mxu0
  %v7184 = vadd.f32 0.0, %v7183
  %v7185 = vpop.f32.mrf.mxu0
  %7186 = vdwg.mxu0
  %v7187 = vadd.f32 %v6906, %v7181
  %v7188 = vadd.f32 %v6907, %v7184
  %v7189 = vld [vmem:[%s4] sm:$0x1]
  %v7191 = vlaneseq
  %v7192 = vshrl.u32 %v7191, 7
  %v7193 = vsub.s32 0, %v7192
  %v7194 = vrot.slane %v7189, %v7193
  %v7196 = vadd.f32 %v7187, %v7194
  %v7197 = vadd.f32 %v7188, %v7194
  %v7198 = vmax.f32 %v7196, 0.0
  %v7199 = vmax.f32 %v7197, 0.0
  %v7200 = vpack.c.bf16 %v7199, %v7198
  %v7201 = vld [vmem:[%s5] sm:$0xf]
  %v7202 = vld [vmem:[%s5 + $0x4] sm:$0xf]
  %v7203 = vld [vmem:[%s5 + $0x8] sm:$0xf]
  %v7204 = vld [vmem:[%s5 + $0xc] sm:$0xf]
  %v7205 = vld [vmem:[%s5 + $0x10] sm:$0xf]
  %v7206 = vld [vmem:[%s5 + $0x14] sm:$0xf]
  %v7207 = vld [vmem:[%s5 + $0x18] sm:$0xf]
  %v7208 = vld [vmem:[%s5 + $0x1c] sm:$0xf]
  %v7209 = vld [vmem:[%s5 + $0x20] sm:$0xf]
  %v7210 = vld [vmem:[%s5 + $0x24] sm:$0xf]
  %v7211 = vld [vmem:[%s5 + $0x28] sm:$0xf]
  %v7212 = vld [vmem:[%s5 + $0x2c] sm:$0xf]
  %v7213 = vld [vmem:[%s5 + $0x30] sm:$0xf]
  %v7214 = vld [vmem:[%s5 + $0x34] sm:$0xf]
  %v7215 = vld [vmem:[%s5 + $0x38] sm:$0xf]
  %v7216 = vld [vmem:[%s5 + $0x3c] sm:$0xf]
  %v7217 = vld [vmem:[%s6] sm:$0x1]
  %v7219 = vlaneseq
  %v7220 = vshrl.u32 %v7219, 7
  %v7221 = vsub.s32 0, %v7220
  %v7222 = vrot.slane %v7217, %v7221
  %v7240 = vunpack.c.l.b16 %v7201
  %v7241 = vunpack.c.l.b16 %v7202
  %v7242 = vunpack.c.l.b16 %v7203
  %v7243 = vunpack.c.l.b16 %v7204
  %v7244 = vunpack.c.l.b16 %v7205
  %v7245 = vunpack.c.l.b16 %v7206
  %v7246 = vunpack.c.l.b16 %v7207
  %v7247 = vunpack.c.l.b16 %v7208
  %v7248 = vunpack.c.l.b16 %v7209
  %v7249 = vunpack.c.l.b16 %v7210
  %v7250 = vunpack.c.l.b16 %v7211
  %v7251 = vunpack.c.l.b16 %v7212
  %v7252 = vunpack.c.l.b16 %v7213
  %v7253 = vunpack.c.l.b16 %v7214
  %v7254 = vunpack.c.l.b16 %v7215
  %v7255 = vunpack.c.l.b16 %v7216
  %v7256 = vpack.c.b16 %v7241, %v7240
  %v7257 = vpack.c.b16 %v7243, %v7242
  %v7258 = vpack.c.b16 %v7245, %v7244
  %v7259 = vpack.c.b16 %v7247, %v7246
  %v7260 = vpack.c.b16 %v7249, %v7248
  %v7261 = vpack.c.b16 %v7251, %v7250
  %v7262 = vpack.c.b16 %v7253, %v7252
  %v7263 = vpack.c.b16 %v7255, %v7254
  %7272 = vmatprep.subr.bf16.mxu0 0
  %7273 = vmatpush1.bf16.msra.mxu0 %v7263
  %7274 = vmatprep.subr.bf16.mxu0 0
  %7275 = vmatpush1.bf16.msra.mxu0 %v7262
  %7276 = vmatprep.subr.bf16.mxu0 0
  %7277 = vmatpush1.bf16.msra.mxu0 %v7261
  %7278 = vmatprep.subr.bf16.mxu0 0
  %7279 = vmatpush1.bf16.msra.mxu0 %v7260
  %7280 = vmatprep.subr.bf16.mxu0 0
  %7281 = vmatpush1.bf16.msra.mxu0 %v7259
  %7282 = vmatprep.subr.bf16.mxu0 0
  %7283 = vmatpush1.bf16.msra.mxu0 %v7258
  %7284 = vmatprep.subr.bf16.mxu0 0
  %7285 = vmatpush1.bf16.msra.mxu0 %v7257
  %7286 = vmatprep.subr.bf16.mxu0 0
  %7287 = vmatpush1.bf16.msra.mxu0 %v7256
  %7288 = vmatprep.subr.bf16.mxu0 0
  %7289 = vmatpush2.bf16.msra.mxu0 0
  %7290 = vmatprep.subr.bf16.mxu0 0
  %7291 = vmatpush2.bf16.msra.mxu0 0
  %7292 = vmatprep.subr.bf16.mxu0 0
  %7293 = vmatpush2.bf16.msra.mxu0 0
  %7294 = vmatprep.subr.bf16.mxu0 0
  %7295 = vmatpush2.bf16.msra.mxu0 0
  %7296 = vmatprep.subr.bf16.mxu0 0
  %7297 = vmatpush2.bf16.msra.mxu0 0
  %7298 = vmatprep.subr.bf16.mxu0 0
  %7299 = vmatpush2.bf16.msra.mxu0 0
  %7300 = vmatprep.subr.bf16.mxu0 0
  %7301 = vmatpush2.bf16.msra.mxu0 0
  %7302 = vmatprep.subr.bf16.mxu0 0
  %7303 = vmatpush2.bf16.msra.mxu0 0
  %7304 = vmatprep.mubr.bf16.mxu0 0
  %7305 = vmatmul.mubr.bf16.gmra.mxu0 %v7200
  %v7306 = vpop.f32.mrf.mxu0
  %v7307 = vadd.f32 %v7222, %v7306
  %v7308 = vpop.f32.mrf.mxu0
  %v7309 = vpop.f32.mrf.mxu0
  %v7310 = vadd.f32 %v7222, %v7309
  %v7311 = vpop.f32.mrf.mxu0
  %7312 = vdwg.mxu0
  %v7313 = vmax.f32 %v7307, 0.0
  %v7314 = vmax.f32 %v7310, 0.0
  %v7315 = vpack.c.bf16 %v7314, %v7313
  %v7316 = vld [vmem:[%s7] sm:$0xf]
  %v7317 = vld [vmem:[%s7 + $0x4] sm:$0xf]
  %v7318 = vld [vmem:[%s7 + $0x8] sm:$0xf]
  %v7319 = vld [vmem:[%s7 + $0xc] sm:$0xf]
  %v7320 = vld [vmem:[%s7 + $0x10] sm:$0xf]
  %v7321 = vld [vmem:[%s7 + $0x14] sm:$0xf]
  %v7322 = vld [vmem:[%s7 + $0x18] sm:$0xf]
  %v7323 = vld [vmem:[%s7 + $0x1c] sm:$0xf]
  %v7324 = vld [vmem:[%s7 + $0x20] sm:$0xf]
  %v7325 = vld [vmem:[%s7 + $0x24] sm:$0xf]
  %v7326 = vld [vmem:[%s7 + $0x28] sm:$0xf]
  %v7327 = vld [vmem:[%s7 + $0x2c] sm:$0xf]
  %v7328 = vld [vmem:[%s7 + $0x30] sm:$0xf]
  %v7329 = vld [vmem:[%s7 + $0x34] sm:$0xf]
  %v7330 = vld [vmem:[%s7 + $0x38] sm:$0xf]
  %v7331 = vld [vmem:[%s7 + $0x3c] sm:$0xf]
  %v7332 = vld [vmem:[%s8] sm:$0x1]
  %v7334 = vlaneseq
  %v7335 = vshrl.u32 %v7334, 7
  %v7336 = vsub.s32 0, %v7335
  %v7337 = vrot.slane %v7332, %v7336
  %v7355 = vunpack.c.l.b16 %v7316
  %v7356 = vunpack.c.l.b16 %v7317
  %v7357 = vunpack.c.l.b16 %v7318
  %v7358 = vunpack.c.l.b16 %v7319
  %v7359 = vunpack.c.l.b16 %v7320
  %v7360 = vunpack.c.l.b16 %v7321
  %v7361 = vunpack.c.l.b16 %v7322
  %v7362 = vunpack.c.l.b16 %v7323
  %v7363 = vunpack.c.l.b16 %v7324
  %v7364 = vunpack.c.l.b16 %v7325
  %v7365 = vunpack.c.l.b16 %v7326
  %v7366 = vunpack.c.l.b16 %v7327
  %v7367 = vunpack.c.l.b16 %v7328
  %v7368 = vunpack.c.l.b16 %v7329
  %v7369 = vunpack.c.l.b16 %v7330
  %v7370 = vunpack.c.l.b16 %v7331
  %v7371 = vpack.c.b16 %v7356, %v7355
  %v7372 = vpack.c.b16 %v7358, %v7357
  %v7373 = vpack.c.b16 %v7360, %v7359
  %v7374 = vpack.c.b16 %v7362, %v7361
  %v7375 = vpack.c.b16 %v7364, %v7363
  %v7376 = vpack.c.b16 %v7366, %v7365
  %v7377 = vpack.c.b16 %v7368, %v7367
  %v7378 = vpack.c.b16 %v7370, %v7369
  %7387 = vmatprep.subr.bf16.mxu0 0
  %7388 = vmatpush1.bf16.msra.mxu0 %v7378
  %7389 = vmatprep.subr.bf16.mxu0 0
  %7390 = vmatpush1.bf16.msra.mxu0 %v7377
  %7391 = vmatprep.subr.bf16.mxu0 0
  %7392 = vmatpush1.bf16.msra.mxu0 %v7376
  %7393 = vmatprep.subr.bf16.mxu0 0
  %7394 = vmatpush1.bf16.msra.mxu0 %v7375
  %7395 = vmatprep.subr.bf16.mxu0 0
  %7396 = vmatpush1.bf16.msra.mxu0 %v7374
  %7397 = vmatprep.subr.bf16.mxu0 0
  %7398 = vmatpush1.bf16.msra.mxu0 %v7373
  %7399 = vmatprep.subr.bf16.mxu0 0
  %7400 = vmatpush1.bf16.msra.mxu0 %v7372
  %7401 = vmatprep.subr.bf16.mxu0 0
  %7402 = vmatpush1.bf16.msra.mxu0 %v7371
  %7403 = vmatprep.subr.bf16.mxu0 0
  %7404 = vmatpush2.bf16.msra.mxu0 0
  %7405 = vmatprep.subr.bf16.mxu0 0
  %7406 = vmatpush2.bf16.msra.mxu0 0
  %7407 = vmatprep.subr.bf16.mxu0 0
  %7408 = vmatpush2.bf16.msra.mxu0 0
  %7409 = vmatprep.subr.bf16.mxu0 0
  %7410 = vmatpush2.bf16.msra.mxu0 0
  %7411 = vmatprep.subr.bf16.mxu0 0
  %7412 = vmatpush2.bf16.msra.mxu0 0
  %7413 = vmatprep.subr.bf16.mxu0 0
  %7414 = vmatpush2.bf16.msra.mxu0 0
  %7415 = vmatprep.subr.bf16.mxu0 0
  %7416 = vmatpush2.bf16.msra.mxu0 0
  %7417 = vmatprep.subr.bf16.mxu0 0
  %7418 = vmatpush2.bf16.msra.mxu0 0
  %7419 = vmatprep.mubr.bf16.mxu0 0
  %7420 = vmatmul.mubr.bf16.gmra.mxu0 %v7315
  %v7421 = vpop.f32.mrf.mxu0
  %v7422 = vadd.f32 %v7337, %v7421
  %v7423 = vpop.f32.mrf.mxu0
  %v7424 = vpop.f32.mrf.mxu0
  %v7425 = vadd.f32 %v7337, %v7424
  %v7426 = vpop.f32.mrf.mxu0
  %7427 = vdwg.mxu0
  %7428 = vst [vmem:[%s9] sm:$0xff] %v7422
  %7429 = vst [vmem:[%s9 + $0x8] sm:$0xff] %v7425
  // Predicated region
  $region38: #{net_forward.3} parent=0 // pred_check
    _
  $region39: #{net_forward.3} parent=0 // pred_check_branch
    %7431 = sbr.rel (0) target = $region41
  $region40: #{net_forward.3} parent=0 // pred_region
    _
  $region41: #{net_forward.3} parent=0 // pred_fallthru
    _
  // Predicated region
  $region42: #{net_forward.3} parent=0 // pred_check
    _
  $region43: #{net_forward.3} parent=0 // pred_check_branch
    %7433 = sbr.rel (0) target = $region45
  $region44: #{net_forward.3} parent=0 // pred_region
    _
  $region45: #{net_forward.3} parent=0 // pred_fallthru
    _

</llo_original>
